<compile_context>
chip_gen: v7x
topology: tpu7x:2x2x1
jax: 0.10.0
libtpu: 0.0.40
codegen_flags: <defaults>
</compile_context>

<pallas_src>
import numpy as np
import jax
import jax.numpy as jnp
from jax.experimental import pallas as pl
from jax.experimental.pallas import tpu as pltpu

BN_EPS = 1e-5

# Geometry of the module (MNIST-like 1x28x28 input implied by 7*7*32 flatten).
H1, W1, C0, C1 = 28, 28, 1, 16          # conv1 stage
H2, W2, C2 = 14, 14, 32                 # conv2 stage (after pool1)
H3, W3 = 7, 7                           # after pool2
KPAD1 = 128                             # lane-aligned dy-block stride, conv1 (C0*W1=28)
KPAD2 = 256                             # lane-aligned dy-block stride, conv2 (C1*W2=224)
FPAD = 256                              # lane-aligned per-row block stride, fc1 (C2*W3=224)
NFC = 128                               # all FC widths zero-padded to 128 lanes


# ---------------------------------------------------------------------------
# Init-time constant builders (plain numpy; zero runtime cost)
# ---------------------------------------------------------------------------
def _conv_band_packed(w, width, kpad):
    # w: [3, 3, cin, cout].  Returns Band [3*kpad, cout*width] such that
    #   staged @ Band == Conv2d(cin, cout, 3, padding=1)
    # where staged[r, dy*kpad + ci*width + x] = input[r + dy - 1, x, ci]
    # (zero rows / zero x-padding handled by zeros in staged / Band).
    _, _, cin, cout = w.shape
    band = np.zeros((3, kpad, cout * width), np.float32)
    ci = np.arange(cin)
    co = np.arange(cout)
    for dy in range(3):
        for dx in range(3):
            for xo in range(width):
                xi = xo + dx - 1
                if 0 <= xi < width:
                    band[dy,
                         (ci * width + xi)[:, None],
                         (co * width + xo)[None, :]] = w[dy, dx]
    return band.reshape(3 * kpad, cout * width)


def _pool_lane_select(ch, width):
    # After pair-max along lanes, select columns c*width + 2k -> c*(width/2)+k.
    wo = width // 2
    sel = np.zeros((ch * width - 1, ch * wo), np.float32)
    for c in range(ch):
        for k in range(wo):
            sel[c * width + 2 * k, c * wo + k] = 1.0
    return sel


def _pool_row_select_batched(batch, h):
    # Batched row down-sample: after pair-max along rows of the [batch*h, ...]
    # tile, select rows b*h + 2k -> b*(h/2) + k (never crosses sample borders).
    ho = h // 2
    sel = np.zeros((batch * ho, batch * h - 1), np.float32)
    for b in range(batch):
        for k in range(ho):
            sel[b * ho + k, b * h + 2 * k] = 1.0
    return sel


def _chan_reduce(ch, width):
    # [1, ch*width] @ R -> per-channel sums;  [1, ch] @ R.T -> planar broadcast.
    r = np.zeros((ch * width, ch), np.float32)
    for c in range(ch):
        r[c * width:(c + 1) * width, c] = 1.0
    return r


# ---------------------------------------------------------------------------
# Fused Pallas kernel
# ---------------------------------------------------------------------------
def _mx(a, b):
    return jnp.dot(a, b, preferred_element_type=jnp.float32)


def simplenet_kernel(
    x_ref,                                                               # [B,28,28] f32
    band1_ref, r1_ref, r1t_ref, gb1_ref, selw1_ref, selh1_ref,           # conv block 1
    band2_ref, r2_ref, r2t_ref, gb2_ref, selw2_ref, selh2_ref,           # conv block 2
    wfc1_ref, gb3_ref, wfc2_ref, gb4_ref, wfc3_ref, gb5_ref,             # FC stack
    out_ref,                                                             # [B,128] f32
    s1_ref, s2_ref, sfc_ref,                                             # VMEM scratch
):
    B = x_ref.shape[0]
    bf16 = jnp.bfloat16

    # Zero the staging scratches once: the lane-padding columns meet zero Band
    # / weight rows in the matmul, so they must not hold garbage (NaN*0=NaN).
    s1_ref[...] = jnp.zeros(s1_ref.shape, jnp.float32)
    s2_ref[...] = jnp.zeros(s2_ref.shape, jnp.float32)
    sfc_ref[...] = jnp.zeros(sfc_ref.shape, jnp.float32)

    def bn2d_relu(y, r_ref, rt_ref, gb_ref, count):
        # Training-mode BatchNorm2d (one-pass biased batch stats, f32) + ReLU,
        # on a batched planar tile [B*H, C*W].
        s = jnp.sum(y, axis=0, keepdims=True)                 # [1, C*W]
        q = jnp.sum(y * y, axis=0, keepdims=True)
        mean = _mx(s, r_ref[...]) * (1.0 / count)             # [1, C]
        msq = _mx(q, r_ref[...]) * (1.0 / count)
        var = msq - mean * mean
        scale = gb_ref[0:1, :] * jax.lax.rsqrt(var + BN_EPS)
        shift = gb_ref[1:2, :] - mean * scale
        scale_p = _mx(scale, rt_ref[...])                     # back to planar lanes
        shift_p = _mx(shift, rt_ref[...])
        return jnp.maximum(y * scale_p + shift_p, 0.0)

    def pool2x2(y, selw_ref, selh_ref):
        # Fused 2x2 max-pool on a batched planar tile [B*H, C*W] -> [B*H/2, C*W/2].
        n = y.shape[1]
        pw = jnp.maximum(y[:, :n - 1], y[:, 1:n]).astype(bf16)   # pair-max along lanes
        pw = _mx(pw, selw_ref[...])                               # stride-2 lane select
        m = pw.shape[0]
        ph = jnp.maximum(pw[:m - 1, :], pw[1:m, :]).astype(bf16)  # pair-max along rows
        return _mx(selh_ref[...], ph)                             # batched row select

    def bn1d_relu(z, gb_ref):
        # Training-mode BatchNorm1d over the batch rows of a [B, 128] tile.
        mean = jnp.sum(z, axis=0, keepdims=True) * (1.0 / B)
        msq = jnp.sum(z * z, axis=0, keepdims=True) * (1.0 / B)
        var = msq - mean * mean
        scale = gb_ref[0:1, :] * jax.lax.rsqrt(var + BN_EPS)
        shift = gb_ref[1:2, :] - mean * scale
        return jnp.maximum(z * scale + shift, 0.0)

    # ---- conv block 1: Conv2d(1,16,3,p=1) + BN2d + ReLU + MaxPool(2) --------
    # Stage the three row-shifted copies (dy = 0,1,2) at 128-aligned lane blocks.
    for b in range(B):
        xb = x_ref[b]                                           # [28, 28] f32
        r0 = b * H1
        s1_ref[r0:r0 + H1, KPAD1:KPAD1 + W1] = xb                       # dy = 1
        s1_ref[r0 + 1:r0 + H1, 0:W1] = xb[0:H1 - 1, :]                  # dy = 0
        s1_ref[r0:r0 + H1 - 1, 2 * KPAD1:2 * KPAD1 + W1] = xb[1:H1, :]  # dy = 2

    c1 = _mx(s1_ref[...].astype(bf16), band1_ref[...])          # [B*28, 448] f32
    y1 = bn2d_relu(c1, r1_ref, r1t_ref, gb1_ref, float(B * H1 * W1))
    p1 = pool2x2(y1, selw1_ref, selh1_ref)                      # [B*14, 224] f32

    # ---- conv block 2: Conv2d(16,32,3,p=1) + BN2d + ReLU + MaxPool(2) -------
    CW2 = C1 * W2                                               # 224
    for b in range(B):
        r0 = b * H2
        pb = p1[r0:r0 + H2, :]                                  # [14, 224]
        s2_ref[r0:r0 + H2, KPAD2:KPAD2 + CW2] = pb                        # dy = 1
        s2_ref[r0 + 1:r0 + H2, 0:CW2] = pb[0:H2 - 1, :]                   # dy = 0
        s2_ref[r0:r0 + H2 - 1, 2 * KPAD2:2 * KPAD2 + CW2] = pb[1:H2, :]   # dy = 2

    c2 = _mx(s2_ref[...].astype(bf16), band2_ref[...])          # [B*14, 448] f32
    y2 = bn2d_relu(c2, r2_ref, r2t_ref, gb2_ref, float(B * H2 * W2))
    p2 = pool2x2(y2, selw2_ref, selh2_ref)                      # [B*7, 224] f32

    # ---- FC stack: (Linear + BN1d + ReLU) x 3, widths padded to 128 lanes ---
    CW3 = C2 * W3                                               # 224
    for b in range(B):
        for h in range(H3):
            sfc_ref[b:b + 1, h * FPAD:h * FPAD + CW3] = \
                p2[b * H3 + h:b * H3 + h + 1, :]

    z = _mx(sfc_ref[...].astype(bf16), wfc1_ref[...])           # [B, 128] f32
    z = bn1d_relu(z, gb3_ref)
    z = _mx(z.astype(bf16), wfc2_ref[...])
    z = bn1d_relu(z, gb4_ref)
    z = _mx(z.astype(bf16), wfc3_ref[...])
    z = bn1d_relu(z, gb5_ref)

    out_ref[...] = z                                            # single [B,128] store


# ---------------------------------------------------------------------------
# Parameters (deterministic, synthetic) and forward wrapper
# ---------------------------------------------------------------------------
def init_params(key, batch):
    ks = jax.random.split(key, 5)

    def dense(k, fan_in, shape):
        return np.asarray(jax.random.normal(k, shape, jnp.float32)) / np.sqrt(
            float(fan_in))

    # Conv/Linear biases omitted on purpose: training-mode BatchNorm's mean
    # subtraction cancels a per-channel constant bias exactly.
    w_conv1 = dense(ks[0], 9 * C0, (3, 3, C0, C1))
    w_conv2 = dense(ks[1], 9 * C1, (3, 3, C1, C2))
    w_fc1 = dense(ks[2], H3 * W3 * C2, (H3 * W3 * C2, 100))
    w_fc2 = dense(ks[3], 100, (100, 28))
    w_fc3 = dense(ks[4], 28, (28, 10))

    # fc1: fold the PyTorch NCHW flatten order (c*49 + h*7 + w) into the rows,
    # reordered to the kernel's staged layout  row = h*FPAD + c*7 + w; pad every
    # FC width to 128 lanes (padded cols: weight 0, gamma 1, beta 0 -> stay 0).
    wfc1p = np.zeros((H3 * FPAD, NFC), np.float32)
    w4 = np.transpose(w_fc1.reshape(C2, H3, W3, 100), (1, 0, 2, 3))  # [h,c,w,n]
    w4 = w4.reshape(H3, C2 * W3, 100)
    for h in range(H3):
        wfc1p[h * FPAD:h * FPAD + C2 * W3, :100] = w4[h]
    wfc2p = np.zeros((NFC, NFC), np.float32)
    wfc2p[:100, :28] = w_fc2
    wfc3p = np.zeros((NFC, NFC), np.float32)
    wfc3p[:28, :10] = w_fc3

    def gb(ch):  # packed [gamma; beta] (PyTorch init: weight=1, bias=0)
        return np.stack(
            [np.ones((ch,), np.float32), np.zeros((ch,), np.float32)])

    bf = jnp.bfloat16
    f32 = jnp.float32
    return {
        # bf16: MXU weight operands (0/1 selection matrices are exact in bf16)
        "band1": jnp.asarray(_conv_band_packed(w_conv1, W1, KPAD1), bf),
        "selw1": jnp.asarray(_pool_lane_select(C1, W1), bf),
        "selh1": jnp.asarray(_pool_row_select_batched(batch, H1), bf),
        "band2": jnp.asarray(_conv_band_packed(w_conv2, W2, KPAD2), bf),
        "selw2": jnp.asarray(_pool_lane_select(C2, W2), bf),
        "selh2": jnp.asarray(_pool_row_select_batched(batch, H2), bf),
        "wfc1": jnp.asarray(wfc1p, bf),
        "wfc2": jnp.asarray(wfc2p, bf),
        "wfc3": jnp.asarray(wfc3p, bf),
        # f32: everything feeding BatchNorm statistics / VPU math
        "r1": jnp.asarray(_chan_reduce(C1, W1), f32),
        "r1t": jnp.asarray(_chan_reduce(C1, W1).T.copy(), f32),
        "gb1": jnp.asarray(gb(C1), f32),
        "r2": jnp.asarray(_chan_reduce(C2, W2), f32),
        "r2t": jnp.asarray(_chan_reduce(C2, W2).T.copy(), f32),
        "gb2": jnp.asarray(gb(C2), f32),
        "gb3": jnp.asarray(gb(NFC), f32),
        "gb4": jnp.asarray(gb(NFC), f32),
        "gb5": jnp.asarray(gb(NFC), f32),
    }


def simple_net_forward(params, x_nchw):
    B = x_nchw.shape[0]
    x = x_nchw.reshape(B, 28, 28).astype(jnp.float32)  # Cin == 1: free reshape

    p = params
    operands = (
        x,
        p["band1"], p["r1"], p["r1t"], p["gb1"], p["selw1"], p["selh1"],
        p["band2"], p["r2"], p["r2t"], p["gb2"], p["selw2"], p["selh2"],
        p["wfc1"], p["gb3"], p["wfc2"], p["gb4"], p["wfc3"], p["gb5"],
    )
    out = pl.pallas_call(
        simplenet_kernel,
        out_shape=jax.ShapeDtypeStruct((B, NFC), jnp.float32),
        in_specs=[pl.BlockSpec(memory_space=pltpu.MemorySpace.VMEM)
                  for _ in operands],
        out_specs=pl.BlockSpec(memory_space=pltpu.MemorySpace.VMEM),
        scratch_shapes=[
            pltpu.VMEM((B * H1, 3 * KPAD1), jnp.float32),   # conv1 staged input
            pltpu.VMEM((B * H2, 3 * KPAD2), jnp.float32),   # conv2 staged input
            pltpu.VMEM((B, H3 * FPAD), jnp.float32),        # fc1 staged input
        ],
    )(*operands)
    return out[:, :10]  # drop the lane padding of the final layer


if __name__ == "__main__":
    key = jax.random.PRNGKey(0)
    k_p, k_x = jax.random.split(key)
    B = 2
    params = init_params(k_p, B)
    # Shapes implied by the module: 1x28x28 inputs (7*7*32 after two 2x2 pools).
    x = jax.random.normal(k_x, (B, 1, 28, 28), jnp.float32)
    y = jax.jit(simple_net_forward)(params, x)
    y = jax.block_until_ready(y)
    assert y.shape == (B, 10) and y.dtype == jnp.float32
    print("KERNEL_OK")
</pallas_src>

<mosaic_0001>
module attributes {stable_mosaic.version = 11 : i64} {
  func.func @simplenet_kernel(%arg0: memref<2x28x28xf32, #tpu.memory_space<vmem>>, %arg1: memref<384x448xbf16, #tpu.memory_space<vmem>>, %arg2: memref<448x16xf32, #tpu.memory_space<vmem>>, %arg3: memref<16x448xf32, #tpu.memory_space<vmem>>, %arg4: memref<2x16xf32, #tpu.memory_space<vmem>>, %arg5: memref<447x224xbf16, #tpu.memory_space<vmem>>, %arg6: memref<28x55xbf16, #tpu.memory_space<vmem>>, %arg7: memref<768x448xbf16, #tpu.memory_space<vmem>>, %arg8: memref<448x32xf32, #tpu.memory_space<vmem>>, %arg9: memref<32x448xf32, #tpu.memory_space<vmem>>, %arg10: memref<2x32xf32, #tpu.memory_space<vmem>>, %arg11: memref<447x224xbf16, #tpu.memory_space<vmem>>, %arg12: memref<14x27xbf16, #tpu.memory_space<vmem>>, %arg13: memref<1792x128xbf16, #tpu.memory_space<vmem>>, %arg14: memref<2x128xf32, #tpu.memory_space<vmem>>, %arg15: memref<128x128xbf16, #tpu.memory_space<vmem>>, %arg16: memref<2x128xf32, #tpu.memory_space<vmem>>, %arg17: memref<128x128xbf16, #tpu.memory_space<vmem>>, %arg18: memref<2x128xf32, #tpu.memory_space<vmem>>, %arg19: memref<2x128xf32, #tpu.memory_space<vmem>>, %arg20: memref<56x384xf32, #tpu.memory_space<vmem>>, %arg21: memref<28x768xf32, #tpu.memory_space<vmem>>, %arg22: memref<2x1792xf32, #tpu.memory_space<vmem>>) attributes {dimension_semantics = [], scalar_prefetch = 0 : i64, scratch_operands = 3 : i64, tpu.core_type = #tpu.core_type<tc>} {
    %cst = arith.constant 0.000000e+00 : f32
    %0 = vector.broadcast %cst : f32 to vector<56x384xf32>
    %c0 = arith.constant 0 : index
    %c0_0 = arith.constant 0 : index
    %1 = vector.load %arg20[%c0, %c0_0] : memref<56x384xf32, #tpu.memory_space<vmem>>, vector<56x384xf32>
    tpu.vector_store %arg20[%c0, %c0_0], %0 {strides = array<i32>} : memref<56x384xf32, #tpu.memory_space<vmem>>, vector<56x384xf32>,
    %cst_1 = arith.constant 0.000000e+00 : f32
    %2 = vector.broadcast %cst_1 : f32 to vector<28x768xf32>
    %c0_2 = arith.constant 0 : index
    %c0_3 = arith.constant 0 : index
    %3 = vector.load %arg21[%c0_2, %c0_3] : memref<28x768xf32, #tpu.memory_space<vmem>>, vector<28x768xf32>
    tpu.vector_store %arg21[%c0_2, %c0_3], %2 {strides = array<i32>} : memref<28x768xf32, #tpu.memory_space<vmem>>, vector<28x768xf32>,
    %cst_4 = arith.constant 0.000000e+00 : f32
    %4 = vector.broadcast %cst_4 : f32 to vector<2x1792xf32>
    %c0_5 = arith.constant 0 : index
    %c0_6 = arith.constant 0 : index
    %5 = vector.load %arg22[%c0_5, %c0_6] : memref<2x1792xf32, #tpu.memory_space<vmem>>, vector<2x1792xf32>
    tpu.vector_store %arg22[%c0_5, %c0_6], %4 {strides = array<i32>} : memref<2x1792xf32, #tpu.memory_space<vmem>>, vector<2x1792xf32>,
    %c0_7 = arith.constant 0 : index
    %c0_8 = arith.constant 0 : index
    %c0_9 = arith.constant 0 : index
    %6 = vector.load %arg0[%c0_7, %c0_8, %c0_9] : memref<2x28x28xf32, #tpu.memory_space<vmem>>, vector<1x28x28xf32>
    %7 = vector.shape_cast %6 : vector<1x28x28xf32> to vector<28x28xf32>
    %c0_10 = arith.constant 0 : index
    %c128 = arith.constant 128 : index
    %8 = vector.load %arg20[%c0_10, %c128] : memref<56x384xf32, #tpu.memory_space<vmem>>, vector<28x28xf32>
    tpu.vector_store %arg20[%c0_10, %c128], %7 {strides = array<i32>} : memref<56x384xf32, #tpu.memory_space<vmem>>, vector<28x28xf32>,
    %9 = vector.extract_strided_slice %7 {offsets = [0, 0], sizes = [27, 28], strides = [1, 1]} : vector<28x28xf32> to vector<27x28xf32>
    %c1 = arith.constant 1 : index
    %c0_11 = arith.constant 0 : index
    %10 = vector.load %arg20[%c1, %c0_11] : memref<56x384xf32, #tpu.memory_space<vmem>>, vector<27x28xf32>
    tpu.vector_store %arg20[%c1, %c0_11], %9 {strides = array<i32>} : memref<56x384xf32, #tpu.memory_space<vmem>>, vector<27x28xf32>,
    %11 = vector.extract_strided_slice %7 {offsets = [1, 0], sizes = [27, 28], strides = [1, 1]} : vector<28x28xf32> to vector<27x28xf32>
    %c0_12 = arith.constant 0 : index
    %c256 = arith.constant 256 : index
    %12 = vector.load %arg20[%c0_12, %c256] : memref<56x384xf32, #tpu.memory_space<vmem>>, vector<27x28xf32>
    tpu.vector_store %arg20[%c0_12, %c256], %11 {strides = array<i32>} : memref<56x384xf32, #tpu.memory_space<vmem>>, vector<27x28xf32>,
    %c1_13 = arith.constant 1 : index
    %c0_14 = arith.constant 0 : index
    %c0_15 = arith.constant 0 : index
    %13 = vector.load %arg0[%c1_13, %c0_14, %c0_15] : memref<2x28x28xf32, #tpu.memory_space<vmem>>, vector<1x28x28xf32>
    %14 = vector.shape_cast %13 : vector<1x28x28xf32> to vector<28x28xf32>
    %c28 = arith.constant 28 : index
    %c128_16 = arith.constant 128 : index
    %15 = vector.load %arg20[%c28, %c128_16] : memref<56x384xf32, #tpu.memory_space<vmem>>, vector<28x28xf32>
    tpu.vector_store %arg20[%c28, %c128_16], %14 {strides = array<i32>} : memref<56x384xf32, #tpu.memory_space<vmem>>, vector<28x28xf32>,
    %16 = vector.extract_strided_slice %14 {offsets = [0, 0], sizes = [27, 28], strides = [1, 1]} : vector<28x28xf32> to vector<27x28xf32>
    %c29 = arith.constant 29 : index
    %c0_17 = arith.constant 0 : index
    %17 = vector.load %arg20[%c29, %c0_17] : memref<56x384xf32, #tpu.memory_space<vmem>>, vector<27x28xf32>
    tpu.vector_store %arg20[%c29, %c0_17], %16 {strides = array<i32>} : memref<56x384xf32, #tpu.memory_space<vmem>>, vector<27x28xf32>,
    %18 = vector.extract_strided_slice %14 {offsets = [1, 0], sizes = [27, 28], strides = [1, 1]} : vector<28x28xf32> to vector<27x28xf32>
    %c28_18 = arith.constant 28 : index
    %c256_19 = arith.constant 256 : index
    %19 = vector.load %arg20[%c28_18, %c256_19] : memref<56x384xf32, #tpu.memory_space<vmem>>, vector<27x28xf32>
    tpu.vector_store %arg20[%c28_18, %c256_19], %18 {strides = array<i32>} : memref<56x384xf32, #tpu.memory_space<vmem>>, vector<27x28xf32>,
    %c0_20 = arith.constant 0 : index
    %c0_21 = arith.constant 0 : index
    %20 = vector.load %arg20[%c0_20, %c0_21] : memref<56x384xf32, #tpu.memory_space<vmem>>, vector<56x384xf32>
    %21 = arith.truncf %20 : vector<56x384xf32> to vector<56x384xbf16>
    %c0_22 = arith.constant 0 : index
    %c0_23 = arith.constant 0 : index
    %22 = vector.load %arg1[%c0_22, %c0_23] : memref<384x448xbf16, #tpu.memory_space<vmem>>, vector<384x448xbf16>
    %cst_24 = arith.constant dense<0.000000e+00> : vector<56x448xf32>
    %23 = tpu.matmul %21, %22, %cst_24 {dimension_numbers = #tpu.dot_dimension_numbers<[1], [0], [0], [1], [0, 0, 1, 1], [], []>} : vector<56x384xbf16>, vector<384x448xbf16>, vector<56x448xf32> -> vector<56x448xf32>
    %cst_25 = arith.constant dense<0.000000e+00> : vector<448xf32>
    %24 = vector.multi_reduction <add>, %23, %cst_25 [0] : vector<56x448xf32> to vector<448xf32>
    %25 = vector.shape_cast %24 : vector<448xf32> to vector<1x448xf32>
    %26 = arith.mulf %23, %23 : vector<56x448xf32>
    %cst_26 = arith.constant dense<0.000000e+00> : vector<448xf32>
    %27 = vector.multi_reduction <add>, %26, %cst_26 [0] : vector<56x448xf32> to vector<448xf32>
    %28 = vector.shape_cast %27 : vector<448xf32> to vector<1x448xf32>
    %c0_27 = arith.constant 0 : index
    %c0_28 = arith.constant 0 : index
    %29 = vector.load %arg2[%c0_27, %c0_28] : memref<448x16xf32, #tpu.memory_space<vmem>>, vector<448x16xf32>
    %cst_29 = arith.constant dense<0.000000e+00> : vector<1x16xf32>
    %30 = tpu.matmul %25, %29, %cst_29 {dimension_numbers = #tpu.dot_dimension_numbers<[1], [0], [0], [1], [0, 0, 1, 1], [], []>} : vector<1x448xf32>, vector<448x16xf32>, vector<1x16xf32> -> vector<1x16xf32>
    %cst_30 = arith.constant 6.37755089E-4 : f32
    %31 = vector.broadcast %cst_30 : f32 to vector<1x16xf32>
    %32 = arith.mulf %30, %31 : vector<1x16xf32>
    %c0_31 = arith.constant 0 : index
    %c0_32 = arith.constant 0 : index
    %33 = vector.load %arg2[%c0_31, %c0_32] : memref<448x16xf32, #tpu.memory_space<vmem>>, vector<448x16xf32>
    %cst_33 = arith.constant dense<0.000000e+00> : vector<1x16xf32>
    %34 = tpu.matmul %28, %33, %cst_33 {dimension_numbers = #tpu.dot_dimension_numbers<[1], [0], [0], [1], [0, 0, 1, 1], [], []>} : vector<1x448xf32>, vector<448x16xf32>, vector<1x16xf32> -> vector<1x16xf32>
    %cst_34 = arith.constant 6.37755089E-4 : f32
    %35 = vector.broadcast %cst_34 : f32 to vector<1x16xf32>
    %36 = arith.mulf %34, %35 : vector<1x16xf32>
    %37 = arith.mulf %32, %32 : vector<1x16xf32>
    %38 = arith.subf %36, %37 : vector<1x16xf32>
    %c0_35 = arith.constant 0 : index
    %c0_36 = arith.constant 0 : index
    %39 = vector.load %arg4[%c0_35, %c0_36] : memref<2x16xf32, #tpu.memory_space<vmem>>, vector<1x16xf32>
    %cst_37 = arith.constant 9.99999974E-6 : f32
    %40 = vector.broadcast %cst_37 : f32 to vector<1x16xf32>
    %41 = arith.addf %38, %40 : vector<1x16xf32>
    %42 = math.rsqrt %41 : vector<1x16xf32>
    %43 = arith.mulf %39, %42 : vector<1x16xf32>
    %c1_38 = arith.constant 1 : index
    %c0_39 = arith.constant 0 : index
    %44 = vector.load %arg4[%c1_38, %c0_39] : memref<2x16xf32, #tpu.memory_space<vmem>>, vector<1x16xf32>
    %45 = arith.mulf %32, %43 : vector<1x16xf32>
    %46 = arith.subf %44, %45 : vector<1x16xf32>
    %c0_40 = arith.constant 0 : index
    %c0_41 = arith.constant 0 : index
    %47 = vector.load %arg3[%c0_40, %c0_41] : memref<16x448xf32, #tpu.memory_space<vmem>>, vector<16x448xf32>
    %cst_42 = arith.constant dense<0.000000e+00> : vector<1x448xf32>
    %48 = tpu.matmul %43, %47, %cst_42 {dimension_numbers = #tpu.dot_dimension_numbers<[1], [0], [0], [1], [0, 0, 1, 1], [], []>} : vector<1x16xf32>, vector<16x448xf32>, vector<1x448xf32> -> vector<1x448xf32>
    %c0_43 = arith.constant 0 : index
    %c0_44 = arith.constant 0 : index
    %49 = vector.load %arg3[%c0_43, %c0_44] : memref<16x448xf32, #tpu.memory_space<vmem>>, vector<16x448xf32>
    %cst_45 = arith.constant dense<0.000000e+00> : vector<1x448xf32>
    %50 = tpu.matmul %46, %49, %cst_45 {dimension_numbers = #tpu.dot_dimension_numbers<[1], [0], [0], [1], [0, 0, 1, 1], [], []>} : vector<1x16xf32>, vector<16x448xf32>, vector<1x448xf32> -> vector<1x448xf32>
    %51 = vector.broadcast %48 : vector<1x448xf32> to vector<56x448xf32>
    %52 = arith.mulf %23, %51 : vector<56x448xf32>
    %53 = vector.broadcast %50 : vector<1x448xf32> to vector<56x448xf32>
    %54 = arith.addf %52, %53 : vector<56x448xf32>
    %cst_46 = arith.constant 0.000000e+00 : f32
    %55 = vector.broadcast %cst_46 : f32 to vector<56x448xf32>
    %56 = arith.maximumf %54, %55 : vector<56x448xf32>
    %57 = vector.extract_strided_slice %56 {offsets = [0, 0], sizes = [56, 447], strides = [1, 1]} : vector<56x448xf32> to vector<56x447xf32>
    %58 = vector.extract_strided_slice %56 {offsets = [0, 1], sizes = [56, 447], strides = [1, 1]} : vector<56x448xf32> to vector<56x447xf32>
    %59 = arith.maximumf %57, %58 : vector<56x447xf32>
    %60 = arith.truncf %59 : vector<56x447xf32> to vector<56x447xbf16>
    %c0_47 = arith.constant 0 : index
    %c0_48 = arith.constant 0 : index
    %61 = vector.load %arg5[%c0_47, %c0_48] : memref<447x224xbf16, #tpu.memory_space<vmem>>, vector<447x224xbf16>
    %cst_49 = arith.constant dense<0.000000e+00> : vector<56x224xf32>
    %62 = tpu.matmul %60, %61, %cst_49 {dimension_numbers = #tpu.dot_dimension_numbers<[1], [0], [0], [1], [0, 0, 1, 1], [], []>} : vector<56x447xbf16>, vector<447x224xbf16>, vector<56x224xf32> -> vector<56x224xf32>
    %63 = vector.extract_strided_slice %62 {offsets = [0, 0], sizes = [55, 224], strides = [1, 1]} : vector<56x224xf32> to vector<55x224xf32>
    %64 = vector.extract_strided_slice %62 {offsets = [1, 0], sizes = [55, 224], strides = [1, 1]} : vector<56x224xf32> to vector<55x224xf32>
    %65 = arith.maximumf %63, %64 : vector<55x224xf32>
    %66 = arith.truncf %65 : vector<55x224xf32> to vector<55x224xbf16>
    %c0_50 = arith.constant 0 : index
    %c0_51 = arith.constant 0 : index
    %67 = vector.load %arg6[%c0_50, %c0_51] : memref<28x55xbf16, #tpu.memory_space<vmem>>, vector<28x55xbf16>
    %cst_52 = arith.constant dense<0.000000e+00> : vector<28x224xf32>
    %68 = tpu.matmul %67, %66, %cst_52 {dimension_numbers = #tpu.dot_dimension_numbers<[1], [0], [0], [1], [0, 0, 1, 1], [], []>} : vector<28x55xbf16>, vector<55x224xbf16>, vector<28x224xf32> -> vector<28x224xf32>
    %69 = vector.extract_strided_slice %68 {offsets = [0, 0], sizes = [14, 224], strides = [1, 1]} : vector<28x224xf32> to vector<14x224xf32>
    %c0_53 = arith.constant 0 : index
    %c256_54 = arith.constant 256 : index
    %70 = vector.load %arg21[%c0_53, %c256_54] : memref<28x768xf32, #tpu.memory_space<vmem>>, vector<14x224xf32>
    tpu.vector_store %arg21[%c0_53, %c256_54], %69 {strides = array<i32>} : memref<28x768xf32, #tpu.memory_space<vmem>>, vector<14x224xf32>,
    %71 = vector.extract_strided_slice %69 {offsets = [0, 0], sizes = [13, 224], strides = [1, 1]} : vector<14x224xf32> to vector<13x224xf32>
    %c1_55 = arith.constant 1 : index
    %c0_56 = arith.constant 0 : index
    %72 = vector.load %arg21[%c1_55, %c0_56] : memref<28x768xf32, #tpu.memory_space<vmem>>, vector<13x224xf32>
    tpu.vector_store %arg21[%c1_55, %c0_56], %71 {strides = array<i32>} : memref<28x768xf32, #tpu.memory_space<vmem>>, vector<13x224xf32>,
    %73 = vector.extract_strided_slice %69 {offsets = [1, 0], sizes = [13, 224], strides = [1, 1]} : vector<14x224xf32> to vector<13x224xf32>
    %c0_57 = arith.constant 0 : index
    %c512 = arith.constant 512 : index
    %74 = vector.load %arg21[%c0_57, %c512] : memref<28x768xf32, #tpu.memory_space<vmem>>, vector<13x224xf32>
    tpu.vector_store %arg21[%c0_57, %c512], %73 {strides = array<i32>} : memref<28x768xf32, #tpu.memory_space<vmem>>, vector<13x224xf32>,
    %75 = vector.extract_strided_slice %68 {offsets = [14, 0], sizes = [14, 224], strides = [1, 1]} : vector<28x224xf32> to vector<14x224xf32>
    %c14 = arith.constant 14 : index
    %c256_58 = arith.constant 256 : index
    %76 = vector.load %arg21[%c14, %c256_58] : memref<28x768xf32, #tpu.memory_space<vmem>>, vector<14x224xf32>
    tpu.vector_store %arg21[%c14, %c256_58], %75 {strides = array<i32>} : memref<28x768xf32, #tpu.memory_space<vmem>>, vector<14x224xf32>,
    %77 = vector.extract_strided_slice %75 {offsets = [0, 0], sizes = [13, 224], strides = [1, 1]} : vector<14x224xf32> to vector<13x224xf32>
    %c15 = arith.constant 15 : index
    %c0_59 = arith.constant 0 : index
    %78 = vector.load %arg21[%c15, %c0_59] : memref<28x768xf32, #tpu.memory_space<vmem>>, vector<13x224xf32>
    tpu.vector_store %arg21[%c15, %c0_59], %77 {strides = array<i32>} : memref<28x768xf32, #tpu.memory_space<vmem>>, vector<13x224xf32>,
    %79 = vector.extract_strided_slice %75 {offsets = [1, 0], sizes = [13, 224], strides = [1, 1]} : vector<14x224xf32> to vector<13x224xf32>
    %c14_60 = arith.constant 14 : index
    %c512_61 = arith.constant 512 : index
    %80 = vector.load %arg21[%c14_60, %c512_61] : memref<28x768xf32, #tpu.memory_space<vmem>>, vector<13x224xf32>
    tpu.vector_store %arg21[%c14_60, %c512_61], %79 {strides = array<i32>} : memref<28x768xf32, #tpu.memory_space<vmem>>, vector<13x224xf32>,
    %c0_62 = arith.constant 0 : index
    %c0_63 = arith.constant 0 : index
    %81 = vector.load %arg21[%c0_62, %c0_63] : memref<28x768xf32, #tpu.memory_space<vmem>>, vector<28x768xf32>
    %82 = arith.truncf %81 : vector<28x768xf32> to vector<28x768xbf16>
    %c0_64 = arith.constant 0 : index
    %c0_65 = arith.constant 0 : index
    %83 = vector.load %arg7[%c0_64, %c0_65] : memref<768x448xbf16, #tpu.memory_space<vmem>>, vector<768x448xbf16>
    %cst_66 = arith.constant dense<0.000000e+00> : vector<28x448xf32>
    %84 = tpu.matmul %82, %83, %cst_66 {dimension_numbers = #tpu.dot_dimension_numbers<[1], [0], [0], [1], [0, 0, 1, 1], [], []>} : vector<28x768xbf16>, vector<768x448xbf16>, vector<28x448xf32> -> vector<28x448xf32>
    %cst_67 = arith.constant dense<0.000000e+00> : vector<448xf32>
    %85 = vector.multi_reduction <add>, %84, %cst_67 [0] : vector<28x448xf32> to vector<448xf32>
    %86 = vector.shape_cast %85 : vector<448xf32> to vector<1x448xf32>
    %87 = arith.mulf %84, %84 : vector<28x448xf32>
    %cst_68 = arith.constant dense<0.000000e+00> : vector<448xf32>
    %88 = vector.multi_reduction <add>, %87, %cst_68 [0] : vector<28x448xf32> to vector<448xf32>
    %89 = vector.shape_cast %88 : vector<448xf32> to vector<1x448xf32>
    %c0_69 = arith.constant 0 : index
    %c0_70 = arith.constant 0 : index
    %90 = vector.load %arg8[%c0_69, %c0_70] : memref<448x32xf32, #tpu.memory_space<vmem>>, vector<448x32xf32>
    %cst_71 = arith.constant dense<0.000000e+00> : vector<1x32xf32>
    %91 = tpu.matmul %86, %90, %cst_71 {dimension_numbers = #tpu.dot_dimension_numbers<[1], [0], [0], [1], [0, 0, 1, 1], [], []>} : vector<1x448xf32>, vector<448x32xf32>, vector<1x32xf32> -> vector<1x32xf32>
    %cst_72 = arith.constant 0.00255102036 : f32
    %92 = vector.broadcast %cst_72 : f32 to vector<1x32xf32>
    %93 = arith.mulf %91, %92 : vector<1x32xf32>
    %c0_73 = arith.constant 0 : index
    %c0_74 = arith.constant 0 : index
    %94 = vector.load %arg8[%c0_73, %c0_74] : memref<448x32xf32, #tpu.memory_space<vmem>>, vector<448x32xf32>
    %cst_75 = arith.constant dense<0.000000e+00> : vector<1x32xf32>
    %95 = tpu.matmul %89, %94, %cst_75 {dimension_numbers = #tpu.dot_dimension_numbers<[1], [0], [0], [1], [0, 0, 1, 1], [], []>} : vector<1x448xf32>, vector<448x32xf32>, vector<1x32xf32> -> vector<1x32xf32>
    %cst_76 = arith.constant 0.00255102036 : f32
    %96 = vector.broadcast %cst_76 : f32 to vector<1x32xf32>
    %97 = arith.mulf %95, %96 : vector<1x32xf32>
    %98 = arith.mulf %93, %93 : vector<1x32xf32>
    %99 = arith.subf %97, %98 : vector<1x32xf32>
    %c0_77 = arith.constant 0 : index
    %c0_78 = arith.constant 0 : index
    %100 = vector.load %arg10[%c0_77, %c0_78] : memref<2x32xf32, #tpu.memory_space<vmem>>, vector<1x32xf32>
    %cst_79 = arith.constant 9.99999974E-6 : f32
    %101 = vector.broadcast %cst_79 : f32 to vector<1x32xf32>
    %102 = arith.addf %99, %101 : vector<1x32xf32>
    %103 = math.rsqrt %102 : vector<1x32xf32>
    %104 = arith.mulf %100, %103 : vector<1x32xf32>
    %c1_80 = arith.constant 1 : index
    %c0_81 = arith.constant 0 : index
    %105 = vector.load %arg10[%c1_80, %c0_81] : memref<2x32xf32, #tpu.memory_space<vmem>>, vector<1x32xf32>
    %106 = arith.mulf %93, %104 : vector<1x32xf32>
    %107 = arith.subf %105, %106 : vector<1x32xf32>
    %c0_82 = arith.constant 0 : index
    %c0_83 = arith.constant 0 : index
    %108 = vector.load %arg9[%c0_82, %c0_83] : memref<32x448xf32, #tpu.memory_space<vmem>>, vector<32x448xf32>
    %cst_84 = arith.constant dense<0.000000e+00> : vector<1x448xf32>
    %109 = tpu.matmul %104, %108, %cst_84 {dimension_numbers = #tpu.dot_dimension_numbers<[1], [0], [0], [1], [0, 0, 1, 1], [], []>} : vector<1x32xf32>, vector<32x448xf32>, vector<1x448xf32> -> vector<1x448xf32>
    %c0_85 = arith.constant 0 : index
    %c0_86 = arith.constant 0 : index
    %110 = vector.load %arg9[%c0_85, %c0_86] : memref<32x448xf32, #tpu.memory_space<vmem>>, vector<32x448xf32>
    %cst_87 = arith.constant dense<0.000000e+00> : vector<1x448xf32>
    %111 = tpu.matmul %107, %110, %cst_87 {dimension_numbers = #tpu.dot_dimension_numbers<[1], [0], [0], [1], [0, 0, 1, 1], [], []>} : vector<1x32xf32>, vector<32x448xf32>, vector<1x448xf32> -> vector<1x448xf32>
    %112 = vector.broadcast %109 : vector<1x448xf32> to vector<28x448xf32>
    %113 = arith.mulf %84, %112 : vector<28x448xf32>
    %114 = vector.broadcast %111 : vector<1x448xf32> to vector<28x448xf32>
    %115 = arith.addf %113, %114 : vector<28x448xf32>
    %cst_88 = arith.constant 0.000000e+00 : f32
    %116 = vector.broadcast %cst_88 : f32 to vector<28x448xf32>
    %117 = arith.maximumf %115, %116 : vector<28x448xf32>
    %118 = vector.extract_strided_slice %117 {offsets = [0, 0], sizes = [28, 447], strides = [1, 1]} : vector<28x448xf32> to vector<28x447xf32>
    %119 = vector.extract_strided_slice %117 {offsets = [0, 1], sizes = [28, 447], strides = [1, 1]} : vector<28x448xf32> to vector<28x447xf32>
    %120 = arith.maximumf %118, %119 : vector<28x447xf32>
    %121 = arith.truncf %120 : vector<28x447xf32> to vector<28x447xbf16>
    %c0_89 = arith.constant 0 : index
    %c0_90 = arith.constant 0 : index
    %122 = vector.load %arg11[%c0_89, %c0_90] : memref<447x224xbf16, #tpu.memory_space<vmem>>, vector<447x224xbf16>
    %cst_91 = arith.constant dense<0.000000e+00> : vector<28x224xf32>
    %123 = tpu.matmul %121, %122, %cst_91 {dimension_numbers = #tpu.dot_dimension_numbers<[1], [0], [0], [1], [0, 0, 1, 1], [], []>} : vector<28x447xbf16>, vector<447x224xbf16>, vector<28x224xf32> -> vector<28x224xf32>
    %124 = vector.extract_strided_slice %123 {offsets = [0, 0], sizes = [27, 224], strides = [1, 1]} : vector<28x224xf32> to vector<27x224xf32>
    %125 = vector.extract_strided_slice %123 {offsets = [1, 0], sizes = [27, 224], strides = [1, 1]} : vector<28x224xf32> to vector<27x224xf32>
    %126 = arith.maximumf %124, %125 : vector<27x224xf32>
    %127 = arith.truncf %126 : vector<27x224xf32> to vector<27x224xbf16>
    %c0_92 = arith.constant 0 : index
    %c0_93 = arith.constant 0 : index
    %128 = vector.load %arg12[%c0_92, %c0_93] : memref<14x27xbf16, #tpu.memory_space<vmem>>, vector<14x27xbf16>
    %cst_94 = arith.constant dense<0.000000e+00> : vector<14x224xf32>
    %129 = tpu.matmul %128, %127, %cst_94 {dimension_numbers = #tpu.dot_dimension_numbers<[1], [0], [0], [1], [0, 0, 1, 1], [], []>} : vector<14x27xbf16>, vector<27x224xbf16>, vector<14x224xf32> -> vector<14x224xf32>
    %130 = vector.extract_strided_slice %129 {offsets = [0, 0], sizes = [1, 224], strides = [1, 1]} : vector<14x224xf32> to vector<1x224xf32>
    %c0_95 = arith.constant 0 : index
    %c0_96 = arith.constant 0 : index
    %131 = vector.load %arg22[%c0_95, %c0_96] : memref<2x1792xf32, #tpu.memory_space<vmem>>, vector<1x224xf32>
    tpu.vector_store %arg22[%c0_95, %c0_96], %130 {strides = array<i32>} : memref<2x1792xf32, #tpu.memory_space<vmem>>, vector<1x224xf32>,
    %132 = vector.extract_strided_slice %129 {offsets = [1, 0], sizes = [1, 224], strides = [1, 1]} : vector<14x224xf32> to vector<1x224xf32>
    %c0_97 = arith.constant 0 : index
    %c256_98 = arith.constant 256 : index
    %133 = vector.load %arg22[%c0_97, %c256_98] : memref<2x1792xf32, #tpu.memory_space<vmem>>, vector<1x224xf32>
    tpu.vector_store %arg22[%c0_97, %c256_98], %132 {strides = array<i32>} : memref<2x1792xf32, #tpu.memory_space<vmem>>, vector<1x224xf32>,
    %134 = vector.extract_strided_slice %129 {offsets = [2, 0], sizes = [1, 224], strides = [1, 1]} : vector<14x224xf32> to vector<1x224xf32>
    %c0_99 = arith.constant 0 : index
    %c512_100 = arith.constant 512 : index
    %135 = vector.load %arg22[%c0_99, %c512_100] : memref<2x1792xf32, #tpu.memory_space<vmem>>, vector<1x224xf32>
    tpu.vector_store %arg22[%c0_99, %c512_100], %134 {strides = array<i32>} : memref<2x1792xf32, #tpu.memory_space<vmem>>, vector<1x224xf32>,
    %136 = vector.extract_strided_slice %129 {offsets = [3, 0], sizes = [1, 224], strides = [1, 1]} : vector<14x224xf32> to vector<1x224xf32>
    %c0_101 = arith.constant 0 : index
    %c768 = arith.constant 768 : index
    %137 = vector.load %arg22[%c0_101, %c768] : memref<2x1792xf32, #tpu.memory_space<vmem>>, vector<1x224xf32>
    tpu.vector_store %arg22[%c0_101, %c768], %136 {strides = array<i32>} : memref<2x1792xf32, #tpu.memory_space<vmem>>, vector<1x224xf32>,
    %138 = vector.extract_strided_slice %129 {offsets = [4, 0], sizes = [1, 224], strides = [1, 1]} : vector<14x224xf32> to vector<1x224xf32>
    %c0_102 = arith.constant 0 : index
    %c1024 = arith.constant 1024 : index
    %139 = vector.load %arg22[%c0_102, %c1024] : memref<2x1792xf32, #tpu.memory_space<vmem>>, vector<1x224xf32>
    tpu.vector_store %arg22[%c0_102, %c1024], %138 {strides = array<i32>} : memref<2x1792xf32, #tpu.memory_space<vmem>>, vector<1x224xf32>,
    %140 = vector.extract_strided_slice %129 {offsets = [5, 0], sizes = [1, 224], strides = [1, 1]} : vector<14x224xf32> to vector<1x224xf32>
    %c0_103 = arith.constant 0 : index
    %c1280 = arith.constant 1280 : index
    %141 = vector.load %arg22[%c0_103, %c1280] : memref<2x1792xf32, #tpu.memory_space<vmem>>, vector<1x224xf32>
    tpu.vector_store %arg22[%c0_103, %c1280], %140 {strides = array<i32>} : memref<2x1792xf32, #tpu.memory_space<vmem>>, vector<1x224xf32>,
    %142 = vector.extract_strided_slice %129 {offsets = [6, 0], sizes = [1, 224], strides = [1, 1]} : vector<14x224xf32> to vector<1x224xf32>
    %c0_104 = arith.constant 0 : index
    %c1536 = arith.constant 1536 : index
    %143 = vector.load %arg22[%c0_104, %c1536] : memref<2x1792xf32, #tpu.memory_space<vmem>>, vector<1x224xf32>
    tpu.vector_store %arg22[%c0_104, %c1536], %142 {strides = array<i32>} : memref<2x1792xf32, #tpu.memory_space<vmem>>, vector<1x224xf32>,
    %144 = vector.extract_strided_slice %129 {offsets = [7, 0], sizes = [1, 224], strides = [1, 1]} : vector<14x224xf32> to vector<1x224xf32>
    %c1_105 = arith.constant 1 : index
    %c0_106 = arith.constant 0 : index
    %145 = vector.load %arg22[%c1_105, %c0_106] : memref<2x1792xf32, #tpu.memory_space<vmem>>, vector<1x224xf32>
    tpu.vector_store %arg22[%c1_105, %c0_106], %144 {strides = array<i32>} : memref<2x1792xf32, #tpu.memory_space<vmem>>, vector<1x224xf32>,
    %146 = vector.extract_strided_slice %129 {offsets = [8, 0], sizes = [1, 224], strides = [1, 1]} : vector<14x224xf32> to vector<1x224xf32>
    %c1_107 = arith.constant 1 : index
    %c256_108 = arith.constant 256 : index
    %147 = vector.load %arg22[%c1_107, %c256_108] : memref<2x1792xf32, #tpu.memory_space<vmem>>, vector<1x224xf32>
    tpu.vector_store %arg22[%c1_107, %c256_108], %146 {strides = array<i32>} : memref<2x1792xf32, #tpu.memory_space<vmem>>, vector<1x224xf32>,
    %148 = vector.extract_strided_slice %129 {offsets = [9, 0], sizes = [1, 224], strides = [1, 1]} : vector<14x224xf32> to vector<1x224xf32>
    %c1_109 = arith.constant 1 : index
    %c512_110 = arith.constant 512 : index
    %149 = vector.load %arg22[%c1_109, %c512_110] : memref<2x1792xf32, #tpu.memory_space<vmem>>, vector<1x224xf32>
    tpu.vector_store %arg22[%c1_109, %c512_110], %148 {strides = array<i32>} : memref<2x1792xf32, #tpu.memory_space<vmem>>, vector<1x224xf32>,
    %150 = vector.extract_strided_slice %129 {offsets = [10, 0], sizes = [1, 224], strides = [1, 1]} : vector<14x224xf32> to vector<1x224xf32>
    %c1_111 = arith.constant 1 : index
    %c768_112 = arith.constant 768 : index
    %151 = vector.load %arg22[%c1_111, %c768_112] : memref<2x1792xf32, #tpu.memory_space<vmem>>, vector<1x224xf32>
    tpu.vector_store %arg22[%c1_111, %c768_112], %150 {strides = array<i32>} : memref<2x1792xf32, #tpu.memory_space<vmem>>, vector<1x224xf32>,
    %152 = vector.extract_strided_slice %129 {offsets = [11, 0], sizes = [1, 224], strides = [1, 1]} : vector<14x224xf32> to vector<1x224xf32>
    %c1_113 = arith.constant 1 : index
    %c1024_114 = arith.constant 1024 : index
    %153 = vector.load %arg22[%c1_113, %c1024_114] : memref<2x1792xf32, #tpu.memory_space<vmem>>, vector<1x224xf32>
    tpu.vector_store %arg22[%c1_113, %c1024_114], %152 {strides = array<i32>} : memref<2x1792xf32, #tpu.memory_space<vmem>>, vector<1x224xf32>,
    %154 = vector.extract_strided_slice %129 {offsets = [12, 0], sizes = [1, 224], strides = [1, 1]} : vector<14x224xf32> to vector<1x224xf32>
    %c1_115 = arith.constant 1 : index
    %c1280_116 = arith.constant 1280 : index
    %155 = vector.load %arg22[%c1_115, %c1280_116] : memref<2x1792xf32, #tpu.memory_space<vmem>>, vector<1x224xf32>
    tpu.vector_store %arg22[%c1_115, %c1280_116], %154 {strides = array<i32>} : memref<2x1792xf32, #tpu.memory_space<vmem>>, vector<1x224xf32>,
    %156 = vector.extract_strided_slice %129 {offsets = [13, 0], sizes = [1, 224], strides = [1, 1]} : vector<14x224xf32> to vector<1x224xf32>
    %c1_117 = arith.constant 1 : index
    %c1536_118 = arith.constant 1536 : index
    %157 = vector.load %arg22[%c1_117, %c1536_118] : memref<2x1792xf32, #tpu.memory_space<vmem>>, vector<1x224xf32>
    tpu.vector_store %arg22[%c1_117, %c1536_118], %156 {strides = array<i32>} : memref<2x1792xf32, #tpu.memory_space<vmem>>, vector<1x224xf32>,
    %c0_119 = arith.constant 0 : index
    %c0_120 = arith.constant 0 : index
    %158 = vector.load %arg22[%c0_119, %c0_120] : memref<2x1792xf32, #tpu.memory_space<vmem>>, vector<2x1792xf32>
    %159 = arith.truncf %158 : vector<2x1792xf32> to vector<2x1792xbf16>
    %c0_121 = arith.constant 0 : index
    %c0_122 = arith.constant 0 : index
    %160 = vector.load %arg13[%c0_121, %c0_122] : memref<1792x128xbf16, #tpu.memory_space<vmem>>, vector<1792x128xbf16>
    %cst_123 = arith.constant dense<0.000000e+00> : vector<2x128xf32>
    %161 = tpu.matmul %159, %160, %cst_123 {dimension_numbers = #tpu.dot_dimension_numbers<[1], [0], [0], [1], [0, 0, 1, 1], [], []>} : vector<2x1792xbf16>, vector<1792x128xbf16>, vector<2x128xf32> -> vector<2x128xf32>
    %cst_124 = arith.constant dense<0.000000e+00> : vector<128xf32>
    %162 = vector.multi_reduction <add>, %161, %cst_124 [0] : vector<2x128xf32> to vector<128xf32>
    %163 = vector.shape_cast %162 : vector<128xf32> to vector<1x128xf32>
    %cst_125 = arith.constant 5.000000e-01 : f32
    %164 = vector.broadcast %cst_125 : f32 to vector<1x128xf32>
    %165 = arith.mulf %163, %164 : vector<1x128xf32>
    %166 = arith.mulf %161, %161 : vector<2x128xf32>
    %cst_126 = arith.constant dense<0.000000e+00> : vector<128xf32>
    %167 = vector.multi_reduction <add>, %166, %cst_126 [0] : vector<2x128xf32> to vector<128xf32>
    %168 = vector.shape_cast %167 : vector<128xf32> to vector<1x128xf32>
    %cst_127 = arith.constant 5.000000e-01 : f32
    %169 = vector.broadcast %cst_127 : f32 to vector<1x128xf32>
    %170 = arith.mulf %168, %169 : vector<1x128xf32>
    %171 = arith.mulf %165, %165 : vector<1x128xf32>
    %172 = arith.subf %170, %171 : vector<1x128xf32>
    %c0_128 = arith.constant 0 : index
    %c0_129 = arith.constant 0 : index
    %173 = vector.load %arg14[%c0_128, %c0_129] : memref<2x128xf32, #tpu.memory_space<vmem>>, vector<1x128xf32>
    %cst_130 = arith.constant 9.99999974E-6 : f32
    %174 = vector.broadcast %cst_130 : f32 to vector<1x128xf32>
    %175 = arith.addf %172, %174 : vector<1x128xf32>
    %176 = math.rsqrt %175 : vector<1x128xf32>
    %177 = arith.mulf %173, %176 : vector<1x128xf32>
    %c1_131 = arith.constant 1 : index
    %c0_132 = arith.constant 0 : index
    %178 = vector.load %arg14[%c1_131, %c0_132] : memref<2x128xf32, #tpu.memory_space<vmem>>, vector<1x128xf32>
    %179 = arith.mulf %165, %177 : vector<1x128xf32>
    %180 = arith.subf %178, %179 : vector<1x128xf32>
    %181 = vector.broadcast %177 : vector<1x128xf32> to vector<2x128xf32>
    %182 = arith.mulf %161, %181 : vector<2x128xf32>
    %183 = vector.broadcast %180 : vector<1x128xf32> to vector<2x128xf32>
    %184 = arith.addf %182, %183 : vector<2x128xf32>
    %cst_133 = arith.constant 0.000000e+00 : f32
    %185 = vector.broadcast %cst_133 : f32 to vector<2x128xf32>
    %186 = arith.maximumf %184, %185 : vector<2x128xf32>
    %187 = arith.truncf %186 : vector<2x128xf32> to vector<2x128xbf16>
    %c0_134 = arith.constant 0 : index
    %c0_135 = arith.constant 0 : index
    %188 = vector.load %arg15[%c0_134, %c0_135] : memref<128x128xbf16, #tpu.memory_space<vmem>>, vector<128x128xbf16>
    %cst_136 = arith.constant dense<0.000000e+00> : vector<2x128xf32>
    %189 = tpu.matmul %187, %188, %cst_136 {dimension_numbers = #tpu.dot_dimension_numbers<[1], [0], [0], [1], [0, 0, 1, 1], [], []>} : vector<2x128xbf16>, vector<128x128xbf16>, vector<2x128xf32> -> vector<2x128xf32>
    %cst_137 = arith.constant dense<0.000000e+00> : vector<128xf32>
    %190 = vector.multi_reduction <add>, %189, %cst_137 [0] : vector<2x128xf32> to vector<128xf32>
    %191 = vector.shape_cast %190 : vector<128xf32> to vector<1x128xf32>
    %cst_138 = arith.constant 5.000000e-01 : f32
    %192 = vector.broadcast %cst_138 : f32 to vector<1x128xf32>
    %193 = arith.mulf %191, %192 : vector<1x128xf32>
    %194 = arith.mulf %189, %189 : vector<2x128xf32>
    %cst_139 = arith.constant dense<0.000000e+00> : vector<128xf32>
    %195 = vector.multi_reduction <add>, %194, %cst_139 [0] : vector<2x128xf32> to vector<128xf32>
    %196 = vector.shape_cast %195 : vector<128xf32> to vector<1x128xf32>
    %cst_140 = arith.constant 5.000000e-01 : f32
    %197 = vector.broadcast %cst_140 : f32 to vector<1x128xf32>
    %198 = arith.mulf %196, %197 : vector<1x128xf32>
    %199 = arith.mulf %193, %193 : vector<1x128xf32>
    %200 = arith.subf %198, %199 : vector<1x128xf32>
    %c0_141 = arith.constant 0 : index
    %c0_142 = arith.constant 0 : index
    %201 = vector.load %arg16[%c0_141, %c0_142] : memref<2x128xf32, #tpu.memory_space<vmem>>, vector<1x128xf32>
    %cst_143 = arith.constant 9.99999974E-6 : f32
    %202 = vector.broadcast %cst_143 : f32 to vector<1x128xf32>
    %203 = arith.addf %200, %202 : vector<1x128xf32>
    %204 = math.rsqrt %203 : vector<1x128xf32>
    %205 = arith.mulf %201, %204 : vector<1x128xf32>
    %c1_144 = arith.constant 1 : index
    %c0_145 = arith.constant 0 : index
    %206 = vector.load %arg16[%c1_144, %c0_145] : memref<2x128xf32, #tpu.memory_space<vmem>>, vector<1x128xf32>
    %207 = arith.mulf %193, %205 : vector<1x128xf32>
    %208 = arith.subf %206, %207 : vector<1x128xf32>
    %209 = vector.broadcast %205 : vector<1x128xf32> to vector<2x128xf32>
    %210 = arith.mulf %189, %209 : vector<2x128xf32>
    %211 = vector.broadcast %208 : vector<1x128xf32> to vector<2x128xf32>
    %212 = arith.addf %210, %211 : vector<2x128xf32>
    %cst_146 = arith.constant 0.000000e+00 : f32
    %213 = vector.broadcast %cst_146 : f32 to vector<2x128xf32>
    %214 = arith.maximumf %212, %213 : vector<2x128xf32>
    %215 = arith.truncf %214 : vector<2x128xf32> to vector<2x128xbf16>
    %c0_147 = arith.constant 0 : index
    %c0_148 = arith.constant 0 : index
    %216 = vector.load %arg17[%c0_147, %c0_148] : memref<128x128xbf16, #tpu.memory_space<vmem>>, vector<128x128xbf16>
    %cst_149 = arith.constant dense<0.000000e+00> : vector<2x128xf32>
    %217 = tpu.matmul %215, %216, %cst_149 {dimension_numbers = #tpu.dot_dimension_numbers<[1], [0], [0], [1], [0, 0, 1, 1], [], []>} : vector<2x128xbf16>, vector<128x128xbf16>, vector<2x128xf32> -> vector<2x128xf32>
    %cst_150 = arith.constant dense<0.000000e+00> : vector<128xf32>
    %218 = vector.multi_reduction <add>, %217, %cst_150 [0] : vector<2x128xf32> to vector<128xf32>
    %219 = vector.shape_cast %218 : vector<128xf32> to vector<1x128xf32>
    %cst_151 = arith.constant 5.000000e-01 : f32
    %220 = vector.broadcast %cst_151 : f32 to vector<1x128xf32>
    %221 = arith.mulf %219, %220 : vector<1x128xf32>
    %222 = arith.mulf %217, %217 : vector<2x128xf32>
    %cst_152 = arith.constant dense<0.000000e+00> : vector<128xf32>
    %223 = vector.multi_reduction <add>, %222, %cst_152 [0] : vector<2x128xf32> to vector<128xf32>
    %224 = vector.shape_cast %223 : vector<128xf32> to vector<1x128xf32>
    %cst_153 = arith.constant 5.000000e-01 : f32
    %225 = vector.broadcast %cst_153 : f32 to vector<1x128xf32>
    %226 = arith.mulf %224, %225 : vector<1x128xf32>
    %227 = arith.mulf %221, %221 : vector<1x128xf32>
    %228 = arith.subf %226, %227 : vector<1x128xf32>
    %c0_154 = arith.constant 0 : index
    %c0_155 = arith.constant 0 : index
    %229 = vector.load %arg18[%c0_154, %c0_155] : memref<2x128xf32, #tpu.memory_space<vmem>>, vector<1x128xf32>
    %cst_156 = arith.constant 9.99999974E-6 : f32
    %230 = vector.broadcast %cst_156 : f32 to vector<1x128xf32>
    %231 = arith.addf %228, %230 : vector<1x128xf32>
    %232 = math.rsqrt %231 : vector<1x128xf32>
    %233 = arith.mulf %229, %232 : vector<1x128xf32>
    %c1_157 = arith.constant 1 : index
    %c0_158 = arith.constant 0 : index
    %234 = vector.load %arg18[%c1_157, %c0_158] : memref<2x128xf32, #tpu.memory_space<vmem>>, vector<1x128xf32>
    %235 = arith.mulf %221, %233 : vector<1x128xf32>
    %236 = arith.subf %234, %235 : vector<1x128xf32>
    %237 = vector.broadcast %233 : vector<1x128xf32> to vector<2x128xf32>
    %238 = arith.mulf %217, %237 : vector<2x128xf32>
    %239 = vector.broadcast %236 : vector<1x128xf32> to vector<2x128xf32>
    %240 = arith.addf %238, %239 : vector<2x128xf32>
    %cst_159 = arith.constant 0.000000e+00 : f32
    %241 = vector.broadcast %cst_159 : f32 to vector<2x128xf32>
    %242 = arith.maximumf %240, %241 : vector<2x128xf32>
    %c0_160 = arith.constant 0 : index
    %c0_161 = arith.constant 0 : index
    %243 = vector.load %arg19[%c0_160, %c0_161] : memref<2x128xf32, #tpu.memory_space<vmem>>, vector<2x128xf32>
    tpu.vector_store %arg19[%c0_160, %c0_161], %242 {strides = array<i32>} : memref<2x128xf32, #tpu.memory_space<vmem>>, vector<2x128xf32>,
    return
  }
}

</mosaic_0001>

<llo_original>
// kernel: simple_net_forward.1
$region0: #{simple_net_forward.1}
  #allocation0 [shape = 'u32[]', space=smem, size = 0x4, offset = 0x4, fixed_abs, tag = 'smem constant byte address 0x4 - core index']
  #allocation1 [shape = 'u32[144,128]{1,0:T(1,128)}', space=vmem, size = 0x12000, scoped, tag = 'internal scratch']
  #allocation2 [shape = 'f32[56,384]{1,0:T(8,128)}', space=vmem, size = 0x15000, scoped, tag = 'scratch operand']
  #allocation3 [shape = 'f32[28,768]{1,0:T(8,128)}', space=vmem, size = 0x18000, scoped, tag = 'scratch operand']
  #allocation4 [shape = 'f32[2,1792]{1,0:T(2,128)}', space=vmem, size = 0x3800, scoped, tag = 'scratch operand']
  %s0 = inlined_call_operand.vmem [shape: f32[2,28,28], index: 0, kind: input, shape index: {}]
  %s1 = inlined_call_operand.vmem [shape: bf16[384,448], index: 1, kind: input, shape index: {}]
  %s2 = inlined_call_operand.vmem [shape: f32[448,16], index: 2, kind: input, shape index: {}]
  %s3 = inlined_call_operand.vmem [shape: f32[16,448], index: 3, kind: input, shape index: {}]
  %s4 = inlined_call_operand.vmem [shape: f32[2,16], index: 4, kind: input, shape index: {}]
  %s5 = inlined_call_operand.vmem [shape: bf16[447,224], index: 5, kind: input, shape index: {}]
  %s6 = inlined_call_operand.vmem [shape: bf16[28,55], index: 6, kind: input, shape index: {}]
  %s7 = inlined_call_operand.vmem [shape: bf16[768,448], index: 7, kind: input, shape index: {}]
  %s8 = inlined_call_operand.vmem [shape: f32[448,32], index: 8, kind: input, shape index: {}]
  %s9 = inlined_call_operand.vmem [shape: f32[32,448], index: 9, kind: input, shape index: {}]
  %s10 = inlined_call_operand.vmem [shape: f32[2,32], index: 10, kind: input, shape index: {}]
  %s11 = inlined_call_operand.vmem [shape: bf16[447,224], index: 11, kind: input, shape index: {}]
  %s12 = inlined_call_operand.vmem [shape: bf16[14,27], index: 12, kind: input, shape index: {}]
  %s13 = inlined_call_operand.vmem [shape: bf16[1792,128], index: 13, kind: input, shape index: {}]
  %s14 = inlined_call_operand.vmem [shape: f32[2,128], index: 14, kind: input, shape index: {}]
  %s15 = inlined_call_operand.vmem [shape: bf16[128,128], index: 15, kind: input, shape index: {}]
  %s16 = inlined_call_operand.vmem [shape: f32[2,128], index: 16, kind: input, shape index: {}]
  %s17 = inlined_call_operand.vmem [shape: bf16[128,128], index: 17, kind: input, shape index: {}]
  %s18 = inlined_call_operand.vmem [shape: f32[2,128], index: 18, kind: input, shape index: {}]
  %s19 = inlined_call_operand.hbm [shape: f32[2,128], index: 19, kind: output, shape index: {}]
  %s20 = sld [smem:[#allocation0]]
  $region86: #{simple_net_forward.1} parent=0
    _
  %s22 = ssub.s32 1, %s20
  %s23 = scalar_select 0, %s22, %s20
  $region1: #{simple_net_forward.1} parent=0
    #allocation5 [shape = 'u8[1024]{0}', space=vmem, size = 0x400, scoped, tag = 'output window, operand 0, single buffered']
    #allocation6 [shape = 's32[1]{0}', space=sflag, size = 0x4, scoped, tag = 'scoped memory for simple_net_forward.1']
    %24 = vsyncpa [#allocation6], 0
    // Predicated region
    $region2: #{simple_net_forward.1} parent=1 // pred_check
      _
    $region3: #{simple_net_forward.1} parent=1 // pred_check_branch
      %26 = sbr.rel (0) target = $region5
    $region4: #{simple_net_forward.1} parent=1 // pred_region
      _
    $region5: #{simple_net_forward.1} parent=1 // pred_fallthru
      _
    // Predicated region
    $region6: #{simple_net_forward.1} parent=1 // pred_check
      _
    $region7: #{simple_net_forward.1} parent=1 // pred_check_branch
      %28 = sbr.rel (0) target = $region9
    $region8: #{simple_net_forward.1} parent=1 // pred_region
      _
    $region9: #{simple_net_forward.1} parent=1 // pred_fallthru
      _
    // Predicated region
    $region10: #{simple_net_forward.1} parent=1 // pred_check
      _
    $region11: #{simple_net_forward.1} parent=1 // pred_check_branch
      %30 = sbr.rel (0) target = $region13
    $region12: #{simple_net_forward.1} parent=1 // pred_region
      _
    $region13: #{simple_net_forward.1} parent=1 // pred_fallthru
      _
    // Predicated region
    $region14: #{simple_net_forward.1} parent=1 // pred_check
      _
    $region15: #{simple_net_forward.1} parent=1 // pred_check_branch
      %32 = sbr.rel (0) target = $region17
    $region16: #{simple_net_forward.1} parent=1 // pred_region
      _
    $region17: #{simple_net_forward.1} parent=1 // pred_fallthru
      _
    // Predicated region
    $region18: #{simple_net_forward.1} parent=1 // pred_check
      _
    $region19: #{simple_net_forward.1} parent=1 // pred_check_branch
      %34 = sbr.rel (0) target = $region21
    $region20: #{simple_net_forward.1} parent=1 // pred_region
      _
    $region21: #{simple_net_forward.1} parent=1 // pred_fallthru
      _
    // Predicated region
    $region22: #{simple_net_forward.1} parent=1 // pred_check
      _
    $region23: #{simple_net_forward.1} parent=1 // pred_check_branch
      %36 = sbr.rel (0) target = $region25
    $region24: #{simple_net_forward.1} parent=1 // pred_region
      _
    $region25: #{simple_net_forward.1} parent=1 // pred_fallthru
      _
    // Predicated region
    $region26: #{simple_net_forward.1} parent=1 // pred_check
      _
    $region27: #{simple_net_forward.1} parent=1 // pred_check_branch
      %38 = sbr.rel (0) target = $region29
    $region28: #{simple_net_forward.1} parent=1 // pred_region
      _
    $region29: #{simple_net_forward.1} parent=1 // pred_fallthru
      _
    // Predicated region
    $region30: #{simple_net_forward.1} parent=1 // pred_check
      _
    $region31: #{simple_net_forward.1} parent=1 // pred_check_branch
      %40 = sbr.rel (0) target = $region33
    $region32: #{simple_net_forward.1} parent=1 // pred_region
      _
    $region33: #{simple_net_forward.1} parent=1 // pred_fallthru
      _
    // Predicated region
    $region34: #{simple_net_forward.1} parent=1 // pred_check
      _
    $region35: #{simple_net_forward.1} parent=1 // pred_check_branch
      %42 = sbr.rel (0) target = $region37
    $region36: #{simple_net_forward.1} parent=1 // pred_region
      _
    $region37: #{simple_net_forward.1} parent=1 // pred_fallthru
      _
    // Predicated region
    $region38: #{simple_net_forward.1} parent=1 // pred_check
      _
    $region39: #{simple_net_forward.1} parent=1 // pred_check_branch
      %44 = sbr.rel (0) target = $region41
    $region40: #{simple_net_forward.1} parent=1 // pred_region
      _
    $region41: #{simple_net_forward.1} parent=1 // pred_fallthru
      _
    // Predicated region
    $region42: #{simple_net_forward.1} parent=1 // pred_check
      _
    $region43: #{simple_net_forward.1} parent=1 // pred_check_branch
      %46 = sbr.rel (0) target = $region45
    $region44: #{simple_net_forward.1} parent=1 // pred_region
      _
    $region45: #{simple_net_forward.1} parent=1 // pred_fallthru
      _
    // Predicated region
    $region46: #{simple_net_forward.1} parent=1 // pred_check
      _
    $region47: #{simple_net_forward.1} parent=1 // pred_check_branch
      %48 = sbr.rel (0) target = $region49
    $region48: #{simple_net_forward.1} parent=1 // pred_region
      _
    $region49: #{simple_net_forward.1} parent=1 // pred_fallthru
      _
    // Predicated region
    $region50: #{simple_net_forward.1} parent=1 // pred_check
      _
    $region51: #{simple_net_forward.1} parent=1 // pred_check_branch
      %50 = sbr.rel (0) target = $region53
    $region52: #{simple_net_forward.1} parent=1 // pred_region
      _
    $region53: #{simple_net_forward.1} parent=1 // pred_fallthru
      _
    // Predicated region
    $region54: #{simple_net_forward.1} parent=1 // pred_check
      _
    $region55: #{simple_net_forward.1} parent=1 // pred_check_branch
      %52 = sbr.rel (0) target = $region57
    $region56: #{simple_net_forward.1} parent=1 // pred_region
      _
    $region57: #{simple_net_forward.1} parent=1 // pred_fallthru
      _
    // Predicated region
    $region58: #{simple_net_forward.1} parent=1 // pred_check
      _
    $region59: #{simple_net_forward.1} parent=1 // pred_check_branch
      %54 = sbr.rel (0) target = $region61
    $region60: #{simple_net_forward.1} parent=1 // pred_region
      _
    $region61: #{simple_net_forward.1} parent=1 // pred_fallthru
      _
    // Predicated region
    $region62: #{simple_net_forward.1} parent=1 // pred_check
      _
    $region63: #{simple_net_forward.1} parent=1 // pred_check_branch
      %56 = sbr.rel (0) target = $region65
    $region64: #{simple_net_forward.1} parent=1 // pred_region
      _
    $region65: #{simple_net_forward.1} parent=1 // pred_fallthru
      _
    // Predicated region
    $region66: #{simple_net_forward.1} parent=1 // pred_check
      _
    $region67: #{simple_net_forward.1} parent=1 // pred_check_branch
      %58 = sbr.rel (0) target = $region69
    $region68: #{simple_net_forward.1} parent=1 // pred_region
      _
    $region69: #{simple_net_forward.1} parent=1 // pred_fallthru
      _
    // Predicated region
    $region70: #{simple_net_forward.1} parent=1 // pred_check
      _
    $region71: #{simple_net_forward.1} parent=1 // pred_check_branch
      %60 = sbr.rel (0) target = $region73
    $region72: #{simple_net_forward.1} parent=1 // pred_region
      _
    $region73: #{simple_net_forward.1} parent=1 // pred_fallthru
      _
    // Predicated region
    $region74: #{simple_net_forward.1} parent=1 // pred_check
      _
    $region75: #{simple_net_forward.1} parent=1 // pred_check_branch
      %62 = sbr.rel (0) target = $region77
    $region76: #{simple_net_forward.1} parent=1 // pred_region
      _
    $region77: #{simple_net_forward.1} parent=1 // pred_fallthru
      _
    %64 = vst [vmem:[#allocation2] sm:$0xff] 0.0
    %65 = vst [vmem:[#allocation2 + $0x8] sm:$0xff] 0.0
    %66 = vst [vmem:[#allocation2 + $0x10] sm:$0xff] 0.0
    %67 = vst [vmem:[#allocation2 + $0x18] sm:$0xff] 0.0
    %68 = vst [vmem:[#allocation2 + $0x20] sm:$0xff] 0.0
    %69 = vst [vmem:[#allocation2 + $0x28] sm:$0xff] 0.0
    %70 = vst [vmem:[#allocation2 + $0x30] sm:$0xff] 0.0
    %71 = vst [vmem:[#allocation2 + $0x38] sm:$0xff] 0.0
    %72 = vst [vmem:[#allocation2 + $0x40] sm:$0xff] 0.0
    %73 = vst [vmem:[#allocation2 + $0x48] sm:$0xff] 0.0
    %74 = vst [vmem:[#allocation2 + $0x50] sm:$0xff] 0.0
    %75 = vst [vmem:[#allocation2 + $0x58] sm:$0xff] 0.0
    %76 = vst [vmem:[#allocation2 + $0x60] sm:$0xff] 0.0
    %77 = vst [vmem:[#allocation2 + $0x68] sm:$0xff] 0.0
    %78 = vst [vmem:[#allocation2 + $0x70] sm:$0xff] 0.0
    %79 = vst [vmem:[#allocation2 + $0x78] sm:$0xff] 0.0
    %80 = vst [vmem:[#allocation2 + $0x80] sm:$0xff] 0.0
    %81 = vst [vmem:[#allocation2 + $0x88] sm:$0xff] 0.0
    %82 = vst [vmem:[#allocation2 + $0x90] sm:$0xff] 0.0
    %83 = vst [vmem:[#allocation2 + $0x98] sm:$0xff] 0.0
    %84 = vst [vmem:[#allocation2 + $0xa0] sm:$0xff] 0.0
    %85 = vst [vmem:[#allocation3] sm:$0xff] 0.0
    %86 = vst [vmem:[#allocation3 + $0x8] sm:$0xff] 0.0
    %87 = vst [vmem:[#allocation3 + $0x10] sm:$0xff] 0.0
    %88 = vst [vmem:[#allocation3 + $0x18] sm:$0xff] 0.0
    %89 = vst [vmem:[#allocation3 + $0x20] sm:$0xff] 0.0
    %90 = vst [vmem:[#allocation3 + $0x28] sm:$0xff] 0.0
    %91 = vst [vmem:[#allocation3 + $0x30] sm:$0xff] 0.0
    %92 = vst [vmem:[#allocation3 + $0x38] sm:$0xff] 0.0
    %93 = vst [vmem:[#allocation3 + $0x40] sm:$0xff] 0.0
    %94 = vst [vmem:[#allocation3 + $0x48] sm:$0xff] 0.0
    %95 = vst [vmem:[#allocation3 + $0x50] sm:$0xff] 0.0
    %96 = vst [vmem:[#allocation3 + $0x58] sm:$0xff] 0.0
    %97 = vst [vmem:[#allocation3 + $0x60] sm:$0xff] 0.0
    %98 = vst [vmem:[#allocation3 + $0x68] sm:$0xff] 0.0
    %99 = vst [vmem:[#allocation3 + $0x70] sm:$0xff] 0.0
    %100 = vst [vmem:[#allocation3 + $0x78] sm:$0xff] 0.0
    %101 = vst [vmem:[#allocation3 + $0x80] sm:$0xff] 0.0
    %102 = vst [vmem:[#allocation3 + $0x88] sm:$0xff] 0.0
    %103 = vst [vmem:[#allocation3 + $0x90] sm:$0xf] 0.0
    %104 = vst [vmem:[#allocation3 + $0x98] sm:$0xf] 0.0
    %105 = vst [vmem:[#allocation3 + $0xa0] sm:$0xf] 0.0
    %106 = vst [vmem:[#allocation3 + $0xa8] sm:$0xf] 0.0
    %107 = vst [vmem:[#allocation3 + $0xb0] sm:$0xf] 0.0
    %108 = vst [vmem:[#allocation3 + $0xb8] sm:$0xf] 0.0
    %109 = vst [vmem:[#allocation4] sm:$0xff] 0.0
    %110 = vst [vmem:[#allocation4 + $0x8] sm:$0xff] 0.0
    %111 = vst [vmem:[#allocation4 + $0x10] sm:$0xff] 0.0
    %112 = vst [vmem:[#allocation4 + $0x18] sm:$0xf] 0.0
    %v113 = vld [vmem:[%s0] sm:$0xff]
    %v114 = vld [vmem:[%s0 + $0x8] sm:$0xff]
    %v115 = vld [vmem:[%s0 + $0x10] sm:$0xff]
    %v116 = vld [vmem:[%s0 + $0x18] sm:$0xf]
    %vm117 = vcmask 228352
    %118 = vst.msk [vmem:[#allocation2 + $0x8] sm:$0xff] %vm117, %v113
    %119 = vst.msk [vmem:[#allocation2 + $0x20] sm:$0xff] %vm117, %v114
    %120 = vst.msk [vmem:[#allocation2 + $0x38] sm:$0xff] %vm117, %v115
    %vm121 = vcmask 224256
    %122 = vst.msk [vmem:[#allocation2 + $0x50] sm:$0xf] %vm121, %v116
    %vm127 = vcmask 1040384
    %v128 = vrot.slane %v113, 7
    %v129 = vrot.slane %v114, 7
    %v130 = vsel %vm127, %v128, %v129
    %v131 = vrot.slane %v115, 7
    %v132 = vsel %vm127, %v129, %v131
    %v133 = vrot.slane %v116, 7
    %v134 = vsel %vm127, %v131, %v133
    %vm139 = vcmask 228353
    %140 = vst.msk [vmem:[#allocation2] sm:$0xfe] %vm139, %v128
    %141 = vst.msk [vmem:[#allocation2 + $0x18] sm:$0xff] %vm117, %v130
    %142 = vst.msk [vmem:[#allocation2 + $0x30] sm:$0xff] %vm117, %v132
    %143 = vst.msk [vmem:[#allocation2 + $0x48] sm:$0xf] %vm121, %v134
    %vm144 = vcmask 1046528
    %v145 = vrot.slane %v113, 1
    %v146 = vrot.slane %v114, 1
    %v147 = vsel %vm144, %v145, %v146
    %v148 = vrot.slane %v115, 1
    %v149 = vsel %vm144, %v146, %v148
    %v150 = vrot.slane %v116, 1
    %v151 = vsel %vm144, %v148, %v150
    %156 = vst.msk [vmem:[#allocation2 + $0x10] sm:$0xff] %vm117, %v147
    %157 = vst.msk [vmem:[#allocation2 + $0x28] sm:$0xff] %vm117, %v149
    %158 = vst.msk [vmem:[#allocation2 + $0x40] sm:$0xff] %vm117, %v151
    %vm159 = vcmask 223232
    %160 = vst.msk [vmem:[#allocation2 + $0x58] sm:$0x7] %vm159, %v150
    %s161 = scalar_lea.vmem %s0, 32
    %v162 = vld [vmem:[%s161] sm:$0xff]
    %v163 = vld [vmem:[%s161 + $0x8] sm:$0xff]
    %v164 = vld [vmem:[%s161 + $0x10] sm:$0xff]
    %v165 = vld [vmem:[%s161 + $0x18] sm:$0xf]
    %vm170 = vcmask 1043456
    %v171 = vrot.slane %v162, 4
    %v172 = vrot.slane %v163, 4
    %v173 = vsel %vm170, %v171, %v172
    %v174 = vrot.slane %v164, 4
    %v175 = vsel %vm170, %v172, %v174
    %v176 = vrot.slane %v165, 4
    %v177 = vsel %vm170, %v174, %v176
    %vm182 = vcmask 228356
    %183 = vst.msk [vmem:[#allocation2 + $0x50] sm:$0xf0] %vm182, %v171
    %184 = vst.msk [vmem:[#allocation2 + $0x68] sm:$0xff] %vm117, %v173
    %185 = vst.msk [vmem:[#allocation2 + $0x80] sm:$0xff] %vm117, %v175
    %186 = vst.msk [vmem:[#allocation2 + $0x98] sm:$0xff] %vm117, %v177
    %vm187 = vcmask 1044480
    %v188 = vrot.slane %v162, 3
    %v189 = vrot.slane %v163, 3
    %v190 = vsel %vm187, %v188, %v189
    %v191 = vrot.slane %v164, 3
    %v192 = vsel %vm187, %v189, %v191
    %v193 = vrot.slane %v165, 3
    %v194 = vsel %vm187, %v191, %v193
    %vm199 = vcmask 228357
    %200 = vst.msk [vmem:[#allocation2 + $0x48] sm:$0xe0] %vm199, %v188
    %201 = vst.msk [vmem:[#allocation2 + $0x60] sm:$0xff] %vm117, %v190
    %202 = vst.msk [vmem:[#allocation2 + $0x78] sm:$0xff] %vm117, %v192
    %203 = vst.msk [vmem:[#allocation2 + $0x90] sm:$0xff] %vm117, %v194
    %vm204 = vcmask 1042432
    %v205 = vrot.slane %v162, 5
    %v206 = vrot.slane %v163, 5
    %v207 = vsel %vm204, %v205, %v206
    %v208 = vrot.slane %v164, 5
    %v209 = vsel %vm204, %v206, %v208
    %v210 = vrot.slane %v165, 5
    %v211 = vsel %vm204, %v208, %v210
    %216 = vst.msk [vmem:[#allocation2 + $0x58] sm:$0xf0] %vm182, %v205
    %217 = vst.msk [vmem:[#allocation2 + $0x70] sm:$0xff] %vm117, %v207
    %218 = vst.msk [vmem:[#allocation2 + $0x88] sm:$0xff] %vm117, %v209
    %vm219 = vcmask 227328
    %220 = vst.msk [vmem:[#allocation2 + $0xa0] sm:$0x7f] %vm219, %v211
    %v221 = vld [vmem:[#allocation2] sm:$0xff]
    %v222 = vld [vmem:[#allocation2 + $0x8] sm:$0xff]
    %v223 = vld [vmem:[#allocation2 + $0x10] sm:$0xff]
    %v224 = vld [vmem:[#allocation2 + $0x18] sm:$0xff]
    %v225 = vld [vmem:[#allocation2 + $0x20] sm:$0xff]
    %v226 = vld [vmem:[#allocation2 + $0x28] sm:$0xff]
    %v227 = vld [vmem:[#allocation2 + $0x30] sm:$0xff]
    %v228 = vld [vmem:[#allocation2 + $0x38] sm:$0xff]
    %v229 = vld [vmem:[#allocation2 + $0x40] sm:$0xff]
    %v230 = vld [vmem:[#allocation2 + $0x48] sm:$0xff]
    %v231 = vld [vmem:[#allocation2 + $0x50] sm:$0xff]
    %v232 = vld [vmem:[#allocation2 + $0x58] sm:$0xff]
    %v233 = vld [vmem:[#allocation2 + $0x60] sm:$0xff]
    %v234 = vld [vmem:[#allocation2 + $0x68] sm:$0xff]
    %v235 = vld [vmem:[#allocation2 + $0x70] sm:$0xff]
    %v236 = vld [vmem:[#allocation2 + $0x78] sm:$0xff]
    %v237 = vld [vmem:[#allocation2 + $0x80] sm:$0xff]
    %v238 = vld [vmem:[#allocation2 + $0x88] sm:$0xff]
    %v239 = vld [vmem:[#allocation2 + $0x90] sm:$0xff]
    %v240 = vld [vmem:[#allocation2 + $0x98] sm:$0xff]
    %v241 = vld [vmem:[#allocation2 + $0xa0] sm:$0xff]
    %v242 = vpack.c.bf16 %v224, %v221
    %v243 = vpack.c.bf16 %v225, %v222
    %v244 = vpack.c.bf16 %v226, %v223
    %v245 = vpack.c.bf16 %v230, %v227
    %v246 = vpack.c.bf16 %v231, %v228
    %v247 = vpack.c.bf16 %v232, %v229
    %v248 = vpack.c.bf16 %v236, %v233
    %v249 = vpack.c.bf16 %v237, %v234
    %v250 = vpack.c.bf16 %v238, %v235
    %v251 = vpack.c.bf16 %v239, %v239
    %v252 = vpack.c.bf16 %v240, %v240
    %v253 = vpack.c.bf16 %v241, %v241
    %v254 = vld [vmem:[%s1] sm:$0xff]
    %v255 = vld [vmem:[%s1 + $0x8] sm:$0xff]
    %v256 = vld [vmem:[%s1 + $0x10] sm:$0xff]
    %v257 = vld [vmem:[%s1 + $0x18] sm:$0xff]
    %v258 = vld [vmem:[%s1 + $0x20] sm:$0xff]
    %v259 = vld [vmem:[%s1 + $0x28] sm:$0xff]
    %v260 = vld [vmem:[%s1 + $0x30] sm:$0xff]
    %v261 = vld [vmem:[%s1 + $0x38] sm:$0xff]
    %v262 = vld [vmem:[%s1 + $0x40] sm:$0xff]
    %v263 = vld [vmem:[%s1 + $0x48] sm:$0xff]
    %v264 = vld [vmem:[%s1 + $0x50] sm:$0xff]
    %v265 = vld [vmem:[%s1 + $0x58] sm:$0xff]
    %v266 = vld [vmem:[%s1 + $0x60] sm:$0xff]
    %v267 = vld [vmem:[%s1 + $0x68] sm:$0xff]
    %v268 = vld [vmem:[%s1 + $0x70] sm:$0xff]
    %v269 = vld [vmem:[%s1 + $0x78] sm:$0xff]
    %v270 = vld [vmem:[%s1 + $0x80] sm:$0xff]
    %v271 = vld [vmem:[%s1 + $0x88] sm:$0xff]
    %v272 = vld [vmem:[%s1 + $0x90] sm:$0xff]
    %v273 = vld [vmem:[%s1 + $0x98] sm:$0xff]
    %v274 = vld [vmem:[%s1 + $0xa0] sm:$0xff]
    %v275 = vld [vmem:[%s1 + $0xa8] sm:$0xff]
    %v276 = vld [vmem:[%s1 + $0xb0] sm:$0xff]
    %v277 = vld [vmem:[%s1 + $0xb8] sm:$0xff]
    %v278 = vld [vmem:[%s1 + $0xc0] sm:$0xff]
    %v279 = vld [vmem:[%s1 + $0xc8] sm:$0xff]
    %v280 = vld [vmem:[%s1 + $0xd0] sm:$0xff]
    %v281 = vld [vmem:[%s1 + $0xd8] sm:$0xff]
    %v282 = vld [vmem:[%s1 + $0xe0] sm:$0xff]
    %v283 = vld [vmem:[%s1 + $0xe8] sm:$0xff]
    %v284 = vld [vmem:[%s1 + $0xf0] sm:$0xff]
    %v285 = vld [vmem:[%s1 + $0xf8] sm:$0xff]
    %v286 = vld [vmem:[%s1 + $0x100] sm:$0xff]
    %v287 = vld [vmem:[%s1 + $0x108] sm:$0xff]
    %v288 = vld [vmem:[%s1 + $0x110] sm:$0xff]
    %v289 = vld [vmem:[%s1 + $0x118] sm:$0xff]
    %v290 = vld [vmem:[%s1 + $0x120] sm:$0xff]
    %v291 = vld [vmem:[%s1 + $0x128] sm:$0xff]
    %v292 = vld [vmem:[%s1 + $0x130] sm:$0xff]
    %v293 = vld [vmem:[%s1 + $0x138] sm:$0xff]
    %v294 = vld [vmem:[%s1 + $0x140] sm:$0xff]
    %v295 = vld [vmem:[%s1 + $0x148] sm:$0xff]
    %v296 = vld [vmem:[%s1 + $0x150] sm:$0xff]
    %v297 = vld [vmem:[%s1 + $0x158] sm:$0xff]
    %v298 = vld [vmem:[%s1 + $0x160] sm:$0xff]
    %v299 = vld [vmem:[%s1 + $0x168] sm:$0xff]
    %v300 = vld [vmem:[%s1 + $0x170] sm:$0xff]
    %v301 = vld [vmem:[%s1 + $0x178] sm:$0xff]
    %v302 = vld [vmem:[%s1 + $0x180] sm:$0xff]
    %v303 = vld [vmem:[%s1 + $0x188] sm:$0xff]
    %v304 = vld [vmem:[%s1 + $0x190] sm:$0xff]
    %v305 = vld [vmem:[%s1 + $0x198] sm:$0xff]
    %v306 = vld [vmem:[%s1 + $0x1a0] sm:$0xff]
    %v307 = vld [vmem:[%s1 + $0x1a8] sm:$0xff]
    %v308 = vld [vmem:[%s1 + $0x1b0] sm:$0xff]
    %v309 = vld [vmem:[%s1 + $0x1b8] sm:$0xff]
    %v310 = vld [vmem:[%s1 + $0x1c0] sm:$0xff]
    %v311 = vld [vmem:[%s1 + $0x1c8] sm:$0xff]
    %v312 = vld [vmem:[%s1 + $0x1d0] sm:$0xff]
    %v313 = vld [vmem:[%s1 + $0x1d8] sm:$0xff]
    %v314 = vld [vmem:[%s1 + $0x1e0] sm:$0xff]
    %v315 = vld [vmem:[%s1 + $0x1e8] sm:$0xff]
    %v316 = vld [vmem:[%s1 + $0x1f0] sm:$0xff]
    %v317 = vld [vmem:[%s1 + $0x1f8] sm:$0xff]
    %v318 = vld [vmem:[%s1 + $0x200] sm:$0xff]
    %v319 = vld [vmem:[%s1 + $0x208] sm:$0xff]
    %v320 = vld [vmem:[%s1 + $0x210] sm:$0xff]
    %v321 = vld [vmem:[%s1 + $0x218] sm:$0xff]
    %v322 = vld [vmem:[%s1 + $0x220] sm:$0xff]
    %v323 = vld [vmem:[%s1 + $0x228] sm:$0xff]
    %v324 = vld [vmem:[%s1 + $0x230] sm:$0xff]
    %v325 = vld [vmem:[%s1 + $0x238] sm:$0xff]
    %v326 = vld [vmem:[%s1 + $0x240] sm:$0xff]
    %v327 = vld [vmem:[%s1 + $0x248] sm:$0xff]
    %v328 = vld [vmem:[%s1 + $0x250] sm:$0xff]
    %v329 = vld [vmem:[%s1 + $0x258] sm:$0xff]
    %v330 = vld [vmem:[%s1 + $0x260] sm:$0xff]
    %v331 = vld [vmem:[%s1 + $0x268] sm:$0xff]
    %v332 = vld [vmem:[%s1 + $0x270] sm:$0xff]
    %v333 = vld [vmem:[%s1 + $0x278] sm:$0xff]
    %v334 = vld [vmem:[%s1 + $0x280] sm:$0xff]
    %v335 = vld [vmem:[%s1 + $0x288] sm:$0xff]
    %v336 = vld [vmem:[%s1 + $0x290] sm:$0xff]
    %v337 = vld [vmem:[%s1 + $0x298] sm:$0xff]
    %v338 = vld [vmem:[%s1 + $0x2a0] sm:$0xff]
    %v339 = vld [vmem:[%s1 + $0x2a8] sm:$0xff]
    %v340 = vld [vmem:[%s1 + $0x2b0] sm:$0xff]
    %v341 = vld [vmem:[%s1 + $0x2b8] sm:$0xff]
    %v342 = vld [vmem:[%s1 + $0x2c0] sm:$0xff]
    %v343 = vld [vmem:[%s1 + $0x2c8] sm:$0xff]
    %v344 = vld [vmem:[%s1 + $0x2d0] sm:$0xff]
    %v345 = vld [vmem:[%s1 + $0x2d8] sm:$0xff]
    %v346 = vld [vmem:[%s1 + $0x2e0] sm:$0xff]
    %v347 = vld [vmem:[%s1 + $0x2e8] sm:$0xff]
    %v348 = vld [vmem:[%s1 + $0x2f0] sm:$0xff]
    %v349 = vld [vmem:[%s1 + $0x2f8] sm:$0xff]
    %v446 = vunpack.c.l.b16 %v254
    %v447 = vunpack.c.h.b16 %v254
    %v448 = vunpack.c.l.b16 %v255
    %v449 = vunpack.c.h.b16 %v255
    %v450 = vunpack.c.l.b16 %v256
    %v451 = vunpack.c.h.b16 %v256
    %v452 = vunpack.c.l.b16 %v257
    %v453 = vunpack.c.h.b16 %v257
    %v454 = vunpack.c.l.b16 %v258
    %v455 = vunpack.c.h.b16 %v258
    %v456 = vunpack.c.l.b16 %v259
    %v457 = vunpack.c.h.b16 %v259
    %v458 = vunpack.c.l.b16 %v260
    %v459 = vunpack.c.h.b16 %v260
    %v460 = vunpack.c.l.b16 %v261
    %v461 = vunpack.c.h.b16 %v261
    %v462 = vunpack.c.l.b16 %v262
    %v463 = vunpack.c.h.b16 %v262
    %v464 = vunpack.c.l.b16 %v263
    %v465 = vunpack.c.h.b16 %v263
    %v466 = vunpack.c.l.b16 %v264
    %v467 = vunpack.c.h.b16 %v264
    %v468 = vunpack.c.l.b16 %v265
    %v469 = vunpack.c.h.b16 %v265
    %v470 = vunpack.c.l.b16 %v266
    %v471 = vunpack.c.h.b16 %v266
    %v472 = vunpack.c.l.b16 %v267
    %v473 = vunpack.c.h.b16 %v267
    %v474 = vunpack.c.l.b16 %v268
    %v475 = vunpack.c.h.b16 %v268
    %v476 = vunpack.c.l.b16 %v269
    %v477 = vunpack.c.h.b16 %v269
    %v478 = vunpack.c.l.b16 %v270
    %v479 = vunpack.c.h.b16 %v270
    %v480 = vunpack.c.l.b16 %v271
    %v481 = vunpack.c.h.b16 %v271
    %v482 = vunpack.c.l.b16 %v272
    %v483 = vunpack.c.h.b16 %v272
    %v484 = vunpack.c.l.b16 %v273
    %v485 = vunpack.c.h.b16 %v273
    %v486 = vunpack.c.l.b16 %v274
    %v487 = vunpack.c.h.b16 %v274
    %v488 = vunpack.c.l.b16 %v275
    %v489 = vunpack.c.h.b16 %v275
    %v490 = vunpack.c.l.b16 %v276
    %v491 = vunpack.c.h.b16 %v276
    %v492 = vunpack.c.l.b16 %v277
    %v493 = vunpack.c.h.b16 %v277
    %v494 = vunpack.c.l.b16 %v278
    %v495 = vunpack.c.h.b16 %v278
    %v496 = vunpack.c.l.b16 %v279
    %v497 = vunpack.c.h.b16 %v279
    %v498 = vunpack.c.l.b16 %v280
    %v499 = vunpack.c.h.b16 %v280
    %v500 = vunpack.c.l.b16 %v281
    %v501 = vunpack.c.h.b16 %v281
    %v502 = vunpack.c.l.b16 %v282
    %v503 = vunpack.c.h.b16 %v282
    %v504 = vunpack.c.l.b16 %v283
    %v505 = vunpack.c.h.b16 %v283
    %v506 = vunpack.c.l.b16 %v284
    %v507 = vunpack.c.h.b16 %v284
    %v508 = vunpack.c.l.b16 %v285
    %v509 = vunpack.c.h.b16 %v285
    %v510 = vunpack.c.l.b16 %v286
    %v511 = vunpack.c.h.b16 %v286
    %v512 = vunpack.c.l.b16 %v287
    %v513 = vunpack.c.h.b16 %v287
    %v514 = vunpack.c.l.b16 %v288
    %v515 = vunpack.c.h.b16 %v288
    %v516 = vunpack.c.l.b16 %v289
    %v517 = vunpack.c.h.b16 %v289
    %v518 = vunpack.c.l.b16 %v290
    %v519 = vunpack.c.h.b16 %v290
    %v520 = vunpack.c.l.b16 %v291
    %v521 = vunpack.c.h.b16 %v291
    %v522 = vunpack.c.l.b16 %v292
    %v523 = vunpack.c.h.b16 %v292
    %v524 = vunpack.c.l.b16 %v293
    %v525 = vunpack.c.h.b16 %v293
    %v526 = vunpack.c.l.b16 %v294
    %v527 = vunpack.c.h.b16 %v294
    %v528 = vunpack.c.l.b16 %v295
    %v529 = vunpack.c.h.b16 %v295
    %v530 = vunpack.c.l.b16 %v296
    %v531 = vunpack.c.h.b16 %v296
    %v532 = vunpack.c.l.b16 %v297
    %v533 = vunpack.c.h.b16 %v297
    %v534 = vunpack.c.l.b16 %v298
    %v535 = vunpack.c.h.b16 %v298
    %v536 = vunpack.c.l.b16 %v299
    %v537 = vunpack.c.h.b16 %v299
    %v538 = vunpack.c.l.b16 %v300
    %v539 = vunpack.c.h.b16 %v300
    %v540 = vunpack.c.l.b16 %v301
    %v541 = vunpack.c.h.b16 %v301
    %v542 = vunpack.c.l.b16 %v302
    %v543 = vunpack.c.h.b16 %v302
    %v544 = vunpack.c.l.b16 %v303
    %v545 = vunpack.c.h.b16 %v303
    %v546 = vunpack.c.l.b16 %v304
    %v547 = vunpack.c.h.b16 %v304
    %v548 = vunpack.c.l.b16 %v305
    %v549 = vunpack.c.h.b16 %v305
    %v550 = vunpack.c.l.b16 %v306
    %v551 = vunpack.c.h.b16 %v306
    %v552 = vunpack.c.l.b16 %v307
    %v553 = vunpack.c.h.b16 %v307
    %v554 = vunpack.c.l.b16 %v308
    %v555 = vunpack.c.h.b16 %v308
    %v556 = vunpack.c.l.b16 %v309
    %v557 = vunpack.c.h.b16 %v309
    %v558 = vunpack.c.l.b16 %v310
    %v559 = vunpack.c.h.b16 %v310
    %v560 = vunpack.c.l.b16 %v311
    %v561 = vunpack.c.h.b16 %v311
    %v562 = vunpack.c.l.b16 %v312
    %v563 = vunpack.c.h.b16 %v312
    %v564 = vunpack.c.l.b16 %v313
    %v565 = vunpack.c.h.b16 %v313
    %v566 = vunpack.c.l.b16 %v314
    %v567 = vunpack.c.h.b16 %v314
    %v568 = vunpack.c.l.b16 %v315
    %v569 = vunpack.c.h.b16 %v315
    %v570 = vunpack.c.l.b16 %v316
    %v571 = vunpack.c.h.b16 %v316
    %v572 = vunpack.c.l.b16 %v317
    %v573 = vunpack.c.h.b16 %v317
    %v574 = vunpack.c.l.b16 %v318
    %v575 = vunpack.c.h.b16 %v318
    %v576 = vunpack.c.l.b16 %v319
    %v577 = vunpack.c.h.b16 %v319
    %v578 = vunpack.c.l.b16 %v320
    %v579 = vunpack.c.h.b16 %v320
    %v580 = vunpack.c.l.b16 %v321
    %v581 = vunpack.c.h.b16 %v321
    %v582 = vunpack.c.l.b16 %v322
    %v583 = vunpack.c.h.b16 %v322
    %v584 = vunpack.c.l.b16 %v323
    %v585 = vunpack.c.h.b16 %v323
    %v586 = vunpack.c.l.b16 %v324
    %v587 = vunpack.c.h.b16 %v324
    %v588 = vunpack.c.l.b16 %v325
    %v589 = vunpack.c.h.b16 %v325
    %v590 = vunpack.c.l.b16 %v326
    %v591 = vunpack.c.h.b16 %v326
    %v592 = vunpack.c.l.b16 %v327
    %v593 = vunpack.c.h.b16 %v327
    %v594 = vunpack.c.l.b16 %v328
    %v595 = vunpack.c.h.b16 %v328
    %v596 = vunpack.c.l.b16 %v329
    %v597 = vunpack.c.h.b16 %v329
    %v598 = vunpack.c.l.b16 %v330
    %v599 = vunpack.c.h.b16 %v330
    %v600 = vunpack.c.l.b16 %v331
    %v601 = vunpack.c.h.b16 %v331
    %v602 = vunpack.c.l.b16 %v332
    %v603 = vunpack.c.h.b16 %v332
    %v604 = vunpack.c.l.b16 %v333
    %v605 = vunpack.c.h.b16 %v333
    %v606 = vunpack.c.l.b16 %v334
    %v607 = vunpack.c.h.b16 %v334
    %v608 = vunpack.c.l.b16 %v335
    %v609 = vunpack.c.h.b16 %v335
    %v610 = vunpack.c.l.b16 %v336
    %v611 = vunpack.c.h.b16 %v336
    %v612 = vunpack.c.l.b16 %v337
    %v613 = vunpack.c.h.b16 %v337
    %v614 = vunpack.c.l.b16 %v338
    %v615 = vunpack.c.h.b16 %v338
    %v616 = vunpack.c.l.b16 %v339
    %v617 = vunpack.c.h.b16 %v339
    %v618 = vunpack.c.l.b16 %v340
    %v619 = vunpack.c.h.b16 %v340
    %v620 = vunpack.c.l.b16 %v341
    %v621 = vunpack.c.h.b16 %v341
    %v622 = vunpack.c.l.b16 %v342
    %v623 = vunpack.c.h.b16 %v342
    %v624 = vunpack.c.l.b16 %v343
    %v625 = vunpack.c.h.b16 %v343
    %v626 = vunpack.c.l.b16 %v344
    %v627 = vunpack.c.h.b16 %v344
    %v628 = vunpack.c.l.b16 %v345
    %v629 = vunpack.c.h.b16 %v345
    %v630 = vunpack.c.l.b16 %v346
    %v631 = vunpack.c.h.b16 %v346
    %v632 = vunpack.c.l.b16 %v347
    %v633 = vunpack.c.h.b16 %v347
    %v634 = vunpack.c.l.b16 %v348
    %v635 = vunpack.c.h.b16 %v348
    %v636 = vunpack.c.l.b16 %v349
    %v637 = vunpack.c.h.b16 %v349
    %v638 = vpack.c.b16 %v450, %v446
    %v639 = vpack.c.b16 %v451, %v447
    %v640 = vpack.c.b16 %v452, %v448
    %v641 = vpack.c.b16 %v453, %v449
    %v642 = vpack.c.b16 %v458, %v454
    %v643 = vpack.c.b16 %v459, %v455
    %v644 = vpack.c.b16 %v460, %v456
    %v645 = vpack.c.b16 %v461, %v457
    %v646 = vpack.c.b16 %v466, %v462
    %v647 = vpack.c.b16 %v467, %v463
    %v648 = vpack.c.b16 %v468, %v464
    %v649 = vpack.c.b16 %v469, %v465
    %v650 = vpack.c.b16 %v474, %v470
    %v651 = vpack.c.b16 %v475, %v471
    %v652 = vpack.c.b16 %v476, %v472
    %v653 = vpack.c.b16 %v477, %v473
    %v654 = vpack.c.b16 %v482, %v478
    %v655 = vpack.c.b16 %v483, %v479
    %v656 = vpack.c.b16 %v484, %v480
    %v657 = vpack.c.b16 %v485, %v481
    %v658 = vpack.c.b16 %v490, %v486
    %v659 = vpack.c.b16 %v491, %v487
    %v660 = vpack.c.b16 %v492, %v488
    %v661 = vpack.c.b16 %v493, %v489
    %v662 = vpack.c.b16 %v498, %v494
    %v663 = vpack.c.b16 %v499, %v495
    %v664 = vpack.c.b16 %v500, %v496
    %v665 = vpack.c.b16 %v501, %v497
    %v666 = vpack.c.b16 %v506, %v502
    %v667 = vpack.c.b16 %v507, %v503
    %v668 = vpack.c.b16 %v508, %v504
    %v669 = vpack.c.b16 %v509, %v505
    %v670 = vpack.c.b16 %v514, %v510
    %v671 = vpack.c.b16 %v515, %v511
    %v672 = vpack.c.b16 %v516, %v512
    %v673 = vpack.c.b16 %v517, %v513
    %v674 = vpack.c.b16 %v522, %v518
    %v675 = vpack.c.b16 %v523, %v519
    %v676 = vpack.c.b16 %v524, %v520
    %v677 = vpack.c.b16 %v525, %v521
    %v678 = vpack.c.b16 %v530, %v526
    %v679 = vpack.c.b16 %v531, %v527
    %v680 = vpack.c.b16 %v532, %v528
    %v681 = vpack.c.b16 %v533, %v529
    %v682 = vpack.c.b16 %v538, %v534
    %v683 = vpack.c.b16 %v539, %v535
    %v684 = vpack.c.b16 %v540, %v536
    %v685 = vpack.c.b16 %v541, %v537
    %v686 = vpack.c.b16 %v546, %v542
    %v687 = vpack.c.b16 %v547, %v543
    %v688 = vpack.c.b16 %v548, %v544
    %v689 = vpack.c.b16 %v549, %v545
    %v690 = vpack.c.b16 %v554, %v550
    %v691 = vpack.c.b16 %v555, %v551
    %v692 = vpack.c.b16 %v556, %v552
    %v693 = vpack.c.b16 %v557, %v553
    %v694 = vpack.c.b16 %v562, %v558
    %v695 = vpack.c.b16 %v563, %v559
    %v696 = vpack.c.b16 %v564, %v560
    %v697 = vpack.c.b16 %v565, %v561
    %v698 = vpack.c.b16 %v570, %v566
    %v699 = vpack.c.b16 %v571, %v567
    %v700 = vpack.c.b16 %v572, %v568
    %v701 = vpack.c.b16 %v573, %v569
    %v702 = vpack.c.b16 %v578, %v574
    %v703 = vpack.c.b16 %v579, %v575
    %v704 = vpack.c.b16 %v580, %v576
    %v705 = vpack.c.b16 %v581, %v577
    %v706 = vpack.c.b16 %v586, %v582
    %v707 = vpack.c.b16 %v587, %v583
    %v708 = vpack.c.b16 %v588, %v584
    %v709 = vpack.c.b16 %v589, %v585
    %v710 = vpack.c.b16 %v594, %v590
    %v711 = vpack.c.b16 %v595, %v591
    %v712 = vpack.c.b16 %v596, %v592
    %v713 = vpack.c.b16 %v597, %v593
    %v714 = vpack.c.b16 %v602, %v598
    %v715 = vpack.c.b16 %v603, %v599
    %v716 = vpack.c.b16 %v604, %v600
    %v717 = vpack.c.b16 %v605, %v601
    %v718 = vpack.c.b16 %v610, %v606
    %v719 = vpack.c.b16 %v611, %v607
    %v720 = vpack.c.b16 %v612, %v608
    %v721 = vpack.c.b16 %v613, %v609
    %v722 = vpack.c.b16 %v618, %v614
    %v723 = vpack.c.b16 %v619, %v615
    %v724 = vpack.c.b16 %v620, %v616
    %v725 = vpack.c.b16 %v621, %v617
    %v726 = vpack.c.b16 %v626, %v622
    %v727 = vpack.c.b16 %v627, %v623
    %v728 = vpack.c.b16 %v628, %v624
    %v729 = vpack.c.b16 %v629, %v625
    %v730 = vpack.c.b16 %v634, %v630
    %v731 = vpack.c.b16 %v635, %v631
    %v732 = vpack.c.b16 %v636, %v632
    %v733 = vpack.c.b16 %v637, %v633
    %830 = vmatprep.subr.bf16.mxu0 %v639
    %831 = vmatpush1.bf16.msra.mxu0 %v638
    %832 = vmatprep.subr.bf16.mxu0 %v643
    %833 = vmatpush1.bf16.msra.mxu0 %v642
    %834 = vmatprep.subr.bf16.mxu0 %v647
    %835 = vmatpush1.bf16.msra.mxu0 %v646
    %836 = vmatprep.subr.bf16.mxu0 %v651
    %837 = vmatpush1.bf16.msra.mxu0 %v650
    %838 = vmatprep.subr.bf16.mxu0 %v655
    %839 = vmatpush1.bf16.msra.mxu0 %v654
    %840 = vmatprep.subr.bf16.mxu0 %v659
    %841 = vmatpush1.bf16.msra.mxu0 %v658
    %842 = vmatprep.subr.bf16.mxu0 %v663
    %843 = vmatpush1.bf16.msra.mxu0 %v662
    %844 = vmatprep.subr.bf16.mxu0 %v667
    %845 = vmatpush1.bf16.msra.mxu0 %v666
    %846 = vmatprep.subr.bf16.mxu0 %v671
    %847 = vmatpush1.bf16.msra.mxu0 %v670
    %848 = vmatprep.subr.bf16.mxu0 %v675
    %849 = vmatpush1.bf16.msra.mxu0 %v674
    %850 = vmatprep.subr.bf16.mxu0 %v679
    %851 = vmatpush1.bf16.msra.mxu0 %v678
    %852 = vmatprep.subr.bf16.mxu0 %v683
    %853 = vmatpush1.bf16.msra.mxu0 %v682
    %854 = vmatprep.subr.bf16.mxu0 %v687
    %855 = vmatpush1.bf16.msra.mxu0 %v686
    %856 = vmatprep.subr.bf16.mxu0 %v691
    %857 = vmatpush1.bf16.msra.mxu0 %v690
    %858 = vmatprep.subr.bf16.mxu0 %v695
    %859 = vmatpush1.bf16.msra.mxu0 %v694
    %860 = vmatprep.subr.bf16.mxu0 %v699
    %861 = vmatpush1.bf16.msra.mxu0 %v698
    %862 = vmatprep.mubr.bf16.mxu0 %v243
    %863 = vmatmul.mubr.bf16.gmra.mrb[0].mxu0 %v242
    %v864 = vpop.f32.mrb[0].mxu0
    %v865 = vadd.f32 0.0, %v864
    %v866 = vpop.f32.mrb[0].mxu0
    %v867 = vadd.f32 0.0, %v866
    %v868 = vpop.f32.mrb[0].mxu0
    %v869 = vadd.f32 0.0, %v868
    %v870 = vpop.f32.mrb[0].mxu0
    %v871 = vadd.f32 0.0, %v870
    %872 = vmatprep.mubr.bf16.mxu0 %v246
    %873 = vmatmul.mubr.bf16.gmra.mrb[0].mxu0 %v245
    %v874 = vpop.f32.mrb[0].mxu0
    %v875 = vadd.f32 0.0, %v874
    %v876 = vpop.f32.mrb[0].mxu0
    %v877 = vadd.f32 0.0, %v876
    %v878 = vpop.f32.mrb[0].mxu0
    %v879 = vadd.f32 0.0, %v878
    %v880 = vpop.f32.mrb[0].mxu0
    %v881 = vadd.f32 0.0, %v880
    %882 = vmatprep.mubr.bf16.mxu0 %v249
    %883 = vmatmul.mubr.bf16.gmra.mrb[0].mxu0 %v248
    %v884 = vpop.f32.mrb[0].mxu0
    %v885 = vadd.f32 0.0, %v884
    %v886 = vpop.f32.mrb[0].mxu0
    %v887 = vadd.f32 0.0, %v886
    %v888 = vpop.f32.mrb[0].mxu0
    %v889 = vadd.f32 0.0, %v888
    %v890 = vpop.f32.mrb[0].mxu0
    %v891 = vadd.f32 0.0, %v890
    %892 = vmatprep.mubr.bf16.mxu0 %v252
    %893 = vmatmul.mubr.bf16.gmra.mrb[0].mxu0 %v251
    %v894 = vpop.f32.mrb[0].mxu0
    %v895 = vadd.f32 0.0, %v894
    %v896 = vpop.f32.mrb[0].mxu0
    %v897 = vadd.f32 0.0, %v896
    %v898 = vpop.f32.mrb[0].mxu0
    %v899 = vpop.f32.mrb[0].mxu0
    %900 = vdwg.mxu0
    %901 = vmatprep.subr.bf16.mxu0 %v703
    %902 = vmatpush1.bf16.msra.mxu0 %v702
    %903 = vmatprep.subr.bf16.mxu0 %v707
    %904 = vmatpush1.bf16.msra.mxu0 %v706
    %905 = vmatprep.subr.bf16.mxu0 %v711
    %906 = vmatpush1.bf16.msra.mxu0 %v710
    %907 = vmatprep.subr.bf16.mxu0 %v715
    %908 = vmatpush1.bf16.msra.mxu0 %v714
    %909 = vmatprep.subr.bf16.mxu0 %v719
    %910 = vmatpush1.bf16.msra.mxu0 %v718
    %911 = vmatprep.subr.bf16.mxu0 %v723
    %912 = vmatpush1.bf16.msra.mxu0 %v722
    %913 = vmatprep.subr.bf16.mxu0 %v727
    %914 = vmatpush1.bf16.msra.mxu0 %v726
    %915 = vmatprep.subr.bf16.mxu0 %v731
    %916 = vmatpush1.bf16.msra.mxu0 %v730
    %917 = vmatprep.subr.bf16.mxu0 0
    %918 = vmatpush1.bf16.msra.mxu0 0
    %919 = vmatprep.subr.bf16.mxu0 0
    %920 = vmatpush1.bf16.msra.mxu0 0
    %921 = vmatprep.subr.bf16.mxu0 0
    %922 = vmatpush1.bf16.msra.mxu0 0
    %923 = vmatprep.subr.bf16.mxu0 0
    %924 = vmatpush1.bf16.msra.mxu0 0
    %925 = vmatprep.subr.bf16.mxu0 0
    %926 = vmatpush1.bf16.msra.mxu0 0
    %927 = vmatprep.subr.bf16.mxu0 0
    %928 = vmatpush1.bf16.msra.mxu0 0
    %929 = vmatprep.subr.bf16.mxu0 0
    %930 = vmatpush1.bf16.msra.mxu0 0
    %931 = vmatprep.subr.bf16.mxu0 0
    %932 = vmatpush1.bf16.msra.mxu0 0
    %933 = vmatprep.mubr.bf16.mxu0 0
    %934 = vmatmul.mubr.bf16.gmra.mrb[0].mxu0 %v244
    %v935 = vpop.f32.mrb[0].mxu0
    %v936 = vadd.f32 %v865, %v935
    %v937 = vpop.f32.mrb[0].mxu0
    %v938 = vadd.f32 %v867, %v937
    %v939 = vpop.f32.mrb[0].mxu0
    %v940 = vadd.f32 %v869, %v939
    %v941 = vpop.f32.mrb[0].mxu0
    %v942 = vadd.f32 %v871, %v941
    %943 = vmatprep.mubr.bf16.mxu0 0
    %944 = vmatmul.mubr.bf16.gmra.mrb[0].mxu0 %v247
    %v945 = vpop.f32.mrb[0].mxu0
    %v946 = vadd.f32 %v875, %v945
    %v947 = vpop.f32.mrb[0].mxu0
    %v948 = vadd.f32 %v877, %v947
    %v949 = vpop.f32.mrb[0].mxu0
    %v950 = vadd.f32 %v879, %v949
    %v951 = vpop.f32.mrb[0].mxu0
    %v952 = vadd.f32 %v881, %v951
    %953 = vmatprep.mubr.bf16.mxu0 0
    %954 = vmatmul.mubr.bf16.gmra.mrb[0].mxu0 %v250
    %v955 = vpop.f32.mrb[0].mxu0
    %v956 = vadd.f32 %v885, %v955
    %v957 = vpop.f32.mrb[0].mxu0
    %v958 = vadd.f32 %v887, %v957
    %v959 = vpop.f32.mrb[0].mxu0
    %v960 = vadd.f32 %v889, %v959
    %v961 = vpop.f32.mrb[0].mxu0
    %v962 = vadd.f32 %v891, %v961
    %963 = vmatprep.mubr.bf16.mxu0 0
    %964 = vmatmul.mubr.bf16.gmra.mrb[0].mxu0 %v253
    %v965 = vpop.f32.mrb[0].mxu0
    %v966 = vadd.f32 %v895, %v965
    %v967 = vpop.f32.mrb[0].mxu0
    %v968 = vadd.f32 %v897, %v967
    %v969 = vpop.f32.mrb[0].mxu0
    %v970 = vpop.f32.mrb[0].mxu0
    %971 = vdwg.mxu0
    %972 = vmatprep.subr.bf16.mxu0 %v641
    %973 = vmatpush1.bf16.msra.mxu0 %v640
    %974 = vmatprep.subr.bf16.mxu0 %v645
    %975 = vmatpush1.bf16.msra.mxu0 %v644
    %976 = vmatprep.subr.bf16.mxu0 %v649
    %977 = vmatpush1.bf16.msra.mxu0 %v648
    %978 = vmatprep.subr.bf16.mxu0 %v653
    %979 = vmatpush1.bf16.msra.mxu0 %v652
    %980 = vmatprep.subr.bf16.mxu0 %v657
    %981 = vmatpush1.bf16.msra.mxu0 %v656
    %982 = vmatprep.subr.bf16.mxu0 %v661
    %983 = vmatpush1.bf16.msra.mxu0 %v660
    %984 = vmatprep.subr.bf16.mxu0 %v665
    %985 = vmatpush1.bf16.msra.mxu0 %v664
    %986 = vmatprep.subr.bf16.mxu0 %v669
    %987 = vmatpush1.bf16.msra.mxu0 %v668
    %988 = vmatprep.subr.bf16.mxu0 %v673
    %989 = vmatpush1.bf16.msra.mxu0 %v672
    %990 = vmatprep.subr.bf16.mxu0 %v677
    %991 = vmatpush1.bf16.msra.mxu0 %v676
    %992 = vmatprep.subr.bf16.mxu0 %v681
    %993 = vmatpush1.bf16.msra.mxu0 %v680
    %994 = vmatprep.subr.bf16.mxu0 %v685
    %995 = vmatpush1.bf16.msra.mxu0 %v684
    %996 = vmatprep.subr.bf16.mxu0 %v689
    %997 = vmatpush1.bf16.msra.mxu0 %v688
    %998 = vmatprep.subr.bf16.mxu0 %v693
    %999 = vmatpush1.bf16.msra.mxu0 %v692
    %1000 = vmatprep.subr.bf16.mxu0 %v697
    %1001 = vmatpush1.bf16.msra.mxu0 %v696
    %1002 = vmatprep.subr.bf16.mxu0 %v701
    %1003 = vmatpush1.bf16.msra.mxu0 %v700
    %1004 = vmatprep.mubr.bf16.mxu0 %v243
    %1005 = vmatmul.mubr.bf16.gmra.mrb[0].mxu0 %v242
    %v1006 = vpop.f32.mrb[0].mxu0
    %v1007 = vadd.f32 0.0, %v1006
    %v1008 = vpop.f32.mrb[0].mxu0
    %v1009 = vadd.f32 0.0, %v1008
    %v1010 = vpop.f32.mrb[0].mxu0
    %v1011 = vadd.f32 0.0, %v1010
    %v1012 = vpop.f32.mrb[0].mxu0
    %v1013 = vadd.f32 0.0, %v1012
    %1014 = vmatprep.mubr.bf16.mxu0 %v246
    %1015 = vmatmul.mubr.bf16.gmra.mrb[0].mxu0 %v245
    %v1016 = vpop.f32.mrb[0].mxu0
    %v1017 = vadd.f32 0.0, %v1016
    %v1018 = vpop.f32.mrb[0].mxu0
    %v1019 = vadd.f32 0.0, %v1018
    %v1020 = vpop.f32.mrb[0].mxu0
    %v1021 = vadd.f32 0.0, %v1020
    %v1022 = vpop.f32.mrb[0].mxu0
    %v1023 = vadd.f32 0.0, %v1022
    %1024 = vmatprep.mubr.bf16.mxu0 %v249
    %1025 = vmatmul.mubr.bf16.gmra.mrb[0].mxu0 %v248
    %v1026 = vpop.f32.mrb[0].mxu0
    %v1027 = vadd.f32 0.0, %v1026
    %v1028 = vpop.f32.mrb[0].mxu0
    %v1029 = vadd.f32 0.0, %v1028
    %v1030 = vpop.f32.mrb[0].mxu0
    %v1031 = vadd.f32 0.0, %v1030
    %v1032 = vpop.f32.mrb[0].mxu0
    %v1033 = vadd.f32 0.0, %v1032
    %1034 = vmatprep.mubr.bf16.mxu0 %v252
    %1035 = vmatmul.mubr.bf16.gmra.mrb[0].mxu0 %v251
    %v1036 = vpop.f32.mrb[0].mxu0
    %v1037 = vadd.f32 0.0, %v1036
    %v1038 = vpop.f32.mrb[0].mxu0
    %v1039 = vadd.f32 0.0, %v1038
    %v1040 = vpop.f32.mrb[0].mxu0
    %v1041 = vpop.f32.mrb[0].mxu0
    %1042 = vdwg.mxu0
    %1043 = vmatprep.subr.bf16.mxu0 %v705
    %1044 = vmatpush1.bf16.msra.mxu0 %v704
    %1045 = vmatprep.subr.bf16.mxu0 %v709
    %1046 = vmatpush1.bf16.msra.mxu0 %v708
    %1047 = vmatprep.subr.bf16.mxu0 %v713
    %1048 = vmatpush1.bf16.msra.mxu0 %v712
    %1049 = vmatprep.subr.bf16.mxu0 %v717
    %1050 = vmatpush1.bf16.msra.mxu0 %v716
    %1051 = vmatprep.subr.bf16.mxu0 %v721
    %1052 = vmatpush1.bf16.msra.mxu0 %v720
    %1053 = vmatprep.subr.bf16.mxu0 %v725
    %1054 = vmatpush1.bf16.msra.mxu0 %v724
    %1055 = vmatprep.subr.bf16.mxu0 %v729
    %1056 = vmatpush1.bf16.msra.mxu0 %v728
    %1057 = vmatprep.subr.bf16.mxu0 %v733
    %1058 = vmatpush1.bf16.msra.mxu0 %v732
    %1059 = vmatprep.subr.bf16.mxu0 0
    %1060 = vmatpush1.bf16.msra.mxu0 0
    %1061 = vmatprep.subr.bf16.mxu0 0
    %1062 = vmatpush1.bf16.msra.mxu0 0
    %1063 = vmatprep.subr.bf16.mxu0 0
    %1064 = vmatpush1.bf16.msra.mxu0 0
    %1065 = vmatprep.subr.bf16.mxu0 0
    %1066 = vmatpush1.bf16.msra.mxu0 0
    %1067 = vmatprep.subr.bf16.mxu0 0
    %1068 = vmatpush1.bf16.msra.mxu0 0
    %1069 = vmatprep.subr.bf16.mxu0 0
    %1070 = vmatpush1.bf16.msra.mxu0 0
    %1071 = vmatprep.subr.bf16.mxu0 0
    %1072 = vmatpush1.bf16.msra.mxu0 0
    %1073 = vmatprep.subr.bf16.mxu0 0
    %1074 = vmatpush1.bf16.msra.mxu0 0
    %1075 = vmatprep.mubr.bf16.mxu0 0
    %1076 = vmatmul.mubr.bf16.gmra.mrb[0].mxu0 %v244
    %v1077 = vpop.f32.mrb[0].mxu0
    %v1078 = vadd.f32 %v1007, %v1077
    %v1079 = vpop.f32.mrb[0].mxu0
    %v1080 = vadd.f32 %v1009, %v1079
    %v1081 = vpop.f32.mrb[0].mxu0
    %v1082 = vadd.f32 %v1011, %v1081
    %v1083 = vpop.f32.mrb[0].mxu0
    %v1084 = vadd.f32 %v1013, %v1083
    %1085 = vmatprep.mubr.bf16.mxu0 0
    %1086 = vmatmul.mubr.bf16.gmra.mrb[0].mxu0 %v247
    %v1087 = vpop.f32.mrb[0].mxu0
    %v1088 = vadd.f32 %v1017, %v1087
    %v1089 = vpop.f32.mrb[0].mxu0
    %v1090 = vadd.f32 %v1019, %v1089
    %v1091 = vpop.f32.mrb[0].mxu0
    %v1092 = vadd.f32 %v1021, %v1091
    %v1093 = vpop.f32.mrb[0].mxu0
    %v1094 = vadd.f32 %v1023, %v1093
    %1095 = vmatprep.mubr.bf16.mxu0 0
    %1096 = vmatmul.mubr.bf16.gmra.mrb[0].mxu0 %v250
    %v1097 = vpop.f32.mrb[0].mxu0
    %v1098 = vadd.f32 %v1027, %v1097
    %v1099 = vpop.f32.mrb[0].mxu0
    %v1100 = vadd.f32 %v1029, %v1099
    %v1101 = vpop.f32.mrb[0].mxu0
    %v1102 = vadd.f32 %v1031, %v1101
    %v1103 = vpop.f32.mrb[0].mxu0
    %v1104 = vadd.f32 %v1033, %v1103
    %1105 = vmatprep.mubr.bf16.mxu0 0
    %1106 = vmatmul.mubr.bf16.gmra.mrb[0].mxu0 %v253
    %v1107 = vpop.f32.mrb[0].mxu0
    %v1108 = vadd.f32 %v1037, %v1107
    %v1109 = vpop.f32.mrb[0].mxu0
    %v1110 = vadd.f32 %v1039, %v1109
    %v1111 = vpop.f32.mrb[0].mxu0
    %v1112 = vpop.f32.mrb[0].mxu0
    %1113 = vdwg.mxu0
    %v1114 = vadd.f32 %v936, %v940
    %v1115 = vadd.f32 %v1114, %v946
    %v1116 = vadd.f32 %v1115, %v950
    %v1117 = vadd.f32 %v1116, %v956
    %v1118 = vadd.f32 %v1117, %v960
    %v1119 = vadd.f32 %v1118, %v966
    %v1120 = vrot.slane %v1119, 4
    %v1121 = vadd.f32 %v1119, %v1120
    %v1122 = vrot.slane %v1121, 2
    %v1123 = vadd.f32 %v1121, %v1122
    %v1124 = vrot.slane %v1123, 1
    %v1125 = vadd.f32 %v1123, %v1124
    %v1126 = vadd.f32 %v938, %v942
    %v1127 = vadd.f32 %v1126, %v948
    %v1128 = vadd.f32 %v1127, %v952
    %v1129 = vadd.f32 %v1128, %v958
    %v1130 = vadd.f32 %v1129, %v962
    %v1131 = vadd.f32 %v1130, %v968
    %v1132 = vrot.slane %v1131, 4
    %v1133 = vadd.f32 %v1131, %v1132
    %v1134 = vrot.slane %v1133, 2
    %v1135 = vadd.f32 %v1133, %v1134
    %v1136 = vrot.slane %v1135, 1
    %v1137 = vadd.f32 %v1135, %v1136
    %v1138 = vadd.f32 %v1078, %v1082
    %v1139 = vadd.f32 %v1138, %v1088
    %v1140 = vadd.f32 %v1139, %v1092
    %v1141 = vadd.f32 %v1140, %v1098
    %v1142 = vadd.f32 %v1141, %v1102
    %v1143 = vadd.f32 %v1142, %v1108
    %v1144 = vrot.slane %v1143, 4
    %v1145 = vadd.f32 %v1143, %v1144
    %v1146 = vrot.slane %v1145, 2
    %v1147 = vadd.f32 %v1145, %v1146
    %v1148 = vrot.slane %v1147, 1
    %v1149 = vadd.f32 %v1147, %v1148
    %vm1150 = vcmask 523264
    %v1151 = vsel %vm1150, %v1080, 0.0
    %v1152 = vsel %vm1150, %v1084, 0.0
    %v1153 = vadd.f32 %v1151, %v1152
    %v1154 = vsel %vm1150, %v1090, 0.0
    %v1155 = vadd.f32 %v1153, %v1154
    %v1156 = vsel %vm1150, %v1094, 0.0
    %v1157 = vadd.f32 %v1155, %v1156
    %v1158 = vsel %vm1150, %v1100, 0.0
    %v1159 = vadd.f32 %v1157, %v1158
    %v1160 = vsel %vm1150, %v1104, 0.0
    %v1161 = vadd.f32 %v1159, %v1160
    %v1162 = vsel %vm1150, %v1110, 0.0
    %v1163 = vadd.f32 %v1161, %v1162
    %v1164 = vrot.slane %v1163, 4
    %v1165 = vadd.f32 %v1163, %v1164
    %v1166 = vrot.slane %v1165, 2
    %v1167 = vadd.f32 %v1165, %v1166
    %v1168 = vrot.slane %v1167, 1
    %v1169 = vadd.f32 %v1167, %v1168
    %v1170 = vmul.f32 %v936, %v936
    %v1171 = vmul.f32 %v938, %v938
    %v1172 = vmul.f32 %v1078, %v1078
    %v1173 = vmul.f32 %v1080, %v1080
    %v1174 = vmul.f32 %v940, %v940
    %v1175 = vmul.f32 %v942, %v942
    %v1176 = vmul.f32 %v1082, %v1082
    %v1177 = vmul.f32 %v1084, %v1084
    %v1178 = vmul.f32 %v946, %v946
    %v1179 = vmul.f32 %v948, %v948
    %v1180 = vmul.f32 %v1088, %v1088
    %v1181 = vmul.f32 %v1090, %v1090
    %v1182 = vmul.f32 %v950, %v950
    %v1183 = vmul.f32 %v952, %v952
    %v1184 = vmul.f32 %v1092, %v1092
    %v1185 = vmul.f32 %v1094, %v1094
    %v1186 = vmul.f32 %v956, %v956
    %v1187 = vmul.f32 %v958, %v958
    %v1188 = vmul.f32 %v1098, %v1098
    %v1189 = vmul.f32 %v1100, %v1100
    %v1190 = vmul.f32 %v960, %v960
    %v1191 = vmul.f32 %v962, %v962
    %v1192 = vmul.f32 %v1102, %v1102
    %v1193 = vmul.f32 %v1104, %v1104
    %v1194 = vmul.f32 %v966, %v966
    %v1195 = vmul.f32 %v968, %v968
    %v1196 = vmul.f32 %v1108, %v1108
    %v1197 = vmul.f32 %v1110, %v1110
    %v1198 = vadd.f32 %v1170, %v1174
    %v1199 = vadd.f32 %v1198, %v1178
    %v1200 = vadd.f32 %v1199, %v1182
    %v1201 = vadd.f32 %v1200, %v1186
    %v1202 = vadd.f32 %v1201, %v1190
    %v1203 = vadd.f32 %v1202, %v1194
    %v1204 = vrot.slane %v1203, 4
    %v1205 = vadd.f32 %v1203, %v1204
    %v1206 = vrot.slane %v1205, 2
    %v1207 = vadd.f32 %v1205, %v1206
    %v1208 = vrot.slane %v1207, 1
    %v1209 = vadd.f32 %v1207, %v1208
    %v1210 = vadd.f32 %v1171, %v1175
    %v1211 = vadd.f32 %v1210, %v1179
    %v1212 = vadd.f32 %v1211, %v1183
    %v1213 = vadd.f32 %v1212, %v1187
    %v1214 = vadd.f32 %v1213, %v1191
    %v1215 = vadd.f32 %v1214, %v1195
    %v1216 = vrot.slane %v1215, 4
    %v1217 = vadd.f32 %v1215, %v1216
    %v1218 = vrot.slane %v1217, 2
    %v1219 = vadd.f32 %v1217, %v1218
    %v1220 = vrot.slane %v1219, 1
    %v1221 = vadd.f32 %v1219, %v1220
    %v1222 = vadd.f32 %v1172, %v1176
    %v1223 = vadd.f32 %v1222, %v1180
    %v1224 = vadd.f32 %v1223, %v1184
    %v1225 = vadd.f32 %v1224, %v1188
    %v1226 = vadd.f32 %v1225, %v1192
    %v1227 = vadd.f32 %v1226, %v1196
    %v1228 = vrot.slane %v1227, 4
    %v1229 = vadd.f32 %v1227, %v1228
    %v1230 = vrot.slane %v1229, 2
    %v1231 = vadd.f32 %v1229, %v1230
    %v1232 = vrot.slane %v1231, 1
    %v1233 = vadd.f32 %v1231, %v1232
    %v1234 = vsel %vm1150, %v1173, 0.0
    %v1235 = vsel %vm1150, %v1177, 0.0
    %v1236 = vadd.f32 %v1234, %v1235
    %v1237 = vsel %vm1150, %v1181, 0.0
    %v1238 = vadd.f32 %v1236, %v1237
    %v1239 = vsel %vm1150, %v1185, 0.0
    %v1240 = vadd.f32 %v1238, %v1239
    %v1241 = vsel %vm1150, %v1189, 0.0
    %v1242 = vadd.f32 %v1240, %v1241
    %v1243 = vsel %vm1150, %v1193, 0.0
    %v1244 = vadd.f32 %v1242, %v1243
    %v1245 = vsel %vm1150, %v1197, 0.0
    %v1246 = vadd.f32 %v1244, %v1245
    %v1247 = vrot.slane %v1246, 4
    %v1248 = vadd.f32 %v1246, %v1247
    %v1249 = vrot.slane %v1248, 2
    %v1250 = vadd.f32 %v1248, %v1249
    %v1251 = vrot.slane %v1250, 1
    %v1252 = vadd.f32 %v1250, %v1251
    %v1253 = vld [vmem:[%s2] sm:$0xff]
    %v1254 = vld [vmem:[%s2 + $0x8] sm:$0xff]
    %v1255 = vld [vmem:[%s2 + $0x10] sm:$0xff]
    %v1256 = vld [vmem:[%s2 + $0x18] sm:$0xff]
    %v1257 = vld [vmem:[%s2 + $0x20] sm:$0xff]
    %v1258 = vld [vmem:[%s2 + $0x28] sm:$0xff]
    %v1259 = vld [vmem:[%s2 + $0x30] sm:$0xff]
    %v1260 = vld [vmem:[%s2 + $0x38] sm:$0xff]
    %v1261 = vld [vmem:[%s2 + $0x40] sm:$0xff]
    %v1262 = vld [vmem:[%s2 + $0x48] sm:$0xff]
    %v1263 = vld [vmem:[%s2 + $0x50] sm:$0xff]
    %v1264 = vld [vmem:[%s2 + $0x58] sm:$0xff]
    %v1265 = vld [vmem:[%s2 + $0x60] sm:$0xff]
    %v1266 = vld [vmem:[%s2 + $0x68] sm:$0xff]
    %v1267 = vld [vmem:[%s2 + $0x70] sm:$0xff]
    %v1268 = vld [vmem:[%s2 + $0x78] sm:$0xff]
    %v1269 = vld [vmem:[%s2 + $0x80] sm:$0xff]
    %v1270 = vld [vmem:[%s2 + $0x88] sm:$0xff]
    %v1271 = vld [vmem:[%s2 + $0x90] sm:$0xff]
    %v1272 = vld [vmem:[%s2 + $0x98] sm:$0xff]
    %v1273 = vld [vmem:[%s2 + $0xa0] sm:$0xff]
    %v1274 = vld [vmem:[%s2 + $0xa8] sm:$0xff]
    %v1275 = vld [vmem:[%s2 + $0xb0] sm:$0xff]
    %v1276 = vld [vmem:[%s2 + $0xb8] sm:$0xff]
    %v1277 = vld [vmem:[%s2 + $0xc0] sm:$0xff]
    %v1278 = vld [vmem:[%s2 + $0xc8] sm:$0xff]
    %v1279 = vld [vmem:[%s2 + $0xd0] sm:$0xff]
    %v1280 = vld [vmem:[%s2 + $0xd8] sm:$0xff]
    %v1281 = vld [vmem:[%s2 + $0xe0] sm:$0xff]
    %v1282 = vld [vmem:[%s2 + $0xe8] sm:$0xff]
    %v1283 = vld [vmem:[%s2 + $0xf0] sm:$0xff]
    %v1284 = vld [vmem:[%s2 + $0xf8] sm:$0xff]
    %v1285 = vld [vmem:[%s2 + $0x100] sm:$0xff]
    %v1286 = vld [vmem:[%s2 + $0x108] sm:$0xff]
    %v1287 = vld [vmem:[%s2 + $0x110] sm:$0xff]
    %v1288 = vld [vmem:[%s2 + $0x118] sm:$0xff]
    %v1289 = vld [vmem:[%s2 + $0x120] sm:$0xff]
    %v1290 = vld [vmem:[%s2 + $0x128] sm:$0xff]
    %v1291 = vld [vmem:[%s2 + $0x130] sm:$0xff]
    %v1292 = vld [vmem:[%s2 + $0x138] sm:$0xff]
    %v1293 = vld [vmem:[%s2 + $0x140] sm:$0xff]
    %v1294 = vld [vmem:[%s2 + $0x148] sm:$0xff]
    %v1295 = vld [vmem:[%s2 + $0x150] sm:$0xff]
    %v1296 = vld [vmem:[%s2 + $0x158] sm:$0xff]
    %v1297 = vld [vmem:[%s2 + $0x160] sm:$0xff]
    %v1298 = vld [vmem:[%s2 + $0x168] sm:$0xff]
    %v1299 = vld [vmem:[%s2 + $0x170] sm:$0xff]
    %v1300 = vld [vmem:[%s2 + $0x178] sm:$0xff]
    %v1301 = vld [vmem:[%s2 + $0x180] sm:$0xff]
    %v1302 = vld [vmem:[%s2 + $0x188] sm:$0xff]
    %v1303 = vld [vmem:[%s2 + $0x190] sm:$0xff]
    %v1304 = vld [vmem:[%s2 + $0x198] sm:$0xff]
    %v1305 = vld [vmem:[%s2 + $0x1a0] sm:$0xff]
    %v1306 = vld [vmem:[%s2 + $0x1a8] sm:$0xff]
    %v1307 = vld [vmem:[%s2 + $0x1b0] sm:$0xff]
    %v1308 = vld [vmem:[%s2 + $0x1b8] sm:$0xff]
    %v1310 = vsel %vm1150, %v1169, 0
    %1312 = vmatprep.subr.mxu0 0.0
    %1313 = vmatpush1.msra.mxu0 %v1253
    %1314 = vmatprep.subr.mxu0 0.0
    %1315 = vmatpush1.msra.mxu0 %v1254
    %1316 = vmatprep.subr.mxu0 0.0
    %1317 = vmatpush1.msra.mxu0 %v1255
    %1318 = vmatprep.subr.mxu0 0.0
    %1319 = vmatpush1.msra.mxu0 %v1256
    %1320 = vmatprep.subr.mxu0 0.0
    %1321 = vmatpush1.msra.mxu0 %v1257
    %1322 = vmatprep.subr.mxu0 0.0
    %1323 = vmatpush1.msra.mxu0 %v1258
    %1324 = vmatprep.subr.mxu0 0.0
    %1325 = vmatpush1.msra.mxu0 %v1259
    %1326 = vmatprep.subr.mxu0 0.0
    %1327 = vmatpush1.msra.mxu0 %v1260
    %1328 = vmatprep.subr.mxu0 0.0
    %1329 = vmatpush1.msra.mxu0 %v1261
    %1330 = vmatprep.subr.mxu0 0.0
    %1331 = vmatpush1.msra.mxu0 %v1262
    %1332 = vmatprep.subr.mxu0 0.0
    %1333 = vmatpush1.msra.mxu0 %v1263
    %1334 = vmatprep.subr.mxu0 0.0
    %1335 = vmatpush1.msra.mxu0 %v1264
    %1336 = vmatprep.subr.mxu0 0.0
    %1337 = vmatpush1.msra.mxu0 %v1265
    %1338 = vmatprep.subr.mxu0 0.0
    %1339 = vmatpush1.msra.mxu0 %v1266
    %1340 = vmatprep.subr.mxu0 0.0
    %1341 = vmatpush1.msra.mxu0 %v1267
    %1342 = vmatprep.subr.mxu0 0.0
    %1343 = vmatpush1.msra.mxu0 %v1268
    %1344 = vmatprep.subr.mxu0 0.0
    %1345 = vmatpush1.msra.mxu0 %v1269
    %1346 = vmatprep.subr.mxu0 0.0
    %1347 = vmatpush1.msra.mxu0 %v1270
    %1348 = vmatprep.subr.mxu0 0.0
    %1349 = vmatpush1.msra.mxu0 %v1271
    %1350 = vmatprep.subr.mxu0 0.0
    %1351 = vmatpush1.msra.mxu0 %v1272
    %1352 = vmatprep.subr.mxu0 0.0
    %1353 = vmatpush1.msra.mxu0 %v1273
    %1354 = vmatprep.subr.mxu0 0.0
    %1355 = vmatpush1.msra.mxu0 %v1274
    %1356 = vmatprep.subr.mxu0 0.0
    %1357 = vmatpush1.msra.mxu0 %v1275
    %1358 = vmatprep.subr.mxu0 0.0
    %1359 = vmatpush1.msra.mxu0 %v1276
    %1360 = vmatprep.subr.mxu0 0.0
    %1361 = vmatpush1.msra.mxu0 %v1277
    %1362 = vmatprep.subr.mxu0 0.0
    %1363 = vmatpush1.msra.mxu0 %v1278
    %1364 = vmatprep.subr.mxu0 0.0
    %1365 = vmatpush1.msra.mxu0 %v1279
    %1366 = vmatprep.subr.mxu0 0.0
    %1367 = vmatpush1.msra.mxu0 %v1280
    %1368 = vmatprep.subr.mxu0 0.0
    %1369 = vmatpush1.msra.mxu0 %v1281
    %1370 = vmatprep.subr.mxu0 0.0
    %1371 = vmatpush1.msra.mxu0 %v1282
    %1372 = vmatprep.subr.mxu0 0.0
    %1373 = vmatpush1.msra.mxu0 %v1283
    %1374 = vmatprep.subr.mxu0 0.0
    %1375 = vmatpush1.msra.mxu0 %v1284
    %1376 = vmatprep.mubr.f32.mxu0 %v1137
    %1377 = vmatmul.mubr.f32.gmra.mrb[0].mxu0 %v1125
    %v1378 = vpop.f32.mrb[0].mxu0
    %v1379 = vadd.f32 0.0, %v1378
    %v1380 = vpop.f32.mrb[0].mxu0
    %1381 = vdwg.mxu0
    %1382 = vmatprep.subr.mxu0 0.0
    %1383 = vmatpush1.msra.mxu0 %v1285
    %1384 = vmatprep.subr.mxu0 0.0
    %1385 = vmatpush1.msra.mxu0 %v1286
    %1386 = vmatprep.subr.mxu0 0.0
    %1387 = vmatpush1.msra.mxu0 %v1287
    %1388 = vmatprep.subr.mxu0 0.0
    %1389 = vmatpush1.msra.mxu0 %v1288
    %1390 = vmatprep.subr.mxu0 0.0
    %1391 = vmatpush1.msra.mxu0 %v1289
    %1392 = vmatprep.subr.mxu0 0.0
    %1393 = vmatpush1.msra.mxu0 %v1290
    %1394 = vmatprep.subr.mxu0 0.0
    %1395 = vmatpush1.msra.mxu0 %v1291
    %1396 = vmatprep.subr.mxu0 0.0
    %1397 = vmatpush1.msra.mxu0 %v1292
    %1398 = vmatprep.subr.mxu0 0.0
    %1399 = vmatpush1.msra.mxu0 %v1293
    %1400 = vmatprep.subr.mxu0 0.0
    %1401 = vmatpush1.msra.mxu0 %v1294
    %1402 = vmatprep.subr.mxu0 0.0
    %1403 = vmatpush1.msra.mxu0 %v1295
    %1404 = vmatprep.subr.mxu0 0.0
    %1405 = vmatpush1.msra.mxu0 %v1296
    %1406 = vmatprep.subr.mxu0 0.0
    %1407 = vmatpush1.msra.mxu0 %v1297
    %1408 = vmatprep.subr.mxu0 0.0
    %1409 = vmatpush1.msra.mxu0 %v1298
    %1410 = vmatprep.subr.mxu0 0.0
    %1411 = vmatpush1.msra.mxu0 %v1299
    %1412 = vmatprep.subr.mxu0 0.0
    %1413 = vmatpush1.msra.mxu0 %v1300
    %1414 = vmatprep.subr.mxu0 0.0
    %1415 = vmatpush1.msra.mxu0 %v1301
    %1416 = vmatprep.subr.mxu0 0.0
    %1417 = vmatpush1.msra.mxu0 %v1302
    %1418 = vmatprep.subr.mxu0 0.0
    %1419 = vmatpush1.msra.mxu0 %v1303
    %1420 = vmatprep.subr.mxu0 0.0
    %1421 = vmatpush1.msra.mxu0 %v1304
    %1422 = vmatprep.subr.mxu0 0.0
    %1423 = vmatpush1.msra.mxu0 %v1305
    %1424 = vmatprep.subr.mxu0 0.0
    %1425 = vmatpush1.msra.mxu0 %v1306
    %1426 = vmatprep.subr.mxu0 0.0
    %1427 = vmatpush1.msra.mxu0 %v1307
    %1428 = vmatprep.subr.mxu0 0.0
    %1429 = vmatpush1.msra.mxu0 %v1308
    %1430 = vmatprep.subr.mxu0 0.0
    %1431 = vmatpush1.msra.mxu0 0.0
    %1432 = vmatprep.subr.mxu0 0.0
    %1433 = vmatpush1.msra.mxu0 0.0
    %1434 = vmatprep.subr.mxu0 0.0
    %1435 = vmatpush1.msra.mxu0 0.0
    %1436 = vmatprep.subr.mxu0 0.0
    %1437 = vmatpush1.msra.mxu0 0.0
    %1438 = vmatprep.subr.mxu0 0.0
    %1439 = vmatpush1.msra.mxu0 0.0
    %1440 = vmatprep.subr.mxu0 0.0
    %1441 = vmatpush1.msra.mxu0 0.0
    %1442 = vmatprep.subr.mxu0 0.0
    %1443 = vmatpush1.msra.mxu0 0.0
    %1444 = vmatprep.subr.mxu0 0.0
    %1445 = vmatpush1.msra.mxu0 0.0
    %1446 = vmatprep.mubr.f32.mxu0 %v1310
    %1447 = vmatmul.mubr.f32.gmra.mrb[0].mxu0 %v1149
    %v1448 = vpop.f32.mrb[0].mxu0
    %v1449 = vadd.f32 %v1379, %v1448
    %v1450 = vpop.f32.mrb[0].mxu0
    %1451 = vdwg.mxu0
    %v1452 = vmul.f32 %v1449, 0.0006377551
    %v1454 = vsel %vm1150, %v1252, 0
    %1456 = vmatprep.subr.mxu0 0.0
    %1457 = vmatpush1.msra.mxu0 %v1253
    %1458 = vmatprep.subr.mxu0 0.0
    %1459 = vmatpush1.msra.mxu0 %v1254
    %1460 = vmatprep.subr.mxu0 0.0
    %1461 = vmatpush1.msra.mxu0 %v1255
    %1462 = vmatprep.subr.mxu0 0.0
    %1463 = vmatpush1.msra.mxu0 %v1256
    %1464 = vmatprep.subr.mxu0 0.0
    %1465 = vmatpush1.msra.mxu0 %v1257
    %1466 = vmatprep.subr.mxu0 0.0
    %1467 = vmatpush1.msra.mxu0 %v1258
    %1468 = vmatprep.subr.mxu0 0.0
    %1469 = vmatpush1.msra.mxu0 %v1259
    %1470 = vmatprep.subr.mxu0 0.0
    %1471 = vmatpush1.msra.mxu0 %v1260
    %1472 = vmatprep.subr.mxu0 0.0
    %1473 = vmatpush1.msra.mxu0 %v1261
    %1474 = vmatprep.subr.mxu0 0.0
    %1475 = vmatpush1.msra.mxu0 %v1262
    %1476 = vmatprep.subr.mxu0 0.0
    %1477 = vmatpush1.msra.mxu0 %v1263
    %1478 = vmatprep.subr.mxu0 0.0
    %1479 = vmatpush1.msra.mxu0 %v1264
    %1480 = vmatprep.subr.mxu0 0.0
    %1481 = vmatpush1.msra.mxu0 %v1265
    %1482 = vmatprep.subr.mxu0 0.0
    %1483 = vmatpush1.msra.mxu0 %v1266
    %1484 = vmatprep.subr.mxu0 0.0
    %1485 = vmatpush1.msra.mxu0 %v1267
    %1486 = vmatprep.subr.mxu0 0.0
    %1487 = vmatpush1.msra.mxu0 %v1268
    %1488 = vmatprep.subr.mxu0 0.0
    %1489 = vmatpush1.msra.mxu0 %v1269
    %1490 = vmatprep.subr.mxu0 0.0
    %1491 = vmatpush1.msra.mxu0 %v1270
    %1492 = vmatprep.subr.mxu0 0.0
    %1493 = vmatpush1.msra.mxu0 %v1271
    %1494 = vmatprep.subr.mxu0 0.0
    %1495 = vmatpush1.msra.mxu0 %v1272
    %1496 = vmatprep.subr.mxu0 0.0
    %1497 = vmatpush1.msra.mxu0 %v1273
    %1498 = vmatprep.subr.mxu0 0.0
    %1499 = vmatpush1.msra.mxu0 %v1274
    %1500 = vmatprep.subr.mxu0 0.0
    %1501 = vmatpush1.msra.mxu0 %v1275
    %1502 = vmatprep.subr.mxu0 0.0
    %1503 = vmatpush1.msra.mxu0 %v1276
    %1504 = vmatprep.subr.mxu0 0.0
    %1505 = vmatpush1.msra.mxu0 %v1277
    %1506 = vmatprep.subr.mxu0 0.0
    %1507 = vmatpush1.msra.mxu0 %v1278
    %1508 = vmatprep.subr.mxu0 0.0
    %1509 = vmatpush1.msra.mxu0 %v1279
    %1510 = vmatprep.subr.mxu0 0.0
    %1511 = vmatpush1.msra.mxu0 %v1280
    %1512 = vmatprep.subr.mxu0 0.0
    %1513 = vmatpush1.msra.mxu0 %v1281
    %1514 = vmatprep.subr.mxu0 0.0
    %1515 = vmatpush1.msra.mxu0 %v1282
    %1516 = vmatprep.subr.mxu0 0.0
    %1517 = vmatpush1.msra.mxu0 %v1283
    %1518 = vmatprep.subr.mxu0 0.0
    %1519 = vmatpush1.msra.mxu0 %v1284
    %1520 = vmatprep.mubr.f32.mxu0 %v1221
    %1521 = vmatmul.mubr.f32.gmra.mrb[0].mxu0 %v1209
    %v1522 = vpop.f32.mrb[0].mxu0
    %v1523 = vadd.f32 0.0, %v1522
    %v1524 = vpop.f32.mrb[0].mxu0
    %1525 = vdwg.mxu0
    %1526 = vmatprep.subr.mxu0 0.0
    %1527 = vmatpush1.msra.mxu0 %v1285
    %1528 = vmatprep.subr.mxu0 0.0
    %1529 = vmatpush1.msra.mxu0 %v1286
    %1530 = vmatprep.subr.mxu0 0.0
    %1531 = vmatpush1.msra.mxu0 %v1287
    %1532 = vmatprep.subr.mxu0 0.0
    %1533 = vmatpush1.msra.mxu0 %v1288
    %1534 = vmatprep.subr.mxu0 0.0
    %1535 = vmatpush1.msra.mxu0 %v1289
    %1536 = vmatprep.subr.mxu0 0.0
    %1537 = vmatpush1.msra.mxu0 %v1290
    %1538 = vmatprep.subr.mxu0 0.0
    %1539 = vmatpush1.msra.mxu0 %v1291
    %1540 = vmatprep.subr.mxu0 0.0
    %1541 = vmatpush1.msra.mxu0 %v1292
    %1542 = vmatprep.subr.mxu0 0.0
    %1543 = vmatpush1.msra.mxu0 %v1293
    %1544 = vmatprep.subr.mxu0 0.0
    %1545 = vmatpush1.msra.mxu0 %v1294
    %1546 = vmatprep.subr.mxu0 0.0
    %1547 = vmatpush1.msra.mxu0 %v1295
    %1548 = vmatprep.subr.mxu0 0.0
    %1549 = vmatpush1.msra.mxu0 %v1296
    %1550 = vmatprep.subr.mxu0 0.0
    %1551 = vmatpush1.msra.mxu0 %v1297
    %1552 = vmatprep.subr.mxu0 0.0
    %1553 = vmatpush1.msra.mxu0 %v1298
    %1554 = vmatprep.subr.mxu0 0.0
    %1555 = vmatpush1.msra.mxu0 %v1299
    %1556 = vmatprep.subr.mxu0 0.0
    %1557 = vmatpush1.msra.mxu0 %v1300
    %1558 = vmatprep.subr.mxu0 0.0
    %1559 = vmatpush1.msra.mxu0 %v1301
    %1560 = vmatprep.subr.mxu0 0.0
    %1561 = vmatpush1.msra.mxu0 %v1302
    %1562 = vmatprep.subr.mxu0 0.0
    %1563 = vmatpush1.msra.mxu0 %v1303
    %1564 = vmatprep.subr.mxu0 0.0
    %1565 = vmatpush1.msra.mxu0 %v1304
    %1566 = vmatprep.subr.mxu0 0.0
    %1567 = vmatpush1.msra.mxu0 %v1305
    %1568 = vmatprep.subr.mxu0 0.0
    %1569 = vmatpush1.msra.mxu0 %v1306
    %1570 = vmatprep.subr.mxu0 0.0
    %1571 = vmatpush1.msra.mxu0 %v1307
    %1572 = vmatprep.subr.mxu0 0.0
    %1573 = vmatpush1.msra.mxu0 %v1308
    %1574 = vmatprep.subr.mxu0 0.0
    %1575 = vmatpush1.msra.mxu0 0.0
    %1576 = vmatprep.subr.mxu0 0.0
    %1577 = vmatpush1.msra.mxu0 0.0
    %1578 = vmatprep.subr.mxu0 0.0
    %1579 = vmatpush1.msra.mxu0 0.0
    %1580 = vmatprep.subr.mxu0 0.0
    %1581 = vmatpush1.msra.mxu0 0.0
    %1582 = vmatprep.subr.mxu0 0.0
    %1583 = vmatpush1.msra.mxu0 0.0
    %1584 = vmatprep.subr.mxu0 0.0
    %1585 = vmatpush1.msra.mxu0 0.0
    %1586 = vmatprep.subr.mxu0 0.0
    %1587 = vmatpush1.msra.mxu0 0.0
    %1588 = vmatprep.subr.mxu0 0.0
    %1589 = vmatpush1.msra.mxu0 0.0
    %1590 = vmatprep.mubr.f32.mxu0 %v1454
    %1591 = vmatmul.mubr.f32.gmra.mrb[0].mxu0 %v1233
    %v1592 = vpop.f32.mrb[0].mxu0
    %v1593 = vadd.f32 %v1523, %v1592
    %v1594 = vpop.f32.mrb[0].mxu0
    %1595 = vdwg.mxu0
    %v1596 = vmul.f32 %v1593, 0.0006377551
    %v1597 = vmul.f32 %v1452, %v1452
    %v1598 = vsub.f32 %v1596, %v1597
    %v1599 = vld [vmem:[%s4] sm:$0x1]
    %v1600 = vadd.f32 %v1598, 1e-05
    %v1601 = vrsqrt.pop %v1600
    %v1602 = vmul.f32 %v1599, %v1601
    %v1603 = vld [vmem:[%s4 + $0x1] sm:$0x1]
    %v1604 = vmul.f32 %v1452, %v1602
    %v1605 = vsub.f32 %v1603, %v1604
    %v1606 = vld [vmem:[%s3] sm:$0xff]
    %v1607 = vld [vmem:[%s3 + $0x8] sm:$0xff]
    %v1608 = vld [vmem:[%s3 + $0x10] sm:$0xff]
    %v1609 = vld [vmem:[%s3 + $0x18] sm:$0xff]
    %v1610 = vld [vmem:[%s3 + $0x20] sm:$0xff]
    %v1611 = vld [vmem:[%s3 + $0x28] sm:$0xff]
    %v1612 = vld [vmem:[%s3 + $0x30] sm:$0xff]
    %v1613 = vld [vmem:[%s3 + $0x38] sm:$0xff]
    %vm1614 = vcmask 130048
    %v1616 = vsel %vm1614, %v1602, 0
    %1618 = vmatprep.subr.mxu0 %v1607
    %1619 = vmatpush1.msra.mxu0 %v1606
    %1620 = vmatprep.subr.mxu0 %v1611
    %1621 = vmatpush1.msra.mxu0 %v1610
    %1622 = vmatprep.subr.mxu0 0.0
    %1623 = vmatpush1.msra.mxu0 0.0
    %1624 = vmatprep.subr.mxu0 0.0
    %1625 = vmatpush1.msra.mxu0 0.0
    %1626 = vmatprep.subr.mxu0 0.0
    %1627 = vmatpush1.msra.mxu0 0.0
    %1628 = vmatprep.subr.mxu0 0.0
    %1629 = vmatpush1.msra.mxu0 0.0
    %1630 = vmatprep.subr.mxu0 0.0
    %1631 = vmatpush1.msra.mxu0 0.0
    %1632 = vmatprep.subr.mxu0 0.0
    %1633 = vmatpush1.msra.mxu0 0.0
    %1634 = vmatprep.subr.mxu0 0.0
    %1635 = vmatpush1.msra.mxu0 0.0
    %1636 = vmatprep.subr.mxu0 0.0
    %1637 = vmatpush1.msra.mxu0 0.0
    %1638 = vmatprep.subr.mxu0 0.0
    %1639 = vmatpush1.msra.mxu0 0.0
    %1640 = vmatprep.subr.mxu0 0.0
    %1641 = vmatpush1.msra.mxu0 0.0
    %1642 = vmatprep.subr.mxu0 0.0
    %1643 = vmatpush1.msra.mxu0 0.0
    %1644 = vmatprep.subr.mxu0 0.0
    %1645 = vmatpush1.msra.mxu0 0.0
    %1646 = vmatprep.subr.mxu0 0.0
    %1647 = vmatpush1.msra.mxu0 0.0
    %1648 = vmatprep.subr.mxu0 0.0
    %1649 = vmatpush1.msra.mxu0 0.0
    %1650 = vmatprep.subr.mxu0 0.0
    %1651 = vmatpush1.msra.mxu0 0.0
    %1652 = vmatprep.subr.mxu0 0.0
    %1653 = vmatpush1.msra.mxu0 0.0
    %1654 = vmatprep.subr.mxu0 0.0
    %1655 = vmatpush1.msra.mxu0 0.0
    %1656 = vmatprep.subr.mxu0 0.0
    %1657 = vmatpush1.msra.mxu0 0.0
    %1658 = vmatprep.subr.mxu0 0.0
    %1659 = vmatpush1.msra.mxu0 0.0
    %1660 = vmatprep.subr.mxu0 0.0
    %1661 = vmatpush1.msra.mxu0 0.0
    %1662 = vmatprep.subr.mxu0 0.0
    %1663 = vmatpush1.msra.mxu0 0.0
    %1664 = vmatprep.subr.mxu0 0.0
    %1665 = vmatpush1.msra.mxu0 0.0
    %1666 = vmatprep.subr.mxu0 0.0
    %1667 = vmatpush1.msra.mxu0 0.0
    %1668 = vmatprep.subr.mxu0 0.0
    %1669 = vmatpush1.msra.mxu0 0.0
    %1670 = vmatprep.subr.mxu0 0.0
    %1671 = vmatpush1.msra.mxu0 0.0
    %1672 = vmatprep.subr.mxu0 0.0
    %1673 = vmatpush1.msra.mxu0 0.0
    %1674 = vmatprep.subr.mxu0 0.0
    %1675 = vmatpush1.msra.mxu0 0.0
    %1676 = vmatprep.subr.mxu0 0.0
    %1677 = vmatpush1.msra.mxu0 0.0
    %1678 = vmatprep.subr.mxu0 0.0
    %1679 = vmatpush1.msra.mxu0 0.0
    %1680 = vmatprep.subr.mxu0 0.0
    %1681 = vmatpush1.msra.mxu0 0.0
    %1682 = vmatprep.mubr.f32.mxu0 0.0
    %1683 = vmatmul.mubr.f32.gmra.mrb[0].mxu0 %v1616
    %v1684 = vpop.f32.mrb[0].mxu0
    %v1685 = vadd.f32 0.0, %v1684
    %v1686 = vpop.f32.mrb[0].mxu0
    %v1687 = vadd.f32 0.0, %v1686
    %1688 = vdwg.mxu0
    %1689 = vmatprep.subr.mxu0 %v1609
    %1690 = vmatpush1.msra.mxu0 %v1608
    %1691 = vmatprep.subr.mxu0 %v1613
    %1692 = vmatpush1.msra.mxu0 %v1612
    %1693 = vmatprep.subr.mxu0 0.0
    %1694 = vmatpush1.msra.mxu0 0.0
    %1695 = vmatprep.subr.mxu0 0.0
    %1696 = vmatpush1.msra.mxu0 0.0
    %1697 = vmatprep.subr.mxu0 0.0
    %1698 = vmatpush1.msra.mxu0 0.0
    %1699 = vmatprep.subr.mxu0 0.0
    %1700 = vmatpush1.msra.mxu0 0.0
    %1701 = vmatprep.subr.mxu0 0.0
    %1702 = vmatpush1.msra.mxu0 0.0
    %1703 = vmatprep.subr.mxu0 0.0
    %1704 = vmatpush1.msra.mxu0 0.0
    %1705 = vmatprep.subr.mxu0 0.0
    %1706 = vmatpush1.msra.mxu0 0.0
    %1707 = vmatprep.subr.mxu0 0.0
    %1708 = vmatpush1.msra.mxu0 0.0
    %1709 = vmatprep.subr.mxu0 0.0
    %1710 = vmatpush1.msra.mxu0 0.0
    %1711 = vmatprep.subr.mxu0 0.0
    %1712 = vmatpush1.msra.mxu0 0.0
    %1713 = vmatprep.subr.mxu0 0.0
    %1714 = vmatpush1.msra.mxu0 0.0
    %1715 = vmatprep.subr.mxu0 0.0
    %1716 = vmatpush1.msra.mxu0 0.0
    %1717 = vmatprep.subr.mxu0 0.0
    %1718 = vmatpush1.msra.mxu0 0.0
    %1719 = vmatprep.subr.mxu0 0.0
    %1720 = vmatpush1.msra.mxu0 0.0
    %1721 = vmatprep.subr.mxu0 0.0
    %1722 = vmatpush1.msra.mxu0 0.0
    %1723 = vmatprep.subr.mxu0 0.0
    %1724 = vmatpush1.msra.mxu0 0.0
    %1725 = vmatprep.subr.mxu0 0.0
    %1726 = vmatpush1.msra.mxu0 0.0
    %1727 = vmatprep.subr.mxu0 0.0
    %1728 = vmatpush1.msra.mxu0 0.0
    %1729 = vmatprep.subr.mxu0 0.0
    %1730 = vmatpush1.msra.mxu0 0.0
    %1731 = vmatprep.subr.mxu0 0.0
    %1732 = vmatpush1.msra.mxu0 0.0
    %1733 = vmatprep.subr.mxu0 0.0
    %1734 = vmatpush1.msra.mxu0 0.0
    %1735 = vmatprep.subr.mxu0 0.0
    %1736 = vmatpush1.msra.mxu0 0.0
    %1737 = vmatprep.subr.mxu0 0.0
    %1738 = vmatpush1.msra.mxu0 0.0
    %1739 = vmatprep.subr.mxu0 0.0
    %1740 = vmatpush1.msra.mxu0 0.0
    %1741 = vmatprep.subr.mxu0 0.0
    %1742 = vmatpush1.msra.mxu0 0.0
    %1743 = vmatprep.subr.mxu0 0.0
    %1744 = vmatpush1.msra.mxu0 0.0
    %1745 = vmatprep.subr.mxu0 0.0
    %1746 = vmatpush1.msra.mxu0 0.0
    %1747 = vmatprep.subr.mxu0 0.0
    %1748 = vmatpush1.msra.mxu0 0.0
    %1749 = vmatprep.subr.mxu0 0.0
    %1750 = vmatpush1.msra.mxu0 0.0
    %1751 = vmatprep.subr.mxu0 0.0
    %1752 = vmatpush1.msra.mxu0 0.0
    %1753 = vmatprep.mubr.f32.mxu0 0.0
    %1754 = vmatmul.mubr.f32.gmra.mrb[0].mxu0 %v1616
    %v1755 = vpop.f32.mrb[0].mxu0
    %v1756 = vadd.f32 0.0, %v1755
    %v1757 = vpop.f32.mrb[0].mxu0
    %v1758 = vadd.f32 0.0, %v1757
    %1759 = vdwg.mxu0
    %v1761 = vsel %vm1614, %v1605, 0
    %1763 = vmatprep.subr.mxu0 %v1607
    %1764 = vmatpush1.msra.mxu0 %v1606
    %1765 = vmatprep.subr.mxu0 %v1611
    %1766 = vmatpush1.msra.mxu0 %v1610
    %1767 = vmatprep.subr.mxu0 0.0
    %1768 = vmatpush1.msra.mxu0 0.0
    %1769 = vmatprep.subr.mxu0 0.0
    %1770 = vmatpush1.msra.mxu0 0.0
    %1771 = vmatprep.subr.mxu0 0.0
    %1772 = vmatpush1.msra.mxu0 0.0
    %1773 = vmatprep.subr.mxu0 0.0
    %1774 = vmatpush1.msra.mxu0 0.0
    %1775 = vmatprep.subr.mxu0 0.0
    %1776 = vmatpush1.msra.mxu0 0.0
    %1777 = vmatprep.subr.mxu0 0.0
    %1778 = vmatpush1.msra.mxu0 0.0
    %1779 = vmatprep.subr.mxu0 0.0
    %1780 = vmatpush1.msra.mxu0 0.0
    %1781 = vmatprep.subr.mxu0 0.0
    %1782 = vmatpush1.msra.mxu0 0.0
    %1783 = vmatprep.subr.mxu0 0.0
    %1784 = vmatpush1.msra.mxu0 0.0
    %1785 = vmatprep.subr.mxu0 0.0
    %1786 = vmatpush1.msra.mxu0 0.0
    %1787 = vmatprep.subr.mxu0 0.0
    %1788 = vmatpush1.msra.mxu0 0.0
    %1789 = vmatprep.subr.mxu0 0.0
    %1790 = vmatpush1.msra.mxu0 0.0
    %1791 = vmatprep.subr.mxu0 0.0
    %1792 = vmatpush1.msra.mxu0 0.0
    %1793 = vmatprep.subr.mxu0 0.0
    %1794 = vmatpush1.msra.mxu0 0.0
    %1795 = vmatprep.subr.mxu0 0.0
    %1796 = vmatpush1.msra.mxu0 0.0
    %1797 = vmatprep.subr.mxu0 0.0
    %1798 = vmatpush1.msra.mxu0 0.0
    %1799 = vmatprep.subr.mxu0 0.0
    %1800 = vmatpush1.msra.mxu0 0.0
    %1801 = vmatprep.subr.mxu0 0.0
    %1802 = vmatpush1.msra.mxu0 0.0
    %1803 = vmatprep.subr.mxu0 0.0
    %1804 = vmatpush1.msra.mxu0 0.0
    %1805 = vmatprep.subr.mxu0 0.0
    %1806 = vmatpush1.msra.mxu0 0.0
    %1807 = vmatprep.subr.mxu0 0.0
    %1808 = vmatpush1.msra.mxu0 0.0
    %1809 = vmatprep.subr.mxu0 0.0
    %1810 = vmatpush1.msra.mxu0 0.0
    %1811 = vmatprep.subr.mxu0 0.0
    %1812 = vmatpush1.msra.mxu0 0.0
    %1813 = vmatprep.subr.mxu0 0.0
    %1814 = vmatpush1.msra.mxu0 0.0
    %1815 = vmatprep.subr.mxu0 0.0
    %1816 = vmatpush1.msra.mxu0 0.0
    %1817 = vmatprep.subr.mxu0 0.0
    %1818 = vmatpush1.msra.mxu0 0.0
    %1819 = vmatprep.subr.mxu0 0.0
    %1820 = vmatpush1.msra.mxu0 0.0
    %1821 = vmatprep.subr.mxu0 0.0
    %1822 = vmatpush1.msra.mxu0 0.0
    %1823 = vmatprep.subr.mxu0 0.0
    %1824 = vmatpush1.msra.mxu0 0.0
    %1825 = vmatprep.subr.mxu0 0.0
    %1826 = vmatpush1.msra.mxu0 0.0
    %1827 = vmatprep.mubr.f32.mxu0 0.0
    %1828 = vmatmul.mubr.f32.gmra.mrb[0].mxu0 %v1761
    %v1829 = vpop.f32.mrb[0].mxu0
    %v1830 = vadd.f32 0.0, %v1829
    %v1831 = vpop.f32.mrb[0].mxu0
    %v1832 = vadd.f32 0.0, %v1831
    %1833 = vdwg.mxu0
    %1834 = vmatprep.subr.mxu0 %v1609
    %1835 = vmatpush1.msra.mxu0 %v1608
    %1836 = vmatprep.subr.mxu0 %v1613
    %1837 = vmatpush1.msra.mxu0 %v1612
    %1838 = vmatprep.subr.mxu0 0.0
    %1839 = vmatpush1.msra.mxu0 0.0
    %1840 = vmatprep.subr.mxu0 0.0
    %1841 = vmatpush1.msra.mxu0 0.0
    %1842 = vmatprep.subr.mxu0 0.0
    %1843 = vmatpush1.msra.mxu0 0.0
    %1844 = vmatprep.subr.mxu0 0.0
    %1845 = vmatpush1.msra.mxu0 0.0
    %1846 = vmatprep.subr.mxu0 0.0
    %1847 = vmatpush1.msra.mxu0 0.0
    %1848 = vmatprep.subr.mxu0 0.0
    %1849 = vmatpush1.msra.mxu0 0.0
    %1850 = vmatprep.subr.mxu0 0.0
    %1851 = vmatpush1.msra.mxu0 0.0
    %1852 = vmatprep.subr.mxu0 0.0
    %1853 = vmatpush1.msra.mxu0 0.0
    %1854 = vmatprep.subr.mxu0 0.0
    %1855 = vmatpush1.msra.mxu0 0.0
    %1856 = vmatprep.subr.mxu0 0.0
    %1857 = vmatpush1.msra.mxu0 0.0
    %1858 = vmatprep.subr.mxu0 0.0
    %1859 = vmatpush1.msra.mxu0 0.0
    %1860 = vmatprep.subr.mxu0 0.0
    %1861 = vmatpush1.msra.mxu0 0.0
    %1862 = vmatprep.subr.mxu0 0.0
    %1863 = vmatpush1.msra.mxu0 0.0
    %1864 = vmatprep.subr.mxu0 0.0
    %1865 = vmatpush1.msra.mxu0 0.0
    %1866 = vmatprep.subr.mxu0 0.0
    %1867 = vmatpush1.msra.mxu0 0.0
    %1868 = vmatprep.subr.mxu0 0.0
    %1869 = vmatpush1.msra.mxu0 0.0
    %1870 = vmatprep.subr.mxu0 0.0
    %1871 = vmatpush1.msra.mxu0 0.0
    %1872 = vmatprep.subr.mxu0 0.0
    %1873 = vmatpush1.msra.mxu0 0.0
    %1874 = vmatprep.subr.mxu0 0.0
    %1875 = vmatpush1.msra.mxu0 0.0
    %1876 = vmatprep.subr.mxu0 0.0
    %1877 = vmatpush1.msra.mxu0 0.0
    %1878 = vmatprep.subr.mxu0 0.0
    %1879 = vmatpush1.msra.mxu0 0.0
    %1880 = vmatprep.subr.mxu0 0.0
    %1881 = vmatpush1.msra.mxu0 0.0
    %1882 = vmatprep.subr.mxu0 0.0
    %1883 = vmatpush1.msra.mxu0 0.0
    %1884 = vmatprep.subr.mxu0 0.0
    %1885 = vmatpush1.msra.mxu0 0.0
    %1886 = vmatprep.subr.mxu0 0.0
    %1887 = vmatpush1.msra.mxu0 0.0
    %1888 = vmatprep.subr.mxu0 0.0
    %1889 = vmatpush1.msra.mxu0 0.0
    %1890 = vmatprep.subr.mxu0 0.0
    %1891 = vmatpush1.msra.mxu0 0.0
    %1892 = vmatprep.subr.mxu0 0.0
    %1893 = vmatpush1.msra.mxu0 0.0
    %1894 = vmatprep.subr.mxu0 0.0
    %1895 = vmatpush1.msra.mxu0 0.0
    %1896 = vmatprep.subr.mxu0 0.0
    %1897 = vmatpush1.msra.mxu0 0.0
    %1898 = vmatprep.mubr.f32.mxu0 0.0
    %1899 = vmatmul.mubr.f32.gmra.mrb[0].mxu0 %v1761
    %v1900 = vpop.f32.mrb[0].mxu0
    %v1901 = vadd.f32 0.0, %v1900
    %v1902 = vpop.f32.mrb[0].mxu0
    %v1903 = vadd.f32 0.0, %v1902
    %1904 = vdwg.mxu0
    %v1905 = vlaneseq
    %v1906 = vshrl.u32 %v1905, 7
    %v1907 = vsub.s32 0, %v1906
    %v1908 = vrot.slane %v1685, %v1907
    %v1909 = vlaneseq
    %v1910 = vshrl.u32 %v1909, 7
    %v1911 = vsub.s32 0, %v1910
    %v1912 = vrot.slane %v1687, %v1911
    %v1913 = vlaneseq
    %v1914 = vshrl.u32 %v1913, 7
    %v1915 = vsub.s32 0, %v1914
    %v1916 = vrot.slane %v1756, %v1915
    %v1917 = vlaneseq
    %v1918 = vshrl.u32 %v1917, 7
    %v1919 = vsub.s32 0, %v1918
    %v1920 = vrot.slane %v1758, %v1919
    %v1921 = vmul.f32 %v936, %v1908
    %v1922 = vmul.f32 %v938, %v1912
    %v1923 = vmul.f32 %v1078, %v1916
    %v1924 = vmul.f32 %v1080, %v1920
    %v1925 = vmul.f32 %v940, %v1908
    %v1926 = vmul.f32 %v942, %v1912
    %v1927 = vmul.f32 %v1082, %v1916
    %v1928 = vmul.f32 %v1084, %v1920
    %v1929 = vmul.f32 %v946, %v1908
    %v1930 = vmul.f32 %v948, %v1912
    %v1931 = vmul.f32 %v1088, %v1916
    %v1932 = vmul.f32 %v1090, %v1920
    %v1933 = vmul.f32 %v950, %v1908
    %v1934 = vmul.f32 %v952, %v1912
    %v1935 = vmul.f32 %v1092, %v1916
    %v1936 = vmul.f32 %v1094, %v1920
    %v1937 = vmul.f32 %v956, %v1908
    %v1938 = vmul.f32 %v958, %v1912
    %v1939 = vmul.f32 %v1098, %v1916
    %v1940 = vmul.f32 %v1100, %v1920
    %v1941 = vmul.f32 %v960, %v1908
    %v1942 = vmul.f32 %v962, %v1912
    %v1943 = vmul.f32 %v1102, %v1916
    %v1944 = vmul.f32 %v1104, %v1920
    %v1945 = vmul.f32 %v966, %v1908
    %v1946 = vmul.f32 %v968, %v1912
    %v1947 = vmul.f32 %v1108, %v1916
    %v1948 = vmul.f32 %v1110, %v1920
    %v1949 = vlaneseq
    %v1950 = vshrl.u32 %v1949, 7
    %v1951 = vsub.s32 0, %v1950
    %v1952 = vrot.slane %v1830, %v1951
    %v1953 = vlaneseq
    %v1954 = vshrl.u32 %v1953, 7
    %v1955 = vsub.s32 0, %v1954
    %v1956 = vrot.slane %v1832, %v1955
    %v1957 = vlaneseq
    %v1958 = vshrl.u32 %v1957, 7
    %v1959 = vsub.s32 0, %v1958
    %v1960 = vrot.slane %v1901, %v1959
    %v1961 = vlaneseq
    %v1962 = vshrl.u32 %v1961, 7
    %v1963 = vsub.s32 0, %v1962
    %v1964 = vrot.slane %v1903, %v1963
    %v1965 = vadd.f32 %v1921, %v1952
    %v1966 = vadd.f32 %v1922, %v1956
    %v1967 = vadd.f32 %v1923, %v1960
    %v1968 = vadd.f32 %v1924, %v1964
    %v1969 = vadd.f32 %v1925, %v1952
    %v1970 = vadd.f32 %v1926, %v1956
    %v1971 = vadd.f32 %v1927, %v1960
    %v1972 = vadd.f32 %v1928, %v1964
    %v1973 = vadd.f32 %v1929, %v1952
    %v1974 = vadd.f32 %v1930, %v1956
    %v1975 = vadd.f32 %v1931, %v1960
    %v1976 = vadd.f32 %v1932, %v1964
    %v1977 = vadd.f32 %v1933, %v1952
    %v1978 = vadd.f32 %v1934, %v1956
    %v1979 = vadd.f32 %v1935, %v1960
    %v1980 = vadd.f32 %v1936, %v1964
    %v1981 = vadd.f32 %v1937, %v1952
    %v1982 = vadd.f32 %v1938, %v1956
    %v1983 = vadd.f32 %v1939, %v1960
    %v1984 = vadd.f32 %v1940, %v1964
    %v1985 = vadd.f32 %v1941, %v1952
    %v1986 = vadd.f32 %v1942, %v1956
    %v1987 = vadd.f32 %v1943, %v1960
    %v1988 = vadd.f32 %v1944, %v1964
    %v1989 = vadd.f32 %v1945, %v1952
    %v1990 = vadd.f32 %v1946, %v1956
    %v1991 = vadd.f32 %v1947, %v1960
    %v1992 = vadd.f32 %v1948, %v1964
    %v1993 = vmax.f32 %v1965, 0.0
    %v1994 = vmax.f32 %v1966, 0.0
    %v1995 = vmax.f32 %v1967, 0.0
    %v1996 = vmax.f32 %v1968, 0.0
    %v1997 = vmax.f32 %v1969, 0.0
    %v1998 = vmax.f32 %v1970, 0.0
    %v1999 = vmax.f32 %v1971, 0.0
    %v2000 = vmax.f32 %v1972, 0.0
    %v2001 = vmax.f32 %v1973, 0.0
    %v2002 = vmax.f32 %v1974, 0.0
    %v2003 = vmax.f32 %v1975, 0.0
    %v2004 = vmax.f32 %v1976, 0.0
    %v2005 = vmax.f32 %v1977, 0.0
    %v2006 = vmax.f32 %v1978, 0.0
    %v2007 = vmax.f32 %v1979, 0.0
    %v2008 = vmax.f32 %v1980, 0.0
    %v2009 = vmax.f32 %v1981, 0.0
    %v2010 = vmax.f32 %v1982, 0.0
    %v2011 = vmax.f32 %v1983, 0.0
    %v2012 = vmax.f32 %v1984, 0.0
    %v2013 = vmax.f32 %v1985, 0.0
    %v2014 = vmax.f32 %v1986, 0.0
    %v2015 = vmax.f32 %v1987, 0.0
    %v2016 = vmax.f32 %v1988, 0.0
    %v2017 = vmax.f32 %v1989, 0.0
    %v2018 = vmax.f32 %v1990, 0.0
    %v2019 = vmax.f32 %v1991, 0.0
    %v2020 = vmax.f32 %v1992, 0.0
    %2049 = vrot.lane.b32.xlu0 %v1993, 127
    %v2050 = vpop.permute.xlu0 %2049
    %2051 = vrot.lane.b32.xlu0 %v1994, 127
    %v2052 = vpop.permute.xlu0 %2051
    %2053 = vrot.lane.b32.xlu0 %v1995, 127
    %v2054 = vpop.permute.xlu0 %2053
    %2055 = vrot.lane.b32.xlu0 %v1996, 127
    %v2056 = vpop.permute.xlu0 %2055
    %2057 = vrot.lane.b32.xlu0 %v1997, 127
    %v2058 = vpop.permute.xlu0 %2057
    %2059 = vrot.lane.b32.xlu0 %v1998, 127
    %v2060 = vpop.permute.xlu0 %2059
    %2061 = vrot.lane.b32.xlu0 %v1999, 127
    %v2062 = vpop.permute.xlu0 %2061
    %2063 = vrot.lane.b32.xlu0 %v2000, 127
    %v2064 = vpop.permute.xlu0 %2063
    %2065 = vrot.lane.b32.xlu0 %v2001, 127
    %v2066 = vpop.permute.xlu0 %2065
    %2067 = vrot.lane.b32.xlu0 %v2002, 127
    %v2068 = vpop.permute.xlu0 %2067
    %2069 = vrot.lane.b32.xlu0 %v2003, 127
    %v2070 = vpop.permute.xlu0 %2069
    %2071 = vrot.lane.b32.xlu0 %v2004, 127
    %v2072 = vpop.permute.xlu0 %2071
    %2073 = vrot.lane.b32.xlu0 %v2005, 127
    %v2074 = vpop.permute.xlu0 %2073
    %2075 = vrot.lane.b32.xlu0 %v2006, 127
    %v2076 = vpop.permute.xlu0 %2075
    %2077 = vrot.lane.b32.xlu0 %v2007, 127
    %v2078 = vpop.permute.xlu0 %2077
    %2079 = vrot.lane.b32.xlu0 %v2008, 127
    %v2080 = vpop.permute.xlu0 %2079
    %2081 = vrot.lane.b32.xlu0 %v2009, 127
    %v2082 = vpop.permute.xlu0 %2081
    %2083 = vrot.lane.b32.xlu0 %v2010, 127
    %v2084 = vpop.permute.xlu0 %2083
    %2085 = vrot.lane.b32.xlu0 %v2011, 127
    %v2086 = vpop.permute.xlu0 %2085
    %2087 = vrot.lane.b32.xlu0 %v2012, 127
    %v2088 = vpop.permute.xlu0 %2087
    %2089 = vrot.lane.b32.xlu0 %v2013, 127
    %v2090 = vpop.permute.xlu0 %2089
    %2091 = vrot.lane.b32.xlu0 %v2014, 127
    %v2092 = vpop.permute.xlu0 %2091
    %2093 = vrot.lane.b32.xlu0 %v2015, 127
    %v2094 = vpop.permute.xlu0 %2093
    %2095 = vrot.lane.b32.xlu0 %v2016, 127
    %v2096 = vpop.permute.xlu0 %2095
    %2097 = vrot.lane.b32.xlu0 %v2017, 127
    %v2098 = vpop.permute.xlu0 %2097
    %2099 = vrot.lane.b32.xlu0 %v2018, 127
    %v2100 = vpop.permute.xlu0 %2099
    %2101 = vrot.lane.b32.xlu0 %v2019, 127
    %v2102 = vpop.permute.xlu0 %2101
    %2103 = vrot.lane.b32.xlu0 %v2020, 127
    %v2104 = vpop.permute.xlu0 %2103
    %vm2105 = vcmask 1039360
    %v2106 = vsel %vm2105, %v2050, %v2052
    %v2107 = vsel %vm2105, %v2052, %v2054
    %v2108 = vsel %vm2105, %v2054, %v2056
    %v2109 = vsel %vm2105, %v2058, %v2060
    %v2110 = vsel %vm2105, %v2060, %v2062
    %v2111 = vsel %vm2105, %v2062, %v2064
    %v2112 = vsel %vm2105, %v2066, %v2068
    %v2113 = vsel %vm2105, %v2068, %v2070
    %v2114 = vsel %vm2105, %v2070, %v2072
    %v2115 = vsel %vm2105, %v2074, %v2076
    %v2116 = vsel %vm2105, %v2076, %v2078
    %v2117 = vsel %vm2105, %v2078, %v2080
    %v2118 = vsel %vm2105, %v2082, %v2084
    %v2119 = vsel %vm2105, %v2084, %v2086
    %v2120 = vsel %vm2105, %v2086, %v2088
    %v2121 = vsel %vm2105, %v2090, %v2092
    %v2122 = vsel %vm2105, %v2092, %v2094
    %v2123 = vsel %vm2105, %v2094, %v2096
    %v2124 = vsel %vm2105, %v2098, %v2100
    %v2125 = vsel %vm2105, %v2100, %v2102
    %v2126 = vsel %vm2105, %v2102, %v2104
    %v2155 = vmax.f32 %v1993, %v2106
    %v2156 = vmax.f32 %v1994, %v2107
    %v2157 = vmax.f32 %v1995, %v2108
    %v2158 = vmax.f32 %v1996, %v2056
    %v2159 = vmax.f32 %v1997, %v2109
    %v2160 = vmax.f32 %v1998, %v2110
    %v2161 = vmax.f32 %v1999, %v2111
    %v2162 = vmax.f32 %v2000, %v2064
    %v2163 = vmax.f32 %v2001, %v2112
    %v2164 = vmax.f32 %v2002, %v2113
    %v2165 = vmax.f32 %v2003, %v2114
    %v2166 = vmax.f32 %v2004, %v2072
    %v2167 = vmax.f32 %v2005, %v2115
    %v2168 = vmax.f32 %v2006, %v2116
    %v2169 = vmax.f32 %v2007, %v2117
    %v2170 = vmax.f32 %v2008, %v2080
    %v2171 = vmax.f32 %v2009, %v2118
    %v2172 = vmax.f32 %v2010, %v2119
    %v2173 = vmax.f32 %v2011, %v2120
    %v2174 = vmax.f32 %v2012, %v2088
    %v2175 = vmax.f32 %v2013, %v2121
    %v2176 = vmax.f32 %v2014, %v2122
    %v2177 = vmax.f32 %v2015, %v2123
    %v2178 = vmax.f32 %v2016, %v2096
    %v2179 = vmax.f32 %v2017, %v2124
    %v2180 = vmax.f32 %v2018, %v2125
    %v2181 = vmax.f32 %v2019, %v2126
    %v2182 = vmax.f32 %v2020, %v2104
    %v2183 = vpack.c.bf16 %v2159, %v2155
    %v2184 = vpack.c.bf16 %v2160, %v2156
    %v2185 = vpack.c.bf16 %v2161, %v2157
    %v2186 = vpack.c.bf16 %v2162, %v2158
    %v2187 = vpack.c.bf16 %v2167, %v2163
    %v2188 = vpack.c.bf16 %v2168, %v2164
    %v2189 = vpack.c.bf16 %v2169, %v2165
    %v2190 = vpack.c.bf16 %v2170, %v2166
    %v2191 = vpack.c.bf16 %v2175, %v2171
    %v2192 = vpack.c.bf16 %v2176, %v2172
    %v2193 = vpack.c.bf16 %v2177, %v2173
    %v2194 = vpack.c.bf16 %v2178, %v2174
    %v2195 = vpack.c.bf16 %v2179, %v2179
    %v2196 = vpack.c.bf16 %v2180, %v2180
    %v2197 = vpack.c.bf16 %v2181, %v2181
    %v2198 = vpack.c.bf16 %v2182, %v2182
    %v2199 = vld [vmem:[%s5] sm:$0xff]
    %v2200 = vld [vmem:[%s5 + $0x8] sm:$0xff]
    %v2201 = vld [vmem:[%s5 + $0x10] sm:$0xff]
    %v2202 = vld [vmem:[%s5 + $0x18] sm:$0xff]
    %v2203 = vld [vmem:[%s5 + $0x20] sm:$0xff]
    %v2204 = vld [vmem:[%s5 + $0x28] sm:$0xff]
    %v2205 = vld [vmem:[%s5 + $0x30] sm:$0xff]
    %v2206 = vld [vmem:[%s5 + $0x38] sm:$0xff]
    %v2207 = vld [vmem:[%s5 + $0x40] sm:$0xff]
    %v2208 = vld [vmem:[%s5 + $0x48] sm:$0xff]
    %v2209 = vld [vmem:[%s5 + $0x50] sm:$0xff]
    %v2210 = vld [vmem:[%s5 + $0x58] sm:$0xff]
    %v2211 = vld [vmem:[%s5 + $0x60] sm:$0xff]
    %v2212 = vld [vmem:[%s5 + $0x68] sm:$0xff]
    %v2213 = vld [vmem:[%s5 + $0x70] sm:$0xff]
    %v2214 = vld [vmem:[%s5 + $0x78] sm:$0xff]
    %v2215 = vld [vmem:[%s5 + $0x80] sm:$0xff]
    %v2216 = vld [vmem:[%s5 + $0x88] sm:$0xff]
    %v2217 = vld [vmem:[%s5 + $0x90] sm:$0xff]
    %v2218 = vld [vmem:[%s5 + $0x98] sm:$0xff]
    %v2219 = vld [vmem:[%s5 + $0xa0] sm:$0xff]
    %v2220 = vld [vmem:[%s5 + $0xa8] sm:$0xff]
    %v2221 = vld [vmem:[%s5 + $0xb0] sm:$0xff]
    %v2222 = vld [vmem:[%s5 + $0xb8] sm:$0xff]
    %v2223 = vld [vmem:[%s5 + $0xc0] sm:$0xff]
    %v2224 = vld [vmem:[%s5 + $0xc8] sm:$0xff]
    %v2225 = vld [vmem:[%s5 + $0xd0] sm:$0xff]
    %v2226 = vld [vmem:[%s5 + $0xd8] sm:$0xff]
    %v2227 = vld [vmem:[%s5 + $0xe0] sm:$0xff]
    %v2228 = vld [vmem:[%s5 + $0xe8] sm:$0xff]
    %v2229 = vld [vmem:[%s5 + $0xf0] sm:$0xff]
    %v2230 = vld [vmem:[%s5 + $0xf8] sm:$0xff]
    %v2231 = vld [vmem:[%s5 + $0x100] sm:$0xff]
    %v2232 = vld [vmem:[%s5 + $0x108] sm:$0xff]
    %v2233 = vld [vmem:[%s5 + $0x110] sm:$0xff]
    %v2234 = vld [vmem:[%s5 + $0x118] sm:$0xff]
    %v2235 = vld [vmem:[%s5 + $0x120] sm:$0xff]
    %v2236 = vld [vmem:[%s5 + $0x128] sm:$0xff]
    %v2237 = vld [vmem:[%s5 + $0x130] sm:$0xff]
    %v2238 = vld [vmem:[%s5 + $0x138] sm:$0xff]
    %v2239 = vld [vmem:[%s5 + $0x140] sm:$0xff]
    %v2240 = vld [vmem:[%s5 + $0x148] sm:$0xff]
    %v2241 = vld [vmem:[%s5 + $0x150] sm:$0xff]
    %v2242 = vld [vmem:[%s5 + $0x158] sm:$0xff]
    %v2243 = vld [vmem:[%s5 + $0x160] sm:$0xff]
    %v2244 = vld [vmem:[%s5 + $0x168] sm:$0xff]
    %v2245 = vld [vmem:[%s5 + $0x170] sm:$0xff]
    %v2246 = vld [vmem:[%s5 + $0x178] sm:$0xff]
    %v2247 = vld [vmem:[%s5 + $0x180] sm:$0xff]
    %v2248 = vld [vmem:[%s5 + $0x188] sm:$0xff]
    %v2249 = vld [vmem:[%s5 + $0x190] sm:$0xff]
    %v2250 = vld [vmem:[%s5 + $0x198] sm:$0xff]
    %v2251 = vld [vmem:[%s5 + $0x1a0] sm:$0xff]
    %v2252 = vld [vmem:[%s5 + $0x1a8] sm:$0xff]
    %v2253 = vld [vmem:[%s5 + $0x1b0] sm:$0xff]
    %v2254 = vld [vmem:[%s5 + $0x1b8] sm:$0xff]
    %v2311 = vunpack.c.l.b16 %v2199
    %v2312 = vunpack.c.h.b16 %v2199
    %v2313 = vunpack.c.l.b16 %v2200
    %v2314 = vunpack.c.h.b16 %v2200
    %v2315 = vunpack.c.l.b16 %v2201
    %v2316 = vunpack.c.h.b16 %v2201
    %v2317 = vunpack.c.l.b16 %v2202
    %v2318 = vunpack.c.h.b16 %v2202
    %v2319 = vunpack.c.l.b16 %v2203
    %v2320 = vunpack.c.h.b16 %v2203
    %v2321 = vunpack.c.l.b16 %v2204
    %v2322 = vunpack.c.h.b16 %v2204
    %v2323 = vunpack.c.l.b16 %v2205
    %v2324 = vunpack.c.h.b16 %v2205
    %v2325 = vunpack.c.l.b16 %v2206
    %v2326 = vunpack.c.h.b16 %v2206
    %v2327 = vunpack.c.l.b16 %v2207
    %v2328 = vunpack.c.h.b16 %v2207
    %v2329 = vunpack.c.l.b16 %v2208
    %v2330 = vunpack.c.h.b16 %v2208
    %v2331 = vunpack.c.l.b16 %v2209
    %v2332 = vunpack.c.h.b16 %v2209
    %v2333 = vunpack.c.l.b16 %v2210
    %v2334 = vunpack.c.h.b16 %v2210
    %v2335 = vunpack.c.l.b16 %v2211
    %v2336 = vunpack.c.h.b16 %v2211
    %v2337 = vunpack.c.l.b16 %v2212
    %v2338 = vunpack.c.h.b16 %v2212
    %v2339 = vunpack.c.l.b16 %v2213
    %v2340 = vunpack.c.h.b16 %v2213
    %v2341 = vunpack.c.l.b16 %v2214
    %v2342 = vunpack.c.h.b16 %v2214
    %v2343 = vunpack.c.l.b16 %v2215
    %v2344 = vunpack.c.h.b16 %v2215
    %v2345 = vunpack.c.l.b16 %v2216
    %v2346 = vunpack.c.h.b16 %v2216
    %v2347 = vunpack.c.l.b16 %v2217
    %v2348 = vunpack.c.h.b16 %v2217
    %v2349 = vunpack.c.l.b16 %v2218
    %v2350 = vunpack.c.h.b16 %v2218
    %v2351 = vunpack.c.l.b16 %v2219
    %v2352 = vunpack.c.h.b16 %v2219
    %v2353 = vunpack.c.l.b16 %v2220
    %v2354 = vunpack.c.h.b16 %v2220
    %v2355 = vunpack.c.l.b16 %v2221
    %v2356 = vunpack.c.h.b16 %v2221
    %v2357 = vunpack.c.l.b16 %v2222
    %v2358 = vunpack.c.h.b16 %v2222
    %v2359 = vunpack.c.l.b16 %v2223
    %v2360 = vunpack.c.h.b16 %v2223
    %v2361 = vunpack.c.l.b16 %v2224
    %v2362 = vunpack.c.h.b16 %v2224
    %v2363 = vunpack.c.l.b16 %v2225
    %v2364 = vunpack.c.h.b16 %v2225
    %v2365 = vunpack.c.l.b16 %v2226
    %v2366 = vunpack.c.h.b16 %v2226
    %v2367 = vunpack.c.l.b16 %v2227
    %v2368 = vunpack.c.h.b16 %v2227
    %v2369 = vunpack.c.l.b16 %v2228
    %v2370 = vunpack.c.h.b16 %v2228
    %v2371 = vunpack.c.l.b16 %v2229
    %v2372 = vunpack.c.h.b16 %v2229
    %v2373 = vunpack.c.l.b16 %v2230
    %v2374 = vunpack.c.h.b16 %v2230
    %v2375 = vunpack.c.l.b16 %v2231
    %v2376 = vunpack.c.h.b16 %v2231
    %v2377 = vunpack.c.l.b16 %v2232
    %v2378 = vunpack.c.h.b16 %v2232
    %v2379 = vunpack.c.l.b16 %v2233
    %v2380 = vunpack.c.h.b16 %v2233
    %v2381 = vunpack.c.l.b16 %v2234
    %v2382 = vunpack.c.h.b16 %v2234
    %v2383 = vunpack.c.l.b16 %v2235
    %v2384 = vunpack.c.h.b16 %v2235
    %v2385 = vunpack.c.l.b16 %v2236
    %v2386 = vunpack.c.h.b16 %v2236
    %v2387 = vunpack.c.l.b16 %v2237
    %v2388 = vunpack.c.h.b16 %v2237
    %v2389 = vunpack.c.l.b16 %v2238
    %v2390 = vunpack.c.h.b16 %v2238
    %v2391 = vunpack.c.l.b16 %v2239
    %v2392 = vunpack.c.h.b16 %v2239
    %v2393 = vunpack.c.l.b16 %v2240
    %v2394 = vunpack.c.h.b16 %v2240
    %v2395 = vunpack.c.l.b16 %v2241
    %v2396 = vunpack.c.h.b16 %v2241
    %v2397 = vunpack.c.l.b16 %v2242
    %v2398 = vunpack.c.h.b16 %v2242
    %v2399 = vunpack.c.l.b16 %v2243
    %v2400 = vunpack.c.h.b16 %v2243
    %v2401 = vunpack.c.l.b16 %v2244
    %v2402 = vunpack.c.h.b16 %v2244
    %v2403 = vunpack.c.l.b16 %v2245
    %v2404 = vunpack.c.h.b16 %v2245
    %v2405 = vunpack.c.l.b16 %v2246
    %v2406 = vunpack.c.h.b16 %v2246
    %v2407 = vunpack.c.l.b16 %v2247
    %v2408 = vunpack.c.h.b16 %v2247
    %v2409 = vunpack.c.l.b16 %v2248
    %v2410 = vunpack.c.h.b16 %v2248
    %v2411 = vunpack.c.l.b16 %v2249
    %v2412 = vunpack.c.h.b16 %v2249
    %v2413 = vunpack.c.l.b16 %v2250
    %v2414 = vunpack.c.h.b16 %v2250
    %v2415 = vunpack.c.l.b16 %v2251
    %v2416 = vunpack.c.h.b16 %v2251
    %v2417 = vunpack.c.l.b16 %v2252
    %v2418 = vunpack.c.h.b16 %v2252
    %v2419 = vunpack.c.l.b16 %v2253
    %v2420 = vunpack.c.h.b16 %v2253
    %v2421 = vunpack.c.l.b16 %v2254
    %v2422 = vunpack.c.h.b16 %v2254
    %v2423 = vpack.c.b16 %v2313, %v2311
    %v2424 = vpack.c.b16 %v2314, %v2312
    %v2425 = vpack.c.b16 %v2317, %v2315
    %v2426 = vpack.c.b16 %v2318, %v2316
    %v2427 = vpack.c.b16 %v2321, %v2319
    %v2428 = vpack.c.b16 %v2322, %v2320
    %v2429 = vpack.c.b16 %v2325, %v2323
    %v2430 = vpack.c.b16 %v2326, %v2324
    %v2431 = vpack.c.b16 %v2329, %v2327
    %v2432 = vpack.c.b16 %v2330, %v2328
    %v2433 = vpack.c.b16 %v2333, %v2331
    %v2434 = vpack.c.b16 %v2334, %v2332
    %v2435 = vpack.c.b16 %v2337, %v2335
    %v2436 = vpack.c.b16 %v2338, %v2336
    %v2437 = vpack.c.b16 %v2341, %v2339
    %v2438 = vpack.c.b16 %v2342, %v2340
    %v2439 = vpack.c.b16 %v2345, %v2343
    %v2440 = vpack.c.b16 %v2346, %v2344
    %v2441 = vpack.c.b16 %v2349, %v2347
    %v2442 = vpack.c.b16 %v2350, %v2348
    %v2443 = vpack.c.b16 %v2353, %v2351
    %v2444 = vpack.c.b16 %v2354, %v2352
    %v2445 = vpack.c.b16 %v2357, %v2355
    %v2446 = vpack.c.b16 %v2358, %v2356
    %v2447 = vpack.c.b16 %v2361, %v2359
    %v2448 = vpack.c.b16 %v2362, %v2360
    %v2449 = vpack.c.b16 %v2365, %v2363
    %v2450 = vpack.c.b16 %v2366, %v2364
    %v2451 = vpack.c.b16 %v2369, %v2367
    %v2452 = vpack.c.b16 %v2370, %v2368
    %v2453 = vpack.c.b16 %v2373, %v2371
    %v2454 = vpack.c.b16 %v2374, %v2372
    %v2455 = vpack.c.b16 %v2377, %v2375
    %v2456 = vpack.c.b16 %v2378, %v2376
    %v2457 = vpack.c.b16 %v2381, %v2379
    %v2458 = vpack.c.b16 %v2382, %v2380
    %v2459 = vpack.c.b16 %v2385, %v2383
    %v2460 = vpack.c.b16 %v2386, %v2384
    %v2461 = vpack.c.b16 %v2389, %v2387
    %v2462 = vpack.c.b16 %v2390, %v2388
    %v2463 = vpack.c.b16 %v2393, %v2391
    %v2464 = vpack.c.b16 %v2394, %v2392
    %v2465 = vpack.c.b16 %v2397, %v2395
    %v2466 = vpack.c.b16 %v2398, %v2396
    %v2467 = vpack.c.b16 %v2401, %v2399
    %v2468 = vpack.c.b16 %v2402, %v2400
    %v2469 = vpack.c.b16 %v2405, %v2403
    %v2470 = vpack.c.b16 %v2406, %v2404
    %v2471 = vpack.c.b16 %v2409, %v2407
    %v2472 = vpack.c.b16 %v2410, %v2408
    %v2473 = vpack.c.b16 %v2413, %v2411
    %v2474 = vpack.c.b16 %v2414, %v2412
    %v2475 = vpack.c.b16 %v2417, %v2415
    %v2476 = vpack.c.b16 %v2418, %v2416
    %v2477 = vpack.c.b16 %v2421, %v2419
    %v2478 = vpack.c.b16 %v2422, %v2420
    %vm2533 = vcmask 515072
    %v2535 = vsel %vm2533, %v2186, 0
    %v2538 = vsel %vm2533, %v2190, 0
    %v2541 = vsel %vm2533, %v2194, 0
    %v2544 = vsel %vm2533, %v2198, 0
    %vm2546 = vcmask 1047552
    %v2547 = vsel %vm144, 4294967295, 65535
    %v2548 = vsel %vm2546, %v2547, 0
    %v2550 = vand.u32 %v2477, %v2548
    %v2553 = vand.u32 %v2478, %v2548
    %2555 = vmatprep.subr.bf16.mxu0 %v2424
    %2556 = vmatpush1.bf16.msra.mxu0 %v2423
    %2557 = vmatprep.subr.bf16.mxu0 %v2426
    %2558 = vmatpush1.bf16.msra.mxu0 %v2425
    %2559 = vmatprep.subr.bf16.mxu0 %v2428
    %2560 = vmatpush1.bf16.msra.mxu0 %v2427
    %2561 = vmatprep.subr.bf16.mxu0 %v2430
    %2562 = vmatpush1.bf16.msra.mxu0 %v2429
    %2563 = vmatprep.subr.bf16.mxu0 %v2432
    %2564 = vmatpush1.bf16.msra.mxu0 %v2431
    %2565 = vmatprep.subr.bf16.mxu0 %v2434
    %2566 = vmatpush1.bf16.msra.mxu0 %v2433
    %2567 = vmatprep.subr.bf16.mxu0 %v2436
    %2568 = vmatpush1.bf16.msra.mxu0 %v2435
    %2569 = vmatprep.subr.bf16.mxu0 %v2438
    %2570 = vmatpush1.bf16.msra.mxu0 %v2437
    %2571 = vmatprep.subr.bf16.mxu0 %v2440
    %2572 = vmatpush1.bf16.msra.mxu0 %v2439
    %2573 = vmatprep.subr.bf16.mxu0 %v2442
    %2574 = vmatpush1.bf16.msra.mxu0 %v2441
    %2575 = vmatprep.subr.bf16.mxu0 %v2444
    %2576 = vmatpush1.bf16.msra.mxu0 %v2443
    %2577 = vmatprep.subr.bf16.mxu0 %v2446
    %2578 = vmatpush1.bf16.msra.mxu0 %v2445
    %2579 = vmatprep.subr.bf16.mxu0 %v2448
    %2580 = vmatpush1.bf16.msra.mxu0 %v2447
    %2581 = vmatprep.subr.bf16.mxu0 %v2450
    %2582 = vmatpush1.bf16.msra.mxu0 %v2449
    %2583 = vmatprep.subr.bf16.mxu0 %v2452
    %2584 = vmatpush1.bf16.msra.mxu0 %v2451
    %2585 = vmatprep.subr.bf16.mxu0 %v2454
    %2586 = vmatpush1.bf16.msra.mxu0 %v2453
    %2587 = vmatprep.mubr.bf16.mxu0 %v2184
    %2588 = vmatmul.mubr.bf16.gmra.mrb[0].mxu0 %v2183
    %v2589 = vpop.f32.mrb[0].mxu0
    %v2590 = vadd.f32 0.0, %v2589
    %v2591 = vpop.f32.mrb[0].mxu0
    %v2592 = vadd.f32 0.0, %v2591
    %v2593 = vpop.f32.mrb[0].mxu0
    %v2594 = vadd.f32 0.0, %v2593
    %v2595 = vpop.f32.mrb[0].mxu0
    %v2596 = vadd.f32 0.0, %v2595
    %2597 = vmatprep.mubr.bf16.mxu0 %v2188
    %2598 = vmatmul.mubr.bf16.gmra.mrb[0].mxu0 %v2187
    %v2599 = vpop.f32.mrb[0].mxu0
    %v2600 = vadd.f32 0.0, %v2599
    %v2601 = vpop.f32.mrb[0].mxu0
    %v2602 = vadd.f32 0.0, %v2601
    %v2603 = vpop.f32.mrb[0].mxu0
    %v2604 = vadd.f32 0.0, %v2603
    %v2605 = vpop.f32.mrb[0].mxu0
    %v2606 = vadd.f32 0.0, %v2605
    %2607 = vmatprep.mubr.bf16.mxu0 %v2192
    %2608 = vmatmul.mubr.bf16.gmra.mrb[0].mxu0 %v2191
    %v2609 = vpop.f32.mrb[0].mxu0
    %v2610 = vadd.f32 0.0, %v2609
    %v2611 = vpop.f32.mrb[0].mxu0
    %v2612 = vadd.f32 0.0, %v2611
    %v2613 = vpop.f32.mrb[0].mxu0
    %v2614 = vadd.f32 0.0, %v2613
    %v2615 = vpop.f32.mrb[0].mxu0
    %v2616 = vadd.f32 0.0, %v2615
    %2617 = vmatprep.mubr.bf16.mxu0 %v2196
    %2618 = vmatmul.mubr.bf16.gmra.mrb[0].mxu0 %v2195
    %v2619 = vpop.f32.mrb[0].mxu0
    %v2620 = vadd.f32 0.0, %v2619
    %v2621 = vpop.f32.mrb[0].mxu0
    %v2622 = vadd.f32 0.0, %v2621
    %v2623 = vpop.f32.mrb[0].mxu0
    %v2624 = vpop.f32.mrb[0].mxu0
    %2625 = vdwg.mxu0
    %2626 = vmatprep.subr.bf16.mxu0 %v2456
    %2627 = vmatpush1.bf16.msra.mxu0 %v2455
    %2628 = vmatprep.subr.bf16.mxu0 %v2458
    %2629 = vmatpush1.bf16.msra.mxu0 %v2457
    %2630 = vmatprep.subr.bf16.mxu0 %v2460
    %2631 = vmatpush1.bf16.msra.mxu0 %v2459
    %2632 = vmatprep.subr.bf16.mxu0 %v2462
    %2633 = vmatpush1.bf16.msra.mxu0 %v2461
    %2634 = vmatprep.subr.bf16.mxu0 %v2464
    %2635 = vmatpush1.bf16.msra.mxu0 %v2463
    %2636 = vmatprep.subr.bf16.mxu0 %v2466
    %2637 = vmatpush1.bf16.msra.mxu0 %v2465
    %2638 = vmatprep.subr.bf16.mxu0 %v2468
    %2639 = vmatpush1.bf16.msra.mxu0 %v2467
    %2640 = vmatprep.subr.bf16.mxu0 %v2470
    %2641 = vmatpush1.bf16.msra.mxu0 %v2469
    %2642 = vmatprep.subr.bf16.mxu0 %v2472
    %2643 = vmatpush1.bf16.msra.mxu0 %v2471
    %2644 = vmatprep.subr.bf16.mxu0 %v2474
    %2645 = vmatpush1.bf16.msra.mxu0 %v2473
    %2646 = vmatprep.subr.bf16.mxu0 %v2476
    %2647 = vmatpush1.bf16.msra.mxu0 %v2475
    %2648 = vmatprep.subr.bf16.mxu0 %v2553
    %2649 = vmatpush1.bf16.msra.mxu0 %v2550
    %2650 = vmatprep.subr.bf16.mxu0 0
    %2651 = vmatpush1.bf16.msra.mxu0 0
    %2652 = vmatprep.subr.bf16.mxu0 0
    %2653 = vmatpush1.bf16.msra.mxu0 0
    %2654 = vmatprep.subr.bf16.mxu0 0
    %2655 = vmatpush1.bf16.msra.mxu0 0
    %2656 = vmatprep.subr.bf16.mxu0 0
    %2657 = vmatpush1.bf16.msra.mxu0 0
    %2658 = vmatprep.mubr.bf16.mxu0 %v2535
    %2659 = vmatmul.mubr.bf16.gmra.mrb[0].mxu0 %v2185
    %v2660 = vpop.f32.mrb[0].mxu0
    %v2661 = vadd.f32 %v2590, %v2660
    %v2662 = vpop.f32.mrb[0].mxu0
    %v2663 = vadd.f32 %v2592, %v2662
    %v2664 = vpop.f32.mrb[0].mxu0
    %v2665 = vadd.f32 %v2594, %v2664
    %v2666 = vpop.f32.mrb[0].mxu0
    %v2667 = vadd.f32 %v2596, %v2666
    %2668 = vmatprep.mubr.bf16.mxu0 %v2538
    %2669 = vmatmul.mubr.bf16.gmra.mrb[0].mxu0 %v2189
    %v2670 = vpop.f32.mrb[0].mxu0
    %v2671 = vadd.f32 %v2600, %v2670
    %v2672 = vpop.f32.mrb[0].mxu0
    %v2673 = vadd.f32 %v2602, %v2672
    %v2674 = vpop.f32.mrb[0].mxu0
    %v2675 = vadd.f32 %v2604, %v2674
    %v2676 = vpop.f32.mrb[0].mxu0
    %v2677 = vadd.f32 %v2606, %v2676
    %2678 = vmatprep.mubr.bf16.mxu0 %v2541
    %2679 = vmatmul.mubr.bf16.gmra.mrb[0].mxu0 %v2193
    %v2680 = vpop.f32.mrb[0].mxu0
    %v2681 = vadd.f32 %v2610, %v2680
    %v2682 = vpop.f32.mrb[0].mxu0
    %v2683 = vadd.f32 %v2612, %v2682
    %v2684 = vpop.f32.mrb[0].mxu0
    %v2685 = vadd.f32 %v2614, %v2684
    %v2686 = vpop.f32.mrb[0].mxu0
    %v2687 = vadd.f32 %v2616, %v2686
    %2688 = vmatprep.mubr.bf16.mxu0 %v2544
    %2689 = vmatmul.mubr.bf16.gmra.mrb[0].mxu0 %v2197
    %v2690 = vpop.f32.mrb[0].mxu0
    %v2691 = vadd.f32 %v2620, %v2690
    %v2692 = vpop.f32.mrb[0].mxu0
    %v2693 = vadd.f32 %v2622, %v2692
    %v2694 = vpop.f32.mrb[0].mxu0
    %v2695 = vpop.f32.mrb[0].mxu0
    %2696 = vdwg.mxu0
    %v2711 = vrot.slane %v2661, 1
    %v2712 = vrot.slane %v2665, 1
    %v2713 = vsel %vm144, %v2711, %v2712
    %v2714 = vrot.slane %v2663, 1
    %v2715 = vrot.slane %v2667, 1
    %v2716 = vsel %vm144, %v2714, %v2715
    %v2717 = vrot.slane %v2671, 1
    %v2718 = vsel %vm144, %v2712, %v2717
    %v2719 = vrot.slane %v2673, 1
    %v2720 = vsel %vm144, %v2715, %v2719
    %v2721 = vrot.slane %v2675, 1
    %v2722 = vsel %vm144, %v2717, %v2721
    %v2723 = vrot.slane %v2677, 1
    %v2724 = vsel %vm144, %v2719, %v2723
    %v2725 = vrot.slane %v2681, 1
    %v2726 = vsel %vm144, %v2721, %v2725
    %v2727 = vrot.slane %v2683, 1
    %v2728 = vsel %vm144, %v2723, %v2727
    %v2729 = vrot.slane %v2685, 1
    %v2730 = vsel %vm144, %v2725, %v2729
    %v2731 = vrot.slane %v2687, 1
    %v2732 = vsel %vm144, %v2727, %v2731
    %v2733 = vrot.slane %v2691, 1
    %v2734 = vsel %vm144, %v2729, %v2733
    %v2735 = vrot.slane %v2693, 1
    %v2736 = vsel %vm144, %v2731, %v2735
    %v2751 = vmax.f32 %v2661, %v2713
    %v2752 = vmax.f32 %v2663, %v2716
    %v2753 = vmax.f32 %v2665, %v2718
    %v2754 = vmax.f32 %v2667, %v2720
    %v2755 = vmax.f32 %v2671, %v2722
    %v2756 = vmax.f32 %v2673, %v2724
    %v2757 = vmax.f32 %v2675, %v2726
    %v2758 = vmax.f32 %v2677, %v2728
    %v2759 = vmax.f32 %v2681, %v2730
    %v2760 = vmax.f32 %v2683, %v2732
    %v2761 = vmax.f32 %v2685, %v2734
    %v2762 = vmax.f32 %v2687, %v2736
    %v2763 = vmax.f32 %v2691, %v2733
    %v2764 = vmax.f32 %v2693, %v2735
    %v2765 = vpack.c.bf16 %v2753, %v2751
    %v2766 = vpack.c.bf16 %v2754, %v2752
    %v2767 = vpack.c.bf16 %v2757, %v2755
    %v2768 = vpack.c.bf16 %v2758, %v2756
    %v2769 = vpack.c.bf16 %v2761, %v2759
    %v2770 = vpack.c.bf16 %v2762, %v2760
    %v2771 = vpack.c.bf16 %v2763, %v2763
    %v2772 = vpack.c.bf16 %v2764, %v2764
    %v2773 = vld [vmem:[%s6] sm:$0xf]
    %v2774 = vld [vmem:[%s6 + $0x4] sm:$0xf]
    %v2775 = vld [vmem:[%s6 + $0x8] sm:$0xf]
    %v2776 = vld [vmem:[%s6 + $0xc] sm:$0x3]
    %v2781 = vunpack.c.l.b16 %v2773
    %v2782 = vunpack.c.l.b16 %v2774
    %v2783 = vunpack.c.l.b16 %v2775
    %v2784 = vunpack.c.l.b16 %v2776
    %v2785 = vpack.c.b16 %v2782, %v2781
    %v2786 = vpack.c.b16 %v2784, %v2783
    %vm2787 = vcmask 449536
    %v2789 = vsel %vm2787, %v2785, 0
    %v2792 = vsel %vm2787, %v2786, 0
    %v2794 = vsel %vm204, 4294967295, 65535
    %v2795 = vsel %vm170, %v2794, 0
    %v2797 = vand.u32 %v2771, %v2795
    %v2800 = vand.u32 %v2772, %v2795
    %2802 = vmatprep.subr.bf16.mxu0 %v2766
    %2803 = vmatpush1.bf16.msra.mxu0 %v2765
    %2804 = vmatprep.subr.bf16.mxu0 %v2768
    %2805 = vmatpush1.bf16.msra.mxu0 %v2767
    %2806 = vmatprep.subr.bf16.mxu0 %v2770
    %2807 = vmatpush1.bf16.msra.mxu0 %v2769
    %2808 = vmatprep.subr.bf16.mxu0 %v2800
    %2809 = vmatpush1.bf16.msra.mxu0 %v2797
    %2810 = vmatprep.subr.bf16.mxu0 0
    %2811 = vmatpush1.bf16.msra.mxu0 0
    %2812 = vmatprep.subr.bf16.mxu0 0
    %2813 = vmatpush1.bf16.msra.mxu0 0
    %2814 = vmatprep.subr.bf16.mxu0 0
    %2815 = vmatpush1.bf16.msra.mxu0 0
    %2816 = vmatprep.subr.bf16.mxu0 0
    %2817 = vmatpush1.bf16.msra.mxu0 0
    %2818 = vmatprep.subr.bf16.mxu0 0
    %2819 = vmatpush1.bf16.msra.mxu0 0
    %2820 = vmatprep.subr.bf16.mxu0 0
    %2821 = vmatpush1.bf16.msra.mxu0 0
    %2822 = vmatprep.subr.bf16.mxu0 0
    %2823 = vmatpush1.bf16.msra.mxu0 0
    %2824 = vmatprep.subr.bf16.mxu0 0
    %2825 = vmatpush1.bf16.msra.mxu0 0
    %2826 = vmatprep.subr.bf16.mxu0 0
    %2827 = vmatpush1.bf16.msra.mxu0 0
    %2828 = vmatprep.subr.bf16.mxu0 0
    %2829 = vmatpush1.bf16.msra.mxu0 0
    %2830 = vmatprep.subr.bf16.mxu0 0
    %2831 = vmatpush1.bf16.msra.mxu0 0
    %2832 = vmatprep.subr.bf16.mxu0 0
    %2833 = vmatpush1.bf16.msra.mxu0 0
    %2834 = vmatprep.mubr.bf16.mxu0 0
    %2835 = vmatmul.mubr.bf16.gmra.mrb[0].mxu0 %v2789
    %v2836 = vpop.f32.mrb[0].mxu0
    %v2837 = vadd.f32 0.0, %v2836
    %v2838 = vpop.f32.mrb[0].mxu0
    %v2839 = vadd.f32 0.0, %v2838
    %v2840 = vpop.f32.mrb[0].mxu0
    %v2841 = vadd.f32 0.0, %v2840
    %v2842 = vpop.f32.mrb[0].mxu0
    %v2843 = vadd.f32 0.0, %v2842
    %2844 = vmatprep.mubr.bf16.mxu0 0
    %2845 = vmatmul.mubr.bf16.gmra.mrb[0].mxu0 %v2792
    %v2846 = vpop.f32.mrb[0].mxu0
    %v2847 = vadd.f32 0.0, %v2846
    %v2848 = vpop.f32.mrb[0].mxu0
    %v2849 = vadd.f32 0.0, %v2848
    %v2850 = vpop.f32.mrb[0].mxu0
    %v2851 = vadd.f32 0.0, %v2850
    %v2852 = vpop.f32.mrb[0].mxu0
    %v2853 = vadd.f32 0.0, %v2852
    %2854 = vdwg.mxu0
    %2855 = vst [vmem:[#allocation3 + $0x10] sm:$0xff] %v2837
    %vm2856 = vcmask 785408
    %2857 = vst.msk [vmem:[#allocation3 + $0x18] sm:$0xff] %vm2856, %v2839
    %2858 = vst [vmem:[#allocation3 + $0x40] sm:$0x3f] %v2841
    %vm2859 = vcmask 783360
    %2860 = vst.msk [vmem:[#allocation3 + $0x48] sm:$0x3f] %vm2859, %v2843
    %v2865 = vrot.slane %v2837, 7
    %v2866 = vrot.slane %v2839, 7
    %v2867 = vrot.slane %v2841, 7
    %v2868 = vsel %vm127, %v2865, %v2867
    %v2869 = vrot.slane %v2843, 7
    %v2870 = vsel %vm127, %v2866, %v2869
    %2875 = vst [vmem:[#allocation3] sm:$0xfe] %v2865
    %vm2876 = vcmask 785409
    %2877 = vst.msk [vmem:[#allocation3 + $0x8] sm:$0xfe] %vm2876, %v2866
    %2878 = vst [vmem:[#allocation3 + $0x30] sm:$0x3f] %v2868
    %2879 = vst.msk [vmem:[#allocation3 + $0x38] sm:$0x3f] %vm2859, %v2870
    %v2880 = vrot.slane %v2837, 1
    %v2881 = vrot.slane %v2841, 1
    %v2882 = vsel %vm144, %v2880, %v2881
    %v2883 = vrot.slane %v2839, 1
    %v2884 = vrot.slane %v2843, 1
    %v2885 = vsel %vm144, %v2883, %v2884
    %2890 = vst [vmem:[#allocation3 + $0x20] sm:$0xff] %v2882
    %2891 = vst.msk [vmem:[#allocation3 + $0x28] sm:$0xff] %vm2856, %v2885
    %2892 = vst [vmem:[#allocation3 + $0x50] sm:$0x1f] %v2881
    %vm2893 = vcmask 782336
    %2894 = vst.msk [vmem:[#allocation3 + $0x58] sm:$0x1f] %vm2893, %v2884
    %2895 = vst [vmem:[#allocation3 + $0x40] sm:$0xc0] %v2841
    %vm2896 = vcmask 785414
    %2897 = vst.msk [vmem:[#allocation3 + $0x48] sm:$0xc0] %vm2896, %v2843
    %2898 = vst [vmem:[#allocation3 + $0x70] sm:$0xff] %v2847
    %2899 = vst.msk [vmem:[#allocation3 + $0x78] sm:$0xff] %vm2856, %v2849
    %2900 = vst [vmem:[#allocation3 + $0xa0] sm:$0xf] %v2851
    %vm2901 = vcmask 781312
    %2902 = vst.msk [vmem:[#allocation3 + $0xa8] sm:$0xf] %vm2901, %v2853
    %v2907 = vrot.slane %v2847, 7
    %v2908 = vsel %vm127, %v2867, %v2907
    %v2909 = vrot.slane %v2849, 7
    %v2910 = vsel %vm127, %v2869, %v2909
    %v2911 = vrot.slane %v2851, 7
    %v2912 = vsel %vm127, %v2907, %v2911
    %v2913 = vrot.slane %v2853, 7
    %v2914 = vsel %vm127, %v2909, %v2913
    %2921 = vst [vmem:[#allocation3 + $0x30] sm:$0x80] %v2867
    %vm2922 = vcmask 785415
    %2923 = vst.msk [vmem:[#allocation3 + $0x38] sm:$0x80] %vm2922, %v2869
    %2924 = vst [vmem:[#allocation3 + $0x60] sm:$0xff] %v2908
    %2925 = vst.msk [vmem:[#allocation3 + $0x68] sm:$0xff] %vm2856, %v2910
    %2926 = vst [vmem:[#allocation3 + $0x90] sm:$0xf] %v2912
    %2927 = vst.msk [vmem:[#allocation3 + $0x98] sm:$0xf] %vm2901, %v2914
    %v2928 = vrot.slane %v2847, 1
    %v2929 = vsel %vm144, %v2881, %v2928
    %v2930 = vrot.slane %v2849, 1
    %v2931 = vsel %vm144, %v2884, %v2930
    %v2932 = vrot.slane %v2851, 1
    %v2933 = vsel %vm144, %v2928, %v2932
    %v2934 = vrot.slane %v2853, 1
    %v2935 = vsel %vm144, %v2930, %v2934
    %2942 = vst [vmem:[#allocation3 + $0x50] sm:$0xc0] %v2929
    %2943 = vst.msk [vmem:[#allocation3 + $0x58] sm:$0xc0] %vm2896, %v2931
    %2944 = vst [vmem:[#allocation3 + $0x80] sm:$0xff] %v2933
    %2945 = vst.msk [vmem:[#allocation3 + $0x88] sm:$0xff] %vm2856, %v2935
    %2946 = vst [vmem:[#allocation3 + $0xb0] sm:$0x7] %v2932
    %vm2947 = vcmask 780288
    %2948 = vst.msk [vmem:[#allocation3 + $0xb8] sm:$0x7] %vm2947, %v2934
    %v2949 = vld [vmem:[#allocation3] sm:$0xff]
    %v2950 = vld [vmem:[#allocation3 + $0x8] sm:$0xff]
    %v2951 = vld [vmem:[#allocation3 + $0x10] sm:$0xff]
    %v2952 = vld [vmem:[#allocation3 + $0x18] sm:$0xff]
    %v2953 = vld [vmem:[#allocation3 + $0x20] sm:$0xff]
    %v2954 = vld [vmem:[#allocation3 + $0x28] sm:$0xff]
    %v2955 = vld [vmem:[#allocation3 + $0x30] sm:$0xff]
    %v2956 = vld [vmem:[#allocation3 + $0x38] sm:$0xff]
    %v2957 = vld [vmem:[#allocation3 + $0x40] sm:$0xff]
    %v2958 = vld [vmem:[#allocation3 + $0x48] sm:$0xff]
    %v2959 = vld [vmem:[#allocation3 + $0x50] sm:$0xff]
    %v2960 = vld [vmem:[#allocation3 + $0x58] sm:$0xff]
    %v2961 = vld [vmem:[#allocation3 + $0x60] sm:$0xff]
    %v2962 = vld [vmem:[#allocation3 + $0x68] sm:$0xff]
    %v2963 = vld [vmem:[#allocation3 + $0x70] sm:$0xff]
    %v2964 = vld [vmem:[#allocation3 + $0x78] sm:$0xff]
    %v2965 = vld [vmem:[#allocation3 + $0x80] sm:$0xff]
    %v2966 = vld [vmem:[#allocation3 + $0x88] sm:$0xff]
    %v2967 = vld [vmem:[#allocation3 + $0x90] sm:$0xf]
    %v2968 = vld [vmem:[#allocation3 + $0x98] sm:$0xf]
    %v2969 = vld [vmem:[#allocation3 + $0xa0] sm:$0xf]
    %v2970 = vld [vmem:[#allocation3 + $0xa8] sm:$0xf]
    %v2971 = vld [vmem:[#allocation3 + $0xb0] sm:$0xf]
    %v2972 = vld [vmem:[#allocation3 + $0xb8] sm:$0xf]
    %v2973 = vpack.c.bf16 %v2955, %v2949
    %v2974 = vpack.c.bf16 %v2956, %v2950
    %v2975 = vpack.c.bf16 %v2957, %v2951
    %v2976 = vpack.c.bf16 %v2958, %v2952
    %v2977 = vpack.c.bf16 %v2959, %v2953
    %v2978 = vpack.c.bf16 %v2960, %v2954
    %v2979 = vpack.c.bf16 %v2967, %v2961
    %v2980 = vpack.c.bf16 %v2968, %v2962
    %v2981 = vpack.c.bf16 %v2969, %v2963
    %v2982 = vpack.c.bf16 %v2970, %v2964
    %v2983 = vpack.c.bf16 %v2971, %v2965
    %v2984 = vpack.c.bf16 %v2972, %v2966
    %v2985 = vld [vmem:[%s7] sm:$0xff]
    %v2986 = vld [vmem:[%s7 + $0x8] sm:$0xff]
    %v2987 = vld [vmem:[%s7 + $0x10] sm:$0xff]
    %v2988 = vld [vmem:[%s7 + $0x18] sm:$0xff]
    %v2989 = vld [vmem:[%s7 + $0x20] sm:$0xff]
    %v2990 = vld [vmem:[%s7 + $0x28] sm:$0xff]
    %v2991 = vld [vmem:[%s7 + $0x30] sm:$0xff]
    %v2992 = vld [vmem:[%s7 + $0x38] sm:$0xff]
    %v2993 = vld [vmem:[%s7 + $0x40] sm:$0xff]
    %v2994 = vld [vmem:[%s7 + $0x48] sm:$0xff]
    %v2995 = vld [vmem:[%s7 + $0x50] sm:$0xff]
    %v2996 = vld [vmem:[%s7 + $0x58] sm:$0xff]
    %v2997 = vld [vmem:[%s7 + $0x60] sm:$0xff]
    %v2998 = vld [vmem:[%s7 + $0x68] sm:$0xff]
    %v2999 = vld [vmem:[%s7 + $0x70] sm:$0xff]
    %v3000 = vld [vmem:[%s7 + $0x78] sm:$0xff]
    %v3001 = vld [vmem:[%s7 + $0x80] sm:$0xff]
    %v3002 = vld [vmem:[%s7 + $0x88] sm:$0xff]
    %v3003 = vld [vmem:[%s7 + $0x90] sm:$0xff]
    %v3004 = vld [vmem:[%s7 + $0x98] sm:$0xff]
    %v3005 = vld [vmem:[%s7 + $0xa0] sm:$0xff]
    %v3006 = vld [vmem:[%s7 + $0xa8] sm:$0xff]
    %v3007 = vld [vmem:[%s7 + $0xb0] sm:$0xff]
    %v3008 = vld [vmem:[%s7 + $0xb8] sm:$0xff]
    %v3009 = vld [vmem:[%s7 + $0xc0] sm:$0xff]
    %v3010 = vld [vmem:[%s7 + $0xc8] sm:$0xff]
    %v3011 = vld [vmem:[%s7 + $0xd0] sm:$0xff]
    %v3012 = vld [vmem:[%s7 + $0xd8] sm:$0xff]
    %v3013 = vld [vmem:[%s7 + $0xe0] sm:$0xff]
    %v3014 = vld [vmem:[%s7 + $0xe8] sm:$0xff]
    %v3015 = vld [vmem:[%s7 + $0xf0] sm:$0xff]
    %v3016 = vld [vmem:[%s7 + $0xf8] sm:$0xff]
    %v3017 = vld [vmem:[%s7 + $0x100] sm:$0xff]
    %v3018 = vld [vmem:[%s7 + $0x108] sm:$0xff]
    %v3019 = vld [vmem:[%s7 + $0x110] sm:$0xff]
    %v3020 = vld [vmem:[%s7 + $0x118] sm:$0xff]
    %v3021 = vld [vmem:[%s7 + $0x120] sm:$0xff]
    %v3022 = vld [vmem:[%s7 + $0x128] sm:$0xff]
    %v3023 = vld [vmem:[%s7 + $0x130] sm:$0xff]
    %v3024 = vld [vmem:[%s7 + $0x138] sm:$0xff]
    %v3025 = vld [vmem:[%s7 + $0x140] sm:$0xff]
    %v3026 = vld [vmem:[%s7 + $0x148] sm:$0xff]
    %v3027 = vld [vmem:[%s7 + $0x150] sm:$0xff]
    %v3028 = vld [vmem:[%s7 + $0x158] sm:$0xff]
    %v3029 = vld [vmem:[%s7 + $0x160] sm:$0xff]
    %v3030 = vld [vmem:[%s7 + $0x168] sm:$0xff]
    %v3031 = vld [vmem:[%s7 + $0x170] sm:$0xff]
    %v3032 = vld [vmem:[%s7 + $0x178] sm:$0xff]
    %v3033 = vld [vmem:[%s7 + $0x180] sm:$0xff]
    %v3034 = vld [vmem:[%s7 + $0x188] sm:$0xff]
    %v3035 = vld [vmem:[%s7 + $0x190] sm:$0xff]
    %v3036 = vld [vmem:[%s7 + $0x198] sm:$0xff]
    %v3037 = vld [vmem:[%s7 + $0x1a0] sm:$0xff]
    %v3038 = vld [vmem:[%s7 + $0x1a8] sm:$0xff]
    %v3039 = vld [vmem:[%s7 + $0x1b0] sm:$0xff]
    %v3040 = vld [vmem:[%s7 + $0x1b8] sm:$0xff]
    %v3041 = vld [vmem:[%s7 + $0x1c0] sm:$0xff]
    %v3042 = vld [vmem:[%s7 + $0x1c8] sm:$0xff]
    %v3043 = vld [vmem:[%s7 + $0x1d0] sm:$0xff]
    %v3044 = vld [vmem:[%s7 + $0x1d8] sm:$0xff]
    %v3045 = vld [vmem:[%s7 + $0x1e0] sm:$0xff]
    %v3046 = vld [vmem:[%s7 + $0x1e8] sm:$0xff]
    %v3047 = vld [vmem:[%s7 + $0x1f0] sm:$0xff]
    %v3048 = vld [vmem:[%s7 + $0x1f8] sm:$0xff]
    %v3049 = vld [vmem:[%s7 + $0x200] sm:$0xff]
    %v3050 = vld [vmem:[%s7 + $0x208] sm:$0xff]
    %v3051 = vld [vmem:[%s7 + $0x210] sm:$0xff]
    %v3052 = vld [vmem:[%s7 + $0x218] sm:$0xff]
    %v3053 = vld [vmem:[%s7 + $0x220] sm:$0xff]
    %v3054 = vld [vmem:[%s7 + $0x228] sm:$0xff]
    %v3055 = vld [vmem:[%s7 + $0x230] sm:$0xff]
    %v3056 = vld [vmem:[%s7 + $0x238] sm:$0xff]
    %v3057 = vld [vmem:[%s7 + $0x240] sm:$0xff]
    %v3058 = vld [vmem:[%s7 + $0x248] sm:$0xff]
    %v3059 = vld [vmem:[%s7 + $0x250] sm:$0xff]
    %v3060 = vld [vmem:[%s7 + $0x258] sm:$0xff]
    %v3061 = vld [vmem:[%s7 + $0x260] sm:$0xff]
    %v3062 = vld [vmem:[%s7 + $0x268] sm:$0xff]
    %v3063 = vld [vmem:[%s7 + $0x270] sm:$0xff]
    %v3064 = vld [vmem:[%s7 + $0x278] sm:$0xff]
    %v3065 = vld [vmem:[%s7 + $0x280] sm:$0xff]
    %v3066 = vld [vmem:[%s7 + $0x288] sm:$0xff]
    %v3067 = vld [vmem:[%s7 + $0x290] sm:$0xff]
    %v3068 = vld [vmem:[%s7 + $0x298] sm:$0xff]
    %v3069 = vld [vmem:[%s7 + $0x2a0] sm:$0xff]
    %v3070 = vld [vmem:[%s7 + $0x2a8] sm:$0xff]
    %v3071 = vld [vmem:[%s7 + $0x2b0] sm:$0xff]
    %v3072 = vld [vmem:[%s7 + $0x2b8] sm:$0xff]
    %v3073 = vld [vmem:[%s7 + $0x2c0] sm:$0xff]
    %v3074 = vld [vmem:[%s7 + $0x2c8] sm:$0xff]
    %v3075 = vld [vmem:[%s7 + $0x2d0] sm:$0xff]
    %v3076 = vld [vmem:[%s7 + $0x2d8] sm:$0xff]
    %v3077 = vld [vmem:[%s7 + $0x2e0] sm:$0xff]
    %v3078 = vld [vmem:[%s7 + $0x2e8] sm:$0xff]
    %v3079 = vld [vmem:[%s7 + $0x2f0] sm:$0xff]
    %v3080 = vld [vmem:[%s7 + $0x2f8] sm:$0xff]
    %v3081 = vld [vmem:[%s7 + $0x300] sm:$0xff]
    %v3082 = vld [vmem:[%s7 + $0x308] sm:$0xff]
    %v3083 = vld [vmem:[%s7 + $0x310] sm:$0xff]
    %v3084 = vld [vmem:[%s7 + $0x318] sm:$0xff]
    %v3085 = vld [vmem:[%s7 + $0x320] sm:$0xff]
    %v3086 = vld [vmem:[%s7 + $0x328] sm:$0xff]
    %v3087 = vld [vmem:[%s7 + $0x330] sm:$0xff]
    %v3088 = vld [vmem:[%s7 + $0x338] sm:$0xff]
    %v3089 = vld [vmem:[%s7 + $0x340] sm:$0xff]
    %v3090 = vld [vmem:[%s7 + $0x348] sm:$0xff]
    %v3091 = vld [vmem:[%s7 + $0x350] sm:$0xff]
    %v3092 = vld [vmem:[%s7 + $0x358] sm:$0xff]
    %v3093 = vld [vmem:[%s7 + $0x360] sm:$0xff]
    %v3094 = vld [vmem:[%s7 + $0x368] sm:$0xff]
    %v3095 = vld [vmem:[%s7 + $0x370] sm:$0xff]
    %v3096 = vld [vmem:[%s7 + $0x378] sm:$0xff]
    %v3097 = vld [vmem:[%s7 + $0x380] sm:$0xff]
    %v3098 = vld [vmem:[%s7 + $0x388] sm:$0xff]
    %v3099 = vld [vmem:[%s7 + $0x390] sm:$0xff]
    %v3100 = vld [vmem:[%s7 + $0x398] sm:$0xff]
    %v3101 = vld [vmem:[%s7 + $0x3a0] sm:$0xff]
    %v3102 = vld [vmem:[%s7 + $0x3a8] sm:$0xff]
    %v3103 = vld [vmem:[%s7 + $0x3b0] sm:$0xff]
    %v3104 = vld [vmem:[%s7 + $0x3b8] sm:$0xff]
    %v3105 = vld [vmem:[%s7 + $0x3c0] sm:$0xff]
    %v3106 = vld [vmem:[%s7 + $0x3c8] sm:$0xff]
    %v3107 = vld [vmem:[%s7 + $0x3d0] sm:$0xff]
    %v3108 = vld [vmem:[%s7 + $0x3d8] sm:$0xff]
    %v3109 = vld [vmem:[%s7 + $0x3e0] sm:$0xff]
    %v3110 = vld [vmem:[%s7 + $0x3e8] sm:$0xff]
    %v3111 = vld [vmem:[%s7 + $0x3f0] sm:$0xff]
    %v3112 = vld [vmem:[%s7 + $0x3f8] sm:$0xff]
    %v3113 = vld [vmem:[%s7 + $0x400] sm:$0xff]
    %v3114 = vld [vmem:[%s7 + $0x408] sm:$0xff]
    %v3115 = vld [vmem:[%s7 + $0x410] sm:$0xff]
    %v3116 = vld [vmem:[%s7 + $0x418] sm:$0xff]
    %v3117 = vld [vmem:[%s7 + $0x420] sm:$0xff]
    %v3118 = vld [vmem:[%s7 + $0x428] sm:$0xff]
    %v3119 = vld [vmem:[%s7 + $0x430] sm:$0xff]
    %v3120 = vld [vmem:[%s7 + $0x438] sm:$0xff]
    %v3121 = vld [vmem:[%s7 + $0x440] sm:$0xff]
    %v3122 = vld [vmem:[%s7 + $0x448] sm:$0xff]
    %v3123 = vld [vmem:[%s7 + $0x450] sm:$0xff]
    %v3124 = vld [vmem:[%s7 + $0x458] sm:$0xff]
    %v3125 = vld [vmem:[%s7 + $0x460] sm:$0xff]
    %v3126 = vld [vmem:[%s7 + $0x468] sm:$0xff]
    %v3127 = vld [vmem:[%s7 + $0x470] sm:$0xff]
    %v3128 = vld [vmem:[%s7 + $0x478] sm:$0xff]
    %v3129 = vld [vmem:[%s7 + $0x480] sm:$0xff]
    %v3130 = vld [vmem:[%s7 + $0x488] sm:$0xff]
    %v3131 = vld [vmem:[%s7 + $0x490] sm:$0xff]
    %v3132 = vld [vmem:[%s7 + $0x498] sm:$0xff]
    %v3133 = vld [vmem:[%s7 + $0x4a0] sm:$0xff]
    %v3134 = vld [vmem:[%s7 + $0x4a8] sm:$0xff]
    %v3135 = vld [vmem:[%s7 + $0x4b0] sm:$0xff]
    %v3136 = vld [vmem:[%s7 + $0x4b8] sm:$0xff]
    %v3137 = vld [vmem:[%s7 + $0x4c0] sm:$0xff]
    %v3138 = vld [vmem:[%s7 + $0x4c8] sm:$0xff]
    %v3139 = vld [vmem:[%s7 + $0x4d0] sm:$0xff]
    %v3140 = vld [vmem:[%s7 + $0x4d8] sm:$0xff]
    %v3141 = vld [vmem:[%s7 + $0x4e0] sm:$0xff]
    %v3142 = vld [vmem:[%s7 + $0x4e8] sm:$0xff]
    %v3143 = vld [vmem:[%s7 + $0x4f0] sm:$0xff]
    %v3144 = vld [vmem:[%s7 + $0x4f8] sm:$0xff]
    %v3145 = vld [vmem:[%s7 + $0x500] sm:$0xff]
    %v3146 = vld [vmem:[%s7 + $0x508] sm:$0xff]
    %v3147 = vld [vmem:[%s7 + $0x510] sm:$0xff]
    %v3148 = vld [vmem:[%s7 + $0x518] sm:$0xff]
    %v3149 = vld [vmem:[%s7 + $0x520] sm:$0xff]
    %v3150 = vld [vmem:[%s7 + $0x528] sm:$0xff]
    %v3151 = vld [vmem:[%s7 + $0x530] sm:$0xff]
    %v3152 = vld [vmem:[%s7 + $0x538] sm:$0xff]
    %v3153 = vld [vmem:[%s7 + $0x540] sm:$0xff]
    %v3154 = vld [vmem:[%s7 + $0x548] sm:$0xff]
    %v3155 = vld [vmem:[%s7 + $0x550] sm:$0xff]
    %v3156 = vld [vmem:[%s7 + $0x558] sm:$0xff]
    %v3157 = vld [vmem:[%s7 + $0x560] sm:$0xff]
    %v3158 = vld [vmem:[%s7 + $0x568] sm:$0xff]
    %v3159 = vld [vmem:[%s7 + $0x570] sm:$0xff]
    %v3160 = vld [vmem:[%s7 + $0x578] sm:$0xff]
    %v3161 = vld [vmem:[%s7 + $0x580] sm:$0xff]
    %v3162 = vld [vmem:[%s7 + $0x588] sm:$0xff]
    %v3163 = vld [vmem:[%s7 + $0x590] sm:$0xff]
    %v3164 = vld [vmem:[%s7 + $0x598] sm:$0xff]
    %v3165 = vld [vmem:[%s7 + $0x5a0] sm:$0xff]
    %v3166 = vld [vmem:[%s7 + $0x5a8] sm:$0xff]
    %v3167 = vld [vmem:[%s7 + $0x5b0] sm:$0xff]
    %v3168 = vld [vmem:[%s7 + $0x5b8] sm:$0xff]
    %v3169 = vld [vmem:[%s7 + $0x5c0] sm:$0xff]
    %v3170 = vld [vmem:[%s7 + $0x5c8] sm:$0xff]
    %v3171 = vld [vmem:[%s7 + $0x5d0] sm:$0xff]
    %v3172 = vld [vmem:[%s7 + $0x5d8] sm:$0xff]
    %v3173 = vld [vmem:[%s7 + $0x5e0] sm:$0xff]
    %v3174 = vld [vmem:[%s7 + $0x5e8] sm:$0xff]
    %v3175 = vld [vmem:[%s7 + $0x5f0] sm:$0xff]
    %v3176 = vld [vmem:[%s7 + $0x5f8] sm:$0xff]
    %v3369 = vunpack.c.l.b16 %v2985
    %v3370 = vunpack.c.h.b16 %v2985
    %v3371 = vunpack.c.l.b16 %v2986
    %v3372 = vunpack.c.h.b16 %v2986
    %v3373 = vunpack.c.l.b16 %v2987
    %v3374 = vunpack.c.h.b16 %v2987
    %v3375 = vunpack.c.l.b16 %v2988
    %v3376 = vunpack.c.h.b16 %v2988
    %v3377 = vunpack.c.l.b16 %v2989
    %v3378 = vunpack.c.h.b16 %v2989
    %v3379 = vunpack.c.l.b16 %v2990
    %v3380 = vunpack.c.h.b16 %v2990
    %v3381 = vunpack.c.l.b16 %v2991
    %v3382 = vunpack.c.h.b16 %v2991
    %v3383 = vunpack.c.l.b16 %v2992
    %v3384 = vunpack.c.h.b16 %v2992
    %v3385 = vunpack.c.l.b16 %v2993
    %v3386 = vunpack.c.h.b16 %v2993
    %v3387 = vunpack.c.l.b16 %v2994
    %v3388 = vunpack.c.h.b16 %v2994
    %v3389 = vunpack.c.l.b16 %v2995
    %v3390 = vunpack.c.h.b16 %v2995
    %v3391 = vunpack.c.l.b16 %v2996
    %v3392 = vunpack.c.h.b16 %v2996
    %v3393 = vunpack.c.l.b16 %v2997
    %v3394 = vunpack.c.h.b16 %v2997
    %v3395 = vunpack.c.l.b16 %v2998
    %v3396 = vunpack.c.h.b16 %v2998
    %v3397 = vunpack.c.l.b16 %v2999
    %v3398 = vunpack.c.h.b16 %v2999
    %v3399 = vunpack.c.l.b16 %v3000
    %v3400 = vunpack.c.h.b16 %v3000
    %v3401 = vunpack.c.l.b16 %v3001
    %v3402 = vunpack.c.h.b16 %v3001
    %v3403 = vunpack.c.l.b16 %v3002
    %v3404 = vunpack.c.h.b16 %v3002
    %v3405 = vunpack.c.l.b16 %v3003
    %v3406 = vunpack.c.h.b16 %v3003
    %v3407 = vunpack.c.l.b16 %v3004
    %v3408 = vunpack.c.h.b16 %v3004
    %v3409 = vunpack.c.l.b16 %v3005
    %v3410 = vunpack.c.h.b16 %v3005
    %v3411 = vunpack.c.l.b16 %v3006
    %v3412 = vunpack.c.h.b16 %v3006
    %v3413 = vunpack.c.l.b16 %v3007
    %v3414 = vunpack.c.h.b16 %v3007
    %v3415 = vunpack.c.l.b16 %v3008
    %v3416 = vunpack.c.h.b16 %v3008
    %v3417 = vunpack.c.l.b16 %v3009
    %v3418 = vunpack.c.h.b16 %v3009
    %v3419 = vunpack.c.l.b16 %v3010
    %v3420 = vunpack.c.h.b16 %v3010
    %v3421 = vunpack.c.l.b16 %v3011
    %v3422 = vunpack.c.h.b16 %v3011
    %v3423 = vunpack.c.l.b16 %v3012
    %v3424 = vunpack.c.h.b16 %v3012
    %v3425 = vunpack.c.l.b16 %v3013
    %v3426 = vunpack.c.h.b16 %v3013
    %v3427 = vunpack.c.l.b16 %v3014
    %v3428 = vunpack.c.h.b16 %v3014
    %v3429 = vunpack.c.l.b16 %v3015
    %v3430 = vunpack.c.h.b16 %v3015
    %v3431 = vunpack.c.l.b16 %v3016
    %v3432 = vunpack.c.h.b16 %v3016
    %v3433 = vunpack.c.l.b16 %v3017
    %v3434 = vunpack.c.h.b16 %v3017
    %v3435 = vunpack.c.l.b16 %v3018
    %v3436 = vunpack.c.h.b16 %v3018
    %v3437 = vunpack.c.l.b16 %v3019
    %v3438 = vunpack.c.h.b16 %v3019
    %v3439 = vunpack.c.l.b16 %v3020
    %v3440 = vunpack.c.h.b16 %v3020
    %v3441 = vunpack.c.l.b16 %v3021
    %v3442 = vunpack.c.h.b16 %v3021
    %v3443 = vunpack.c.l.b16 %v3022
    %v3444 = vunpack.c.h.b16 %v3022
    %v3445 = vunpack.c.l.b16 %v3023
    %v3446 = vunpack.c.h.b16 %v3023
    %v3447 = vunpack.c.l.b16 %v3024
    %v3448 = vunpack.c.h.b16 %v3024
    %v3449 = vunpack.c.l.b16 %v3025
    %v3450 = vunpack.c.h.b16 %v3025
    %v3451 = vunpack.c.l.b16 %v3026
    %v3452 = vunpack.c.h.b16 %v3026
    %v3453 = vunpack.c.l.b16 %v3027
    %v3454 = vunpack.c.h.b16 %v3027
    %v3455 = vunpack.c.l.b16 %v3028
    %v3456 = vunpack.c.h.b16 %v3028
    %v3457 = vunpack.c.l.b16 %v3029
    %v3458 = vunpack.c.h.b16 %v3029
    %v3459 = vunpack.c.l.b16 %v3030
    %v3460 = vunpack.c.h.b16 %v3030
    %v3461 = vunpack.c.l.b16 %v3031
    %v3462 = vunpack.c.h.b16 %v3031
    %v3463 = vunpack.c.l.b16 %v3032
    %v3464 = vunpack.c.h.b16 %v3032
    %v3465 = vunpack.c.l.b16 %v3033
    %v3466 = vunpack.c.h.b16 %v3033
    %v3467 = vunpack.c.l.b16 %v3034
    %v3468 = vunpack.c.h.b16 %v3034
    %v3469 = vunpack.c.l.b16 %v3035
    %v3470 = vunpack.c.h.b16 %v3035
    %v3471 = vunpack.c.l.b16 %v3036
    %v3472 = vunpack.c.h.b16 %v3036
    %v3473 = vunpack.c.l.b16 %v3037
    %v3474 = vunpack.c.h.b16 %v3037
    %v3475 = vunpack.c.l.b16 %v3038
    %v3476 = vunpack.c.h.b16 %v3038
    %v3477 = vunpack.c.l.b16 %v3039
    %v3478 = vunpack.c.h.b16 %v3039
    %v3479 = vunpack.c.l.b16 %v3040
    %v3480 = vunpack.c.h.b16 %v3040
    %v3481 = vunpack.c.l.b16 %v3041
    %v3482 = vunpack.c.h.b16 %v3041
    %v3483 = vunpack.c.l.b16 %v3042
    %v3484 = vunpack.c.h.b16 %v3042
    %v3485 = vunpack.c.l.b16 %v3043
    %v3486 = vunpack.c.h.b16 %v3043
    %v3487 = vunpack.c.l.b16 %v3044
    %v3488 = vunpack.c.h.b16 %v3044
    %v3489 = vunpack.c.l.b16 %v3045
    %v3490 = vunpack.c.h.b16 %v3045
    %v3491 = vunpack.c.l.b16 %v3046
    %v3492 = vunpack.c.h.b16 %v3046
    %v3493 = vunpack.c.l.b16 %v3047
    %v3494 = vunpack.c.h.b16 %v3047
    %v3495 = vunpack.c.l.b16 %v3048
    %v3496 = vunpack.c.h.b16 %v3048
    %v3497 = vunpack.c.l.b16 %v3049
    %v3498 = vunpack.c.h.b16 %v3049
    %v3499 = vunpack.c.l.b16 %v3050
    %v3500 = vunpack.c.h.b16 %v3050
    %v3501 = vunpack.c.l.b16 %v3051
    %v3502 = vunpack.c.h.b16 %v3051
    %v3503 = vunpack.c.l.b16 %v3052
    %v3504 = vunpack.c.h.b16 %v3052
    %v3505 = vunpack.c.l.b16 %v3053
    %v3506 = vunpack.c.h.b16 %v3053
    %v3507 = vunpack.c.l.b16 %v3054
    %v3508 = vunpack.c.h.b16 %v3054
    %v3509 = vunpack.c.l.b16 %v3055
    %v3510 = vunpack.c.h.b16 %v3055
    %v3511 = vunpack.c.l.b16 %v3056
    %v3512 = vunpack.c.h.b16 %v3056
    %v3513 = vunpack.c.l.b16 %v3057
    %v3514 = vunpack.c.h.b16 %v3057
    %v3515 = vunpack.c.l.b16 %v3058
    %v3516 = vunpack.c.h.b16 %v3058
    %v3517 = vunpack.c.l.b16 %v3059
    %v3518 = vunpack.c.h.b16 %v3059
    %v3519 = vunpack.c.l.b16 %v3060
    %v3520 = vunpack.c.h.b16 %v3060
    %v3521 = vunpack.c.l.b16 %v3061
    %v3522 = vunpack.c.h.b16 %v3061
    %v3523 = vunpack.c.l.b16 %v3062
    %v3524 = vunpack.c.h.b16 %v3062
    %v3525 = vunpack.c.l.b16 %v3063
    %v3526 = vunpack.c.h.b16 %v3063
    %v3527 = vunpack.c.l.b16 %v3064
    %v3528 = vunpack.c.h.b16 %v3064
    %v3529 = vunpack.c.l.b16 %v3065
    %v3530 = vunpack.c.h.b16 %v3065
    %v3531 = vunpack.c.l.b16 %v3066
    %v3532 = vunpack.c.h.b16 %v3066
    %v3533 = vunpack.c.l.b16 %v3067
    %v3534 = vunpack.c.h.b16 %v3067
    %v3535 = vunpack.c.l.b16 %v3068
    %v3536 = vunpack.c.h.b16 %v3068
    %v3537 = vunpack.c.l.b16 %v3069
    %v3538 = vunpack.c.h.b16 %v3069
    %v3539 = vunpack.c.l.b16 %v3070
    %v3540 = vunpack.c.h.b16 %v3070
    %v3541 = vunpack.c.l.b16 %v3071
    %v3542 = vunpack.c.h.b16 %v3071
    %v3543 = vunpack.c.l.b16 %v3072
    %v3544 = vunpack.c.h.b16 %v3072
    %v3545 = vunpack.c.l.b16 %v3073
    %v3546 = vunpack.c.h.b16 %v3073
    %v3547 = vunpack.c.l.b16 %v3074
    %v3548 = vunpack.c.h.b16 %v3074
    %v3549 = vunpack.c.l.b16 %v3075
    %v3550 = vunpack.c.h.b16 %v3075
    %v3551 = vunpack.c.l.b16 %v3076
    %v3552 = vunpack.c.h.b16 %v3076
    %v3553 = vunpack.c.l.b16 %v3077
    %v3554 = vunpack.c.h.b16 %v3077
    %v3555 = vunpack.c.l.b16 %v3078
    %v3556 = vunpack.c.h.b16 %v3078
    %v3557 = vunpack.c.l.b16 %v3079
    %v3558 = vunpack.c.h.b16 %v3079
    %v3559 = vunpack.c.l.b16 %v3080
    %v3560 = vunpack.c.h.b16 %v3080
    %v3561 = vunpack.c.l.b16 %v3081
    %v3562 = vunpack.c.h.b16 %v3081
    %v3563 = vunpack.c.l.b16 %v3082
    %v3564 = vunpack.c.h.b16 %v3082
    %v3565 = vunpack.c.l.b16 %v3083
    %v3566 = vunpack.c.h.b16 %v3083
    %v3567 = vunpack.c.l.b16 %v3084
    %v3568 = vunpack.c.h.b16 %v3084
    %v3569 = vunpack.c.l.b16 %v3085
    %v3570 = vunpack.c.h.b16 %v3085
    %v3571 = vunpack.c.l.b16 %v3086
    %v3572 = vunpack.c.h.b16 %v3086
    %v3573 = vunpack.c.l.b16 %v3087
    %v3574 = vunpack.c.h.b16 %v3087
    %v3575 = vunpack.c.l.b16 %v3088
    %v3576 = vunpack.c.h.b16 %v3088
    %v3577 = vunpack.c.l.b16 %v3089
    %v3578 = vunpack.c.h.b16 %v3089
    %v3579 = vunpack.c.l.b16 %v3090
    %v3580 = vunpack.c.h.b16 %v3090
    %v3581 = vunpack.c.l.b16 %v3091
    %v3582 = vunpack.c.h.b16 %v3091
    %v3583 = vunpack.c.l.b16 %v3092
    %v3584 = vunpack.c.h.b16 %v3092
    %v3585 = vunpack.c.l.b16 %v3093
    %v3586 = vunpack.c.h.b16 %v3093
    %v3587 = vunpack.c.l.b16 %v3094
    %v3588 = vunpack.c.h.b16 %v3094
    %v3589 = vunpack.c.l.b16 %v3095
    %v3590 = vunpack.c.h.b16 %v3095
    %v3591 = vunpack.c.l.b16 %v3096
    %v3592 = vunpack.c.h.b16 %v3096
    %v3593 = vunpack.c.l.b16 %v3097
    %v3594 = vunpack.c.h.b16 %v3097
    %v3595 = vunpack.c.l.b16 %v3098
    %v3596 = vunpack.c.h.b16 %v3098
    %v3597 = vunpack.c.l.b16 %v3099
    %v3598 = vunpack.c.h.b16 %v3099
    %v3599 = vunpack.c.l.b16 %v3100
    %v3600 = vunpack.c.h.b16 %v3100
    %v3601 = vunpack.c.l.b16 %v3101
    %v3602 = vunpack.c.h.b16 %v3101
    %v3603 = vunpack.c.l.b16 %v3102
    %v3604 = vunpack.c.h.b16 %v3102
    %v3605 = vunpack.c.l.b16 %v3103
    %v3606 = vunpack.c.h.b16 %v3103
    %v3607 = vunpack.c.l.b16 %v3104
    %v3608 = vunpack.c.h.b16 %v3104
    %v3609 = vunpack.c.l.b16 %v3105
    %v3610 = vunpack.c.h.b16 %v3105
    %v3611 = vunpack.c.l.b16 %v3106
    %v3612 = vunpack.c.h.b16 %v3106
    %v3613 = vunpack.c.l.b16 %v3107
    %v3614 = vunpack.c.h.b16 %v3107
    %v3615 = vunpack.c.l.b16 %v3108
    %v3616 = vunpack.c.h.b16 %v3108
    %v3617 = vunpack.c.l.b16 %v3109
    %v3618 = vunpack.c.h.b16 %v3109
    %v3619 = vunpack.c.l.b16 %v3110
    %v3620 = vunpack.c.h.b16 %v3110
    %v3621 = vunpack.c.l.b16 %v3111
    %v3622 = vunpack.c.h.b16 %v3111
    %v3623 = vunpack.c.l.b16 %v3112
    %v3624 = vunpack.c.h.b16 %v3112
    %v3625 = vunpack.c.l.b16 %v3113
    %v3626 = vunpack.c.h.b16 %v3113
    %v3627 = vunpack.c.l.b16 %v3114
    %v3628 = vunpack.c.h.b16 %v3114
    %v3629 = vunpack.c.l.b16 %v3115
    %v3630 = vunpack.c.h.b16 %v3115
    %v3631 = vunpack.c.l.b16 %v3116
    %v3632 = vunpack.c.h.b16 %v3116
    %v3633 = vunpack.c.l.b16 %v3117
    %v3634 = vunpack.c.h.b16 %v3117
    %v3635 = vunpack.c.l.b16 %v3118
    %v3636 = vunpack.c.h.b16 %v3118
    %v3637 = vunpack.c.l.b16 %v3119
    %v3638 = vunpack.c.h.b16 %v3119
    %v3639 = vunpack.c.l.b16 %v3120
    %v3640 = vunpack.c.h.b16 %v3120
    %v3641 = vunpack.c.l.b16 %v3121
    %v3642 = vunpack.c.h.b16 %v3121
    %v3643 = vunpack.c.l.b16 %v3122
    %v3644 = vunpack.c.h.b16 %v3122
    %v3645 = vunpack.c.l.b16 %v3123
    %v3646 = vunpack.c.h.b16 %v3123
    %v3647 = vunpack.c.l.b16 %v3124
    %v3648 = vunpack.c.h.b16 %v3124
    %v3649 = vunpack.c.l.b16 %v3125
    %v3650 = vunpack.c.h.b16 %v3125
    %v3651 = vunpack.c.l.b16 %v3126
    %v3652 = vunpack.c.h.b16 %v3126
    %v3653 = vunpack.c.l.b16 %v3127
    %v3654 = vunpack.c.h.b16 %v3127
    %v3655 = vunpack.c.l.b16 %v3128
    %v3656 = vunpack.c.h.b16 %v3128
    %v3657 = vunpack.c.l.b16 %v3129
    %v3658 = vunpack.c.h.b16 %v3129
    %v3659 = vunpack.c.l.b16 %v3130
    %v3660 = vunpack.c.h.b16 %v3130
    %v3661 = vunpack.c.l.b16 %v3131
    %v3662 = vunpack.c.h.b16 %v3131
    %v3663 = vunpack.c.l.b16 %v3132
    %v3664 = vunpack.c.h.b16 %v3132
    %v3665 = vunpack.c.l.b16 %v3133
    %v3666 = vunpack.c.h.b16 %v3133
    %v3667 = vunpack.c.l.b16 %v3134
    %v3668 = vunpack.c.h.b16 %v3134
    %v3669 = vunpack.c.l.b16 %v3135
    %v3670 = vunpack.c.h.b16 %v3135
    %v3671 = vunpack.c.l.b16 %v3136
    %v3672 = vunpack.c.h.b16 %v3136
    %v3673 = vunpack.c.l.b16 %v3137
    %v3674 = vunpack.c.h.b16 %v3137
    %v3675 = vunpack.c.l.b16 %v3138
    %v3676 = vunpack.c.h.b16 %v3138
    %v3677 = vunpack.c.l.b16 %v3139
    %v3678 = vunpack.c.h.b16 %v3139
    %v3679 = vunpack.c.l.b16 %v3140
    %v3680 = vunpack.c.h.b16 %v3140
    %v3681 = vunpack.c.l.b16 %v3141
    %v3682 = vunpack.c.h.b16 %v3141
    %v3683 = vunpack.c.l.b16 %v3142
    %v3684 = vunpack.c.h.b16 %v3142
    %v3685 = vunpack.c.l.b16 %v3143
    %v3686 = vunpack.c.h.b16 %v3143
    %v3687 = vunpack.c.l.b16 %v3144
    %v3688 = vunpack.c.h.b16 %v3144
    %v3689 = vunpack.c.l.b16 %v3145
    %v3690 = vunpack.c.h.b16 %v3145
    %v3691 = vunpack.c.l.b16 %v3146
    %v3692 = vunpack.c.h.b16 %v3146
    %v3693 = vunpack.c.l.b16 %v3147
    %v3694 = vunpack.c.h.b16 %v3147
    %v3695 = vunpack.c.l.b16 %v3148
    %v3696 = vunpack.c.h.b16 %v3148
    %v3697 = vunpack.c.l.b16 %v3149
    %v3698 = vunpack.c.h.b16 %v3149
    %v3699 = vunpack.c.l.b16 %v3150
    %v3700 = vunpack.c.h.b16 %v3150
    %v3701 = vunpack.c.l.b16 %v3151
    %v3702 = vunpack.c.h.b16 %v3151
    %v3703 = vunpack.c.l.b16 %v3152
    %v3704 = vunpack.c.h.b16 %v3152
    %v3705 = vunpack.c.l.b16 %v3153
    %v3706 = vunpack.c.h.b16 %v3153
    %v3707 = vunpack.c.l.b16 %v3154
    %v3708 = vunpack.c.h.b16 %v3154
    %v3709 = vunpack.c.l.b16 %v3155
    %v3710 = vunpack.c.h.b16 %v3155
    %v3711 = vunpack.c.l.b16 %v3156
    %v3712 = vunpack.c.h.b16 %v3156
    %v3713 = vunpack.c.l.b16 %v3157
    %v3714 = vunpack.c.h.b16 %v3157
    %v3715 = vunpack.c.l.b16 %v3158
    %v3716 = vunpack.c.h.b16 %v3158
    %v3717 = vunpack.c.l.b16 %v3159
    %v3718 = vunpack.c.h.b16 %v3159
    %v3719 = vunpack.c.l.b16 %v3160
    %v3720 = vunpack.c.h.b16 %v3160
    %v3721 = vunpack.c.l.b16 %v3161
    %v3722 = vunpack.c.h.b16 %v3161
    %v3723 = vunpack.c.l.b16 %v3162
    %v3724 = vunpack.c.h.b16 %v3162
    %v3725 = vunpack.c.l.b16 %v3163
    %v3726 = vunpack.c.h.b16 %v3163
    %v3727 = vunpack.c.l.b16 %v3164
    %v3728 = vunpack.c.h.b16 %v3164
    %v3729 = vunpack.c.l.b16 %v3165
    %v3730 = vunpack.c.h.b16 %v3165
    %v3731 = vunpack.c.l.b16 %v3166
    %v3732 = vunpack.c.h.b16 %v3166
    %v3733 = vunpack.c.l.b16 %v3167
    %v3734 = vunpack.c.h.b16 %v3167
    %v3735 = vunpack.c.l.b16 %v3168
    %v3736 = vunpack.c.h.b16 %v3168
    %v3737 = vunpack.c.l.b16 %v3169
    %v3738 = vunpack.c.h.b16 %v3169
    %v3739 = vunpack.c.l.b16 %v3170
    %v3740 = vunpack.c.h.b16 %v3170
    %v3741 = vunpack.c.l.b16 %v3171
    %v3742 = vunpack.c.h.b16 %v3171
    %v3743 = vunpack.c.l.b16 %v3172
    %v3744 = vunpack.c.h.b16 %v3172
    %v3745 = vunpack.c.l.b16 %v3173
    %v3746 = vunpack.c.h.b16 %v3173
    %v3747 = vunpack.c.l.b16 %v3174
    %v3748 = vunpack.c.h.b16 %v3174
    %v3749 = vunpack.c.l.b16 %v3175
    %v3750 = vunpack.c.h.b16 %v3175
    %v3751 = vunpack.c.l.b16 %v3176
    %v3752 = vunpack.c.h.b16 %v3176
    %v3753 = vpack.c.b16 %v3373, %v3369
    %v3754 = vpack.c.b16 %v3374, %v3370
    %v3755 = vpack.c.b16 %v3375, %v3371
    %v3756 = vpack.c.b16 %v3376, %v3372
    %v3757 = vpack.c.b16 %v3381, %v3377
    %v3758 = vpack.c.b16 %v3382, %v3378
    %v3759 = vpack.c.b16 %v3383, %v3379
    %v3760 = vpack.c.b16 %v3384, %v3380
    %v3761 = vpack.c.b16 %v3389, %v3385
    %v3762 = vpack.c.b16 %v3390, %v3386
    %v3763 = vpack.c.b16 %v3391, %v3387
    %v3764 = vpack.c.b16 %v3392, %v3388
    %v3765 = vpack.c.b16 %v3397, %v3393
    %v3766 = vpack.c.b16 %v3398, %v3394
    %v3767 = vpack.c.b16 %v3399, %v3395
    %v3768 = vpack.c.b16 %v3400, %v3396
    %v3769 = vpack.c.b16 %v3405, %v3401
    %v3770 = vpack.c.b16 %v3406, %v3402
    %v3771 = vpack.c.b16 %v3407, %v3403
    %v3772 = vpack.c.b16 %v3408, %v3404
    %v3773 = vpack.c.b16 %v3413, %v3409
    %v3774 = vpack.c.b16 %v3414, %v3410
    %v3775 = vpack.c.b16 %v3415, %v3411
    %v3776 = vpack.c.b16 %v3416, %v3412
    %v3777 = vpack.c.b16 %v3421, %v3417
    %v3778 = vpack.c.b16 %v3422, %v3418
    %v3779 = vpack.c.b16 %v3423, %v3419
    %v3780 = vpack.c.b16 %v3424, %v3420
    %v3781 = vpack.c.b16 %v3429, %v3425
    %v3782 = vpack.c.b16 %v3430, %v3426
    %v3783 = vpack.c.b16 %v3431, %v3427
    %v3784 = vpack.c.b16 %v3432, %v3428
    %v3785 = vpack.c.b16 %v3437, %v3433
    %v3786 = vpack.c.b16 %v3438, %v3434
    %v3787 = vpack.c.b16 %v3439, %v3435
    %v3788 = vpack.c.b16 %v3440, %v3436
    %v3789 = vpack.c.b16 %v3445, %v3441
    %v3790 = vpack.c.b16 %v3446, %v3442
    %v3791 = vpack.c.b16 %v3447, %v3443
    %v3792 = vpack.c.b16 %v3448, %v3444
    %v3793 = vpack.c.b16 %v3453, %v3449
    %v3794 = vpack.c.b16 %v3454, %v3450
    %v3795 = vpack.c.b16 %v3455, %v3451
    %v3796 = vpack.c.b16 %v3456, %v3452
    %v3797 = vpack.c.b16 %v3461, %v3457
    %v3798 = vpack.c.b16 %v3462, %v3458
    %v3799 = vpack.c.b16 %v3463, %v3459
    %v3800 = vpack.c.b16 %v3464, %v3460
    %v3801 = vpack.c.b16 %v3469, %v3465
    %v3802 = vpack.c.b16 %v3470, %v3466
    %v3803 = vpack.c.b16 %v3471, %v3467
    %v3804 = vpack.c.b16 %v3472, %v3468
    %v3805 = vpack.c.b16 %v3477, %v3473
    %v3806 = vpack.c.b16 %v3478, %v3474
    %v3807 = vpack.c.b16 %v3479, %v3475
    %v3808 = vpack.c.b16 %v3480, %v3476
    %v3809 = vpack.c.b16 %v3485, %v3481
    %v3810 = vpack.c.b16 %v3486, %v3482
    %v3811 = vpack.c.b16 %v3487, %v3483
    %v3812 = vpack.c.b16 %v3488, %v3484
    %v3813 = vpack.c.b16 %v3493, %v3489
    %v3814 = vpack.c.b16 %v3494, %v3490
    %v3815 = vpack.c.b16 %v3495, %v3491
    %v3816 = vpack.c.b16 %v3496, %v3492
    %v3817 = vpack.c.b16 %v3501, %v3497
    %v3818 = vpack.c.b16 %v3502, %v3498
    %v3819 = vpack.c.b16 %v3503, %v3499
    %v3820 = vpack.c.b16 %v3504, %v3500
    %v3821 = vpack.c.b16 %v3509, %v3505
    %v3822 = vpack.c.b16 %v3510, %v3506
    %v3823 = vpack.c.b16 %v3511, %v3507
    %v3824 = vpack.c.b16 %v3512, %v3508
    %v3825 = vpack.c.b16 %v3517, %v3513
    %v3826 = vpack.c.b16 %v3518, %v3514
    %v3827 = vpack.c.b16 %v3519, %v3515
    %v3828 = vpack.c.b16 %v3520, %v3516
    %v3829 = vpack.c.b16 %v3525, %v3521
    %v3830 = vpack.c.b16 %v3526, %v3522
    %v3831 = vpack.c.b16 %v3527, %v3523
    %v3832 = vpack.c.b16 %v3528, %v3524
    %v3833 = vpack.c.b16 %v3533, %v3529
    %v3834 = vpack.c.b16 %v3534, %v3530
    %v3835 = vpack.c.b16 %v3535, %v3531
    %v3836 = vpack.c.b16 %v3536, %v3532
    %v3837 = vpack.c.b16 %v3541, %v3537
    %v3838 = vpack.c.b16 %v3542, %v3538
    %v3839 = vpack.c.b16 %v3543, %v3539
    %v3840 = vpack.c.b16 %v3544, %v3540
    %v3841 = vpack.c.b16 %v3549, %v3545
    %v3842 = vpack.c.b16 %v3550, %v3546
    %v3843 = vpack.c.b16 %v3551, %v3547
    %v3844 = vpack.c.b16 %v3552, %v3548
    %v3845 = vpack.c.b16 %v3557, %v3553
    %v3846 = vpack.c.b16 %v3558, %v3554
    %v3847 = vpack.c.b16 %v3559, %v3555
    %v3848 = vpack.c.b16 %v3560, %v3556
    %v3849 = vpack.c.b16 %v3565, %v3561
    %v3850 = vpack.c.b16 %v3566, %v3562
    %v3851 = vpack.c.b16 %v3567, %v3563
    %v3852 = vpack.c.b16 %v3568, %v3564
    %v3853 = vpack.c.b16 %v3573, %v3569
    %v3854 = vpack.c.b16 %v3574, %v3570
    %v3855 = vpack.c.b16 %v3575, %v3571
    %v3856 = vpack.c.b16 %v3576, %v3572
    %v3857 = vpack.c.b16 %v3581, %v3577
    %v3858 = vpack.c.b16 %v3582, %v3578
    %v3859 = vpack.c.b16 %v3583, %v3579
    %v3860 = vpack.c.b16 %v3584, %v3580
    %v3861 = vpack.c.b16 %v3589, %v3585
    %v3862 = vpack.c.b16 %v3590, %v3586
    %v3863 = vpack.c.b16 %v3591, %v3587
    %v3864 = vpack.c.b16 %v3592, %v3588
    %v3865 = vpack.c.b16 %v3597, %v3593
    %v3866 = vpack.c.b16 %v3598, %v3594
    %v3867 = vpack.c.b16 %v3599, %v3595
    %v3868 = vpack.c.b16 %v3600, %v3596
    %v3869 = vpack.c.b16 %v3605, %v3601
    %v3870 = vpack.c.b16 %v3606, %v3602
    %v3871 = vpack.c.b16 %v3607, %v3603
    %v3872 = vpack.c.b16 %v3608, %v3604
    %v3873 = vpack.c.b16 %v3613, %v3609
    %v3874 = vpack.c.b16 %v3614, %v3610
    %v3875 = vpack.c.b16 %v3615, %v3611
    %v3876 = vpack.c.b16 %v3616, %v3612
    %v3877 = vpack.c.b16 %v3621, %v3617
    %v3878 = vpack.c.b16 %v3622, %v3618
    %v3879 = vpack.c.b16 %v3623, %v3619
    %v3880 = vpack.c.b16 %v3624, %v3620
    %v3881 = vpack.c.b16 %v3629, %v3625
    %v3882 = vpack.c.b16 %v3630, %v3626
    %v3883 = vpack.c.b16 %v3631, %v3627
    %v3884 = vpack.c.b16 %v3632, %v3628
    %v3885 = vpack.c.b16 %v3637, %v3633
    %v3886 = vpack.c.b16 %v3638, %v3634
    %v3887 = vpack.c.b16 %v3639, %v3635
    %v3888 = vpack.c.b16 %v3640, %v3636
    %v3889 = vpack.c.b16 %v3645, %v3641
    %v3890 = vpack.c.b16 %v3646, %v3642
    %v3891 = vpack.c.b16 %v3647, %v3643
    %v3892 = vpack.c.b16 %v3648, %v3644
    %v3893 = vpack.c.b16 %v3653, %v3649
    %v3894 = vpack.c.b16 %v3654, %v3650
    %v3895 = vpack.c.b16 %v3655, %v3651
    %v3896 = vpack.c.b16 %v3656, %v3652
    %v3897 = vpack.c.b16 %v3661, %v3657
    %v3898 = vpack.c.b16 %v3662, %v3658
    %v3899 = vpack.c.b16 %v3663, %v3659
    %v3900 = vpack.c.b16 %v3664, %v3660
    %v3901 = vpack.c.b16 %v3669, %v3665
    %v3902 = vpack.c.b16 %v3670, %v3666
    %v3903 = vpack.c.b16 %v3671, %v3667
    %v3904 = vpack.c.b16 %v3672, %v3668
    %v3905 = vpack.c.b16 %v3677, %v3673
    %v3906 = vpack.c.b16 %v3678, %v3674
    %v3907 = vpack.c.b16 %v3679, %v3675
    %v3908 = vpack.c.b16 %v3680, %v3676
    %v3909 = vpack.c.b16 %v3685, %v3681
    %v3910 = vpack.c.b16 %v3686, %v3682
    %v3911 = vpack.c.b16 %v3687, %v3683
    %v3912 = vpack.c.b16 %v3688, %v3684
    %v3913 = vpack.c.b16 %v3693, %v3689
    %v3914 = vpack.c.b16 %v3694, %v3690
    %v3915 = vpack.c.b16 %v3695, %v3691
    %v3916 = vpack.c.b16 %v3696, %v3692
    %v3917 = vpack.c.b16 %v3701, %v3697
    %v3918 = vpack.c.b16 %v3702, %v3698
    %v3919 = vpack.c.b16 %v3703, %v3699
    %v3920 = vpack.c.b16 %v3704, %v3700
    %v3921 = vpack.c.b16 %v3709, %v3705
    %v3922 = vpack.c.b16 %v3710, %v3706
    %v3923 = vpack.c.b16 %v3711, %v3707
    %v3924 = vpack.c.b16 %v3712, %v3708
    %v3925 = vpack.c.b16 %v3717, %v3713
    %v3926 = vpack.c.b16 %v3718, %v3714
    %v3927 = vpack.c.b16 %v3719, %v3715
    %v3928 = vpack.c.b16 %v3720, %v3716
    %v3929 = vpack.c.b16 %v3725, %v3721
    %v3930 = vpack.c.b16 %v3726, %v3722
    %v3931 = vpack.c.b16 %v3727, %v3723
    %v3932 = vpack.c.b16 %v3728, %v3724
    %v3933 = vpack.c.b16 %v3733, %v3729
    %v3934 = vpack.c.b16 %v3734, %v3730
    %v3935 = vpack.c.b16 %v3735, %v3731
    %v3936 = vpack.c.b16 %v3736, %v3732
    %v3937 = vpack.c.b16 %v3741, %v3737
    %v3938 = vpack.c.b16 %v3742, %v3738
    %v3939 = vpack.c.b16 %v3743, %v3739
    %v3940 = vpack.c.b16 %v3744, %v3740
    %v3941 = vpack.c.b16 %v3749, %v3745
    %v3942 = vpack.c.b16 %v3750, %v3746
    %v3943 = vpack.c.b16 %v3751, %v3747
    %v3944 = vpack.c.b16 %v3752, %v3748
    %4137 = vmatprep.subr.bf16.mxu0 %v3754
    %4138 = vmatpush1.bf16.msra.mxu0 %v3753
    %4139 = vmatprep.subr.bf16.mxu0 %v3758
    %4140 = vmatpush1.bf16.msra.mxu0 %v3757
    %4141 = vmatprep.subr.bf16.mxu0 %v3762
    %4142 = vmatpush1.bf16.msra.mxu0 %v3761
    %4143 = vmatprep.subr.bf16.mxu0 %v3766
    %4144 = vmatpush1.bf16.msra.mxu0 %v3765
    %4145 = vmatprep.subr.bf16.mxu0 %v3770
    %4146 = vmatpush1.bf16.msra.mxu0 %v3769
    %4147 = vmatprep.subr.bf16.mxu0 %v3774
    %4148 = vmatpush1.bf16.msra.mxu0 %v3773
    %4149 = vmatprep.subr.bf16.mxu0 %v3778
    %4150 = vmatpush1.bf16.msra.mxu0 %v3777
    %4151 = vmatprep.subr.bf16.mxu0 %v3782
    %4152 = vmatpush1.bf16.msra.mxu0 %v3781
    %4153 = vmatprep.subr.bf16.mxu0 %v3786
    %4154 = vmatpush1.bf16.msra.mxu0 %v3785
    %4155 = vmatprep.subr.bf16.mxu0 %v3790
    %4156 = vmatpush1.bf16.msra.mxu0 %v3789
    %4157 = vmatprep.subr.bf16.mxu0 %v3794
    %4158 = vmatpush1.bf16.msra.mxu0 %v3793
    %4159 = vmatprep.subr.bf16.mxu0 %v3798
    %4160 = vmatpush1.bf16.msra.mxu0 %v3797
    %4161 = vmatprep.subr.bf16.mxu0 %v3802
    %4162 = vmatpush1.bf16.msra.mxu0 %v3801
    %4163 = vmatprep.subr.bf16.mxu0 %v3806
    %4164 = vmatpush1.bf16.msra.mxu0 %v3805
    %4165 = vmatprep.subr.bf16.mxu0 %v3810
    %4166 = vmatpush1.bf16.msra.mxu0 %v3809
    %4167 = vmatprep.subr.bf16.mxu0 %v3814
    %4168 = vmatpush1.bf16.msra.mxu0 %v3813
    %4169 = vmatprep.mubr.bf16.mxu0 %v2974
    %4170 = vmatmul.mubr.bf16.gmra.mrb[0].mxu0 %v2973
    %v4171 = vpop.f32.mrb[0].mxu0
    %v4172 = vadd.f32 0.0, %v4171
    %v4173 = vpop.f32.mrb[0].mxu0
    %v4174 = vadd.f32 0.0, %v4173
    %v4175 = vpop.f32.mrb[0].mxu0
    %v4176 = vadd.f32 0.0, %v4175
    %v4177 = vpop.f32.mrb[0].mxu0
    %v4178 = vadd.f32 0.0, %v4177
    %4179 = vmatprep.mubr.bf16.mxu0 %v2980
    %4180 = vmatmul.mubr.bf16.gmra.mrb[0].mxu0 %v2979
    %v4181 = vpop.f32.mrb[0].mxu0
    %v4182 = vadd.f32 0.0, %v4181
    %v4183 = vpop.f32.mrb[0].mxu0
    %v4184 = vadd.f32 0.0, %v4183
    %v4185 = vpop.f32.mrb[0].mxu0
    %v4186 = vadd.f32 0.0, %v4185
    %v4187 = vpop.f32.mrb[0].mxu0
    %v4188 = vadd.f32 0.0, %v4187
    %4189 = vdwg.mxu0
    %4190 = vmatprep.subr.bf16.mxu0 %v3818
    %4191 = vmatpush1.bf16.msra.mxu0 %v3817
    %4192 = vmatprep.subr.bf16.mxu0 %v3822
    %4193 = vmatpush1.bf16.msra.mxu0 %v3821
    %4194 = vmatprep.subr.bf16.mxu0 %v3826
    %4195 = vmatpush1.bf16.msra.mxu0 %v3825
    %4196 = vmatprep.subr.bf16.mxu0 %v3830
    %4197 = vmatpush1.bf16.msra.mxu0 %v3829
    %4198 = vmatprep.subr.bf16.mxu0 %v3834
    %4199 = vmatpush1.bf16.msra.mxu0 %v3833
    %4200 = vmatprep.subr.bf16.mxu0 %v3838
    %4201 = vmatpush1.bf16.msra.mxu0 %v3837
    %4202 = vmatprep.subr.bf16.mxu0 %v3842
    %4203 = vmatpush1.bf16.msra.mxu0 %v3841
    %4204 = vmatprep.subr.bf16.mxu0 %v3846
    %4205 = vmatpush1.bf16.msra.mxu0 %v3845
    %4206 = vmatprep.subr.bf16.mxu0 %v3850
    %4207 = vmatpush1.bf16.msra.mxu0 %v3849
    %4208 = vmatprep.subr.bf16.mxu0 %v3854
    %4209 = vmatpush1.bf16.msra.mxu0 %v3853
    %4210 = vmatprep.subr.bf16.mxu0 %v3858
    %4211 = vmatpush1.bf16.msra.mxu0 %v3857
    %4212 = vmatprep.subr.bf16.mxu0 %v3862
    %4213 = vmatpush1.bf16.msra.mxu0 %v3861
    %4214 = vmatprep.subr.bf16.mxu0 %v3866
    %4215 = vmatpush1.bf16.msra.mxu0 %v3865
    %4216 = vmatprep.subr.bf16.mxu0 %v3870
    %4217 = vmatpush1.bf16.msra.mxu0 %v3869
    %4218 = vmatprep.subr.bf16.mxu0 %v3874
    %4219 = vmatpush1.bf16.msra.mxu0 %v3873
    %4220 = vmatprep.subr.bf16.mxu0 %v3878
    %4221 = vmatpush1.bf16.msra.mxu0 %v3877
    %4222 = vmatprep.mubr.bf16.mxu0 %v2976
    %4223 = vmatmul.mubr.bf16.gmra.mrb[0].mxu0 %v2975
    %v4224 = vpop.f32.mrb[0].mxu0
    %v4225 = vadd.f32 %v4172, %v4224
    %v4226 = vpop.f32.mrb[0].mxu0
    %v4227 = vadd.f32 %v4174, %v4226
    %v4228 = vpop.f32.mrb[0].mxu0
    %v4229 = vadd.f32 %v4176, %v4228
    %v4230 = vpop.f32.mrb[0].mxu0
    %v4231 = vadd.f32 %v4178, %v4230
    %4232 = vmatprep.mubr.bf16.mxu0 %v2982
    %4233 = vmatmul.mubr.bf16.gmra.mrb[0].mxu0 %v2981
    %v4234 = vpop.f32.mrb[0].mxu0
    %v4235 = vadd.f32 %v4182, %v4234
    %v4236 = vpop.f32.mrb[0].mxu0
    %v4237 = vadd.f32 %v4184, %v4236
    %v4238 = vpop.f32.mrb[0].mxu0
    %v4239 = vadd.f32 %v4186, %v4238
    %v4240 = vpop.f32.mrb[0].mxu0
    %v4241 = vadd.f32 %v4188, %v4240
    %4242 = vdwg.mxu0
    %4243 = vmatprep.subr.bf16.mxu0 %v3882
    %4244 = vmatpush1.bf16.msra.mxu0 %v3881
    %4245 = vmatprep.subr.bf16.mxu0 %v3886
    %4246 = vmatpush1.bf16.msra.mxu0 %v3885
    %4247 = vmatprep.subr.bf16.mxu0 %v3890
    %4248 = vmatpush1.bf16.msra.mxu0 %v3889
    %4249 = vmatprep.subr.bf16.mxu0 %v3894
    %4250 = vmatpush1.bf16.msra.mxu0 %v3893
    %4251 = vmatprep.subr.bf16.mxu0 %v3898
    %4252 = vmatpush1.bf16.msra.mxu0 %v3897
    %4253 = vmatprep.subr.bf16.mxu0 %v3902
    %4254 = vmatpush1.bf16.msra.mxu0 %v3901
    %4255 = vmatprep.subr.bf16.mxu0 %v3906
    %4256 = vmatpush1.bf16.msra.mxu0 %v3905
    %4257 = vmatprep.subr.bf16.mxu0 %v3910
    %4258 = vmatpush1.bf16.msra.mxu0 %v3909
    %4259 = vmatprep.subr.bf16.mxu0 %v3914
    %4260 = vmatpush1.bf16.msra.mxu0 %v3913
    %4261 = vmatprep.subr.bf16.mxu0 %v3918
    %4262 = vmatpush1.bf16.msra.mxu0 %v3917
    %4263 = vmatprep.subr.bf16.mxu0 %v3922
    %4264 = vmatpush1.bf16.msra.mxu0 %v3921
    %4265 = vmatprep.subr.bf16.mxu0 %v3926
    %4266 = vmatpush1.bf16.msra.mxu0 %v3925
    %4267 = vmatprep.subr.bf16.mxu0 %v3930
    %4268 = vmatpush1.bf16.msra.mxu0 %v3929
    %4269 = vmatprep.subr.bf16.mxu0 %v3934
    %4270 = vmatpush1.bf16.msra.mxu0 %v3933
    %4271 = vmatprep.subr.bf16.mxu0 %v3938
    %4272 = vmatpush1.bf16.msra.mxu0 %v3937
    %4273 = vmatprep.subr.bf16.mxu0 %v3942
    %4274 = vmatpush1.bf16.msra.mxu0 %v3941
    %4275 = vmatprep.mubr.bf16.mxu0 %v2978
    %4276 = vmatmul.mubr.bf16.gmra.mrb[0].mxu0 %v2977
    %v4277 = vpop.f32.mrb[0].mxu0
    %v4278 = vadd.f32 %v4225, %v4277
    %v4279 = vpop.f32.mrb[0].mxu0
    %v4280 = vadd.f32 %v4227, %v4279
    %v4281 = vpop.f32.mrb[0].mxu0
    %v4282 = vadd.f32 %v4229, %v4281
    %v4283 = vpop.f32.mrb[0].mxu0
    %v4284 = vadd.f32 %v4231, %v4283
    %4285 = vmatprep.mubr.bf16.mxu0 %v2984
    %4286 = vmatmul.mubr.bf16.gmra.mrb[0].mxu0 %v2983
    %v4287 = vpop.f32.mrb[0].mxu0
    %v4288 = vadd.f32 %v4235, %v4287
    %v4289 = vpop.f32.mrb[0].mxu0
    %v4290 = vadd.f32 %v4237, %v4289
    %v4291 = vpop.f32.mrb[0].mxu0
    %v4292 = vadd.f32 %v4239, %v4291
    %v4293 = vpop.f32.mrb[0].mxu0
    %v4294 = vadd.f32 %v4241, %v4293
    %4295 = vdwg.mxu0
    %4296 = vmatprep.subr.bf16.mxu0 %v3756
    %4297 = vmatpush1.bf16.msra.mxu0 %v3755
    %4298 = vmatprep.subr.bf16.mxu0 %v3760
    %4299 = vmatpush1.bf16.msra.mxu0 %v3759
    %4300 = vmatprep.subr.bf16.mxu0 %v3764
    %4301 = vmatpush1.bf16.msra.mxu0 %v3763
    %4302 = vmatprep.subr.bf16.mxu0 %v3768
    %4303 = vmatpush1.bf16.msra.mxu0 %v3767
    %4304 = vmatprep.subr.bf16.mxu0 %v3772
    %4305 = vmatpush1.bf16.msra.mxu0 %v3771
    %4306 = vmatprep.subr.bf16.mxu0 %v3776
    %4307 = vmatpush1.bf16.msra.mxu0 %v3775
    %4308 = vmatprep.subr.bf16.mxu0 %v3780
    %4309 = vmatpush1.bf16.msra.mxu0 %v3779
    %4310 = vmatprep.subr.bf16.mxu0 %v3784
    %4311 = vmatpush1.bf16.msra.mxu0 %v3783
    %4312 = vmatprep.subr.bf16.mxu0 %v3788
    %4313 = vmatpush1.bf16.msra.mxu0 %v3787
    %4314 = vmatprep.subr.bf16.mxu0 %v3792
    %4315 = vmatpush1.bf16.msra.mxu0 %v3791
    %4316 = vmatprep.subr.bf16.mxu0 %v3796
    %4317 = vmatpush1.bf16.msra.mxu0 %v3795
    %4318 = vmatprep.subr.bf16.mxu0 %v3800
    %4319 = vmatpush1.bf16.msra.mxu0 %v3799
    %4320 = vmatprep.subr.bf16.mxu0 %v3804
    %4321 = vmatpush1.bf16.msra.mxu0 %v3803
    %4322 = vmatprep.subr.bf16.mxu0 %v3808
    %4323 = vmatpush1.bf16.msra.mxu0 %v3807
    %4324 = vmatprep.subr.bf16.mxu0 %v3812
    %4325 = vmatpush1.bf16.msra.mxu0 %v3811
    %4326 = vmatprep.subr.bf16.mxu0 %v3816
    %4327 = vmatpush1.bf16.msra.mxu0 %v3815
    %4328 = vmatprep.mubr.bf16.mxu0 %v2974
    %4329 = vmatmul.mubr.bf16.gmra.mrb[0].mxu0 %v2973
    %v4330 = vpop.f32.mrb[0].mxu0
    %v4331 = vadd.f32 0.0, %v4330
    %v4332 = vpop.f32.mrb[0].mxu0
    %v4333 = vadd.f32 0.0, %v4332
    %v4334 = vpop.f32.mrb[0].mxu0
    %v4335 = vadd.f32 0.0, %v4334
    %v4336 = vpop.f32.mrb[0].mxu0
    %v4337 = vadd.f32 0.0, %v4336
    %4338 = vmatprep.mubr.bf16.mxu0 %v2980
    %4339 = vmatmul.mubr.bf16.gmra.mrb[0].mxu0 %v2979
    %v4340 = vpop.f32.mrb[0].mxu0
    %v4341 = vadd.f32 0.0, %v4340
    %v4342 = vpop.f32.mrb[0].mxu0
    %v4343 = vadd.f32 0.0, %v4342
    %v4344 = vpop.f32.mrb[0].mxu0
    %v4345 = vadd.f32 0.0, %v4344
    %v4346 = vpop.f32.mrb[0].mxu0
    %v4347 = vadd.f32 0.0, %v4346
    %4348 = vdwg.mxu0
    %4349 = vmatprep.subr.bf16.mxu0 %v3820
    %4350 = vmatpush1.bf16.msra.mxu0 %v3819
    %4351 = vmatprep.subr.bf16.mxu0 %v3824
    %4352 = vmatpush1.bf16.msra.mxu0 %v3823
    %4353 = vmatprep.subr.bf16.mxu0 %v3828
    %4354 = vmatpush1.bf16.msra.mxu0 %v3827
    %4355 = vmatprep.subr.bf16.mxu0 %v3832
    %4356 = vmatpush1.bf16.msra.mxu0 %v3831
    %4357 = vmatprep.subr.bf16.mxu0 %v3836
    %4358 = vmatpush1.bf16.msra.mxu0 %v3835
    %4359 = vmatprep.subr.bf16.mxu0 %v3840
    %4360 = vmatpush1.bf16.msra.mxu0 %v3839
    %4361 = vmatprep.subr.bf16.mxu0 %v3844
    %4362 = vmatpush1.bf16.msra.mxu0 %v3843
    %4363 = vmatprep.subr.bf16.mxu0 %v3848
    %4364 = vmatpush1.bf16.msra.mxu0 %v3847
    %4365 = vmatprep.subr.bf16.mxu0 %v3852
    %4366 = vmatpush1.bf16.msra.mxu0 %v3851
    %4367 = vmatprep.subr.bf16.mxu0 %v3856
    %4368 = vmatpush1.bf16.msra.mxu0 %v3855
    %4369 = vmatprep.subr.bf16.mxu0 %v3860
    %4370 = vmatpush1.bf16.msra.mxu0 %v3859
    %4371 = vmatprep.subr.bf16.mxu0 %v3864
    %4372 = vmatpush1.bf16.msra.mxu0 %v3863
    %4373 = vmatprep.subr.bf16.mxu0 %v3868
    %4374 = vmatpush1.bf16.msra.mxu0 %v3867
    %4375 = vmatprep.subr.bf16.mxu0 %v3872
    %4376 = vmatpush1.bf16.msra.mxu0 %v3871
    %4377 = vmatprep.subr.bf16.mxu0 %v3876
    %4378 = vmatpush1.bf16.msra.mxu0 %v3875
    %4379 = vmatprep.subr.bf16.mxu0 %v3880
    %4380 = vmatpush1.bf16.msra.mxu0 %v3879
    %4381 = vmatprep.mubr.bf16.mxu0 %v2976
    %4382 = vmatmul.mubr.bf16.gmra.mrb[0].mxu0 %v2975
    %v4383 = vpop.f32.mrb[0].mxu0
    %v4384 = vadd.f32 %v4331, %v4383
    %v4385 = vpop.f32.mrb[0].mxu0
    %v4386 = vadd.f32 %v4333, %v4385
    %v4387 = vpop.f32.mrb[0].mxu0
    %v4388 = vadd.f32 %v4335, %v4387
    %v4389 = vpop.f32.mrb[0].mxu0
    %v4390 = vadd.f32 %v4337, %v4389
    %4391 = vmatprep.mubr.bf16.mxu0 %v2982
    %4392 = vmatmul.mubr.bf16.gmra.mrb[0].mxu0 %v2981
    %v4393 = vpop.f32.mrb[0].mxu0
    %v4394 = vadd.f32 %v4341, %v4393
    %v4395 = vpop.f32.mrb[0].mxu0
    %v4396 = vadd.f32 %v4343, %v4395
    %v4397 = vpop.f32.mrb[0].mxu0
    %v4398 = vadd.f32 %v4345, %v4397
    %v4399 = vpop.f32.mrb[0].mxu0
    %v4400 = vadd.f32 %v4347, %v4399
    %4401 = vdwg.mxu0
    %4402 = vmatprep.subr.bf16.mxu0 %v3884
    %4403 = vmatpush1.bf16.msra.mxu0 %v3883
    %4404 = vmatprep.subr.bf16.mxu0 %v3888
    %4405 = vmatpush1.bf16.msra.mxu0 %v3887
    %4406 = vmatprep.subr.bf16.mxu0 %v3892
    %4407 = vmatpush1.bf16.msra.mxu0 %v3891
    %4408 = vmatprep.subr.bf16.mxu0 %v3896
    %4409 = vmatpush1.bf16.msra.mxu0 %v3895
    %4410 = vmatprep.subr.bf16.mxu0 %v3900
    %4411 = vmatpush1.bf16.msra.mxu0 %v3899
    %4412 = vmatprep.subr.bf16.mxu0 %v3904
    %4413 = vmatpush1.bf16.msra.mxu0 %v3903
    %4414 = vmatprep.subr.bf16.mxu0 %v3908
    %4415 = vmatpush1.bf16.msra.mxu0 %v3907
    %4416 = vmatprep.subr.bf16.mxu0 %v3912
    %4417 = vmatpush1.bf16.msra.mxu0 %v3911
    %4418 = vmatprep.subr.bf16.mxu0 %v3916
    %4419 = vmatpush1.bf16.msra.mxu0 %v3915
    %4420 = vmatprep.subr.bf16.mxu0 %v3920
    %4421 = vmatpush1.bf16.msra.mxu0 %v3919
    %4422 = vmatprep.subr.bf16.mxu0 %v3924
    %4423 = vmatpush1.bf16.msra.mxu0 %v3923
    %4424 = vmatprep.subr.bf16.mxu0 %v3928
    %4425 = vmatpush1.bf16.msra.mxu0 %v3927
    %4426 = vmatprep.subr.bf16.mxu0 %v3932
    %4427 = vmatpush1.bf16.msra.mxu0 %v3931
    %4428 = vmatprep.subr.bf16.mxu0 %v3936
    %4429 = vmatpush1.bf16.msra.mxu0 %v3935
    %4430 = vmatprep.subr.bf16.mxu0 %v3940
    %4431 = vmatpush1.bf16.msra.mxu0 %v3939
    %4432 = vmatprep.subr.bf16.mxu0 %v3944
    %4433 = vmatpush1.bf16.msra.mxu0 %v3943
    %4434 = vmatprep.mubr.bf16.mxu0 %v2978
    %4435 = vmatmul.mubr.bf16.gmra.mrb[0].mxu0 %v2977
    %v4436 = vpop.f32.mrb[0].mxu0
    %v4437 = vadd.f32 %v4384, %v4436
    %v4438 = vpop.f32.mrb[0].mxu0
    %v4439 = vadd.f32 %v4386, %v4438
    %v4440 = vpop.f32.mrb[0].mxu0
    %v4441 = vadd.f32 %v4388, %v4440
    %v4442 = vpop.f32.mrb[0].mxu0
    %v4443 = vadd.f32 %v4390, %v4442
    %4444 = vmatprep.mubr.bf16.mxu0 %v2984
    %4445 = vmatmul.mubr.bf16.gmra.mrb[0].mxu0 %v2983
    %v4446 = vpop.f32.mrb[0].mxu0
    %v4447 = vadd.f32 %v4394, %v4446
    %v4448 = vpop.f32.mrb[0].mxu0
    %v4449 = vadd.f32 %v4396, %v4448
    %v4450 = vpop.f32.mrb[0].mxu0
    %v4451 = vadd.f32 %v4398, %v4450
    %v4452 = vpop.f32.mrb[0].mxu0
    %v4453 = vadd.f32 %v4400, %v4452
    %4454 = vdwg.mxu0
    %v4455 = vadd.f32 %v4278, %v4282
    %v4456 = vadd.f32 %v4455, %v4288
    %v4457 = vsel %vm170, %v4292, 0.0
    %v4458 = vadd.f32 %v4456, %v4457
    %v4459 = vrot.slane %v4458, 4
    %v4460 = vadd.f32 %v4458, %v4459
    %v4461 = vrot.slane %v4460, 2
    %v4462 = vadd.f32 %v4460, %v4461
    %v4463 = vrot.slane %v4462, 1
    %v4464 = vadd.f32 %v4462, %v4463
    %v4465 = vadd.f32 %v4280, %v4284
    %v4466 = vadd.f32 %v4465, %v4290
    %v4467 = vsel %vm170, %v4294, 0.0
    %v4468 = vadd.f32 %v4466, %v4467
    %v4469 = vrot.slane %v4468, 4
    %v4470 = vadd.f32 %v4468, %v4469
    %v4471 = vrot.slane %v4470, 2
    %v4472 = vadd.f32 %v4470, %v4471
    %v4473 = vrot.slane %v4472, 1
    %v4474 = vadd.f32 %v4472, %v4473
    %v4475 = vadd.f32 %v4437, %v4441
    %v4476 = vadd.f32 %v4475, %v4447
    %v4477 = vsel %vm170, %v4451, 0.0
    %v4478 = vadd.f32 %v4476, %v4477
    %v4479 = vrot.slane %v4478, 4
    %v4480 = vadd.f32 %v4478, %v4479
    %v4481 = vrot.slane %v4480, 2
    %v4482 = vadd.f32 %v4480, %v4481
    %v4483 = vrot.slane %v4482, 1
    %v4484 = vadd.f32 %v4482, %v4483
    %v4485 = vsel %vm1150, %v4439, 0.0
    %v4486 = vsel %vm1150, %v4443, 0.0
    %v4487 = vadd.f32 %v4485, %v4486
    %v4488 = vsel %vm1150, %v4449, 0.0
    %v4489 = vadd.f32 %v4487, %v4488
    %vm4490 = vcmask 519168
    %v4491 = vsel %vm4490, %v4453, 0.0
    %v4492 = vadd.f32 %v4489, %v4491
    %v4493 = vrot.slane %v4492, 4
    %v4494 = vadd.f32 %v4492, %v4493
    %v4495 = vrot.slane %v4494, 2
    %v4496 = vadd.f32 %v4494, %v4495
    %v4497 = vrot.slane %v4496, 1
    %v4498 = vadd.f32 %v4496, %v4497
    %v4499 = vmul.f32 %v4278, %v4278
    %v4500 = vmul.f32 %v4280, %v4280
    %v4501 = vmul.f32 %v4437, %v4437
    %v4502 = vmul.f32 %v4439, %v4439
    %v4503 = vmul.f32 %v4282, %v4282
    %v4504 = vmul.f32 %v4284, %v4284
    %v4505 = vmul.f32 %v4441, %v4441
    %v4506 = vmul.f32 %v4443, %v4443
    %v4507 = vmul.f32 %v4288, %v4288
    %v4508 = vmul.f32 %v4290, %v4290
    %v4509 = vmul.f32 %v4447, %v4447
    %v4510 = vmul.f32 %v4449, %v4449
    %v4511 = vmul.f32 %v4292, %v4292
    %v4512 = vmul.f32 %v4294, %v4294
    %v4513 = vmul.f32 %v4451, %v4451
    %v4514 = vmul.f32 %v4453, %v4453
    %v4515 = vadd.f32 %v4499, %v4503
    %v4516 = vadd.f32 %v4515, %v4507
    %v4517 = vsel %vm170, %v4511, 0.0
    %v4518 = vadd.f32 %v4516, %v4517
    %v4519 = vrot.slane %v4518, 4
    %v4520 = vadd.f32 %v4518, %v4519
    %v4521 = vrot.slane %v4520, 2
    %v4522 = vadd.f32 %v4520, %v4521
    %v4523 = vrot.slane %v4522, 1
    %v4524 = vadd.f32 %v4522, %v4523
    %v4525 = vadd.f32 %v4500, %v4504
    %v4526 = vadd.f32 %v4525, %v4508
    %v4527 = vsel %vm170, %v4512, 0.0
    %v4528 = vadd.f32 %v4526, %v4527
    %v4529 = vrot.slane %v4528, 4
    %v4530 = vadd.f32 %v4528, %v4529
    %v4531 = vrot.slane %v4530, 2
    %v4532 = vadd.f32 %v4530, %v4531
    %v4533 = vrot.slane %v4532, 1
    %v4534 = vadd.f32 %v4532, %v4533
    %v4535 = vadd.f32 %v4501, %v4505
    %v4536 = vadd.f32 %v4535, %v4509
    %v4537 = vsel %vm170, %v4513, 0.0
    %v4538 = vadd.f32 %v4536, %v4537
    %v4539 = vrot.slane %v4538, 4
    %v4540 = vadd.f32 %v4538, %v4539
    %v4541 = vrot.slane %v4540, 2
    %v4542 = vadd.f32 %v4540, %v4541
    %v4543 = vrot.slane %v4542, 1
    %v4544 = vadd.f32 %v4542, %v4543
    %v4545 = vsel %vm1150, %v4502, 0.0
    %v4546 = vsel %vm1150, %v4506, 0.0
    %v4547 = vadd.f32 %v4545, %v4546
    %v4548 = vsel %vm1150, %v4510, 0.0
    %v4549 = vadd.f32 %v4547, %v4548
    %v4550 = vsel %vm4490, %v4514, 0.0
    %v4551 = vadd.f32 %v4549, %v4550
    %v4552 = vrot.slane %v4551, 4
    %v4553 = vadd.f32 %v4551, %v4552
    %v4554 = vrot.slane %v4553, 2
    %v4555 = vadd.f32 %v4553, %v4554
    %v4556 = vrot.slane %v4555, 1
    %v4557 = vadd.f32 %v4555, %v4556
    %v4558 = vld [vmem:[%s8] sm:$0xff]
    %v4559 = vld [vmem:[%s8 + $0x8] sm:$0xff]
    %v4560 = vld [vmem:[%s8 + $0x10] sm:$0xff]
    %v4561 = vld [vmem:[%s8 + $0x18] sm:$0xff]
    %v4562 = vld [vmem:[%s8 + $0x20] sm:$0xff]
    %v4563 = vld [vmem:[%s8 + $0x28] sm:$0xff]
    %v4564 = vld [vmem:[%s8 + $0x30] sm:$0xff]
    %v4565 = vld [vmem:[%s8 + $0x38] sm:$0xff]
    %v4566 = vld [vmem:[%s8 + $0x40] sm:$0xff]
    %v4567 = vld [vmem:[%s8 + $0x48] sm:$0xff]
    %v4568 = vld [vmem:[%s8 + $0x50] sm:$0xff]
    %v4569 = vld [vmem:[%s8 + $0x58] sm:$0xff]
    %v4570 = vld [vmem:[%s8 + $0x60] sm:$0xff]
    %v4571 = vld [vmem:[%s8 + $0x68] sm:$0xff]
    %v4572 = vld [vmem:[%s8 + $0x70] sm:$0xff]
    %v4573 = vld [vmem:[%s8 + $0x78] sm:$0xff]
    %v4574 = vld [vmem:[%s8 + $0x80] sm:$0xff]
    %v4575 = vld [vmem:[%s8 + $0x88] sm:$0xff]
    %v4576 = vld [vmem:[%s8 + $0x90] sm:$0xff]
    %v4577 = vld [vmem:[%s8 + $0x98] sm:$0xff]
    %v4578 = vld [vmem:[%s8 + $0xa0] sm:$0xff]
    %v4579 = vld [vmem:[%s8 + $0xa8] sm:$0xff]
    %v4580 = vld [vmem:[%s8 + $0xb0] sm:$0xff]
    %v4581 = vld [vmem:[%s8 + $0xb8] sm:$0xff]
    %v4582 = vld [vmem:[%s8 + $0xc0] sm:$0xff]
    %v4583 = vld [vmem:[%s8 + $0xc8] sm:$0xff]
    %v4584 = vld [vmem:[%s8 + $0xd0] sm:$0xff]
    %v4585 = vld [vmem:[%s8 + $0xd8] sm:$0xff]
    %v4586 = vld [vmem:[%s8 + $0xe0] sm:$0xff]
    %v4587 = vld [vmem:[%s8 + $0xe8] sm:$0xff]
    %v4588 = vld [vmem:[%s8 + $0xf0] sm:$0xff]
    %v4589 = vld [vmem:[%s8 + $0xf8] sm:$0xff]
    %v4590 = vld [vmem:[%s8 + $0x100] sm:$0xff]
    %v4591 = vld [vmem:[%s8 + $0x108] sm:$0xff]
    %v4592 = vld [vmem:[%s8 + $0x110] sm:$0xff]
    %v4593 = vld [vmem:[%s8 + $0x118] sm:$0xff]
    %v4594 = vld [vmem:[%s8 + $0x120] sm:$0xff]
    %v4595 = vld [vmem:[%s8 + $0x128] sm:$0xff]
    %v4596 = vld [vmem:[%s8 + $0x130] sm:$0xff]
    %v4597 = vld [vmem:[%s8 + $0x138] sm:$0xff]
    %v4598 = vld [vmem:[%s8 + $0x140] sm:$0xff]
    %v4599 = vld [vmem:[%s8 + $0x148] sm:$0xff]
    %v4600 = vld [vmem:[%s8 + $0x150] sm:$0xff]
    %v4601 = vld [vmem:[%s8 + $0x158] sm:$0xff]
    %v4602 = vld [vmem:[%s8 + $0x160] sm:$0xff]
    %v4603 = vld [vmem:[%s8 + $0x168] sm:$0xff]
    %v4604 = vld [vmem:[%s8 + $0x170] sm:$0xff]
    %v4605 = vld [vmem:[%s8 + $0x178] sm:$0xff]
    %v4606 = vld [vmem:[%s8 + $0x180] sm:$0xff]
    %v4607 = vld [vmem:[%s8 + $0x188] sm:$0xff]
    %v4608 = vld [vmem:[%s8 + $0x190] sm:$0xff]
    %v4609 = vld [vmem:[%s8 + $0x198] sm:$0xff]
    %v4610 = vld [vmem:[%s8 + $0x1a0] sm:$0xff]
    %v4611 = vld [vmem:[%s8 + $0x1a8] sm:$0xff]
    %v4612 = vld [vmem:[%s8 + $0x1b0] sm:$0xff]
    %v4613 = vld [vmem:[%s8 + $0x1b8] sm:$0xff]
    %v4615 = vsel %vm1150, %v4498, 0
    %4617 = vmatprep.subr.mxu0 0.0
    %4618 = vmatpush1.msra.mxu0 %v4558
    %4619 = vmatprep.subr.mxu0 0.0
    %4620 = vmatpush1.msra.mxu0 %v4559
    %4621 = vmatprep.subr.mxu0 0.0
    %4622 = vmatpush1.msra.mxu0 %v4560
    %4623 = vmatprep.subr.mxu0 0.0
    %4624 = vmatpush1.msra.mxu0 %v4561
    %4625 = vmatprep.subr.mxu0 0.0
    %4626 = vmatpush1.msra.mxu0 %v4562
    %4627 = vmatprep.subr.mxu0 0.0
    %4628 = vmatpush1.msra.mxu0 %v4563
    %4629 = vmatprep.subr.mxu0 0.0
    %4630 = vmatpush1.msra.mxu0 %v4564
    %4631 = vmatprep.subr.mxu0 0.0
    %4632 = vmatpush1.msra.mxu0 %v4565
    %4633 = vmatprep.subr.mxu0 0.0
    %4634 = vmatpush1.msra.mxu0 %v4566
    %4635 = vmatprep.subr.mxu0 0.0
    %4636 = vmatpush1.msra.mxu0 %v4567
    %4637 = vmatprep.subr.mxu0 0.0
    %4638 = vmatpush1.msra.mxu0 %v4568
    %4639 = vmatprep.subr.mxu0 0.0
    %4640 = vmatpush1.msra.mxu0 %v4569
    %4641 = vmatprep.subr.mxu0 0.0
    %4642 = vmatpush1.msra.mxu0 %v4570
    %4643 = vmatprep.subr.mxu0 0.0
    %4644 = vmatpush1.msra.mxu0 %v4571
    %4645 = vmatprep.subr.mxu0 0.0
    %4646 = vmatpush1.msra.mxu0 %v4572
    %4647 = vmatprep.subr.mxu0 0.0
    %4648 = vmatpush1.msra.mxu0 %v4573
    %4649 = vmatprep.subr.mxu0 0.0
    %4650 = vmatpush1.msra.mxu0 %v4574
    %4651 = vmatprep.subr.mxu0 0.0
    %4652 = vmatpush1.msra.mxu0 %v4575
    %4653 = vmatprep.subr.mxu0 0.0
    %4654 = vmatpush1.msra.mxu0 %v4576
    %4655 = vmatprep.subr.mxu0 0.0
    %4656 = vmatpush1.msra.mxu0 %v4577
    %4657 = vmatprep.subr.mxu0 0.0
    %4658 = vmatpush1.msra.mxu0 %v4578
    %4659 = vmatprep.subr.mxu0 0.0
    %4660 = vmatpush1.msra.mxu0 %v4579
    %4661 = vmatprep.subr.mxu0 0.0
    %4662 = vmatpush1.msra.mxu0 %v4580
    %4663 = vmatprep.subr.mxu0 0.0
    %4664 = vmatpush1.msra.mxu0 %v4581
    %4665 = vmatprep.subr.mxu0 0.0
    %4666 = vmatpush1.msra.mxu0 %v4582
    %4667 = vmatprep.subr.mxu0 0.0
    %4668 = vmatpush1.msra.mxu0 %v4583
    %4669 = vmatprep.subr.mxu0 0.0
    %4670 = vmatpush1.msra.mxu0 %v4584
    %4671 = vmatprep.subr.mxu0 0.0
    %4672 = vmatpush1.msra.mxu0 %v4585
    %4673 = vmatprep.subr.mxu0 0.0
    %4674 = vmatpush1.msra.mxu0 %v4586
    %4675 = vmatprep.subr.mxu0 0.0
    %4676 = vmatpush1.msra.mxu0 %v4587
    %4677 = vmatprep.subr.mxu0 0.0
    %4678 = vmatpush1.msra.mxu0 %v4588
    %4679 = vmatprep.subr.mxu0 0.0
    %4680 = vmatpush1.msra.mxu0 %v4589
    %4681 = vmatprep.mubr.f32.mxu0 %v4474
    %4682 = vmatmul.mubr.f32.gmra.mrb[0].mxu0 %v4464
    %v4683 = vpop.f32.mrb[0].mxu0
    %v4684 = vadd.f32 0.0, %v4683
    %v4685 = vpop.f32.mrb[0].mxu0
    %4686 = vdwg.mxu0
    %4687 = vmatprep.subr.mxu0 0.0
    %4688 = vmatpush1.msra.mxu0 %v4590
    %4689 = vmatprep.subr.mxu0 0.0
    %4690 = vmatpush1.msra.mxu0 %v4591
    %4691 = vmatprep.subr.mxu0 0.0
    %4692 = vmatpush1.msra.mxu0 %v4592
    %4693 = vmatprep.subr.mxu0 0.0
    %4694 = vmatpush1.msra.mxu0 %v4593
    %4695 = vmatprep.subr.mxu0 0.0
    %4696 = vmatpush1.msra.mxu0 %v4594
    %4697 = vmatprep.subr.mxu0 0.0
    %4698 = vmatpush1.msra.mxu0 %v4595
    %4699 = vmatprep.subr.mxu0 0.0
    %4700 = vmatpush1.msra.mxu0 %v4596
    %4701 = vmatprep.subr.mxu0 0.0
    %4702 = vmatpush1.msra.mxu0 %v4597
    %4703 = vmatprep.subr.mxu0 0.0
    %4704 = vmatpush1.msra.mxu0 %v4598
    %4705 = vmatprep.subr.mxu0 0.0
    %4706 = vmatpush1.msra.mxu0 %v4599
    %4707 = vmatprep.subr.mxu0 0.0
    %4708 = vmatpush1.msra.mxu0 %v4600
    %4709 = vmatprep.subr.mxu0 0.0
    %4710 = vmatpush1.msra.mxu0 %v4601
    %4711 = vmatprep.subr.mxu0 0.0
    %4712 = vmatpush1.msra.mxu0 %v4602
    %4713 = vmatprep.subr.mxu0 0.0
    %4714 = vmatpush1.msra.mxu0 %v4603
    %4715 = vmatprep.subr.mxu0 0.0
    %4716 = vmatpush1.msra.mxu0 %v4604
    %4717 = vmatprep.subr.mxu0 0.0
    %4718 = vmatpush1.msra.mxu0 %v4605
    %4719 = vmatprep.subr.mxu0 0.0
    %4720 = vmatpush1.msra.mxu0 %v4606
    %4721 = vmatprep.subr.mxu0 0.0
    %4722 = vmatpush1.msra.mxu0 %v4607
    %4723 = vmatprep.subr.mxu0 0.0
    %4724 = vmatpush1.msra.mxu0 %v4608
    %4725 = vmatprep.subr.mxu0 0.0
    %4726 = vmatpush1.msra.mxu0 %v4609
    %4727 = vmatprep.subr.mxu0 0.0
    %4728 = vmatpush1.msra.mxu0 %v4610
    %4729 = vmatprep.subr.mxu0 0.0
    %4730 = vmatpush1.msra.mxu0 %v4611
    %4731 = vmatprep.subr.mxu0 0.0
    %4732 = vmatpush1.msra.mxu0 %v4612
    %4733 = vmatprep.subr.mxu0 0.0
    %4734 = vmatpush1.msra.mxu0 %v4613
    %4735 = vmatprep.subr.mxu0 0.0
    %4736 = vmatpush1.msra.mxu0 0.0
    %4737 = vmatprep.subr.mxu0 0.0
    %4738 = vmatpush1.msra.mxu0 0.0
    %4739 = vmatprep.subr.mxu0 0.0
    %4740 = vmatpush1.msra.mxu0 0.0
    %4741 = vmatprep.subr.mxu0 0.0
    %4742 = vmatpush1.msra.mxu0 0.0
    %4743 = vmatprep.subr.mxu0 0.0
    %4744 = vmatpush1.msra.mxu0 0.0
    %4745 = vmatprep.subr.mxu0 0.0
    %4746 = vmatpush1.msra.mxu0 0.0
    %4747 = vmatprep.subr.mxu0 0.0
    %4748 = vmatpush1.msra.mxu0 0.0
    %4749 = vmatprep.subr.mxu0 0.0
    %4750 = vmatpush1.msra.mxu0 0.0
    %4751 = vmatprep.mubr.f32.mxu0 %v4615
    %4752 = vmatmul.mubr.f32.gmra.mrb[0].mxu0 %v4484
    %v4753 = vpop.f32.mrb[0].mxu0
    %v4754 = vadd.f32 %v4684, %v4753
    %v4755 = vpop.f32.mrb[0].mxu0
    %4756 = vdwg.mxu0
    %v4757 = vmul.f32 %v4754, 0.0025510204
    %v4759 = vsel %vm1150, %v4557, 0
    %4761 = vmatprep.subr.mxu0 0.0
    %4762 = vmatpush1.msra.mxu0 %v4558
    %4763 = vmatprep.subr.mxu0 0.0
    %4764 = vmatpush1.msra.mxu0 %v4559
    %4765 = vmatprep.subr.mxu0 0.0
    %4766 = vmatpush1.msra.mxu0 %v4560
    %4767 = vmatprep.subr.mxu0 0.0
    %4768 = vmatpush1.msra.mxu0 %v4561
    %4769 = vmatprep.subr.mxu0 0.0
    %4770 = vmatpush1.msra.mxu0 %v4562
    %4771 = vmatprep.subr.mxu0 0.0
    %4772 = vmatpush1.msra.mxu0 %v4563
    %4773 = vmatprep.subr.mxu0 0.0
    %4774 = vmatpush1.msra.mxu0 %v4564
    %4775 = vmatprep.subr.mxu0 0.0
    %4776 = vmatpush1.msra.mxu0 %v4565
    %4777 = vmatprep.subr.mxu0 0.0
    %4778 = vmatpush1.msra.mxu0 %v4566
    %4779 = vmatprep.subr.mxu0 0.0
    %4780 = vmatpush1.msra.mxu0 %v4567
    %4781 = vmatprep.subr.mxu0 0.0
    %4782 = vmatpush1.msra.mxu0 %v4568
    %4783 = vmatprep.subr.mxu0 0.0
    %4784 = vmatpush1.msra.mxu0 %v4569
    %4785 = vmatprep.subr.mxu0 0.0
    %4786 = vmatpush1.msra.mxu0 %v4570
    %4787 = vmatprep.subr.mxu0 0.0
    %4788 = vmatpush1.msra.mxu0 %v4571
    %4789 = vmatprep.subr.mxu0 0.0
    %4790 = vmatpush1.msra.mxu0 %v4572
    %4791 = vmatprep.subr.mxu0 0.0
    %4792 = vmatpush1.msra.mxu0 %v4573
    %4793 = vmatprep.subr.mxu0 0.0
    %4794 = vmatpush1.msra.mxu0 %v4574
    %4795 = vmatprep.subr.mxu0 0.0
    %4796 = vmatpush1.msra.mxu0 %v4575
    %4797 = vmatprep.subr.mxu0 0.0
    %4798 = vmatpush1.msra.mxu0 %v4576
    %4799 = vmatprep.subr.mxu0 0.0
    %4800 = vmatpush1.msra.mxu0 %v4577
    %4801 = vmatprep.subr.mxu0 0.0
    %4802 = vmatpush1.msra.mxu0 %v4578
    %4803 = vmatprep.subr.mxu0 0.0
    %4804 = vmatpush1.msra.mxu0 %v4579
    %4805 = vmatprep.subr.mxu0 0.0
    %4806 = vmatpush1.msra.mxu0 %v4580
    %4807 = vmatprep.subr.mxu0 0.0
    %4808 = vmatpush1.msra.mxu0 %v4581
    %4809 = vmatprep.subr.mxu0 0.0
    %4810 = vmatpush1.msra.mxu0 %v4582
    %4811 = vmatprep.subr.mxu0 0.0
    %4812 = vmatpush1.msra.mxu0 %v4583
    %4813 = vmatprep.subr.mxu0 0.0
    %4814 = vmatpush1.msra.mxu0 %v4584
    %4815 = vmatprep.subr.mxu0 0.0
    %4816 = vmatpush1.msra.mxu0 %v4585
    %4817 = vmatprep.subr.mxu0 0.0
    %4818 = vmatpush1.msra.mxu0 %v4586
    %4819 = vmatprep.subr.mxu0 0.0
    %4820 = vmatpush1.msra.mxu0 %v4587
    %4821 = vmatprep.subr.mxu0 0.0
    %4822 = vmatpush1.msra.mxu0 %v4588
    %4823 = vmatprep.subr.mxu0 0.0
    %4824 = vmatpush1.msra.mxu0 %v4589
    %4825 = vmatprep.mubr.f32.mxu0 %v4534
    %4826 = vmatmul.mubr.f32.gmra.mrb[0].mxu0 %v4524
    %v4827 = vpop.f32.mrb[0].mxu0
    %v4828 = vadd.f32 0.0, %v4827
    %v4829 = vpop.f32.mrb[0].mxu0
    %4830 = vdwg.mxu0
    %4831 = vmatprep.subr.mxu0 0.0
    %4832 = vmatpush1.msra.mxu0 %v4590
    %4833 = vmatprep.subr.mxu0 0.0
    %4834 = vmatpush1.msra.mxu0 %v4591
    %4835 = vmatprep.subr.mxu0 0.0
    %4836 = vmatpush1.msra.mxu0 %v4592
    %4837 = vmatprep.subr.mxu0 0.0
    %4838 = vmatpush1.msra.mxu0 %v4593
    %4839 = vmatprep.subr.mxu0 0.0
    %4840 = vmatpush1.msra.mxu0 %v4594
    %4841 = vmatprep.subr.mxu0 0.0
    %4842 = vmatpush1.msra.mxu0 %v4595
    %4843 = vmatprep.subr.mxu0 0.0
    %4844 = vmatpush1.msra.mxu0 %v4596
    %4845 = vmatprep.subr.mxu0 0.0
    %4846 = vmatpush1.msra.mxu0 %v4597
    %4847 = vmatprep.subr.mxu0 0.0
    %4848 = vmatpush1.msra.mxu0 %v4598
    %4849 = vmatprep.subr.mxu0 0.0
    %4850 = vmatpush1.msra.mxu0 %v4599
    %4851 = vmatprep.subr.mxu0 0.0
    %4852 = vmatpush1.msra.mxu0 %v4600
    %4853 = vmatprep.subr.mxu0 0.0
    %4854 = vmatpush1.msra.mxu0 %v4601
    %4855 = vmatprep.subr.mxu0 0.0
    %4856 = vmatpush1.msra.mxu0 %v4602
    %4857 = vmatprep.subr.mxu0 0.0
    %4858 = vmatpush1.msra.mxu0 %v4603
    %4859 = vmatprep.subr.mxu0 0.0
    %4860 = vmatpush1.msra.mxu0 %v4604
    %4861 = vmatprep.subr.mxu0 0.0
    %4862 = vmatpush1.msra.mxu0 %v4605
    %4863 = vmatprep.subr.mxu0 0.0
    %4864 = vmatpush1.msra.mxu0 %v4606
    %4865 = vmatprep.subr.mxu0 0.0
    %4866 = vmatpush1.msra.mxu0 %v4607
    %4867 = vmatprep.subr.mxu0 0.0
    %4868 = vmatpush1.msra.mxu0 %v4608
    %4869 = vmatprep.subr.mxu0 0.0
    %4870 = vmatpush1.msra.mxu0 %v4609
    %4871 = vmatprep.subr.mxu0 0.0
    %4872 = vmatpush1.msra.mxu0 %v4610
    %4873 = vmatprep.subr.mxu0 0.0
    %4874 = vmatpush1.msra.mxu0 %v4611
    %4875 = vmatprep.subr.mxu0 0.0
    %4876 = vmatpush1.msra.mxu0 %v4612
    %4877 = vmatprep.subr.mxu0 0.0
    %4878 = vmatpush1.msra.mxu0 %v4613
    %4879 = vmatprep.subr.mxu0 0.0
    %4880 = vmatpush1.msra.mxu0 0.0
    %4881 = vmatprep.subr.mxu0 0.0
    %4882 = vmatpush1.msra.mxu0 0.0
    %4883 = vmatprep.subr.mxu0 0.0
    %4884 = vmatpush1.msra.mxu0 0.0
    %4885 = vmatprep.subr.mxu0 0.0
    %4886 = vmatpush1.msra.mxu0 0.0
    %4887 = vmatprep.subr.mxu0 0.0
    %4888 = vmatpush1.msra.mxu0 0.0
    %4889 = vmatprep.subr.mxu0 0.0
    %4890 = vmatpush1.msra.mxu0 0.0
    %4891 = vmatprep.subr.mxu0 0.0
    %4892 = vmatpush1.msra.mxu0 0.0
    %4893 = vmatprep.subr.mxu0 0.0
    %4894 = vmatpush1.msra.mxu0 0.0
    %4895 = vmatprep.mubr.f32.mxu0 %v4759
    %4896 = vmatmul.mubr.f32.gmra.mrb[0].mxu0 %v4544
    %v4897 = vpop.f32.mrb[0].mxu0
    %v4898 = vadd.f32 %v4828, %v4897
    %v4899 = vpop.f32.mrb[0].mxu0
    %4900 = vdwg.mxu0
    %v4901 = vmul.f32 %v4898, 0.0025510204
    %v4902 = vmul.f32 %v4757, %v4757
    %v4903 = vsub.f32 %v4901, %v4902
    %v4904 = vld [vmem:[%s10] sm:$0x1]
    %v4905 = vadd.f32 %v4903, 1e-05
    %v4906 = vrsqrt.pop %v4905
    %v4907 = vmul.f32 %v4904, %v4906
    %v4908 = vld [vmem:[%s10 + $0x1] sm:$0x1]
    %v4909 = vmul.f32 %v4757, %v4907
    %v4910 = vsub.f32 %v4908, %v4909
    %v4911 = vld [vmem:[%s9] sm:$0xff]
    %v4912 = vld [vmem:[%s9 + $0x8] sm:$0xff]
    %v4913 = vld [vmem:[%s9 + $0x10] sm:$0xff]
    %v4914 = vld [vmem:[%s9 + $0x18] sm:$0xff]
    %v4915 = vld [vmem:[%s9 + $0x20] sm:$0xff]
    %v4916 = vld [vmem:[%s9 + $0x28] sm:$0xff]
    %v4917 = vld [vmem:[%s9 + $0x30] sm:$0xff]
    %v4918 = vld [vmem:[%s9 + $0x38] sm:$0xff]
    %v4919 = vld [vmem:[%s9 + $0x40] sm:$0xff]
    %v4920 = vld [vmem:[%s9 + $0x48] sm:$0xff]
    %v4921 = vld [vmem:[%s9 + $0x50] sm:$0xff]
    %v4922 = vld [vmem:[%s9 + $0x58] sm:$0xff]
    %v4923 = vld [vmem:[%s9 + $0x60] sm:$0xff]
    %v4924 = vld [vmem:[%s9 + $0x68] sm:$0xff]
    %v4925 = vld [vmem:[%s9 + $0x70] sm:$0xff]
    %v4926 = vld [vmem:[%s9 + $0x78] sm:$0xff]
    %vm4927 = vcmask 261120
    %v4929 = vsel %vm4927, %v4907, 0
    %4931 = vmatprep.subr.mxu0 %v4912
    %4932 = vmatpush1.msra.mxu0 %v4911
    %4933 = vmatprep.subr.mxu0 %v4916
    %4934 = vmatpush1.msra.mxu0 %v4915
    %4935 = vmatprep.subr.mxu0 %v4920
    %4936 = vmatpush1.msra.mxu0 %v4919
    %4937 = vmatprep.subr.mxu0 %v4924
    %4938 = vmatpush1.msra.mxu0 %v4923
    %4939 = vmatprep.subr.mxu0 0.0
    %4940 = vmatpush1.msra.mxu0 0.0
    %4941 = vmatprep.subr.mxu0 0.0
    %4942 = vmatpush1.msra.mxu0 0.0
    %4943 = vmatprep.subr.mxu0 0.0
    %4944 = vmatpush1.msra.mxu0 0.0
    %4945 = vmatprep.subr.mxu0 0.0
    %4946 = vmatpush1.msra.mxu0 0.0
    %4947 = vmatprep.subr.mxu0 0.0
    %4948 = vmatpush1.msra.mxu0 0.0
    %4949 = vmatprep.subr.mxu0 0.0
    %4950 = vmatpush1.msra.mxu0 0.0
    %4951 = vmatprep.subr.mxu0 0.0
    %4952 = vmatpush1.msra.mxu0 0.0
    %4953 = vmatprep.subr.mxu0 0.0
    %4954 = vmatpush1.msra.mxu0 0.0
    %4955 = vmatprep.subr.mxu0 0.0
    %4956 = vmatpush1.msra.mxu0 0.0
    %4957 = vmatprep.subr.mxu0 0.0
    %4958 = vmatpush1.msra.mxu0 0.0
    %4959 = vmatprep.subr.mxu0 0.0
    %4960 = vmatpush1.msra.mxu0 0.0
    %4961 = vmatprep.subr.mxu0 0.0
    %4962 = vmatpush1.msra.mxu0 0.0
    %4963 = vmatprep.subr.mxu0 0.0
    %4964 = vmatpush1.msra.mxu0 0.0
    %4965 = vmatprep.subr.mxu0 0.0
    %4966 = vmatpush1.msra.mxu0 0.0
    %4967 = vmatprep.subr.mxu0 0.0
    %4968 = vmatpush1.msra.mxu0 0.0
    %4969 = vmatprep.subr.mxu0 0.0
    %4970 = vmatpush1.msra.mxu0 0.0
    %4971 = vmatprep.subr.mxu0 0.0
    %4972 = vmatpush1.msra.mxu0 0.0
    %4973 = vmatprep.subr.mxu0 0.0
    %4974 = vmatpush1.msra.mxu0 0.0
    %4975 = vmatprep.subr.mxu0 0.0
    %4976 = vmatpush1.msra.mxu0 0.0
    %4977 = vmatprep.subr.mxu0 0.0
    %4978 = vmatpush1.msra.mxu0 0.0
    %4979 = vmatprep.subr.mxu0 0.0
    %4980 = vmatpush1.msra.mxu0 0.0
    %4981 = vmatprep.subr.mxu0 0.0
    %4982 = vmatpush1.msra.mxu0 0.0
    %4983 = vmatprep.subr.mxu0 0.0
    %4984 = vmatpush1.msra.mxu0 0.0
    %4985 = vmatprep.subr.mxu0 0.0
    %4986 = vmatpush1.msra.mxu0 0.0
    %4987 = vmatprep.subr.mxu0 0.0
    %4988 = vmatpush1.msra.mxu0 0.0
    %4989 = vmatprep.subr.mxu0 0.0
    %4990 = vmatpush1.msra.mxu0 0.0
    %4991 = vmatprep.subr.mxu0 0.0
    %4992 = vmatpush1.msra.mxu0 0.0
    %4993 = vmatprep.subr.mxu0 0.0
    %4994 = vmatpush1.msra.mxu0 0.0
    %4995 = vmatprep.mubr.f32.mxu0 0.0
    %4996 = vmatmul.mubr.f32.gmra.mrb[0].mxu0 %v4929
    %v4997 = vpop.f32.mrb[0].mxu0
    %v4998 = vadd.f32 0.0, %v4997
    %v4999 = vpop.f32.mrb[0].mxu0
    %v5000 = vadd.f32 0.0, %v4999
    %5001 = vdwg.mxu0
    %5002 = vmatprep.subr.mxu0 %v4914
    %5003 = vmatpush1.msra.mxu0 %v4913
    %5004 = vmatprep.subr.mxu0 %v4918
    %5005 = vmatpush1.msra.mxu0 %v4917
    %5006 = vmatprep.subr.mxu0 %v4922
    %5007 = vmatpush1.msra.mxu0 %v4921
    %5008 = vmatprep.subr.mxu0 %v4926
    %5009 = vmatpush1.msra.mxu0 %v4925
    %5010 = vmatprep.subr.mxu0 0.0
    %5011 = vmatpush1.msra.mxu0 0.0
    %5012 = vmatprep.subr.mxu0 0.0
    %5013 = vmatpush1.msra.mxu0 0.0
    %5014 = vmatprep.subr.mxu0 0.0
    %5015 = vmatpush1.msra.mxu0 0.0
    %5016 = vmatprep.subr.mxu0 0.0
    %5017 = vmatpush1.msra.mxu0 0.0
    %5018 = vmatprep.subr.mxu0 0.0
    %5019 = vmatpush1.msra.mxu0 0.0
    %5020 = vmatprep.subr.mxu0 0.0
    %5021 = vmatpush1.msra.mxu0 0.0
    %5022 = vmatprep.subr.mxu0 0.0
    %5023 = vmatpush1.msra.mxu0 0.0
    %5024 = vmatprep.subr.mxu0 0.0
    %5025 = vmatpush1.msra.mxu0 0.0
    %5026 = vmatprep.subr.mxu0 0.0
    %5027 = vmatpush1.msra.mxu0 0.0
    %5028 = vmatprep.subr.mxu0 0.0
    %5029 = vmatpush1.msra.mxu0 0.0
    %5030 = vmatprep.subr.mxu0 0.0
    %5031 = vmatpush1.msra.mxu0 0.0
    %5032 = vmatprep.subr.mxu0 0.0
    %5033 = vmatpush1.msra.mxu0 0.0
    %5034 = vmatprep.subr.mxu0 0.0
    %5035 = vmatpush1.msra.mxu0 0.0
    %5036 = vmatprep.subr.mxu0 0.0
    %5037 = vmatpush1.msra.mxu0 0.0
    %5038 = vmatprep.subr.mxu0 0.0
    %5039 = vmatpush1.msra.mxu0 0.0
    %5040 = vmatprep.subr.mxu0 0.0
    %5041 = vmatpush1.msra.mxu0 0.0
    %5042 = vmatprep.subr.mxu0 0.0
    %5043 = vmatpush1.msra.mxu0 0.0
    %5044 = vmatprep.subr.mxu0 0.0
    %5045 = vmatpush1.msra.mxu0 0.0
    %5046 = vmatprep.subr.mxu0 0.0
    %5047 = vmatpush1.msra.mxu0 0.0
    %5048 = vmatprep.subr.mxu0 0.0
    %5049 = vmatpush1.msra.mxu0 0.0
    %5050 = vmatprep.subr.mxu0 0.0
    %5051 = vmatpush1.msra.mxu0 0.0
    %5052 = vmatprep.subr.mxu0 0.0
    %5053 = vmatpush1.msra.mxu0 0.0
    %5054 = vmatprep.subr.mxu0 0.0
    %5055 = vmatpush1.msra.mxu0 0.0
    %5056 = vmatprep.subr.mxu0 0.0
    %5057 = vmatpush1.msra.mxu0 0.0
    %5058 = vmatprep.subr.mxu0 0.0
    %5059 = vmatpush1.msra.mxu0 0.0
    %5060 = vmatprep.subr.mxu0 0.0
    %5061 = vmatpush1.msra.mxu0 0.0
    %5062 = vmatprep.subr.mxu0 0.0
    %5063 = vmatpush1.msra.mxu0 0.0
    %5064 = vmatprep.subr.mxu0 0.0
    %5065 = vmatpush1.msra.mxu0 0.0
    %5066 = vmatprep.mubr.f32.mxu0 0.0
    %5067 = vmatmul.mubr.f32.gmra.mrb[0].mxu0 %v4929
    %v5068 = vpop.f32.mrb[0].mxu0
    %v5069 = vadd.f32 0.0, %v5068
    %v5070 = vpop.f32.mrb[0].mxu0
    %v5071 = vadd.f32 0.0, %v5070
    %5072 = vdwg.mxu0
    %v5074 = vsel %vm4927, %v4910, 0
    %5076 = vmatprep.subr.mxu0 %v4912
    %5077 = vmatpush1.msra.mxu0 %v4911
    %5078 = vmatprep.subr.mxu0 %v4916
    %5079 = vmatpush1.msra.mxu0 %v4915
    %5080 = vmatprep.subr.mxu0 %v4920
    %5081 = vmatpush1.msra.mxu0 %v4919
    %5082 = vmatprep.subr.mxu0 %v4924
    %5083 = vmatpush1.msra.mxu0 %v4923
    %5084 = vmatprep.subr.mxu0 0.0
    %5085 = vmatpush1.msra.mxu0 0.0
    %5086 = vmatprep.subr.mxu0 0.0
    %5087 = vmatpush1.msra.mxu0 0.0
    %5088 = vmatprep.subr.mxu0 0.0
    %5089 = vmatpush1.msra.mxu0 0.0
    %5090 = vmatprep.subr.mxu0 0.0
    %5091 = vmatpush1.msra.mxu0 0.0
    %5092 = vmatprep.subr.mxu0 0.0
    %5093 = vmatpush1.msra.mxu0 0.0
    %5094 = vmatprep.subr.mxu0 0.0
    %5095 = vmatpush1.msra.mxu0 0.0
    %5096 = vmatprep.subr.mxu0 0.0
    %5097 = vmatpush1.msra.mxu0 0.0
    %5098 = vmatprep.subr.mxu0 0.0
    %5099 = vmatpush1.msra.mxu0 0.0
    %5100 = vmatprep.subr.mxu0 0.0
    %5101 = vmatpush1.msra.mxu0 0.0
    %5102 = vmatprep.subr.mxu0 0.0
    %5103 = vmatpush1.msra.mxu0 0.0
    %5104 = vmatprep.subr.mxu0 0.0
    %5105 = vmatpush1.msra.mxu0 0.0
    %5106 = vmatprep.subr.mxu0 0.0
    %5107 = vmatpush1.msra.mxu0 0.0
    %5108 = vmatprep.subr.mxu0 0.0
    %5109 = vmatpush1.msra.mxu0 0.0
    %5110 = vmatprep.subr.mxu0 0.0
    %5111 = vmatpush1.msra.mxu0 0.0
    %5112 = vmatprep.subr.mxu0 0.0
    %5113 = vmatpush1.msra.mxu0 0.0
    %5114 = vmatprep.subr.mxu0 0.0
    %5115 = vmatpush1.msra.mxu0 0.0
    %5116 = vmatprep.subr.mxu0 0.0
    %5117 = vmatpush1.msra.mxu0 0.0
    %5118 = vmatprep.subr.mxu0 0.0
    %5119 = vmatpush1.msra.mxu0 0.0
    %5120 = vmatprep.subr.mxu0 0.0
    %5121 = vmatpush1.msra.mxu0 0.0
    %5122 = vmatprep.subr.mxu0 0.0
    %5123 = vmatpush1.msra.mxu0 0.0
    %5124 = vmatprep.subr.mxu0 0.0
    %5125 = vmatpush1.msra.mxu0 0.0
    %5126 = vmatprep.subr.mxu0 0.0
    %5127 = vmatpush1.msra.mxu0 0.0
    %5128 = vmatprep.subr.mxu0 0.0
    %5129 = vmatpush1.msra.mxu0 0.0
    %5130 = vmatprep.subr.mxu0 0.0
    %5131 = vmatpush1.msra.mxu0 0.0
    %5132 = vmatprep.subr.mxu0 0.0
    %5133 = vmatpush1.msra.mxu0 0.0
    %5134 = vmatprep.subr.mxu0 0.0
    %5135 = vmatpush1.msra.mxu0 0.0
    %5136 = vmatprep.subr.mxu0 0.0
    %5137 = vmatpush1.msra.mxu0 0.0
    %5138 = vmatprep.subr.mxu0 0.0
    %5139 = vmatpush1.msra.mxu0 0.0
    %5140 = vmatprep.mubr.f32.mxu0 0.0
    %5141 = vmatmul.mubr.f32.gmra.mrb[0].mxu0 %v5074
    %v5142 = vpop.f32.mrb[0].mxu0
    %v5143 = vadd.f32 0.0, %v5142
    %v5144 = vpop.f32.mrb[0].mxu0
    %v5145 = vadd.f32 0.0, %v5144
    %5146 = vdwg.mxu0
    %5147 = vmatprep.subr.mxu0 %v4914
    %5148 = vmatpush1.msra.mxu0 %v4913
    %5149 = vmatprep.subr.mxu0 %v4918
    %5150 = vmatpush1.msra.mxu0 %v4917
    %5151 = vmatprep.subr.mxu0 %v4922
    %5152 = vmatpush1.msra.mxu0 %v4921
    %5153 = vmatprep.subr.mxu0 %v4926
    %5154 = vmatpush1.msra.mxu0 %v4925
    %5155 = vmatprep.subr.mxu0 0.0
    %5156 = vmatpush1.msra.mxu0 0.0
    %5157 = vmatprep.subr.mxu0 0.0
    %5158 = vmatpush1.msra.mxu0 0.0
    %5159 = vmatprep.subr.mxu0 0.0
    %5160 = vmatpush1.msra.mxu0 0.0
    %5161 = vmatprep.subr.mxu0 0.0
    %5162 = vmatpush1.msra.mxu0 0.0
    %5163 = vmatprep.subr.mxu0 0.0
    %5164 = vmatpush1.msra.mxu0 0.0
    %5165 = vmatprep.subr.mxu0 0.0
    %5166 = vmatpush1.msra.mxu0 0.0
    %5167 = vmatprep.subr.mxu0 0.0
    %5168 = vmatpush1.msra.mxu0 0.0
    %5169 = vmatprep.subr.mxu0 0.0
    %5170 = vmatpush1.msra.mxu0 0.0
    %5171 = vmatprep.subr.mxu0 0.0
    %5172 = vmatpush1.msra.mxu0 0.0
    %5173 = vmatprep.subr.mxu0 0.0
    %5174 = vmatpush1.msra.mxu0 0.0
    %5175 = vmatprep.subr.mxu0 0.0
    %5176 = vmatpush1.msra.mxu0 0.0
    %5177 = vmatprep.subr.mxu0 0.0
    %5178 = vmatpush1.msra.mxu0 0.0
    %5179 = vmatprep.subr.mxu0 0.0
    %5180 = vmatpush1.msra.mxu0 0.0
    %5181 = vmatprep.subr.mxu0 0.0
    %5182 = vmatpush1.msra.mxu0 0.0
    %5183 = vmatprep.subr.mxu0 0.0
    %5184 = vmatpush1.msra.mxu0 0.0
    %5185 = vmatprep.subr.mxu0 0.0
    %5186 = vmatpush1.msra.mxu0 0.0
    %5187 = vmatprep.subr.mxu0 0.0
    %5188 = vmatpush1.msra.mxu0 0.0
    %5189 = vmatprep.subr.mxu0 0.0
    %5190 = vmatpush1.msra.mxu0 0.0
    %5191 = vmatprep.subr.mxu0 0.0
    %5192 = vmatpush1.msra.mxu0 0.0
    %5193 = vmatprep.subr.mxu0 0.0
    %5194 = vmatpush1.msra.mxu0 0.0
    %5195 = vmatprep.subr.mxu0 0.0
    %5196 = vmatpush1.msra.mxu0 0.0
    %5197 = vmatprep.subr.mxu0 0.0
    %5198 = vmatpush1.msra.mxu0 0.0
    %5199 = vmatprep.subr.mxu0 0.0
    %5200 = vmatpush1.msra.mxu0 0.0
    %5201 = vmatprep.subr.mxu0 0.0
    %5202 = vmatpush1.msra.mxu0 0.0
    %5203 = vmatprep.subr.mxu0 0.0
    %5204 = vmatpush1.msra.mxu0 0.0
    %5205 = vmatprep.subr.mxu0 0.0
    %5206 = vmatpush1.msra.mxu0 0.0
    %5207 = vmatprep.subr.mxu0 0.0
    %5208 = vmatpush1.msra.mxu0 0.0
    %5209 = vmatprep.subr.mxu0 0.0
    %5210 = vmatpush1.msra.mxu0 0.0
    %5211 = vmatprep.mubr.f32.mxu0 0.0
    %5212 = vmatmul.mubr.f32.gmra.mrb[0].mxu0 %v5074
    %v5213 = vpop.f32.mrb[0].mxu0
    %v5214 = vadd.f32 0.0, %v5213
    %v5215 = vpop.f32.mrb[0].mxu0
    %v5216 = vadd.f32 0.0, %v5215
    %5217 = vdwg.mxu0
    %v5218 = vlaneseq
    %v5219 = vshrl.u32 %v5218, 7
    %v5220 = vsub.s32 0, %v5219
    %v5221 = vrot.slane %v4998, %v5220
    %v5222 = vlaneseq
    %v5223 = vshrl.u32 %v5222, 7
    %v5224 = vsub.s32 0, %v5223
    %v5225 = vrot.slane %v5000, %v5224
    %v5226 = vlaneseq
    %v5227 = vshrl.u32 %v5226, 7
    %v5228 = vsub.s32 0, %v5227
    %v5229 = vrot.slane %v5069, %v5228
    %v5230 = vlaneseq
    %v5231 = vshrl.u32 %v5230, 7
    %v5232 = vsub.s32 0, %v5231
    %v5233 = vrot.slane %v5071, %v5232
    %v5234 = vmul.f32 %v4278, %v5221
    %v5235 = vmul.f32 %v4280, %v5225
    %v5236 = vmul.f32 %v4437, %v5229
    %v5237 = vmul.f32 %v4439, %v5233
    %v5238 = vmul.f32 %v4282, %v5221
    %v5239 = vmul.f32 %v4284, %v5225
    %v5240 = vmul.f32 %v4441, %v5229
    %v5241 = vmul.f32 %v4443, %v5233
    %v5242 = vmul.f32 %v4288, %v5221
    %v5243 = vmul.f32 %v4290, %v5225
    %v5244 = vmul.f32 %v4447, %v5229
    %v5245 = vmul.f32 %v4449, %v5233
    %v5246 = vmul.f32 %v4292, %v5221
    %v5247 = vmul.f32 %v4294, %v5225
    %v5248 = vmul.f32 %v4451, %v5229
    %v5249 = vmul.f32 %v4453, %v5233
    %v5250 = vlaneseq
    %v5251 = vshrl.u32 %v5250, 7
    %v5252 = vsub.s32 0, %v5251
    %v5253 = vrot.slane %v5143, %v5252
    %v5254 = vlaneseq
    %v5255 = vshrl.u32 %v5254, 7
    %v5256 = vsub.s32 0, %v5255
    %v5257 = vrot.slane %v5145, %v5256
    %v5258 = vlaneseq
    %v5259 = vshrl.u32 %v5258, 7
    %v5260 = vsub.s32 0, %v5259
    %v5261 = vrot.slane %v5214, %v5260
    %v5262 = vlaneseq
    %v5263 = vshrl.u32 %v5262, 7
    %v5264 = vsub.s32 0, %v5263
    %v5265 = vrot.slane %v5216, %v5264
    %v5266 = vadd.f32 %v5234, %v5253
    %v5267 = vadd.f32 %v5235, %v5257
    %v5268 = vadd.f32 %v5236, %v5261
    %v5269 = vadd.f32 %v5237, %v5265
    %v5270 = vadd.f32 %v5238, %v5253
    %v5271 = vadd.f32 %v5239, %v5257
    %v5272 = vadd.f32 %v5240, %v5261
    %v5273 = vadd.f32 %v5241, %v5265
    %v5274 = vadd.f32 %v5242, %v5253
    %v5275 = vadd.f32 %v5243, %v5257
    %v5276 = vadd.f32 %v5244, %v5261
    %v5277 = vadd.f32 %v5245, %v5265
    %v5278 = vadd.f32 %v5246, %v5253
    %v5279 = vadd.f32 %v5247, %v5257
    %v5280 = vadd.f32 %v5248, %v5261
    %v5281 = vadd.f32 %v5249, %v5265
    %v5282 = vmax.f32 %v5266, 0.0
    %v5283 = vmax.f32 %v5267, 0.0
    %v5284 = vmax.f32 %v5268, 0.0
    %v5285 = vmax.f32 %v5269, 0.0
    %v5286 = vmax.f32 %v5270, 0.0
    %v5287 = vmax.f32 %v5271, 0.0
    %v5288 = vmax.f32 %v5272, 0.0
    %v5289 = vmax.f32 %v5273, 0.0
    %v5290 = vmax.f32 %v5274, 0.0
    %v5291 = vmax.f32 %v5275, 0.0
    %v5292 = vmax.f32 %v5276, 0.0
    %v5293 = vmax.f32 %v5277, 0.0
    %v5294 = vmax.f32 %v5278, 0.0
    %v5295 = vmax.f32 %v5279, 0.0
    %v5296 = vmax.f32 %v5280, 0.0
    %v5297 = vmax.f32 %v5281, 0.0
    %5314 = vrot.lane.b32.xlu0 %v5282, 127
    %v5315 = vpop.permute.xlu0 %5314
    %5316 = vrot.lane.b32.xlu0 %v5283, 127
    %v5317 = vpop.permute.xlu0 %5316
    %5318 = vrot.lane.b32.xlu0 %v5284, 127
    %v5319 = vpop.permute.xlu0 %5318
    %5320 = vrot.lane.b32.xlu0 %v5285, 127
    %v5321 = vpop.permute.xlu0 %5320
    %5322 = vrot.lane.b32.xlu0 %v5286, 127
    %v5323 = vpop.permute.xlu0 %5322
    %5324 = vrot.lane.b32.xlu0 %v5287, 127
    %v5325 = vpop.permute.xlu0 %5324
    %5326 = vrot.lane.b32.xlu0 %v5288, 127
    %v5327 = vpop.permute.xlu0 %5326
    %5328 = vrot.lane.b32.xlu0 %v5289, 127
    %v5329 = vpop.permute.xlu0 %5328
    %5330 = vrot.lane.b32.xlu0 %v5290, 127
    %v5331 = vpop.permute.xlu0 %5330
    %5332 = vrot.lane.b32.xlu0 %v5291, 127
    %v5333 = vpop.permute.xlu0 %5332
    %5334 = vrot.lane.b32.xlu0 %v5292, 127
    %v5335 = vpop.permute.xlu0 %5334
    %5336 = vrot.lane.b32.xlu0 %v5293, 127
    %v5337 = vpop.permute.xlu0 %5336
    %5338 = vrot.lane.b32.xlu0 %v5294, 127
    %v5339 = vpop.permute.xlu0 %5338
    %5340 = vrot.lane.b32.xlu0 %v5295, 127
    %v5341 = vpop.permute.xlu0 %5340
    %5342 = vrot.lane.b32.xlu0 %v5296, 127
    %v5343 = vpop.permute.xlu0 %5342
    %5344 = vrot.lane.b32.xlu0 %v5297, 127
    %v5345 = vpop.permute.xlu0 %5344
    %v5346 = vsel %vm2105, %v5315, %v5317
    %v5347 = vsel %vm2105, %v5317, %v5319
    %v5348 = vsel %vm2105, %v5319, %v5321
    %v5349 = vsel %vm2105, %v5323, %v5325
    %v5350 = vsel %vm2105, %v5325, %v5327
    %v5351 = vsel %vm2105, %v5327, %v5329
    %v5352 = vsel %vm2105, %v5331, %v5333
    %v5353 = vsel %vm2105, %v5333, %v5335
    %v5354 = vsel %vm2105, %v5335, %v5337
    %v5355 = vsel %vm2105, %v5339, %v5341
    %v5356 = vsel %vm2105, %v5341, %v5343
    %v5357 = vsel %vm2105, %v5343, %v5345
    %v5374 = vmax.f32 %v5282, %v5346
    %v5375 = vmax.f32 %v5283, %v5347
    %v5376 = vmax.f32 %v5284, %v5348
    %v5377 = vmax.f32 %v5285, %v5321
    %v5378 = vmax.f32 %v5286, %v5349
    %v5379 = vmax.f32 %v5287, %v5350
    %v5380 = vmax.f32 %v5288, %v5351
    %v5381 = vmax.f32 %v5289, %v5329
    %v5382 = vmax.f32 %v5290, %v5352
    %v5383 = vmax.f32 %v5291, %v5353
    %v5384 = vmax.f32 %v5292, %v5354
    %v5385 = vmax.f32 %v5293, %v5337
    %v5386 = vmax.f32 %v5294, %v5355
    %v5387 = vmax.f32 %v5295, %v5356
    %v5388 = vmax.f32 %v5296, %v5357
    %v5389 = vmax.f32 %v5297, %v5345
    %v5390 = vpack.c.bf16 %v5378, %v5374
    %v5391 = vpack.c.bf16 %v5379, %v5375
    %v5392 = vpack.c.bf16 %v5380, %v5376
    %v5393 = vpack.c.bf16 %v5381, %v5377
    %v5394 = vpack.c.bf16 %v5386, %v5382
    %v5395 = vpack.c.bf16 %v5387, %v5383
    %v5396 = vpack.c.bf16 %v5388, %v5384
    %v5397 = vpack.c.bf16 %v5389, %v5385
    %v5398 = vld [vmem:[%s11] sm:$0xff]
    %v5399 = vld [vmem:[%s11 + $0x8] sm:$0xff]
    %v5400 = vld [vmem:[%s11 + $0x10] sm:$0xff]
    %v5401 = vld [vmem:[%s11 + $0x18] sm:$0xff]
    %v5402 = vld [vmem:[%s11 + $0x20] sm:$0xff]
    %v5403 = vld [vmem:[%s11 + $0x28] sm:$0xff]
    %v5404 = vld [vmem:[%s11 + $0x30] sm:$0xff]
    %v5405 = vld [vmem:[%s11 + $0x38] sm:$0xff]
    %v5406 = vld [vmem:[%s11 + $0x40] sm:$0xff]
    %v5407 = vld [vmem:[%s11 + $0x48] sm:$0xff]
    %v5408 = vld [vmem:[%s11 + $0x50] sm:$0xff]
    %v5409 = vld [vmem:[%s11 + $0x58] sm:$0xff]
    %v5410 = vld [vmem:[%s11 + $0x60] sm:$0xff]
    %v5411 = vld [vmem:[%s11 + $0x68] sm:$0xff]
    %v5412 = vld [vmem:[%s11 + $0x70] sm:$0xff]
    %v5413 = vld [vmem:[%s11 + $0x78] sm:$0xff]
    %v5414 = vld [vmem:[%s11 + $0x80] sm:$0xff]
    %v5415 = vld [vmem:[%s11 + $0x88] sm:$0xff]
    %v5416 = vld [vmem:[%s11 + $0x90] sm:$0xff]
    %v5417 = vld [vmem:[%s11 + $0x98] sm:$0xff]
    %v5418 = vld [vmem:[%s11 + $0xa0] sm:$0xff]
    %v5419 = vld [vmem:[%s11 + $0xa8] sm:$0xff]
    %v5420 = vld [vmem:[%s11 + $0xb0] sm:$0xff]
    %v5421 = vld [vmem:[%s11 + $0xb8] sm:$0xff]
    %v5422 = vld [vmem:[%s11 + $0xc0] sm:$0xff]
    %v5423 = vld [vmem:[%s11 + $0xc8] sm:$0xff]
    %v5424 = vld [vmem:[%s11 + $0xd0] sm:$0xff]
    %v5425 = vld [vmem:[%s11 + $0xd8] sm:$0xff]
    %v5426 = vld [vmem:[%s11 + $0xe0] sm:$0xff]
    %v5427 = vld [vmem:[%s11 + $0xe8] sm:$0xff]
    %v5428 = vld [vmem:[%s11 + $0xf0] sm:$0xff]
    %v5429 = vld [vmem:[%s11 + $0xf8] sm:$0xff]
    %v5430 = vld [vmem:[%s11 + $0x100] sm:$0xff]
    %v5431 = vld [vmem:[%s11 + $0x108] sm:$0xff]
    %v5432 = vld [vmem:[%s11 + $0x110] sm:$0xff]
    %v5433 = vld [vmem:[%s11 + $0x118] sm:$0xff]
    %v5434 = vld [vmem:[%s11 + $0x120] sm:$0xff]
    %v5435 = vld [vmem:[%s11 + $0x128] sm:$0xff]
    %v5436 = vld [vmem:[%s11 + $0x130] sm:$0xff]
    %v5437 = vld [vmem:[%s11 + $0x138] sm:$0xff]
    %v5438 = vld [vmem:[%s11 + $0x140] sm:$0xff]
    %v5439 = vld [vmem:[%s11 + $0x148] sm:$0xff]
    %v5440 = vld [vmem:[%s11 + $0x150] sm:$0xff]
    %v5441 = vld [vmem:[%s11 + $0x158] sm:$0xff]
    %v5442 = vld [vmem:[%s11 + $0x160] sm:$0xff]
    %v5443 = vld [vmem:[%s11 + $0x168] sm:$0xff]
    %v5444 = vld [vmem:[%s11 + $0x170] sm:$0xff]
    %v5445 = vld [vmem:[%s11 + $0x178] sm:$0xff]
    %v5446 = vld [vmem:[%s11 + $0x180] sm:$0xff]
    %v5447 = vld [vmem:[%s11 + $0x188] sm:$0xff]
    %v5448 = vld [vmem:[%s11 + $0x190] sm:$0xff]
    %v5449 = vld [vmem:[%s11 + $0x198] sm:$0xff]
    %v5450 = vld [vmem:[%s11 + $0x1a0] sm:$0xff]
    %v5451 = vld [vmem:[%s11 + $0x1a8] sm:$0xff]
    %v5452 = vld [vmem:[%s11 + $0x1b0] sm:$0xff]
    %v5453 = vld [vmem:[%s11 + $0x1b8] sm:$0xff]
    %v5510 = vunpack.c.l.b16 %v5398
    %v5511 = vunpack.c.h.b16 %v5398
    %v5512 = vunpack.c.l.b16 %v5399
    %v5513 = vunpack.c.h.b16 %v5399
    %v5514 = vunpack.c.l.b16 %v5400
    %v5515 = vunpack.c.h.b16 %v5400
    %v5516 = vunpack.c.l.b16 %v5401
    %v5517 = vunpack.c.h.b16 %v5401
    %v5518 = vunpack.c.l.b16 %v5402
    %v5519 = vunpack.c.h.b16 %v5402
    %v5520 = vunpack.c.l.b16 %v5403
    %v5521 = vunpack.c.h.b16 %v5403
    %v5522 = vunpack.c.l.b16 %v5404
    %v5523 = vunpack.c.h.b16 %v5404
    %v5524 = vunpack.c.l.b16 %v5405
    %v5525 = vunpack.c.h.b16 %v5405
    %v5526 = vunpack.c.l.b16 %v5406
    %v5527 = vunpack.c.h.b16 %v5406
    %v5528 = vunpack.c.l.b16 %v5407
    %v5529 = vunpack.c.h.b16 %v5407
    %v5530 = vunpack.c.l.b16 %v5408
    %v5531 = vunpack.c.h.b16 %v5408
    %v5532 = vunpack.c.l.b16 %v5409
    %v5533 = vunpack.c.h.b16 %v5409
    %v5534 = vunpack.c.l.b16 %v5410
    %v5535 = vunpack.c.h.b16 %v5410
    %v5536 = vunpack.c.l.b16 %v5411
    %v5537 = vunpack.c.h.b16 %v5411
    %v5538 = vunpack.c.l.b16 %v5412
    %v5539 = vunpack.c.h.b16 %v5412
    %v5540 = vunpack.c.l.b16 %v5413
    %v5541 = vunpack.c.h.b16 %v5413
    %v5542 = vunpack.c.l.b16 %v5414
    %v5543 = vunpack.c.h.b16 %v5414
    %v5544 = vunpack.c.l.b16 %v5415
    %v5545 = vunpack.c.h.b16 %v5415
    %v5546 = vunpack.c.l.b16 %v5416
    %v5547 = vunpack.c.h.b16 %v5416
    %v5548 = vunpack.c.l.b16 %v5417
    %v5549 = vunpack.c.h.b16 %v5417
    %v5550 = vunpack.c.l.b16 %v5418
    %v5551 = vunpack.c.h.b16 %v5418
    %v5552 = vunpack.c.l.b16 %v5419
    %v5553 = vunpack.c.h.b16 %v5419
    %v5554 = vunpack.c.l.b16 %v5420
    %v5555 = vunpack.c.h.b16 %v5420
    %v5556 = vunpack.c.l.b16 %v5421
    %v5557 = vunpack.c.h.b16 %v5421
    %v5558 = vunpack.c.l.b16 %v5422
    %v5559 = vunpack.c.h.b16 %v5422
    %v5560 = vunpack.c.l.b16 %v5423
    %v5561 = vunpack.c.h.b16 %v5423
    %v5562 = vunpack.c.l.b16 %v5424
    %v5563 = vunpack.c.h.b16 %v5424
    %v5564 = vunpack.c.l.b16 %v5425
    %v5565 = vunpack.c.h.b16 %v5425
    %v5566 = vunpack.c.l.b16 %v5426
    %v5567 = vunpack.c.h.b16 %v5426
    %v5568 = vunpack.c.l.b16 %v5427
    %v5569 = vunpack.c.h.b16 %v5427
    %v5570 = vunpack.c.l.b16 %v5428
    %v5571 = vunpack.c.h.b16 %v5428
    %v5572 = vunpack.c.l.b16 %v5429
    %v5573 = vunpack.c.h.b16 %v5429
    %v5574 = vunpack.c.l.b16 %v5430
    %v5575 = vunpack.c.h.b16 %v5430
    %v5576 = vunpack.c.l.b16 %v5431
    %v5577 = vunpack.c.h.b16 %v5431
    %v5578 = vunpack.c.l.b16 %v5432
    %v5579 = vunpack.c.h.b16 %v5432
    %v5580 = vunpack.c.l.b16 %v5433
    %v5581 = vunpack.c.h.b16 %v5433
    %v5582 = vunpack.c.l.b16 %v5434
    %v5583 = vunpack.c.h.b16 %v5434
    %v5584 = vunpack.c.l.b16 %v5435
    %v5585 = vunpack.c.h.b16 %v5435
    %v5586 = vunpack.c.l.b16 %v5436
    %v5587 = vunpack.c.h.b16 %v5436
    %v5588 = vunpack.c.l.b16 %v5437
    %v5589 = vunpack.c.h.b16 %v5437
    %v5590 = vunpack.c.l.b16 %v5438
    %v5591 = vunpack.c.h.b16 %v5438
    %v5592 = vunpack.c.l.b16 %v5439
    %v5593 = vunpack.c.h.b16 %v5439
    %v5594 = vunpack.c.l.b16 %v5440
    %v5595 = vunpack.c.h.b16 %v5440
    %v5596 = vunpack.c.l.b16 %v5441
    %v5597 = vunpack.c.h.b16 %v5441
    %v5598 = vunpack.c.l.b16 %v5442
    %v5599 = vunpack.c.h.b16 %v5442
    %v5600 = vunpack.c.l.b16 %v5443
    %v5601 = vunpack.c.h.b16 %v5443
    %v5602 = vunpack.c.l.b16 %v5444
    %v5603 = vunpack.c.h.b16 %v5444
    %v5604 = vunpack.c.l.b16 %v5445
    %v5605 = vunpack.c.h.b16 %v5445
    %v5606 = vunpack.c.l.b16 %v5446
    %v5607 = vunpack.c.h.b16 %v5446
    %v5608 = vunpack.c.l.b16 %v5447
    %v5609 = vunpack.c.h.b16 %v5447
    %v5610 = vunpack.c.l.b16 %v5448
    %v5611 = vunpack.c.h.b16 %v5448
    %v5612 = vunpack.c.l.b16 %v5449
    %v5613 = vunpack.c.h.b16 %v5449
    %v5614 = vunpack.c.l.b16 %v5450
    %v5615 = vunpack.c.h.b16 %v5450
    %v5616 = vunpack.c.l.b16 %v5451
    %v5617 = vunpack.c.h.b16 %v5451
    %v5618 = vunpack.c.l.b16 %v5452
    %v5619 = vunpack.c.h.b16 %v5452
    %v5620 = vunpack.c.l.b16 %v5453
    %v5621 = vunpack.c.h.b16 %v5453
    %v5622 = vpack.c.b16 %v5512, %v5510
    %v5623 = vpack.c.b16 %v5513, %v5511
    %v5624 = vpack.c.b16 %v5516, %v5514
    %v5625 = vpack.c.b16 %v5517, %v5515
    %v5626 = vpack.c.b16 %v5520, %v5518
    %v5627 = vpack.c.b16 %v5521, %v5519
    %v5628 = vpack.c.b16 %v5524, %v5522
    %v5629 = vpack.c.b16 %v5525, %v5523
    %v5630 = vpack.c.b16 %v5528, %v5526
    %v5631 = vpack.c.b16 %v5529, %v5527
    %v5632 = vpack.c.b16 %v5532, %v5530
    %v5633 = vpack.c.b16 %v5533, %v5531
    %v5634 = vpack.c.b16 %v5536, %v5534
    %v5635 = vpack.c.b16 %v5537, %v5535
    %v5636 = vpack.c.b16 %v5540, %v5538
    %v5637 = vpack.c.b16 %v5541, %v5539
    %v5638 = vpack.c.b16 %v5544, %v5542
    %v5639 = vpack.c.b16 %v5545, %v5543
    %v5640 = vpack.c.b16 %v5548, %v5546
    %v5641 = vpack.c.b16 %v5549, %v5547
    %v5642 = vpack.c.b16 %v5552, %v5550
    %v5643 = vpack.c.b16 %v5553, %v5551
    %v5644 = vpack.c.b16 %v5556, %v5554
    %v5645 = vpack.c.b16 %v5557, %v5555
    %v5646 = vpack.c.b16 %v5560, %v5558
    %v5647 = vpack.c.b16 %v5561, %v5559
    %v5648 = vpack.c.b16 %v5564, %v5562
    %v5649 = vpack.c.b16 %v5565, %v5563
    %v5650 = vpack.c.b16 %v5568, %v5566
    %v5651 = vpack.c.b16 %v5569, %v5567
    %v5652 = vpack.c.b16 %v5572, %v5570
    %v5653 = vpack.c.b16 %v5573, %v5571
    %v5654 = vpack.c.b16 %v5576, %v5574
    %v5655 = vpack.c.b16 %v5577, %v5575
    %v5656 = vpack.c.b16 %v5580, %v5578
    %v5657 = vpack.c.b16 %v5581, %v5579
    %v5658 = vpack.c.b16 %v5584, %v5582
    %v5659 = vpack.c.b16 %v5585, %v5583
    %v5660 = vpack.c.b16 %v5588, %v5586
    %v5661 = vpack.c.b16 %v5589, %v5587
    %v5662 = vpack.c.b16 %v5592, %v5590
    %v5663 = vpack.c.b16 %v5593, %v5591
    %v5664 = vpack.c.b16 %v5596, %v5594
    %v5665 = vpack.c.b16 %v5597, %v5595
    %v5666 = vpack.c.b16 %v5600, %v5598
    %v5667 = vpack.c.b16 %v5601, %v5599
    %v5668 = vpack.c.b16 %v5604, %v5602
    %v5669 = vpack.c.b16 %v5605, %v5603
    %v5670 = vpack.c.b16 %v5608, %v5606
    %v5671 = vpack.c.b16 %v5609, %v5607
    %v5672 = vpack.c.b16 %v5612, %v5610
    %v5673 = vpack.c.b16 %v5613, %v5611
    %v5674 = vpack.c.b16 %v5616, %v5614
    %v5675 = vpack.c.b16 %v5617, %v5615
    %v5676 = vpack.c.b16 %v5620, %v5618
    %v5677 = vpack.c.b16 %v5621, %v5619
    %v5733 = vsel %vm2533, %v5393, 0
    %v5736 = vsel %vm2533, %v5397, 0
    %v5739 = vand.u32 %v5676, %v2548
    %v5742 = vand.u32 %v5677, %v2548
    %5744 = vmatprep.subr.bf16.mxu0 %v5623
    %5745 = vmatpush1.bf16.msra.mxu0 %v5622
    %5746 = vmatprep.subr.bf16.mxu0 %v5625
    %5747 = vmatpush1.bf16.msra.mxu0 %v5624
    %5748 = vmatprep.subr.bf16.mxu0 %v5627
    %5749 = vmatpush1.bf16.msra.mxu0 %v5626
    %5750 = vmatprep.subr.bf16.mxu0 %v5629
    %5751 = vmatpush1.bf16.msra.mxu0 %v5628
    %5752 = vmatprep.subr.bf16.mxu0 %v5631
    %5753 = vmatpush1.bf16.msra.mxu0 %v5630
    %5754 = vmatprep.subr.bf16.mxu0 %v5633
    %5755 = vmatpush1.bf16.msra.mxu0 %v5632
    %5756 = vmatprep.subr.bf16.mxu0 %v5635
    %5757 = vmatpush1.bf16.msra.mxu0 %v5634
    %5758 = vmatprep.subr.bf16.mxu0 %v5637
    %5759 = vmatpush1.bf16.msra.mxu0 %v5636
    %5760 = vmatprep.subr.bf16.mxu0 %v5639
    %5761 = vmatpush1.bf16.msra.mxu0 %v5638
    %5762 = vmatprep.subr.bf16.mxu0 %v5641
    %5763 = vmatpush1.bf16.msra.mxu0 %v5640
    %5764 = vmatprep.subr.bf16.mxu0 %v5643
    %5765 = vmatpush1.bf16.msra.mxu0 %v5642
    %5766 = vmatprep.subr.bf16.mxu0 %v5645
    %5767 = vmatpush1.bf16.msra.mxu0 %v5644
    %5768 = vmatprep.subr.bf16.mxu0 %v5647
    %5769 = vmatpush1.bf16.msra.mxu0 %v5646
    %5770 = vmatprep.subr.bf16.mxu0 %v5649
    %5771 = vmatpush1.bf16.msra.mxu0 %v5648
    %5772 = vmatprep.subr.bf16.mxu0 %v5651
    %5773 = vmatpush1.bf16.msra.mxu0 %v5650
    %5774 = vmatprep.subr.bf16.mxu0 %v5653
    %5775 = vmatpush1.bf16.msra.mxu0 %v5652
    %5776 = vmatprep.mubr.bf16.mxu0 %v5391
    %5777 = vmatmul.mubr.bf16.gmra.mrb[0].mxu0 %v5390
    %v5778 = vpop.f32.mrb[0].mxu0
    %v5779 = vadd.f32 0.0, %v5778
    %v5780 = vpop.f32.mrb[0].mxu0
    %v5781 = vadd.f32 0.0, %v5780
    %v5782 = vpop.f32.mrb[0].mxu0
    %v5783 = vadd.f32 0.0, %v5782
    %v5784 = vpop.f32.mrb[0].mxu0
    %v5785 = vadd.f32 0.0, %v5784
    %5786 = vmatprep.mubr.bf16.mxu0 %v5395
    %5787 = vmatmul.mubr.bf16.gmra.mrb[0].mxu0 %v5394
    %v5788 = vpop.f32.mrb[0].mxu0
    %v5789 = vadd.f32 0.0, %v5788
    %v5790 = vpop.f32.mrb[0].mxu0
    %v5791 = vadd.f32 0.0, %v5790
    %v5792 = vpop.f32.mrb[0].mxu0
    %v5793 = vadd.f32 0.0, %v5792
    %v5794 = vpop.f32.mrb[0].mxu0
    %v5795 = vadd.f32 0.0, %v5794
    %5796 = vdwg.mxu0
    %5797 = vmatprep.subr.bf16.mxu0 %v5655
    %5798 = vmatpush1.bf16.msra.mxu0 %v5654
    %5799 = vmatprep.subr.bf16.mxu0 %v5657
    %5800 = vmatpush1.bf16.msra.mxu0 %v5656
    %5801 = vmatprep.subr.bf16.mxu0 %v5659
    %5802 = vmatpush1.bf16.msra.mxu0 %v5658
    %5803 = vmatprep.subr.bf16.mxu0 %v5661
    %5804 = vmatpush1.bf16.msra.mxu0 %v5660
    %5805 = vmatprep.subr.bf16.mxu0 %v5663
    %5806 = vmatpush1.bf16.msra.mxu0 %v5662
    %5807 = vmatprep.subr.bf16.mxu0 %v5665
    %5808 = vmatpush1.bf16.msra.mxu0 %v5664
    %5809 = vmatprep.subr.bf16.mxu0 %v5667
    %5810 = vmatpush1.bf16.msra.mxu0 %v5666
    %5811 = vmatprep.subr.bf16.mxu0 %v5669
    %5812 = vmatpush1.bf16.msra.mxu0 %v5668
    %5813 = vmatprep.subr.bf16.mxu0 %v5671
    %5814 = vmatpush1.bf16.msra.mxu0 %v5670
    %5815 = vmatprep.subr.bf16.mxu0 %v5673
    %5816 = vmatpush1.bf16.msra.mxu0 %v5672
    %5817 = vmatprep.subr.bf16.mxu0 %v5675
    %5818 = vmatpush1.bf16.msra.mxu0 %v5674
    %5819 = vmatprep.subr.bf16.mxu0 %v5742
    %5820 = vmatpush1.bf16.msra.mxu0 %v5739
    %5821 = vmatprep.subr.bf16.mxu0 0
    %5822 = vmatpush1.bf16.msra.mxu0 0
    %5823 = vmatprep.subr.bf16.mxu0 0
    %5824 = vmatpush1.bf16.msra.mxu0 0
    %5825 = vmatprep.subr.bf16.mxu0 0
    %5826 = vmatpush1.bf16.msra.mxu0 0
    %5827 = vmatprep.subr.bf16.mxu0 0
    %5828 = vmatpush1.bf16.msra.mxu0 0
    %5829 = vmatprep.mubr.bf16.mxu0 %v5733
    %5830 = vmatmul.mubr.bf16.gmra.mrb[0].mxu0 %v5392
    %v5831 = vpop.f32.mrb[0].mxu0
    %v5832 = vadd.f32 %v5779, %v5831
    %v5833 = vpop.f32.mrb[0].mxu0
    %v5834 = vadd.f32 %v5781, %v5833
    %v5835 = vpop.f32.mrb[0].mxu0
    %v5836 = vadd.f32 %v5783, %v5835
    %v5837 = vpop.f32.mrb[0].mxu0
    %v5838 = vadd.f32 %v5785, %v5837
    %5839 = vmatprep.mubr.bf16.mxu0 %v5736
    %5840 = vmatmul.mubr.bf16.gmra.mrb[0].mxu0 %v5396
    %v5841 = vpop.f32.mrb[0].mxu0
    %v5842 = vadd.f32 %v5789, %v5841
    %v5843 = vpop.f32.mrb[0].mxu0
    %v5844 = vadd.f32 %v5791, %v5843
    %v5845 = vpop.f32.mrb[0].mxu0
    %v5846 = vadd.f32 %v5793, %v5845
    %v5847 = vpop.f32.mrb[0].mxu0
    %v5848 = vadd.f32 %v5795, %v5847
    %5849 = vdwg.mxu0
    %v5858 = vrot.slane %v5832, 1
    %v5859 = vrot.slane %v5836, 1
    %v5860 = vsel %vm144, %v5858, %v5859
    %v5861 = vrot.slane %v5834, 1
    %v5862 = vrot.slane %v5838, 1
    %v5863 = vsel %vm144, %v5861, %v5862
    %v5864 = vrot.slane %v5842, 1
    %v5865 = vsel %vm144, %v5859, %v5864
    %v5866 = vrot.slane %v5844, 1
    %v5867 = vsel %vm144, %v5862, %v5866
    %v5868 = vrot.slane %v5846, 1
    %v5869 = vsel %vm144, %v5864, %v5868
    %v5870 = vrot.slane %v5848, 1
    %v5871 = vsel %vm144, %v5866, %v5870
    %v5880 = vmax.f32 %v5832, %v5860
    %v5881 = vmax.f32 %v5834, %v5863
    %v5882 = vmax.f32 %v5836, %v5865
    %v5883 = vmax.f32 %v5838, %v5867
    %v5884 = vmax.f32 %v5842, %v5869
    %v5885 = vmax.f32 %v5844, %v5871
    %v5886 = vmax.f32 %v5846, %v5868
    %v5887 = vmax.f32 %v5848, %v5870
    %v5888 = vpack.c.bf16 %v5882, %v5880
    %v5889 = vpack.c.bf16 %v5883, %v5881
    %v5890 = vpack.c.bf16 %v5886, %v5884
    %v5891 = vpack.c.bf16 %v5887, %v5885
    %v5892 = vld [vmem:[%s12] sm:$0xf]
    %v5893 = vld [vmem:[%s12 + $0x4] sm:$0x7]
    %v5896 = vunpack.c.l.b16 %v5892
    %v5897 = vunpack.c.l.b16 %v5893
    %v5898 = vpack.c.b16 %v5897, %v5896
    %vm5899 = vcmask 220160
    %v5901 = vsel %vm5899, %v5898, 0
    %vm5903 = vcmask 1045504
    %v5904 = vsel %vm187, 4294967295, 65535
    %v5905 = vsel %vm5903, %v5904, 0
    %v5907 = vand.u32 %v5890, %v5905
    %v5910 = vand.u32 %v5891, %v5905
    %5912 = vmatprep.subr.bf16.mxu0 %v5889
    %5913 = vmatpush1.bf16.msra.mxu0 %v5888
    %5914 = vmatprep.subr.bf16.mxu0 %v5910
    %5915 = vmatpush1.bf16.msra.mxu0 %v5907
    %5916 = vmatprep.subr.bf16.mxu0 0
    %5917 = vmatpush1.bf16.msra.mxu0 0
    %5918 = vmatprep.subr.bf16.mxu0 0
    %5919 = vmatpush1.bf16.msra.mxu0 0
    %5920 = vmatprep.subr.bf16.mxu0 0
    %5921 = vmatpush1.bf16.msra.mxu0 0
    %5922 = vmatprep.subr.bf16.mxu0 0
    %5923 = vmatpush1.bf16.msra.mxu0 0
    %5924 = vmatprep.subr.bf16.mxu0 0
    %5925 = vmatpush1.bf16.msra.mxu0 0
    %5926 = vmatprep.subr.bf16.mxu0 0
    %5927 = vmatpush1.bf16.msra.mxu0 0
    %5928 = vmatprep.subr.bf16.mxu0 0
    %5929 = vmatpush1.bf16.msra.mxu0 0
    %5930 = vmatprep.subr.bf16.mxu0 0
    %5931 = vmatpush1.bf16.msra.mxu0 0
    %5932 = vmatprep.subr.bf16.mxu0 0
    %5933 = vmatpush1.bf16.msra.mxu0 0
    %5934 = vmatprep.subr.bf16.mxu0 0
    %5935 = vmatpush1.bf16.msra.mxu0 0
    %5936 = vmatprep.subr.bf16.mxu0 0
    %5937 = vmatpush1.bf16.msra.mxu0 0
    %5938 = vmatprep.subr.bf16.mxu0 0
    %5939 = vmatpush1.bf16.msra.mxu0 0
    %5940 = vmatprep.subr.bf16.mxu0 0
    %5941 = vmatpush1.bf16.msra.mxu0 0
    %5942 = vmatprep.subr.bf16.mxu0 0
    %5943 = vmatpush1.bf16.msra.mxu0 0
    %5944 = vmatprep.mubr.bf16.mxu0 0
    %5945 = vmatmul.mubr.bf16.gmra.mrb[0].mxu0 %v5901
    %v5946 = vpop.f32.mrb[0].mxu0
    %v5947 = vadd.f32 0.0, %v5946
    %v5948 = vpop.f32.mrb[0].mxu0
    %v5949 = vadd.f32 0.0, %v5948
    %v5950 = vpop.f32.mrb[0].mxu0
    %v5951 = vadd.f32 0.0, %v5950
    %v5952 = vpop.f32.mrb[0].mxu0
    %v5953 = vadd.f32 0.0, %v5952
    %5954 = vdwg.mxu0
    %v5957 = vcombine.low %v5947, %v5949
    %v5959 = vunpack.c.l.s4 1966171168
    %v5960 = vunpack.c.0.s8 %v5959
    %v5961 = vlaneseq
    %v5962 = vshrl.u32 %v5961, 7
    %v5963 = vsub.s32 %v5960, %v5962
    %v5964 = vrot.slane %v5957, %v5963
    %v5966 = vunpack.c.l.s4 1966171168
    %v5967 = vunpack.c.0.s8 %v5966
    %v5968 = vlaneseq
    %v5969 = vshrl.u32 %v5968, 7
    %v5970 = vsub.s32 %v5967, %v5969
    %v5971 = vrot.slane %v5964, %v5970
    %v5973 = vlaneseq
    %vm5974 = vcmp.ge.s32.totalorder %v5973, 0
    %vm5975 = vcmp.lt.s32.totalorder %v5973, 224
    %vm5976 = vmand %vm5974, %vm5975
    %5977 = vst.msk [vmem:[#allocation4] ss:$2 sm:$0x3] %vm5976, %v5971
    %v5978 = vcombine.high %v5964, %v5964
    %v5980 = vunpack.c.l.s4 1966171168
    %v5981 = vunpack.c.0.s8 %v5980
    %v5982 = vlaneseq
    %v5983 = vshrl.u32 %v5982, 7
    %v5984 = vsub.s32 %v5981, %v5983
    %v5985 = vrot.slane %v5978, %v5984
    %s5987 = scalar_lea.vmem [#allocation4], 4
    %5988 = vst.msk [vmem:[%s5987] ss:$2 sm:$0x3] %vm5976, %v5985
    %v5989 = vcombine.high %v5971, %v5971
    %s5991 = scalar_lea.vmem [#allocation4], 8
    %5992 = vst.msk [vmem:[%s5991] ss:$2 sm:$0x3] %vm5976, %v5989
    %v5993 = vcombine.high %v5985, %v5985
    %s5995 = scalar_lea.vmem [#allocation4], 12
    %5996 = vst.msk [vmem:[%s5995] ss:$2 sm:$0x3] %vm5976, %v5993
    %v5997 = vcombine.high %v5947, %v5949
    %v5999 = vunpack.c.l.s4 1966171168
    %v6000 = vunpack.c.0.s8 %v5999
    %v6001 = vlaneseq
    %v6002 = vshrl.u32 %v6001, 7
    %v6003 = vsub.s32 %v6000, %v6002
    %v6004 = vrot.slane %v5997, %v6003
    %v6006 = vunpack.c.l.s4 1966171168
    %v6007 = vunpack.c.0.s8 %v6006
    %v6008 = vlaneseq
    %v6009 = vshrl.u32 %v6008, 7
    %v6010 = vsub.s32 %v6007, %v6009
    %v6011 = vrot.slane %v6004, %v6010
    %s6013 = scalar_lea.vmem [#allocation4], 16
    %6014 = vst.msk [vmem:[%s6013] ss:$2 sm:$0x3] %vm5976, %v6011
    %v6015 = vcombine.high %v6004, %v6004
    %v6017 = vunpack.c.l.s4 1966171168
    %v6018 = vunpack.c.0.s8 %v6017
    %v6019 = vlaneseq
    %v6020 = vshrl.u32 %v6019, 7
    %v6021 = vsub.s32 %v6018, %v6020
    %v6022 = vrot.slane %v6015, %v6021
    %s6024 = scalar_lea.vmem [#allocation4], 20
    %6025 = vst.msk [vmem:[%s6024] ss:$2 sm:$0x3] %vm5976, %v6022
    %v6026 = vcombine.high %v6011, %v6011
    %s6028 = scalar_lea.vmem [#allocation4], 24
    %6029 = vst.msk [vmem:[%s6028] ss:$2 sm:$0x3] %vm5976, %v6026
    %v6030 = vcombine.high %v6022, %v6022
    %s6032 = scalar_lea.vmem [#allocation4], 1
    %6033 = vst.msk [vmem:[%s6032] ss:$2 sm:$0x3] %vm5976, %v6030
    %v6036 = vcombine.low %v5951, %v5953
    %v6038 = vunpack.c.l.s4 1966171168
    %v6039 = vunpack.c.0.s8 %v6038
    %v6040 = vlaneseq
    %v6041 = vshrl.u32 %v6040, 7
    %v6042 = vsub.s32 %v6039, %v6041
    %v6043 = vrot.slane %v6036, %v6042
    %v6045 = vunpack.c.l.s4 1966171168
    %v6046 = vunpack.c.0.s8 %v6045
    %v6047 = vlaneseq
    %v6048 = vshrl.u32 %v6047, 7
    %v6049 = vsub.s32 %v6046, %v6048
    %v6050 = vrot.slane %v6043, %v6049
    %s6052 = scalar_lea.vmem [#allocation4], 5
    %6053 = vst.msk [vmem:[%s6052] ss:$2 sm:$0x3] %vm5976, %v6050
    %v6054 = vcombine.high %v6043, %v6043
    %v6056 = vunpack.c.l.s4 1966171168
    %v6057 = vunpack.c.0.s8 %v6056
    %v6058 = vlaneseq
    %v6059 = vshrl.u32 %v6058, 7
    %v6060 = vsub.s32 %v6057, %v6059
    %v6061 = vrot.slane %v6054, %v6060
    %s6063 = scalar_lea.vmem [#allocation4], 9
    %6064 = vst.msk [vmem:[%s6063] ss:$2 sm:$0x3] %vm5976, %v6061
    %v6065 = vcombine.high %v6050, %v6050
    %s6067 = scalar_lea.vmem [#allocation4], 13
    %6068 = vst.msk [vmem:[%s6067] ss:$2 sm:$0x3] %vm5976, %v6065
    %v6069 = vcombine.high %v6061, %v6061
    %s6071 = scalar_lea.vmem [#allocation4], 17
    %6072 = vst.msk [vmem:[%s6071] ss:$2 sm:$0x3] %vm5976, %v6069
    %v6073 = vcombine.high %v5951, %v5953
    %v6075 = vunpack.c.l.s4 1966171168
    %v6076 = vunpack.c.0.s8 %v6075
    %v6077 = vlaneseq
    %v6078 = vshrl.u32 %v6077, 7
    %v6079 = vsub.s32 %v6076, %v6078
    %v6080 = vrot.slane %v6073, %v6079
    %v6082 = vunpack.c.l.s4 1966171168
    %v6083 = vunpack.c.0.s8 %v6082
    %v6084 = vlaneseq
    %v6085 = vshrl.u32 %v6084, 7
    %v6086 = vsub.s32 %v6083, %v6085
    %v6087 = vrot.slane %v6080, %v6086
    %s6089 = scalar_lea.vmem [#allocation4], 21
    %6090 = vst.msk [vmem:[%s6089] ss:$2 sm:$0x3] %vm5976, %v6087
    %v6091 = vcombine.high %v6080, %v6080
    %v6093 = vunpack.c.l.s4 1966171168
    %v6094 = vunpack.c.0.s8 %v6093
    %v6095 = vlaneseq
    %v6096 = vshrl.u32 %v6095, 7
    %v6097 = vsub.s32 %v6094, %v6096
    %v6098 = vrot.slane %v6091, %v6097
    %s6100 = scalar_lea.vmem [#allocation4], 25
    %6101 = vst.msk [vmem:[%s6100] ss:$2 sm:$0x3] %vm5976, %v6098
    %v6102 = vld [vmem:[#allocation4] sm:$0xff]
    %v6103 = vld [vmem:[#allocation4 + $0x8] sm:$0xff]
    %v6104 = vld [vmem:[#allocation4 + $0x10] sm:$0xff]
    %v6105 = vld [vmem:[#allocation4 + $0x18] sm:$0xf]
    %v6110 = vcombine.high %v6102, %v6102
    %v6112 = vunpack.c.l.s4 1983009808
    %v6113 = vunpack.c.0.s8 %v6112
    %v6114 = vlaneseq
    %v6115 = vshrl.u32 %v6114, 7
    %v6116 = vsub.s32 %v6113, %v6115
    %v6117 = vrot.slane %v6102, %v6116
    %v6119 = vunpack.c.l.s4 1983009808
    %v6120 = vunpack.c.0.s8 %v6119
    %v6121 = vlaneseq
    %v6122 = vshrl.u32 %v6121, 7
    %v6123 = vsub.s32 %v6120, %v6122
    %v6124 = vrot.slane %v6110, %v6123
    %v6125 = vcombine.high %v6117, %v6117
    %v6126 = vcombine.high %v6124, %v6124
    %v6127 = vcombine.high %v6103, %v6103
    %v6129 = vunpack.c.l.s4 1983009808
    %v6130 = vunpack.c.0.s8 %v6129
    %v6131 = vlaneseq
    %v6132 = vshrl.u32 %v6131, 7
    %v6133 = vsub.s32 %v6130, %v6132
    %v6134 = vrot.slane %v6103, %v6133
    %v6136 = vunpack.c.l.s4 1983009808
    %v6137 = vunpack.c.0.s8 %v6136
    %v6138 = vlaneseq
    %v6139 = vshrl.u32 %v6138, 7
    %v6140 = vsub.s32 %v6137, %v6139
    %v6141 = vrot.slane %v6127, %v6140
    %v6142 = vcombine.high %v6134, %v6134
    %v6143 = vcombine.high %v6141, %v6141
    %v6144 = vcombine.high %v6104, %v6104
    %v6146 = vunpack.c.l.s4 1983009808
    %v6147 = vunpack.c.0.s8 %v6146
    %v6148 = vlaneseq
    %v6149 = vshrl.u32 %v6148, 7
    %v6150 = vsub.s32 %v6147, %v6149
    %v6151 = vrot.slane %v6104, %v6150
    %v6153 = vunpack.c.l.s4 1983009808
    %v6154 = vunpack.c.0.s8 %v6153
    %v6155 = vlaneseq
    %v6156 = vshrl.u32 %v6155, 7
    %v6157 = vsub.s32 %v6154, %v6156
    %v6158 = vrot.slane %v6144, %v6157
    %v6159 = vcombine.high %v6151, %v6151
    %v6160 = vcombine.high %v6158, %v6158
    %v6162 = vunpack.c.l.s4 1983009808
    %v6163 = vunpack.c.0.s8 %v6162
    %v6164 = vlaneseq
    %v6165 = vshrl.u32 %v6164, 7
    %v6166 = vsub.s32 %v6163, %v6165
    %v6167 = vrot.slane %v6105, %v6166
    %v6168 = vcombine.high %v6167, %v6167
    %v6183 = vpack.c.bf16 %v6117, %v6117
    %v6184 = vpack.c.bf16 %v6125, %v6125
    %v6185 = vpack.c.bf16 %v6124, %v6124
    %v6186 = vpack.c.bf16 %v6126, %v6126
    %v6187 = vpack.c.bf16 %v6134, %v6134
    %v6188 = vpack.c.bf16 %v6142, %v6142
    %v6189 = vpack.c.bf16 %v6141, %v6141
    %v6190 = vpack.c.bf16 %v6143, %v6143
    %v6191 = vpack.c.bf16 %v6151, %v6151
    %v6192 = vpack.c.bf16 %v6159, %v6159
    %v6193 = vpack.c.bf16 %v6158, %v6158
    %v6194 = vpack.c.bf16 %v6160, %v6160
    %v6195 = vpack.c.bf16 %v6167, %v6167
    %v6196 = vpack.c.bf16 %v6168, %v6168
    %v6197 = vld [vmem:[%s13] sm:$0xf]
    %v6198 = vld [vmem:[%s13 + $0x4] sm:$0xf]
    %v6199 = vld [vmem:[%s13 + $0x8] sm:$0xf]
    %v6200 = vld [vmem:[%s13 + $0xc] sm:$0xf]
    %v6201 = vld [vmem:[%s13 + $0x10] sm:$0xf]
    %v6202 = vld [vmem:[%s13 + $0x14] sm:$0xf]
    %v6203 = vld [vmem:[%s13 + $0x18] sm:$0xf]
    %v6204 = vld [vmem:[%s13 + $0x1c] sm:$0xf]
    %v6205 = vld [vmem:[%s13 + $0x20] sm:$0xf]
    %v6206 = vld [vmem:[%s13 + $0x24] sm:$0xf]
    %v6207 = vld [vmem:[%s13 + $0x28] sm:$0xf]
    %v6208 = vld [vmem:[%s13 + $0x2c] sm:$0xf]
    %v6209 = vld [vmem:[%s13 + $0x30] sm:$0xf]
    %v6210 = vld [vmem:[%s13 + $0x34] sm:$0xf]
    %v6211 = vld [vmem:[%s13 + $0x38] sm:$0xf]
    %v6212 = vld [vmem:[%s13 + $0x3c] sm:$0xf]
    %v6213 = vld [vmem:[%s13 + $0x40] sm:$0xf]
    %v6214 = vld [vmem:[%s13 + $0x44] sm:$0xf]
    %v6215 = vld [vmem:[%s13 + $0x48] sm:$0xf]
    %v6216 = vld [vmem:[%s13 + $0x4c] sm:$0xf]
    %v6217 = vld [vmem:[%s13 + $0x50] sm:$0xf]
    %v6218 = vld [vmem:[%s13 + $0x54] sm:$0xf]
    %v6219 = vld [vmem:[%s13 + $0x58] sm:$0xf]
    %v6220 = vld [vmem:[%s13 + $0x5c] sm:$0xf]
    %v6221 = vld [vmem:[%s13 + $0x60] sm:$0xf]
    %v6222 = vld [vmem:[%s13 + $0x64] sm:$0xf]
    %v6223 = vld [vmem:[%s13 + $0x68] sm:$0xf]
    %v6224 = vld [vmem:[%s13 + $0x6c] sm:$0xf]
    %v6225 = vld [vmem:[%s13 + $0x70] sm:$0xf]
    %v6226 = vld [vmem:[%s13 + $0x74] sm:$0xf]
    %v6227 = vld [vmem:[%s13 + $0x78] sm:$0xf]
    %v6228 = vld [vmem:[%s13 + $0x7c] sm:$0xf]
    %v6229 = vld [vmem:[%s13 + $0x80] sm:$0xf]
    %v6230 = vld [vmem:[%s13 + $0x84] sm:$0xf]
    %v6231 = vld [vmem:[%s13 + $0x88] sm:$0xf]
    %v6232 = vld [vmem:[%s13 + $0x8c] sm:$0xf]
    %v6233 = vld [vmem:[%s13 + $0x90] sm:$0xf]
    %v6234 = vld [vmem:[%s13 + $0x94] sm:$0xf]
    %v6235 = vld [vmem:[%s13 + $0x98] sm:$0xf]
    %v6236 = vld [vmem:[%s13 + $0x9c] sm:$0xf]
    %v6237 = vld [vmem:[%s13 + $0xa0] sm:$0xf]
    %v6238 = vld [vmem:[%s13 + $0xa4] sm:$0xf]
    %v6239 = vld [vmem:[%s13 + $0xa8] sm:$0xf]
    %v6240 = vld [vmem:[%s13 + $0xac] sm:$0xf]
    %v6241 = vld [vmem:[%s13 + $0xb0] sm:$0xf]
    %v6242 = vld [vmem:[%s13 + $0xb4] sm:$0xf]
    %v6243 = vld [vmem:[%s13 + $0xb8] sm:$0xf]
    %v6244 = vld [vmem:[%s13 + $0xbc] sm:$0xf]
    %v6245 = vld [vmem:[%s13 + $0xc0] sm:$0xf]
    %v6246 = vld [vmem:[%s13 + $0xc4] sm:$0xf]
    %v6247 = vld [vmem:[%s13 + $0xc8] sm:$0xf]
    %v6248 = vld [vmem:[%s13 + $0xcc] sm:$0xf]
    %v6249 = vld [vmem:[%s13 + $0xd0] sm:$0xf]
    %v6250 = vld [vmem:[%s13 + $0xd4] sm:$0xf]
    %v6251 = vld [vmem:[%s13 + $0xd8] sm:$0xf]
    %v6252 = vld [vmem:[%s13 + $0xdc] sm:$0xf]
    %v6253 = vld [vmem:[%s13 + $0xe0] sm:$0xf]
    %v6254 = vld [vmem:[%s13 + $0xe4] sm:$0xf]
    %v6255 = vld [vmem:[%s13 + $0xe8] sm:$0xf]
    %v6256 = vld [vmem:[%s13 + $0xec] sm:$0xf]
    %v6257 = vld [vmem:[%s13 + $0xf0] sm:$0xf]
    %v6258 = vld [vmem:[%s13 + $0xf4] sm:$0xf]
    %v6259 = vld [vmem:[%s13 + $0xf8] sm:$0xf]
    %v6260 = vld [vmem:[%s13 + $0xfc] sm:$0xf]
    %v6261 = vld [vmem:[%s13 + $0x100] sm:$0xf]
    %v6262 = vld [vmem:[%s13 + $0x104] sm:$0xf]
    %v6263 = vld [vmem:[%s13 + $0x108] sm:$0xf]
    %v6264 = vld [vmem:[%s13 + $0x10c] sm:$0xf]
    %v6265 = vld [vmem:[%s13 + $0x110] sm:$0xf]
    %v6266 = vld [vmem:[%s13 + $0x114] sm:$0xf]
    %v6267 = vld [vmem:[%s13 + $0x118] sm:$0xf]
    %v6268 = vld [vmem:[%s13 + $0x11c] sm:$0xf]
    %v6269 = vld [vmem:[%s13 + $0x120] sm:$0xf]
    %v6270 = vld [vmem:[%s13 + $0x124] sm:$0xf]
    %v6271 = vld [vmem:[%s13 + $0x128] sm:$0xf]
    %v6272 = vld [vmem:[%s13 + $0x12c] sm:$0xf]
    %v6273 = vld [vmem:[%s13 + $0x130] sm:$0xf]
    %v6274 = vld [vmem:[%s13 + $0x134] sm:$0xf]
    %v6275 = vld [vmem:[%s13 + $0x138] sm:$0xf]
    %v6276 = vld [vmem:[%s13 + $0x13c] sm:$0xf]
    %v6277 = vld [vmem:[%s13 + $0x140] sm:$0xf]
    %v6278 = vld [vmem:[%s13 + $0x144] sm:$0xf]
    %v6279 = vld [vmem:[%s13 + $0x148] sm:$0xf]
    %v6280 = vld [vmem:[%s13 + $0x14c] sm:$0xf]
    %v6281 = vld [vmem:[%s13 + $0x150] sm:$0xf]
    %v6282 = vld [vmem:[%s13 + $0x154] sm:$0xf]
    %v6283 = vld [vmem:[%s13 + $0x158] sm:$0xf]
    %v6284 = vld [vmem:[%s13 + $0x15c] sm:$0xf]
    %v6285 = vld [vmem:[%s13 + $0x160] sm:$0xf]
    %v6286 = vld [vmem:[%s13 + $0x164] sm:$0xf]
    %v6287 = vld [vmem:[%s13 + $0x168] sm:$0xf]
    %v6288 = vld [vmem:[%s13 + $0x16c] sm:$0xf]
    %v6289 = vld [vmem:[%s13 + $0x170] sm:$0xf]
    %v6290 = vld [vmem:[%s13 + $0x174] sm:$0xf]
    %v6291 = vld [vmem:[%s13 + $0x178] sm:$0xf]
    %v6292 = vld [vmem:[%s13 + $0x17c] sm:$0xf]
    %v6293 = vld [vmem:[%s13 + $0x180] sm:$0xf]
    %v6294 = vld [vmem:[%s13 + $0x184] sm:$0xf]
    %v6295 = vld [vmem:[%s13 + $0x188] sm:$0xf]
    %v6296 = vld [vmem:[%s13 + $0x18c] sm:$0xf]
    %v6297 = vld [vmem:[%s13 + $0x190] sm:$0xf]
    %v6298 = vld [vmem:[%s13 + $0x194] sm:$0xf]
    %v6299 = vld [vmem:[%s13 + $0x198] sm:$0xf]
    %v6300 = vld [vmem:[%s13 + $0x19c] sm:$0xf]
    %v6301 = vld [vmem:[%s13 + $0x1a0] sm:$0xf]
    %v6302 = vld [vmem:[%s13 + $0x1a4] sm:$0xf]
    %v6303 = vld [vmem:[%s13 + $0x1a8] sm:$0xf]
    %v6304 = vld [vmem:[%s13 + $0x1ac] sm:$0xf]
    %v6305 = vld [vmem:[%s13 + $0x1b0] sm:$0xf]
    %v6306 = vld [vmem:[%s13 + $0x1b4] sm:$0xf]
    %v6307 = vld [vmem:[%s13 + $0x1b8] sm:$0xf]
    %v6308 = vld [vmem:[%s13 + $0x1bc] sm:$0xf]
    %v6309 = vld [vmem:[%s13 + $0x1c0] sm:$0xf]
    %v6310 = vld [vmem:[%s13 + $0x1c4] sm:$0xf]
    %v6311 = vld [vmem:[%s13 + $0x1c8] sm:$0xf]
    %v6312 = vld [vmem:[%s13 + $0x1cc] sm:$0xf]
    %v6313 = vld [vmem:[%s13 + $0x1d0] sm:$0xf]
    %v6314 = vld [vmem:[%s13 + $0x1d4] sm:$0xf]
    %v6315 = vld [vmem:[%s13 + $0x1d8] sm:$0xf]
    %v6316 = vld [vmem:[%s13 + $0x1dc] sm:$0xf]
    %v6317 = vld [vmem:[%s13 + $0x1e0] sm:$0xf]
    %v6318 = vld [vmem:[%s13 + $0x1e4] sm:$0xf]
    %v6319 = vld [vmem:[%s13 + $0x1e8] sm:$0xf]
    %v6320 = vld [vmem:[%s13 + $0x1ec] sm:$0xf]
    %v6321 = vld [vmem:[%s13 + $0x1f0] sm:$0xf]
    %v6322 = vld [vmem:[%s13 + $0x1f4] sm:$0xf]
    %v6323 = vld [vmem:[%s13 + $0x1f8] sm:$0xf]
    %v6324 = vld [vmem:[%s13 + $0x1fc] sm:$0xf]
    %v6325 = vld [vmem:[%s13 + $0x200] sm:$0xf]
    %v6326 = vld [vmem:[%s13 + $0x204] sm:$0xf]
    %v6327 = vld [vmem:[%s13 + $0x208] sm:$0xf]
    %v6328 = vld [vmem:[%s13 + $0x20c] sm:$0xf]
    %v6329 = vld [vmem:[%s13 + $0x210] sm:$0xf]
    %v6330 = vld [vmem:[%s13 + $0x214] sm:$0xf]
    %v6331 = vld [vmem:[%s13 + $0x218] sm:$0xf]
    %v6332 = vld [vmem:[%s13 + $0x21c] sm:$0xf]
    %v6333 = vld [vmem:[%s13 + $0x220] sm:$0xf]
    %v6334 = vld [vmem:[%s13 + $0x224] sm:$0xf]
    %v6335 = vld [vmem:[%s13 + $0x228] sm:$0xf]
    %v6336 = vld [vmem:[%s13 + $0x22c] sm:$0xf]
    %v6337 = vld [vmem:[%s13 + $0x230] sm:$0xf]
    %v6338 = vld [vmem:[%s13 + $0x234] sm:$0xf]
    %v6339 = vld [vmem:[%s13 + $0x238] sm:$0xf]
    %v6340 = vld [vmem:[%s13 + $0x23c] sm:$0xf]
    %v6341 = vld [vmem:[%s13 + $0x240] sm:$0xf]
    %v6342 = vld [vmem:[%s13 + $0x244] sm:$0xf]
    %v6343 = vld [vmem:[%s13 + $0x248] sm:$0xf]
    %v6344 = vld [vmem:[%s13 + $0x24c] sm:$0xf]
    %v6345 = vld [vmem:[%s13 + $0x250] sm:$0xf]
    %v6346 = vld [vmem:[%s13 + $0x254] sm:$0xf]
    %v6347 = vld [vmem:[%s13 + $0x258] sm:$0xf]
    %v6348 = vld [vmem:[%s13 + $0x25c] sm:$0xf]
    %v6349 = vld [vmem:[%s13 + $0x260] sm:$0xf]
    %v6350 = vld [vmem:[%s13 + $0x264] sm:$0xf]
    %v6351 = vld [vmem:[%s13 + $0x268] sm:$0xf]
    %v6352 = vld [vmem:[%s13 + $0x26c] sm:$0xf]
    %v6353 = vld [vmem:[%s13 + $0x270] sm:$0xf]
    %v6354 = vld [vmem:[%s13 + $0x274] sm:$0xf]
    %v6355 = vld [vmem:[%s13 + $0x278] sm:$0xf]
    %v6356 = vld [vmem:[%s13 + $0x27c] sm:$0xf]
    %v6357 = vld [vmem:[%s13 + $0x280] sm:$0xf]
    %v6358 = vld [vmem:[%s13 + $0x284] sm:$0xf]
    %v6359 = vld [vmem:[%s13 + $0x288] sm:$0xf]
    %v6360 = vld [vmem:[%s13 + $0x28c] sm:$0xf]
    %v6361 = vld [vmem:[%s13 + $0x290] sm:$0xf]
    %v6362 = vld [vmem:[%s13 + $0x294] sm:$0xf]
    %v6363 = vld [vmem:[%s13 + $0x298] sm:$0xf]
    %v6364 = vld [vmem:[%s13 + $0x29c] sm:$0xf]
    %v6365 = vld [vmem:[%s13 + $0x2a0] sm:$0xf]
    %v6366 = vld [vmem:[%s13 + $0x2a4] sm:$0xf]
    %v6367 = vld [vmem:[%s13 + $0x2a8] sm:$0xf]
    %v6368 = vld [vmem:[%s13 + $0x2ac] sm:$0xf]
    %v6369 = vld [vmem:[%s13 + $0x2b0] sm:$0xf]
    %v6370 = vld [vmem:[%s13 + $0x2b4] sm:$0xf]
    %v6371 = vld [vmem:[%s13 + $0x2b8] sm:$0xf]
    %v6372 = vld [vmem:[%s13 + $0x2bc] sm:$0xf]
    %v6373 = vld [vmem:[%s13 + $0x2c0] sm:$0xf]
    %v6374 = vld [vmem:[%s13 + $0x2c4] sm:$0xf]
    %v6375 = vld [vmem:[%s13 + $0x2c8] sm:$0xf]
    %v6376 = vld [vmem:[%s13 + $0x2cc] sm:$0xf]
    %v6377 = vld [vmem:[%s13 + $0x2d0] sm:$0xf]
    %v6378 = vld [vmem:[%s13 + $0x2d4] sm:$0xf]
    %v6379 = vld [vmem:[%s13 + $0x2d8] sm:$0xf]
    %v6380 = vld [vmem:[%s13 + $0x2dc] sm:$0xf]
    %v6381 = vld [vmem:[%s13 + $0x2e0] sm:$0xf]
    %v6382 = vld [vmem:[%s13 + $0x2e4] sm:$0xf]
    %v6383 = vld [vmem:[%s13 + $0x2e8] sm:$0xf]
    %v6384 = vld [vmem:[%s13 + $0x2ec] sm:$0xf]
    %v6385 = vld [vmem:[%s13 + $0x2f0] sm:$0xf]
    %v6386 = vld [vmem:[%s13 + $0x2f4] sm:$0xf]
    %v6387 = vld [vmem:[%s13 + $0x2f8] sm:$0xf]
    %v6388 = vld [vmem:[%s13 + $0x2fc] sm:$0xf]
    %v6389 = vld [vmem:[%s13 + $0x300] sm:$0xf]
    %v6390 = vld [vmem:[%s13 + $0x304] sm:$0xf]
    %v6391 = vld [vmem:[%s13 + $0x308] sm:$0xf]
    %v6392 = vld [vmem:[%s13 + $0x30c] sm:$0xf]
    %v6393 = vld [vmem:[%s13 + $0x310] sm:$0xf]
    %v6394 = vld [vmem:[%s13 + $0x314] sm:$0xf]
    %v6395 = vld [vmem:[%s13 + $0x318] sm:$0xf]
    %v6396 = vld [vmem:[%s13 + $0x31c] sm:$0xf]
    %v6397 = vld [vmem:[%s13 + $0x320] sm:$0xf]
    %v6398 = vld [vmem:[%s13 + $0x324] sm:$0xf]
    %v6399 = vld [vmem:[%s13 + $0x328] sm:$0xf]
    %v6400 = vld [vmem:[%s13 + $0x32c] sm:$0xf]
    %v6401 = vld [vmem:[%s13 + $0x330] sm:$0xf]
    %v6402 = vld [vmem:[%s13 + $0x334] sm:$0xf]
    %v6403 = vld [vmem:[%s13 + $0x338] sm:$0xf]
    %v6404 = vld [vmem:[%s13 + $0x33c] sm:$0xf]
    %v6405 = vld [vmem:[%s13 + $0x340] sm:$0xf]
    %v6406 = vld [vmem:[%s13 + $0x344] sm:$0xf]
    %v6407 = vld [vmem:[%s13 + $0x348] sm:$0xf]
    %v6408 = vld [vmem:[%s13 + $0x34c] sm:$0xf]
    %v6409 = vld [vmem:[%s13 + $0x350] sm:$0xf]
    %v6410 = vld [vmem:[%s13 + $0x354] sm:$0xf]
    %v6411 = vld [vmem:[%s13 + $0x358] sm:$0xf]
    %v6412 = vld [vmem:[%s13 + $0x35c] sm:$0xf]
    %v6413 = vld [vmem:[%s13 + $0x360] sm:$0xf]
    %v6414 = vld [vmem:[%s13 + $0x364] sm:$0xf]
    %v6415 = vld [vmem:[%s13 + $0x368] sm:$0xf]
    %v6416 = vld [vmem:[%s13 + $0x36c] sm:$0xf]
    %v6417 = vld [vmem:[%s13 + $0x370] sm:$0xf]
    %v6418 = vld [vmem:[%s13 + $0x374] sm:$0xf]
    %v6419 = vld [vmem:[%s13 + $0x378] sm:$0xf]
    %v6420 = vld [vmem:[%s13 + $0x37c] sm:$0xf]
    %v6645 = vunpack.c.l.b16 %v6197
    %v6646 = vunpack.c.l.b16 %v6198
    %v6647 = vunpack.c.l.b16 %v6199
    %v6648 = vunpack.c.l.b16 %v6200
    %v6649 = vunpack.c.l.b16 %v6201
    %v6650 = vunpack.c.l.b16 %v6202
    %v6651 = vunpack.c.l.b16 %v6203
    %v6652 = vunpack.c.l.b16 %v6204
    %v6653 = vunpack.c.l.b16 %v6205
    %v6654 = vunpack.c.l.b16 %v6206
    %v6655 = vunpack.c.l.b16 %v6207
    %v6656 = vunpack.c.l.b16 %v6208
    %v6657 = vunpack.c.l.b16 %v6209
    %v6658 = vunpack.c.l.b16 %v6210
    %v6659 = vunpack.c.l.b16 %v6211
    %v6660 = vunpack.c.l.b16 %v6212
    %v6661 = vunpack.c.l.b16 %v6213
    %v6662 = vunpack.c.l.b16 %v6214
    %v6663 = vunpack.c.l.b16 %v6215
    %v6664 = vunpack.c.l.b16 %v6216
    %v6665 = vunpack.c.l.b16 %v6217
    %v6666 = vunpack.c.l.b16 %v6218
    %v6667 = vunpack.c.l.b16 %v6219
    %v6668 = vunpack.c.l.b16 %v6220
    %v6669 = vunpack.c.l.b16 %v6221
    %v6670 = vunpack.c.l.b16 %v6222
    %v6671 = vunpack.c.l.b16 %v6223
    %v6672 = vunpack.c.l.b16 %v6224
    %v6673 = vunpack.c.l.b16 %v6225
    %v6674 = vunpack.c.l.b16 %v6226
    %v6675 = vunpack.c.l.b16 %v6227
    %v6676 = vunpack.c.l.b16 %v6228
    %v6677 = vunpack.c.l.b16 %v6229
    %v6678 = vunpack.c.l.b16 %v6230
    %v6679 = vunpack.c.l.b16 %v6231
    %v6680 = vunpack.c.l.b16 %v6232
    %v6681 = vunpack.c.l.b16 %v6233
    %v6682 = vunpack.c.l.b16 %v6234
    %v6683 = vunpack.c.l.b16 %v6235
    %v6684 = vunpack.c.l.b16 %v6236
    %v6685 = vunpack.c.l.b16 %v6237
    %v6686 = vunpack.c.l.b16 %v6238
    %v6687 = vunpack.c.l.b16 %v6239
    %v6688 = vunpack.c.l.b16 %v6240
    %v6689 = vunpack.c.l.b16 %v6241
    %v6690 = vunpack.c.l.b16 %v6242
    %v6691 = vunpack.c.l.b16 %v6243
    %v6692 = vunpack.c.l.b16 %v6244
    %v6693 = vunpack.c.l.b16 %v6245
    %v6694 = vunpack.c.l.b16 %v6246
    %v6695 = vunpack.c.l.b16 %v6247
    %v6696 = vunpack.c.l.b16 %v6248
    %v6697 = vunpack.c.l.b16 %v6249
    %v6698 = vunpack.c.l.b16 %v6250
    %v6699 = vunpack.c.l.b16 %v6251
    %v6700 = vunpack.c.l.b16 %v6252
    %v6701 = vunpack.c.l.b16 %v6253
    %v6702 = vunpack.c.l.b16 %v6254
    %v6703 = vunpack.c.l.b16 %v6255
    %v6704 = vunpack.c.l.b16 %v6256
    %v6705 = vunpack.c.l.b16 %v6257
    %v6706 = vunpack.c.l.b16 %v6258
    %v6707 = vunpack.c.l.b16 %v6259
    %v6708 = vunpack.c.l.b16 %v6260
    %v6709 = vunpack.c.l.b16 %v6261
    %v6710 = vunpack.c.l.b16 %v6262
    %v6711 = vunpack.c.l.b16 %v6263
    %v6712 = vunpack.c.l.b16 %v6264
    %v6713 = vunpack.c.l.b16 %v6265
    %v6714 = vunpack.c.l.b16 %v6266
    %v6715 = vunpack.c.l.b16 %v6267
    %v6716 = vunpack.c.l.b16 %v6268
    %v6717 = vunpack.c.l.b16 %v6269
    %v6718 = vunpack.c.l.b16 %v6270
    %v6719 = vunpack.c.l.b16 %v6271
    %v6720 = vunpack.c.l.b16 %v6272
    %v6721 = vunpack.c.l.b16 %v6273
    %v6722 = vunpack.c.l.b16 %v6274
    %v6723 = vunpack.c.l.b16 %v6275
    %v6724 = vunpack.c.l.b16 %v6276
    %v6725 = vunpack.c.l.b16 %v6277
    %v6726 = vunpack.c.l.b16 %v6278
    %v6727 = vunpack.c.l.b16 %v6279
    %v6728 = vunpack.c.l.b16 %v6280
    %v6729 = vunpack.c.l.b16 %v6281
    %v6730 = vunpack.c.l.b16 %v6282
    %v6731 = vunpack.c.l.b16 %v6283
    %v6732 = vunpack.c.l.b16 %v6284
    %v6733 = vunpack.c.l.b16 %v6285
    %v6734 = vunpack.c.l.b16 %v6286
    %v6735 = vunpack.c.l.b16 %v6287
    %v6736 = vunpack.c.l.b16 %v6288
    %v6737 = vunpack.c.l.b16 %v6289
    %v6738 = vunpack.c.l.b16 %v6290
    %v6739 = vunpack.c.l.b16 %v6291
    %v6740 = vunpack.c.l.b16 %v6292
    %v6741 = vunpack.c.l.b16 %v6293
    %v6742 = vunpack.c.l.b16 %v6294
    %v6743 = vunpack.c.l.b16 %v6295
    %v6744 = vunpack.c.l.b16 %v6296
    %v6745 = vunpack.c.l.b16 %v6297
    %v6746 = vunpack.c.l.b16 %v6298
    %v6747 = vunpack.c.l.b16 %v6299
    %v6748 = vunpack.c.l.b16 %v6300
    %v6749 = vunpack.c.l.b16 %v6301
    %v6750 = vunpack.c.l.b16 %v6302
    %v6751 = vunpack.c.l.b16 %v6303
    %v6752 = vunpack.c.l.b16 %v6304
    %v6753 = vunpack.c.l.b16 %v6305
    %v6754 = vunpack.c.l.b16 %v6306
    %v6755 = vunpack.c.l.b16 %v6307
    %v6756 = vunpack.c.l.b16 %v6308
    %v6757 = vunpack.c.l.b16 %v6309
    %v6758 = vunpack.c.l.b16 %v6310
    %v6759 = vunpack.c.l.b16 %v6311
    %v6760 = vunpack.c.l.b16 %v6312
    %v6761 = vunpack.c.l.b16 %v6313
    %v6762 = vunpack.c.l.b16 %v6314
    %v6763 = vunpack.c.l.b16 %v6315
    %v6764 = vunpack.c.l.b16 %v6316
    %v6765 = vunpack.c.l.b16 %v6317
    %v6766 = vunpack.c.l.b16 %v6318
    %v6767 = vunpack.c.l.b16 %v6319
    %v6768 = vunpack.c.l.b16 %v6320
    %v6769 = vunpack.c.l.b16 %v6321
    %v6770 = vunpack.c.l.b16 %v6322
    %v6771 = vunpack.c.l.b16 %v6323
    %v6772 = vunpack.c.l.b16 %v6324
    %v6773 = vunpack.c.l.b16 %v6325
    %v6774 = vunpack.c.l.b16 %v6326
    %v6775 = vunpack.c.l.b16 %v6327
    %v6776 = vunpack.c.l.b16 %v6328
    %v6777 = vunpack.c.l.b16 %v6329
    %v6778 = vunpack.c.l.b16 %v6330
    %v6779 = vunpack.c.l.b16 %v6331
    %v6780 = vunpack.c.l.b16 %v6332
    %v6781 = vunpack.c.l.b16 %v6333
    %v6782 = vunpack.c.l.b16 %v6334
    %v6783 = vunpack.c.l.b16 %v6335
    %v6784 = vunpack.c.l.b16 %v6336
    %v6785 = vunpack.c.l.b16 %v6337
    %v6786 = vunpack.c.l.b16 %v6338
    %v6787 = vunpack.c.l.b16 %v6339
    %v6788 = vunpack.c.l.b16 %v6340
    %v6789 = vunpack.c.l.b16 %v6341
    %v6790 = vunpack.c.l.b16 %v6342
    %v6791 = vunpack.c.l.b16 %v6343
    %v6792 = vunpack.c.l.b16 %v6344
    %v6793 = vunpack.c.l.b16 %v6345
    %v6794 = vunpack.c.l.b16 %v6346
    %v6795 = vunpack.c.l.b16 %v6347
    %v6796 = vunpack.c.l.b16 %v6348
    %v6797 = vunpack.c.l.b16 %v6349
    %v6798 = vunpack.c.l.b16 %v6350
    %v6799 = vunpack.c.l.b16 %v6351
    %v6800 = vunpack.c.l.b16 %v6352
    %v6801 = vunpack.c.l.b16 %v6353
    %v6802 = vunpack.c.l.b16 %v6354
    %v6803 = vunpack.c.l.b16 %v6355
    %v6804 = vunpack.c.l.b16 %v6356
    %v6805 = vunpack.c.l.b16 %v6357
    %v6806 = vunpack.c.l.b16 %v6358
    %v6807 = vunpack.c.l.b16 %v6359
    %v6808 = vunpack.c.l.b16 %v6360
    %v6809 = vunpack.c.l.b16 %v6361
    %v6810 = vunpack.c.l.b16 %v6362
    %v6811 = vunpack.c.l.b16 %v6363
    %v6812 = vunpack.c.l.b16 %v6364
    %v6813 = vunpack.c.l.b16 %v6365
    %v6814 = vunpack.c.l.b16 %v6366
    %v6815 = vunpack.c.l.b16 %v6367
    %v6816 = vunpack.c.l.b16 %v6368
    %v6817 = vunpack.c.l.b16 %v6369
    %v6818 = vunpack.c.l.b16 %v6370
    %v6819 = vunpack.c.l.b16 %v6371
    %v6820 = vunpack.c.l.b16 %v6372
    %v6821 = vunpack.c.l.b16 %v6373
    %v6822 = vunpack.c.l.b16 %v6374
    %v6823 = vunpack.c.l.b16 %v6375
    %v6824 = vunpack.c.l.b16 %v6376
    %v6825 = vunpack.c.l.b16 %v6377
    %v6826 = vunpack.c.l.b16 %v6378
    %v6827 = vunpack.c.l.b16 %v6379
    %v6828 = vunpack.c.l.b16 %v6380
    %v6829 = vunpack.c.l.b16 %v6381
    %v6830 = vunpack.c.l.b16 %v6382
    %v6831 = vunpack.c.l.b16 %v6383
    %v6832 = vunpack.c.l.b16 %v6384
    %v6833 = vunpack.c.l.b16 %v6385
    %v6834 = vunpack.c.l.b16 %v6386
    %v6835 = vunpack.c.l.b16 %v6387
    %v6836 = vunpack.c.l.b16 %v6388
    %v6837 = vunpack.c.l.b16 %v6389
    %v6838 = vunpack.c.l.b16 %v6390
    %v6839 = vunpack.c.l.b16 %v6391
    %v6840 = vunpack.c.l.b16 %v6392
    %v6841 = vunpack.c.l.b16 %v6393
    %v6842 = vunpack.c.l.b16 %v6394
    %v6843 = vunpack.c.l.b16 %v6395
    %v6844 = vunpack.c.l.b16 %v6396
    %v6845 = vunpack.c.l.b16 %v6397
    %v6846 = vunpack.c.l.b16 %v6398
    %v6847 = vunpack.c.l.b16 %v6399
    %v6848 = vunpack.c.l.b16 %v6400
    %v6849 = vunpack.c.l.b16 %v6401
    %v6850 = vunpack.c.l.b16 %v6402
    %v6851 = vunpack.c.l.b16 %v6403
    %v6852 = vunpack.c.l.b16 %v6404
    %v6853 = vunpack.c.l.b16 %v6405
    %v6854 = vunpack.c.l.b16 %v6406
    %v6855 = vunpack.c.l.b16 %v6407
    %v6856 = vunpack.c.l.b16 %v6408
    %v6857 = vunpack.c.l.b16 %v6409
    %v6858 = vunpack.c.l.b16 %v6410
    %v6859 = vunpack.c.l.b16 %v6411
    %v6860 = vunpack.c.l.b16 %v6412
    %v6861 = vunpack.c.l.b16 %v6413
    %v6862 = vunpack.c.l.b16 %v6414
    %v6863 = vunpack.c.l.b16 %v6415
    %v6864 = vunpack.c.l.b16 %v6416
    %v6865 = vunpack.c.l.b16 %v6417
    %v6866 = vunpack.c.l.b16 %v6418
    %v6867 = vunpack.c.l.b16 %v6419
    %v6868 = vunpack.c.l.b16 %v6420
    %v6869 = vpack.c.b16 %v6646, %v6645
    %v6870 = vpack.c.b16 %v6648, %v6647
    %v6871 = vpack.c.b16 %v6650, %v6649
    %v6872 = vpack.c.b16 %v6652, %v6651
    %v6873 = vpack.c.b16 %v6654, %v6653
    %v6874 = vpack.c.b16 %v6656, %v6655
    %v6875 = vpack.c.b16 %v6658, %v6657
    %v6876 = vpack.c.b16 %v6660, %v6659
    %v6877 = vpack.c.b16 %v6662, %v6661
    %v6878 = vpack.c.b16 %v6664, %v6663
    %v6879 = vpack.c.b16 %v6666, %v6665
    %v6880 = vpack.c.b16 %v6668, %v6667
    %v6881 = vpack.c.b16 %v6670, %v6669
    %v6882 = vpack.c.b16 %v6672, %v6671
    %v6883 = vpack.c.b16 %v6674, %v6673
    %v6884 = vpack.c.b16 %v6676, %v6675
    %v6885 = vpack.c.b16 %v6678, %v6677
    %v6886 = vpack.c.b16 %v6680, %v6679
    %v6887 = vpack.c.b16 %v6682, %v6681
    %v6888 = vpack.c.b16 %v6684, %v6683
    %v6889 = vpack.c.b16 %v6686, %v6685
    %v6890 = vpack.c.b16 %v6688, %v6687
    %v6891 = vpack.c.b16 %v6690, %v6689
    %v6892 = vpack.c.b16 %v6692, %v6691
    %v6893 = vpack.c.b16 %v6694, %v6693
    %v6894 = vpack.c.b16 %v6696, %v6695
    %v6895 = vpack.c.b16 %v6698, %v6697
    %v6896 = vpack.c.b16 %v6700, %v6699
    %v6897 = vpack.c.b16 %v6702, %v6701
    %v6898 = vpack.c.b16 %v6704, %v6703
    %v6899 = vpack.c.b16 %v6706, %v6705
    %v6900 = vpack.c.b16 %v6708, %v6707
    %v6901 = vpack.c.b16 %v6710, %v6709
    %v6902 = vpack.c.b16 %v6712, %v6711
    %v6903 = vpack.c.b16 %v6714, %v6713
    %v6904 = vpack.c.b16 %v6716, %v6715
    %v6905 = vpack.c.b16 %v6718, %v6717
    %v6906 = vpack.c.b16 %v6720, %v6719
    %v6907 = vpack.c.b16 %v6722, %v6721
    %v6908 = vpack.c.b16 %v6724, %v6723
    %v6909 = vpack.c.b16 %v6726, %v6725
    %v6910 = vpack.c.b16 %v6728, %v6727
    %v6911 = vpack.c.b16 %v6730, %v6729
    %v6912 = vpack.c.b16 %v6732, %v6731
    %v6913 = vpack.c.b16 %v6734, %v6733
    %v6914 = vpack.c.b16 %v6736, %v6735
    %v6915 = vpack.c.b16 %v6738, %v6737
    %v6916 = vpack.c.b16 %v6740, %v6739
    %v6917 = vpack.c.b16 %v6742, %v6741
    %v6918 = vpack.c.b16 %v6744, %v6743
    %v6919 = vpack.c.b16 %v6746, %v6745
    %v6920 = vpack.c.b16 %v6748, %v6747
    %v6921 = vpack.c.b16 %v6750, %v6749
    %v6922 = vpack.c.b16 %v6752, %v6751
    %v6923 = vpack.c.b16 %v6754, %v6753
    %v6924 = vpack.c.b16 %v6756, %v6755
    %v6925 = vpack.c.b16 %v6758, %v6757
    %v6926 = vpack.c.b16 %v6760, %v6759
    %v6927 = vpack.c.b16 %v6762, %v6761
    %v6928 = vpack.c.b16 %v6764, %v6763
    %v6929 = vpack.c.b16 %v6766, %v6765
    %v6930 = vpack.c.b16 %v6768, %v6767
    %v6931 = vpack.c.b16 %v6770, %v6769
    %v6932 = vpack.c.b16 %v6772, %v6771
    %v6933 = vpack.c.b16 %v6774, %v6773
    %v6934 = vpack.c.b16 %v6776, %v6775
    %v6935 = vpack.c.b16 %v6778, %v6777
    %v6936 = vpack.c.b16 %v6780, %v6779
    %v6937 = vpack.c.b16 %v6782, %v6781
    %v6938 = vpack.c.b16 %v6784, %v6783
    %v6939 = vpack.c.b16 %v6786, %v6785
    %v6940 = vpack.c.b16 %v6788, %v6787
    %v6941 = vpack.c.b16 %v6790, %v6789
    %v6942 = vpack.c.b16 %v6792, %v6791
    %v6943 = vpack.c.b16 %v6794, %v6793
    %v6944 = vpack.c.b16 %v6796, %v6795
    %v6945 = vpack.c.b16 %v6798, %v6797
    %v6946 = vpack.c.b16 %v6800, %v6799
    %v6947 = vpack.c.b16 %v6802, %v6801
    %v6948 = vpack.c.b16 %v6804, %v6803
    %v6949 = vpack.c.b16 %v6806, %v6805
    %v6950 = vpack.c.b16 %v6808, %v6807
    %v6951 = vpack.c.b16 %v6810, %v6809
    %v6952 = vpack.c.b16 %v6812, %v6811
    %v6953 = vpack.c.b16 %v6814, %v6813
    %v6954 = vpack.c.b16 %v6816, %v6815
    %v6955 = vpack.c.b16 %v6818, %v6817
    %v6956 = vpack.c.b16 %v6820, %v6819
    %v6957 = vpack.c.b16 %v6822, %v6821
    %v6958 = vpack.c.b16 %v6824, %v6823
    %v6959 = vpack.c.b16 %v6826, %v6825
    %v6960 = vpack.c.b16 %v6828, %v6827
    %v6961 = vpack.c.b16 %v6830, %v6829
    %v6962 = vpack.c.b16 %v6832, %v6831
    %v6963 = vpack.c.b16 %v6834, %v6833
    %v6964 = vpack.c.b16 %v6836, %v6835
    %v6965 = vpack.c.b16 %v6838, %v6837
    %v6966 = vpack.c.b16 %v6840, %v6839
    %v6967 = vpack.c.b16 %v6842, %v6841
    %v6968 = vpack.c.b16 %v6844, %v6843
    %v6969 = vpack.c.b16 %v6846, %v6845
    %v6970 = vpack.c.b16 %v6848, %v6847
    %v6971 = vpack.c.b16 %v6850, %v6849
    %v6972 = vpack.c.b16 %v6852, %v6851
    %v6973 = vpack.c.b16 %v6854, %v6853
    %v6974 = vpack.c.b16 %v6856, %v6855
    %v6975 = vpack.c.b16 %v6858, %v6857
    %v6976 = vpack.c.b16 %v6860, %v6859
    %v6977 = vpack.c.b16 %v6862, %v6861
    %v6978 = vpack.c.b16 %v6864, %v6863
    %v6979 = vpack.c.b16 %v6866, %v6865
    %v6980 = vpack.c.b16 %v6868, %v6867
    %7093 = vmatprep.subr.bf16.mxu0 0
    %7094 = vmatpush1.bf16.msra.mxu0 %v6869
    %7095 = vmatprep.subr.bf16.mxu0 0
    %7096 = vmatpush1.bf16.msra.mxu0 %v6870
    %7097 = vmatprep.subr.bf16.mxu0 0
    %7098 = vmatpush1.bf16.msra.mxu0 %v6871
    %7099 = vmatprep.subr.bf16.mxu0 0
    %7100 = vmatpush1.bf16.msra.mxu0 %v6872
    %7101 = vmatprep.subr.bf16.mxu0 0
    %7102 = vmatpush1.bf16.msra.mxu0 %v6873
    %7103 = vmatprep.subr.bf16.mxu0 0
    %7104 = vmatpush1.bf16.msra.mxu0 %v6874
    %7105 = vmatprep.subr.bf16.mxu0 0
    %7106 = vmatpush1.bf16.msra.mxu0 %v6875
    %7107 = vmatprep.subr.bf16.mxu0 0
    %7108 = vmatpush1.bf16.msra.mxu0 %v6876
    %7109 = vmatprep.subr.bf16.mxu0 0
    %7110 = vmatpush1.bf16.msra.mxu0 %v6877
    %7111 = vmatprep.subr.bf16.mxu0 0
    %7112 = vmatpush1.bf16.msra.mxu0 %v6878
    %7113 = vmatprep.subr.bf16.mxu0 0
    %7114 = vmatpush1.bf16.msra.mxu0 %v6879
    %7115 = vmatprep.subr.bf16.mxu0 0
    %7116 = vmatpush1.bf16.msra.mxu0 %v6880
    %7117 = vmatprep.subr.bf16.mxu0 0
    %7118 = vmatpush1.bf16.msra.mxu0 %v6881
    %7119 = vmatprep.subr.bf16.mxu0 0
    %7120 = vmatpush1.bf16.msra.mxu0 %v6882
    %7121 = vmatprep.subr.bf16.mxu0 0
    %7122 = vmatpush1.bf16.msra.mxu0 %v6883
    %7123 = vmatprep.subr.bf16.mxu0 0
    %7124 = vmatpush1.bf16.msra.mxu0 %v6884
    %7125 = vmatprep.mubr.bf16.mxu0 %v6184
    %7126 = vmatmul.mubr.bf16.gmra.mrb[0].mxu0 %v6183
    %v7127 = vpop.f32.mrb[0].mxu0
    %v7128 = vadd.f32 0.0, %v7127
    %v7129 = vpop.f32.mrb[0].mxu0
    %v7130 = vpop.f32.mrb[0].mxu0
    %v7131 = vpop.f32.mrb[0].mxu0
    %7132 = vdwg.mxu0
    %7133 = vmatprep.subr.bf16.mxu0 0
    %7134 = vmatpush1.bf16.msra.mxu0 %v6885
    %7135 = vmatprep.subr.bf16.mxu0 0
    %7136 = vmatpush1.bf16.msra.mxu0 %v6886
    %7137 = vmatprep.subr.bf16.mxu0 0
    %7138 = vmatpush1.bf16.msra.mxu0 %v6887
    %7139 = vmatprep.subr.bf16.mxu0 0
    %7140 = vmatpush1.bf16.msra.mxu0 %v6888
    %7141 = vmatprep.subr.bf16.mxu0 0
    %7142 = vmatpush1.bf16.msra.mxu0 %v6889
    %7143 = vmatprep.subr.bf16.mxu0 0
    %7144 = vmatpush1.bf16.msra.mxu0 %v6890
    %7145 = vmatprep.subr.bf16.mxu0 0
    %7146 = vmatpush1.bf16.msra.mxu0 %v6891
    %7147 = vmatprep.subr.bf16.mxu0 0
    %7148 = vmatpush1.bf16.msra.mxu0 %v6892
    %7149 = vmatprep.subr.bf16.mxu0 0
    %7150 = vmatpush1.bf16.msra.mxu0 %v6893
    %7151 = vmatprep.subr.bf16.mxu0 0
    %7152 = vmatpush1.bf16.msra.mxu0 %v6894
    %7153 = vmatprep.subr.bf16.mxu0 0
    %7154 = vmatpush1.bf16.msra.mxu0 %v6895
    %7155 = vmatprep.subr.bf16.mxu0 0
    %7156 = vmatpush1.bf16.msra.mxu0 %v6896
    %7157 = vmatprep.subr.bf16.mxu0 0
    %7158 = vmatpush1.bf16.msra.mxu0 %v6897
    %7159 = vmatprep.subr.bf16.mxu0 0
    %7160 = vmatpush1.bf16.msra.mxu0 %v6898
    %7161 = vmatprep.subr.bf16.mxu0 0
    %7162 = vmatpush1.bf16.msra.mxu0 %v6899
    %7163 = vmatprep.subr.bf16.mxu0 0
    %7164 = vmatpush1.bf16.msra.mxu0 %v6900
    %7165 = vmatprep.mubr.bf16.mxu0 %v6186
    %7166 = vmatmul.mubr.bf16.gmra.mrb[0].mxu0 %v6185
    %v7167 = vpop.f32.mrb[0].mxu0
    %v7168 = vadd.f32 %v7128, %v7167
    %v7169 = vpop.f32.mrb[0].mxu0
    %v7170 = vpop.f32.mrb[0].mxu0
    %v7171 = vpop.f32.mrb[0].mxu0
    %7172 = vdwg.mxu0
    %7173 = vmatprep.subr.bf16.mxu0 0
    %7174 = vmatpush1.bf16.msra.mxu0 %v6901
    %7175 = vmatprep.subr.bf16.mxu0 0
    %7176 = vmatpush1.bf16.msra.mxu0 %v6902
    %7177 = vmatprep.subr.bf16.mxu0 0
    %7178 = vmatpush1.bf16.msra.mxu0 %v6903
    %7179 = vmatprep.subr.bf16.mxu0 0
    %7180 = vmatpush1.bf16.msra.mxu0 %v6904
    %7181 = vmatprep.subr.bf16.mxu0 0
    %7182 = vmatpush1.bf16.msra.mxu0 %v6905
    %7183 = vmatprep.subr.bf16.mxu0 0
    %7184 = vmatpush1.bf16.msra.mxu0 %v6906
    %7185 = vmatprep.subr.bf16.mxu0 0
    %7186 = vmatpush1.bf16.msra.mxu0 %v6907
    %7187 = vmatprep.subr.bf16.mxu0 0
    %7188 = vmatpush1.bf16.msra.mxu0 %v6908
    %7189 = vmatprep.subr.bf16.mxu0 0
    %7190 = vmatpush1.bf16.msra.mxu0 %v6909
    %7191 = vmatprep.subr.bf16.mxu0 0
    %7192 = vmatpush1.bf16.msra.mxu0 %v6910
    %7193 = vmatprep.subr.bf16.mxu0 0
    %7194 = vmatpush1.bf16.msra.mxu0 %v6911
    %7195 = vmatprep.subr.bf16.mxu0 0
    %7196 = vmatpush1.bf16.msra.mxu0 %v6912
    %7197 = vmatprep.subr.bf16.mxu0 0
    %7198 = vmatpush1.bf16.msra.mxu0 %v6913
    %7199 = vmatprep.subr.bf16.mxu0 0
    %7200 = vmatpush1.bf16.msra.mxu0 %v6914
    %7201 = vmatprep.subr.bf16.mxu0 0
    %7202 = vmatpush1.bf16.msra.mxu0 %v6915
    %7203 = vmatprep.subr.bf16.mxu0 0
    %7204 = vmatpush1.bf16.msra.mxu0 %v6916
    %7205 = vmatprep.mubr.bf16.mxu0 %v6188
    %7206 = vmatmul.mubr.bf16.gmra.mrb[0].mxu0 %v6187
    %v7207 = vpop.f32.mrb[0].mxu0
    %v7208 = vadd.f32 %v7168, %v7207
    %v7209 = vpop.f32.mrb[0].mxu0
    %v7210 = vpop.f32.mrb[0].mxu0
    %v7211 = vpop.f32.mrb[0].mxu0
    %7212 = vdwg.mxu0
    %7213 = vmatprep.subr.bf16.mxu0 0
    %7214 = vmatpush1.bf16.msra.mxu0 %v6917
    %7215 = vmatprep.subr.bf16.mxu0 0
    %7216 = vmatpush1.bf16.msra.mxu0 %v6918
    %7217 = vmatprep.subr.bf16.mxu0 0
    %7218 = vmatpush1.bf16.msra.mxu0 %v6919
    %7219 = vmatprep.subr.bf16.mxu0 0
    %7220 = vmatpush1.bf16.msra.mxu0 %v6920
    %7221 = vmatprep.subr.bf16.mxu0 0
    %7222 = vmatpush1.bf16.msra.mxu0 %v6921
    %7223 = vmatprep.subr.bf16.mxu0 0
    %7224 = vmatpush1.bf16.msra.mxu0 %v6922
    %7225 = vmatprep.subr.bf16.mxu0 0
    %7226 = vmatpush1.bf16.msra.mxu0 %v6923
    %7227 = vmatprep.subr.bf16.mxu0 0
    %7228 = vmatpush1.bf16.msra.mxu0 %v6924
    %7229 = vmatprep.subr.bf16.mxu0 0
    %7230 = vmatpush1.bf16.msra.mxu0 %v6925
    %7231 = vmatprep.subr.bf16.mxu0 0
    %7232 = vmatpush1.bf16.msra.mxu0 %v6926
    %7233 = vmatprep.subr.bf16.mxu0 0
    %7234 = vmatpush1.bf16.msra.mxu0 %v6927
    %7235 = vmatprep.subr.bf16.mxu0 0
    %7236 = vmatpush1.bf16.msra.mxu0 %v6928
    %7237 = vmatprep.subr.bf16.mxu0 0
    %7238 = vmatpush1.bf16.msra.mxu0 %v6929
    %7239 = vmatprep.subr.bf16.mxu0 0
    %7240 = vmatpush1.bf16.msra.mxu0 %v6930
    %7241 = vmatprep.subr.bf16.mxu0 0
    %7242 = vmatpush1.bf16.msra.mxu0 %v6931
    %7243 = vmatprep.subr.bf16.mxu0 0
    %7244 = vmatpush1.bf16.msra.mxu0 %v6932
    %7245 = vmatprep.mubr.bf16.mxu0 %v6190
    %7246 = vmatmul.mubr.bf16.gmra.mrb[0].mxu0 %v6189
    %v7247 = vpop.f32.mrb[0].mxu0
    %v7248 = vadd.f32 %v7208, %v7247
    %v7249 = vpop.f32.mrb[0].mxu0
    %v7250 = vpop.f32.mrb[0].mxu0
    %v7251 = vpop.f32.mrb[0].mxu0
    %7252 = vdwg.mxu0
    %7253 = vmatprep.subr.bf16.mxu0 0
    %7254 = vmatpush1.bf16.msra.mxu0 %v6933
    %7255 = vmatprep.subr.bf16.mxu0 0
    %7256 = vmatpush1.bf16.msra.mxu0 %v6934
    %7257 = vmatprep.subr.bf16.mxu0 0
    %7258 = vmatpush1.bf16.msra.mxu0 %v6935
    %7259 = vmatprep.subr.bf16.mxu0 0
    %7260 = vmatpush1.bf16.msra.mxu0 %v6936
    %7261 = vmatprep.subr.bf16.mxu0 0
    %7262 = vmatpush1.bf16.msra.mxu0 %v6937
    %7263 = vmatprep.subr.bf16.mxu0 0
    %7264 = vmatpush1.bf16.msra.mxu0 %v6938
    %7265 = vmatprep.subr.bf16.mxu0 0
    %7266 = vmatpush1.bf16.msra.mxu0 %v6939
    %7267 = vmatprep.subr.bf16.mxu0 0
    %7268 = vmatpush1.bf16.msra.mxu0 %v6940
    %7269 = vmatprep.subr.bf16.mxu0 0
    %7270 = vmatpush1.bf16.msra.mxu0 %v6941
    %7271 = vmatprep.subr.bf16.mxu0 0
    %7272 = vmatpush1.bf16.msra.mxu0 %v6942
    %7273 = vmatprep.subr.bf16.mxu0 0
    %7274 = vmatpush1.bf16.msra.mxu0 %v6943
    %7275 = vmatprep.subr.bf16.mxu0 0
    %7276 = vmatpush1.bf16.msra.mxu0 %v6944
    %7277 = vmatprep.subr.bf16.mxu0 0
    %7278 = vmatpush1.bf16.msra.mxu0 %v6945
    %7279 = vmatprep.subr.bf16.mxu0 0
    %7280 = vmatpush1.bf16.msra.mxu0 %v6946
    %7281 = vmatprep.subr.bf16.mxu0 0
    %7282 = vmatpush1.bf16.msra.mxu0 %v6947
    %7283 = vmatprep.subr.bf16.mxu0 0
    %7284 = vmatpush1.bf16.msra.mxu0 %v6948
    %7285 = vmatprep.mubr.bf16.mxu0 %v6192
    %7286 = vmatmul.mubr.bf16.gmra.mrb[0].mxu0 %v6191
    %v7287 = vpop.f32.mrb[0].mxu0
    %v7288 = vadd.f32 %v7248, %v7287
    %v7289 = vpop.f32.mrb[0].mxu0
    %v7290 = vpop.f32.mrb[0].mxu0
    %v7291 = vpop.f32.mrb[0].mxu0
    %7292 = vdwg.mxu0
    %7293 = vmatprep.subr.bf16.mxu0 0
    %7294 = vmatpush1.bf16.msra.mxu0 %v6949
    %7295 = vmatprep.subr.bf16.mxu0 0
    %7296 = vmatpush1.bf16.msra.mxu0 %v6950
    %7297 = vmatprep.subr.bf16.mxu0 0
    %7298 = vmatpush1.bf16.msra.mxu0 %v6951
    %7299 = vmatprep.subr.bf16.mxu0 0
    %7300 = vmatpush1.bf16.msra.mxu0 %v6952
    %7301 = vmatprep.subr.bf16.mxu0 0
    %7302 = vmatpush1.bf16.msra.mxu0 %v6953
    %7303 = vmatprep.subr.bf16.mxu0 0
    %7304 = vmatpush1.bf16.msra.mxu0 %v6954
    %7305 = vmatprep.subr.bf16.mxu0 0
    %7306 = vmatpush1.bf16.msra.mxu0 %v6955
    %7307 = vmatprep.subr.bf16.mxu0 0
    %7308 = vmatpush1.bf16.msra.mxu0 %v6956
    %7309 = vmatprep.subr.bf16.mxu0 0
    %7310 = vmatpush1.bf16.msra.mxu0 %v6957
    %7311 = vmatprep.subr.bf16.mxu0 0
    %7312 = vmatpush1.bf16.msra.mxu0 %v6958
    %7313 = vmatprep.subr.bf16.mxu0 0
    %7314 = vmatpush1.bf16.msra.mxu0 %v6959
    %7315 = vmatprep.subr.bf16.mxu0 0
    %7316 = vmatpush1.bf16.msra.mxu0 %v6960
    %7317 = vmatprep.subr.bf16.mxu0 0
    %7318 = vmatpush1.bf16.msra.mxu0 %v6961
    %7319 = vmatprep.subr.bf16.mxu0 0
    %7320 = vmatpush1.bf16.msra.mxu0 %v6962
    %7321 = vmatprep.subr.bf16.mxu0 0
    %7322 = vmatpush1.bf16.msra.mxu0 %v6963
    %7323 = vmatprep.subr.bf16.mxu0 0
    %7324 = vmatpush1.bf16.msra.mxu0 %v6964
    %7325 = vmatprep.mubr.bf16.mxu0 %v6194
    %7326 = vmatmul.mubr.bf16.gmra.mrb[0].mxu0 %v6193
    %v7327 = vpop.f32.mrb[0].mxu0
    %v7328 = vadd.f32 %v7288, %v7327
    %v7329 = vpop.f32.mrb[0].mxu0
    %v7330 = vpop.f32.mrb[0].mxu0
    %v7331 = vpop.f32.mrb[0].mxu0
    %7332 = vdwg.mxu0
    %7333 = vmatprep.subr.bf16.mxu0 0
    %7334 = vmatpush1.bf16.msra.mxu0 %v6965
    %7335 = vmatprep.subr.bf16.mxu0 0
    %7336 = vmatpush1.bf16.msra.mxu0 %v6966
    %7337 = vmatprep.subr.bf16.mxu0 0
    %7338 = vmatpush1.bf16.msra.mxu0 %v6967
    %7339 = vmatprep.subr.bf16.mxu0 0
    %7340 = vmatpush1.bf16.msra.mxu0 %v6968
    %7341 = vmatprep.subr.bf16.mxu0 0
    %7342 = vmatpush1.bf16.msra.mxu0 %v6969
    %7343 = vmatprep.subr.bf16.mxu0 0
    %7344 = vmatpush1.bf16.msra.mxu0 %v6970
    %7345 = vmatprep.subr.bf16.mxu0 0
    %7346 = vmatpush1.bf16.msra.mxu0 %v6971
    %7347 = vmatprep.subr.bf16.mxu0 0
    %7348 = vmatpush1.bf16.msra.mxu0 %v6972
    %7349 = vmatprep.subr.bf16.mxu0 0
    %7350 = vmatpush1.bf16.msra.mxu0 %v6973
    %7351 = vmatprep.subr.bf16.mxu0 0
    %7352 = vmatpush1.bf16.msra.mxu0 %v6974
    %7353 = vmatprep.subr.bf16.mxu0 0
    %7354 = vmatpush1.bf16.msra.mxu0 %v6975
    %7355 = vmatprep.subr.bf16.mxu0 0
    %7356 = vmatpush1.bf16.msra.mxu0 %v6976
    %7357 = vmatprep.subr.bf16.mxu0 0
    %7358 = vmatpush1.bf16.msra.mxu0 %v6977
    %7359 = vmatprep.subr.bf16.mxu0 0
    %7360 = vmatpush1.bf16.msra.mxu0 %v6978
    %7361 = vmatprep.subr.bf16.mxu0 0
    %7362 = vmatpush1.bf16.msra.mxu0 %v6979
    %7363 = vmatprep.subr.bf16.mxu0 0
    %7364 = vmatpush1.bf16.msra.mxu0 %v6980
    %7365 = vmatprep.mubr.bf16.mxu0 %v6196
    %7366 = vmatmul.mubr.bf16.gmra.mrb[0].mxu0 %v6195
    %v7367 = vpop.f32.mrb[0].mxu0
    %v7368 = vadd.f32 %v7328, %v7367
    %v7369 = vpop.f32.mrb[0].mxu0
    %v7370 = vpop.f32.mrb[0].mxu0
    %v7371 = vpop.f32.mrb[0].mxu0
    %7372 = vdwg.mxu0
    %vm7373 = vcmask 1041408
    %v7374 = vsel %vm7373, %v7368, 0.0
    %v7375 = vrot.slane %v7374, 4
    %v7376 = vadd.f32 %v7374, %v7375
    %v7377 = vrot.slane %v7376, 2
    %v7378 = vadd.f32 %v7376, %v7377
    %v7379 = vrot.slane %v7378, 1
    %v7380 = vadd.f32 %v7378, %v7379
    %v7381 = vmul.f32 %v7380, 0.5
    %v7382 = vmul.f32 %v7368, %v7368
    %v7383 = vsel %vm7373, %v7382, 0.0
    %v7384 = vrot.slane %v7383, 4
    %v7385 = vadd.f32 %v7383, %v7384
    %v7386 = vrot.slane %v7385, 2
    %v7387 = vadd.f32 %v7385, %v7386
    %v7388 = vrot.slane %v7387, 1
    %v7389 = vadd.f32 %v7387, %v7388
    %v7390 = vmul.f32 %v7389, 0.5
    %v7391 = vmul.f32 %v7381, %v7381
    %v7392 = vsub.f32 %v7390, %v7391
    %v7393 = vld [vmem:[%s14] sm:$0x1]
    %v7394 = vadd.f32 %v7392, 1e-05
    %v7395 = vrsqrt.pop %v7394
    %v7396 = vmul.f32 %v7393, %v7395
    %v7397 = vld [vmem:[%s14 + $0x1] sm:$0x1]
    %v7398 = vmul.f32 %v7381, %v7396
    %v7399 = vsub.f32 %v7397, %v7398
    %v7400 = vlaneseq
    %v7401 = vshrl.u32 %v7400, 7
    %v7402 = vsub.s32 0, %v7401
    %v7403 = vrot.slane %v7396, %v7402
    %v7404 = vmul.f32 %v7368, %v7403
    %v7405 = vlaneseq
    %v7406 = vshrl.u32 %v7405, 7
    %v7407 = vsub.s32 0, %v7406
    %v7408 = vrot.slane %v7399, %v7407
    %v7409 = vadd.f32 %v7404, %v7408
    %v7410 = vmax.f32 %v7409, 0.0
    %v7411 = vpack.c.bf16 %v7410, %v7410
    %v7412 = vld [vmem:[%s15] sm:$0xf]
    %v7413 = vld [vmem:[%s15 + $0x4] sm:$0xf]
    %v7414 = vld [vmem:[%s15 + $0x8] sm:$0xf]
    %v7415 = vld [vmem:[%s15 + $0xc] sm:$0xf]
    %v7416 = vld [vmem:[%s15 + $0x10] sm:$0xf]
    %v7417 = vld [vmem:[%s15 + $0x14] sm:$0xf]
    %v7418 = vld [vmem:[%s15 + $0x18] sm:$0xf]
    %v7419 = vld [vmem:[%s15 + $0x1c] sm:$0xf]
    %v7420 = vld [vmem:[%s15 + $0x20] sm:$0xf]
    %v7421 = vld [vmem:[%s15 + $0x24] sm:$0xf]
    %v7422 = vld [vmem:[%s15 + $0x28] sm:$0xf]
    %v7423 = vld [vmem:[%s15 + $0x2c] sm:$0xf]
    %v7424 = vld [vmem:[%s15 + $0x30] sm:$0xf]
    %v7425 = vld [vmem:[%s15 + $0x34] sm:$0xf]
    %v7426 = vld [vmem:[%s15 + $0x38] sm:$0xf]
    %v7427 = vld [vmem:[%s15 + $0x3c] sm:$0xf]
    %v7444 = vunpack.c.l.b16 %v7412
    %v7445 = vunpack.c.l.b16 %v7413
    %v7446 = vunpack.c.l.b16 %v7414
    %v7447 = vunpack.c.l.b16 %v7415
    %v7448 = vunpack.c.l.b16 %v7416
    %v7449 = vunpack.c.l.b16 %v7417
    %v7450 = vunpack.c.l.b16 %v7418
    %v7451 = vunpack.c.l.b16 %v7419
    %v7452 = vunpack.c.l.b16 %v7420
    %v7453 = vunpack.c.l.b16 %v7421
    %v7454 = vunpack.c.l.b16 %v7422
    %v7455 = vunpack.c.l.b16 %v7423
    %v7456 = vunpack.c.l.b16 %v7424
    %v7457 = vunpack.c.l.b16 %v7425
    %v7458 = vunpack.c.l.b16 %v7426
    %v7459 = vunpack.c.l.b16 %v7427
    %v7460 = vpack.c.b16 %v7445, %v7444
    %v7461 = vpack.c.b16 %v7447, %v7446
    %v7462 = vpack.c.b16 %v7449, %v7448
    %v7463 = vpack.c.b16 %v7451, %v7450
    %v7464 = vpack.c.b16 %v7453, %v7452
    %v7465 = vpack.c.b16 %v7455, %v7454
    %v7466 = vpack.c.b16 %v7457, %v7456
    %v7467 = vpack.c.b16 %v7459, %v7458
    %7476 = vmatprep.subr.bf16.mxu0 0
    %7477 = vmatpush1.bf16.msra.mxu0 %v7460
    %7478 = vmatprep.subr.bf16.mxu0 0
    %7479 = vmatpush1.bf16.msra.mxu0 %v7461
    %7480 = vmatprep.subr.bf16.mxu0 0
    %7481 = vmatpush1.bf16.msra.mxu0 %v7462
    %7482 = vmatprep.subr.bf16.mxu0 0
    %7483 = vmatpush1.bf16.msra.mxu0 %v7463
    %7484 = vmatprep.subr.bf16.mxu0 0
    %7485 = vmatpush1.bf16.msra.mxu0 %v7464
    %7486 = vmatprep.subr.bf16.mxu0 0
    %7487 = vmatpush1.bf16.msra.mxu0 %v7465
    %7488 = vmatprep.subr.bf16.mxu0 0
    %7489 = vmatpush1.bf16.msra.mxu0 %v7466
    %7490 = vmatprep.subr.bf16.mxu0 0
    %7491 = vmatpush1.bf16.msra.mxu0 %v7467
    %7492 = vmatprep.subr.bf16.mxu0 0
    %7493 = vmatpush1.bf16.msra.mxu0 0
    %7494 = vmatprep.subr.bf16.mxu0 0
    %7495 = vmatpush1.bf16.msra.mxu0 0
    %7496 = vmatprep.subr.bf16.mxu0 0
    %7497 = vmatpush1.bf16.msra.mxu0 0
    %7498 = vmatprep.subr.bf16.mxu0 0
    %7499 = vmatpush1.bf16.msra.mxu0 0
    %7500 = vmatprep.subr.bf16.mxu0 0
    %7501 = vmatpush1.bf16.msra.mxu0 0
    %7502 = vmatprep.subr.bf16.mxu0 0
    %7503 = vmatpush1.bf16.msra.mxu0 0
    %7504 = vmatprep.subr.bf16.mxu0 0
    %7505 = vmatpush1.bf16.msra.mxu0 0
    %7506 = vmatprep.subr.bf16.mxu0 0
    %7507 = vmatpush1.bf16.msra.mxu0 0
    %7508 = vmatprep.mubr.bf16.mxu0 0
    %7509 = vmatmul.mubr.bf16.gmra.mrb[0].mxu0 %v7411
    %v7510 = vpop.f32.mrb[0].mxu0
    %v7511 = vadd.f32 0.0, %v7510
    %v7512 = vpop.f32.mrb[0].mxu0
    %v7513 = vpop.f32.mrb[0].mxu0
    %v7514 = vpop.f32.mrb[0].mxu0
    %7515 = vdwg.mxu0
    %v7516 = vsel %vm7373, %v7511, 0.0
    %v7517 = vrot.slane %v7516, 4
    %v7518 = vadd.f32 %v7516, %v7517
    %v7519 = vrot.slane %v7518, 2
    %v7520 = vadd.f32 %v7518, %v7519
    %v7521 = vrot.slane %v7520, 1
    %v7522 = vadd.f32 %v7520, %v7521
    %v7523 = vmul.f32 %v7522, 0.5
    %v7524 = vmul.f32 %v7511, %v7511
    %v7525 = vsel %vm7373, %v7524, 0.0
    %v7526 = vrot.slane %v7525, 4
    %v7527 = vadd.f32 %v7525, %v7526
    %v7528 = vrot.slane %v7527, 2
    %v7529 = vadd.f32 %v7527, %v7528
    %v7530 = vrot.slane %v7529, 1
    %v7531 = vadd.f32 %v7529, %v7530
    %v7532 = vmul.f32 %v7531, 0.5
    %v7533 = vmul.f32 %v7523, %v7523
    %v7534 = vsub.f32 %v7532, %v7533
    %v7535 = vld [vmem:[%s16] sm:$0x1]
    %v7536 = vadd.f32 %v7534, 1e-05
    %v7537 = vrsqrt.pop %v7536
    %v7538 = vmul.f32 %v7535, %v7537
    %v7539 = vld [vmem:[%s16 + $0x1] sm:$0x1]
    %v7540 = vmul.f32 %v7523, %v7538
    %v7541 = vsub.f32 %v7539, %v7540
    %v7542 = vlaneseq
    %v7543 = vshrl.u32 %v7542, 7
    %v7544 = vsub.s32 0, %v7543
    %v7545 = vrot.slane %v7538, %v7544
    %v7546 = vmul.f32 %v7511, %v7545
    %v7547 = vlaneseq
    %v7548 = vshrl.u32 %v7547, 7
    %v7549 = vsub.s32 0, %v7548
    %v7550 = vrot.slane %v7541, %v7549
    %v7551 = vadd.f32 %v7546, %v7550
    %v7552 = vmax.f32 %v7551, 0.0
    %v7553 = vpack.c.bf16 %v7552, %v7552
    %v7554 = vld [vmem:[%s17] sm:$0xf]
    %v7555 = vld [vmem:[%s17 + $0x4] sm:$0xf]
    %v7556 = vld [vmem:[%s17 + $0x8] sm:$0xf]
    %v7557 = vld [vmem:[%s17 + $0xc] sm:$0xf]
    %v7558 = vld [vmem:[%s17 + $0x10] sm:$0xf]
    %v7559 = vld [vmem:[%s17 + $0x14] sm:$0xf]
    %v7560 = vld [vmem:[%s17 + $0x18] sm:$0xf]
    %v7561 = vld [vmem:[%s17 + $0x1c] sm:$0xf]
    %v7562 = vld [vmem:[%s17 + $0x20] sm:$0xf]
    %v7563 = vld [vmem:[%s17 + $0x24] sm:$0xf]
    %v7564 = vld [vmem:[%s17 + $0x28] sm:$0xf]
    %v7565 = vld [vmem:[%s17 + $0x2c] sm:$0xf]
    %v7566 = vld [vmem:[%s17 + $0x30] sm:$0xf]
    %v7567 = vld [vmem:[%s17 + $0x34] sm:$0xf]
    %v7568 = vld [vmem:[%s17 + $0x38] sm:$0xf]
    %v7569 = vld [vmem:[%s17 + $0x3c] sm:$0xf]
    %v7586 = vunpack.c.l.b16 %v7554
    %v7587 = vunpack.c.l.b16 %v7555
    %v7588 = vunpack.c.l.b16 %v7556
    %v7589 = vunpack.c.l.b16 %v7557
    %v7590 = vunpack.c.l.b16 %v7558
    %v7591 = vunpack.c.l.b16 %v7559
    %v7592 = vunpack.c.l.b16 %v7560
    %v7593 = vunpack.c.l.b16 %v7561
    %v7594 = vunpack.c.l.b16 %v7562
    %v7595 = vunpack.c.l.b16 %v7563
    %v7596 = vunpack.c.l.b16 %v7564
    %v7597 = vunpack.c.l.b16 %v7565
    %v7598 = vunpack.c.l.b16 %v7566
    %v7599 = vunpack.c.l.b16 %v7567
    %v7600 = vunpack.c.l.b16 %v7568
    %v7601 = vunpack.c.l.b16 %v7569
    %v7602 = vpack.c.b16 %v7587, %v7586
    %v7603 = vpack.c.b16 %v7589, %v7588
    %v7604 = vpack.c.b16 %v7591, %v7590
    %v7605 = vpack.c.b16 %v7593, %v7592
    %v7606 = vpack.c.b16 %v7595, %v7594
    %v7607 = vpack.c.b16 %v7597, %v7596
    %v7608 = vpack.c.b16 %v7599, %v7598
    %v7609 = vpack.c.b16 %v7601, %v7600
    %7618 = vmatprep.subr.bf16.mxu0 0
    %7619 = vmatpush1.bf16.msra.mxu0 %v7602
    %7620 = vmatprep.subr.bf16.mxu0 0
    %7621 = vmatpush1.bf16.msra.mxu0 %v7603
    %7622 = vmatprep.subr.bf16.mxu0 0
    %7623 = vmatpush1.bf16.msra.mxu0 %v7604
    %7624 = vmatprep.subr.bf16.mxu0 0
    %7625 = vmatpush1.bf16.msra.mxu0 %v7605
    %7626 = vmatprep.subr.bf16.mxu0 0
    %7627 = vmatpush1.bf16.msra.mxu0 %v7606
    %7628 = vmatprep.subr.bf16.mxu0 0
    %7629 = vmatpush1.bf16.msra.mxu0 %v7607
    %7630 = vmatprep.subr.bf16.mxu0 0
    %7631 = vmatpush1.bf16.msra.mxu0 %v7608
    %7632 = vmatprep.subr.bf16.mxu0 0
    %7633 = vmatpush1.bf16.msra.mxu0 %v7609
    %7634 = vmatprep.subr.bf16.mxu0 0
    %7635 = vmatpush1.bf16.msra.mxu0 0
    %7636 = vmatprep.subr.bf16.mxu0 0
    %7637 = vmatpush1.bf16.msra.mxu0 0
    %7638 = vmatprep.subr.bf16.mxu0 0
    %7639 = vmatpush1.bf16.msra.mxu0 0
    %7640 = vmatprep.subr.bf16.mxu0 0
    %7641 = vmatpush1.bf16.msra.mxu0 0
    %7642 = vmatprep.subr.bf16.mxu0 0
    %7643 = vmatpush1.bf16.msra.mxu0 0
    %7644 = vmatprep.subr.bf16.mxu0 0
    %7645 = vmatpush1.bf16.msra.mxu0 0
    %7646 = vmatprep.subr.bf16.mxu0 0
    %7647 = vmatpush1.bf16.msra.mxu0 0
    %7648 = vmatprep.subr.bf16.mxu0 0
    %7649 = vmatpush1.bf16.msra.mxu0 0
    %7650 = vmatprep.mubr.bf16.mxu0 0
    %7651 = vmatmul.mubr.bf16.gmra.mrb[0].mxu0 %v7553
    %v7652 = vpop.f32.mrb[0].mxu0
    %v7653 = vadd.f32 0.0, %v7652
    %v7654 = vpop.f32.mrb[0].mxu0
    %v7655 = vpop.f32.mrb[0].mxu0
    %v7656 = vpop.f32.mrb[0].mxu0
    %7657 = vdwg.mxu0
    %v7658 = vsel %vm7373, %v7653, 0.0
    %v7659 = vrot.slane %v7658, 4
    %v7660 = vadd.f32 %v7658, %v7659
    %v7661 = vrot.slane %v7660, 2
    %v7662 = vadd.f32 %v7660, %v7661
    %v7663 = vrot.slane %v7662, 1
    %v7664 = vadd.f32 %v7662, %v7663
    %v7665 = vmul.f32 %v7664, 0.5
    %v7666 = vmul.f32 %v7653, %v7653
    %v7667 = vsel %vm7373, %v7666, 0.0
    %v7668 = vrot.slane %v7667, 4
    %v7669 = vadd.f32 %v7667, %v7668
    %v7670 = vrot.slane %v7669, 2
    %v7671 = vadd.f32 %v7669, %v7670
    %v7672 = vrot.slane %v7671, 1
    %v7673 = vadd.f32 %v7671, %v7672
    %v7674 = vmul.f32 %v7673, 0.5
    %v7675 = vmul.f32 %v7665, %v7665
    %v7676 = vsub.f32 %v7674, %v7675
    %v7677 = vld [vmem:[%s18] sm:$0x1]
    %v7678 = vadd.f32 %v7676, 1e-05
    %v7679 = vrsqrt.pop %v7678
    %v7680 = vmul.f32 %v7677, %v7679
    %v7681 = vld [vmem:[%s18 + $0x1] sm:$0x1]
    %v7682 = vmul.f32 %v7665, %v7680
    %v7683 = vsub.f32 %v7681, %v7682
    %v7684 = vlaneseq
    %v7685 = vshrl.u32 %v7684, 7
    %v7686 = vsub.s32 0, %v7685
    %v7687 = vrot.slane %v7680, %v7686
    %v7688 = vmul.f32 %v7653, %v7687
    %v7689 = vlaneseq
    %v7690 = vshrl.u32 %v7689, 7
    %v7691 = vsub.s32 0, %v7690
    %v7692 = vrot.slane %v7683, %v7691
    %v7693 = vadd.f32 %v7688, %v7692
    %v7694 = vmax.f32 %v7693, 0.0
    %7695 = vst [vmem:[#allocation5] sm:$0x3] %v7694
    // Predicated region
    $region78: #{simple_net_forward.1} parent=1 // pred_check
      _
    $region79: #{simple_net_forward.1} parent=1 // pred_check_branch
      %7697 = sbr.rel (0) target = $region81
    $region80: #{simple_net_forward.1} parent=1 // pred_region
      %s7699 = ssub.s32 32, 32
      %7700 = vsyncadd [#allocation6], %s7699
      %s7702 = sshll.u32 [#allocation5], 4
      %s7703 = int_to_ptr.vmem [resolvable:$true] %s7702
      %7705 = dma.vmem_to_hbm [thread:$0]  %s7703, 32, %s19, [#allocation6]
    $region81: #{simple_net_forward.1} parent=1 // pred_fallthru
      _
    // Predicated region
    $region82: #{simple_net_forward.1} parent=1 // pred_check
      _
    $region83: #{simple_net_forward.1} parent=1 // pred_check_branch
      %7707 = sbr.rel (0) target = $region85
    $region84: #{simple_net_forward.1} parent=1 // pred_region
      %7708 = dma.done [#allocation6], 32
    $region85: #{simple_net_forward.1} parent=1 // pred_fallthru
      _
    %7709 = vsyncpa [#allocation6], 1

</llo_original>
